<compile_context>
chip_gen: v7x
topology: tpu7x:2x2x1
jax: 0.10.0
libtpu: 0.0.40
codegen_flags: <defaults>
</compile_context>

<pallas_src>
import functools
from typing import Dict, List

import jax
import jax.numpy as jnp
import numpy as np
from jax import lax
from jax.experimental import pallas as pl
from jax.experimental.pallas import tpu as pltpu

_MM = functools.partial(jnp.dot, preferred_element_type=jnp.float32)
_PREC = lax.Precision.HIGHEST


# ------------------------------------------------------------------ host helpers

def _np(x):
    return np.asarray(jax.device_get(x), np.float32)


def _bn_fold(bn, eps=1e-5):
    s = _np(bn["gamma"]) / np.sqrt(_np(bn["var"]) + eps)
    t = _np(bn["beta"]) - _np(bn["mean"]) * s
    return s, t


def _kron_pointwise(wc, w, col_scale=None):
    """1x1 conv weight (Cin, Cout) -> block-diagonal (w*Cin, w*Cout)."""
    wc = _np(wc)
    if col_scale is not None:
        wc = wc * col_scale[None, :]
    cin, cout = wc.shape
    m = np.zeros((w * cin, w * cout), np.float32)
    for n in range(w):
        m[n * cin:(n + 1) * cin, n * cout:(n + 1) * cout] = wc
    return m


def _banded_conv3(wk, w, col_scale=None):
    """3x3 conv (3,3,Cin,Cout) HWIO -> (3, w*Cin, w*Cout) banded matrices A_ky with
    out_row[y] = sum_ky in_row[y+ky-1] @ A_ky (x-taps + zero padding folded in)."""
    wk = _np(wk)
    if col_scale is not None:
        wk = wk * col_scale[None, None, None, :]
    cin, cout = wk.shape[2], wk.shape[3]
    a = np.zeros((3, w * cin, w * cout), np.float32)
    for ky in range(3):
        for x in range(w):
            for kx in range(3):
                n = x + kx - 1
                if 0 <= n < w:
                    a[ky, n * cin:(n + 1) * cin, x * cout:(x + 1) * cout] = wk[ky, kx]
    return a


def _shift_pack(h):
    """(2,h,h): [0] selects row y-1 (zero at y=0), [1] selects row y+1."""
    return np.stack([np.eye(h, k=-1, dtype=np.float32),
                     np.eye(h, k=1, dtype=np.float32)], 0)


def _pool_packs(h, w, c):
    """0/1 selection matrices implementing 2x2 max-pool as exact matmuls."""
    h2, w2 = h // 2, w // 2
    sel = np.zeros((2, w * c, w2 * c), np.float32)
    for n2 in range(w2):
        sel[0, (2 * n2) * c:(2 * n2 + 1) * c, n2 * c:(n2 + 1) * c] = np.eye(c)
        sel[1, (2 * n2 + 1) * c:(2 * n2 + 2) * c, n2 * c:(n2 + 1) * c] = np.eye(c)
    rows = np.zeros((2, h2, h), np.float32)
    rows[0, np.arange(h2), 2 * np.arange(h2)] = 1.0
    rows[1, np.arange(h2), 2 * np.arange(h2) + 1] = 1.0
    return sel, rows


def _deconv_bands(wd, h, w, col_scale):
    """ConvTranspose2d(k=4, s=2, p=1) weight (Cin,Cout,4,4) -> (4, w*Cin, 2w*Cout):
       out[2m] = x[m]@B1 + x[m-1]@B3 ;  out[2m+1] = x[m]@B2 + x[m+1]@B0."""
    wd = _np(wd)
    cin, cout = wd.shape[0], wd.shape[1]
    b = np.zeros((4, w * cin, 2 * w * cout), np.float32)
    for ky in range(4):
        for n in range(w):
            for ox in range(2 * w):
                kx = ox + 1 - 2 * n
                if 0 <= kx < 4:
                    b[ky, n * cin:(n + 1) * cin, ox * cout:(ox + 1) * cout] = wd[:, :, ky, kx]
    b = b * col_scale[None, None, :]                 # fold BN scale into columns
    inter = np.zeros((2, 2 * h, h), np.float32)      # even/odd row interleave
    inter[0, 2 * np.arange(h), np.arange(h)] = 1.0
    inter[1, 2 * np.arange(h) + 1, np.arange(h)] = 1.0
    return b, inter


# ---------------------------------------------------------------- constant bank

class ConstBank:
    """Flat, ordered list of host-precomputed constants passed to the fused kernel."""

    def __init__(self):
        self.arrays: List[jnp.ndarray] = []
        self._shift_idx: Dict[int, int] = {}

    def add(self, arr):
        self.arrays.append(jnp.asarray(arr, jnp.float32))
        return len(self.arrays) - 1

    def shift_idx(self, h):              # per-height shift matrices, shared
        if h not in self._shift_idx:
            self._shift_idx[h] = self.add(_shift_pack(h))
        return self._shift_idx[h]


# ---------------------------------------------------------------- stage builders

def build_residual(bank, p, h, w, cin, cout):
    half = cout // 2
    s1, t1 = _bn_fold(p["bn1"])
    s2, t2 = _bn_fold(p["bn2"])
    s3, t3 = _bn_fold(p["bn3"])
    b1, b2, b3 = _np(p["conv1"]["b"]), _np(p["conv2"]["b"]), _np(p["conv3"]["b"])
    has_skip = p["skip"] is not None

    rw = w * max(cin, cout)

    def row(vec, reps):
        r = np.zeros((rw,), np.float32)
        v = np.tile(_np(vec), reps)
        r[:v.size] = v
        return r

    rows = [row(s1, w), row(t1, w),
            row(b1 * s2 + t2, w),        # conv1 bias + bn2 shift (scale folded in m1)
            row(b2 * s3 + t3, w),        # conv2 bias + bn3 shift (scale folded in a)
            row(b3, w)]
    if has_skip:
        rows.append(row(p["skip"]["b"], w))

    return dict(
        kind="res", h=h, wcin=w * cin, whalf=w * half, wcout=w * cout,
        has_skip=has_skip,
        rows=bank.add(np.stack(rows, 0)),
        m1=bank.add(_kron_pointwise(p["conv1"]["w"], w, col_scale=s2)),
        a=bank.add(_banded_conv3(p["conv2"]["w"], w, col_scale=s3)),
        m3=bank.add(_kron_pointwise(p["conv3"]["w"], w)),
        skip_m=bank.add(_kron_pointwise(p["skip"]["w"], w)) if has_skip else None,
        shift=bank.shift_idx(h),
    )


def build_pool(bank, h, w, c):
    sel, rows = _pool_packs(h, w, c)
    return dict(kind="pool", sel=bank.add(sel), rows=bank.add(rows))


def build_deconv(bank, p, h, w, f):
    s, t = _bn_fold(p["bn"])
    b, inter = _deconv_bands(p["w"], h, w, np.tile(s, 2 * w))
    c2 = 2 * w * f
    merged = (c2 % 128 == 0)             # merge the 4 banded matmuls only when the
    if merged:                           # resulting column splits are 128-aligned
        bmat = np.concatenate([b[1], b[2], b[3], b[0]], axis=1)
    else:
        bmat = b
    return dict(kind="dec", c2=c2, merged=merged,
                b=bank.add(bmat), t=bank.add(np.tile(t, 2 * w)[None, :]),
                inter=bank.add(inter), shift=bank.shift_idx(h))


def build_hourglass(bank, p, n, h, w, f, increase=0):
    nf = f + increase
    level = dict(n=n,
                 up1=build_residual(bank, p["up1"], h, w, f, f),
                 pool=build_pool(bank, h, w, f),
                 low1=build_residual(bank, p["low1"], h // 2, w // 2, f, nf))
    if n > 1:
        level["inner"] = build_hourglass(bank, p["low2"], n - 1, h // 2, w // 2, nf, 0)
    else:
        level["low2"] = build_residual(bank, p["low2"], h // 2, w // 2, nf, nf)
    level["low3"] = build_residual(bank, p["low3"], h // 2, w // 2, nf, f)
    level["dec"] = build_deconv(bank, p["up2"], h // 2, w // 2, f)
    return level


# ------------------------------------------------------- in-kernel stage appliers
# `c` is the tuple of constant Refs; constants are loaded right at their use site.

def _apply_residual(c, m, v):
    wcin, wh, wcout = m["wcin"], m["whalf"], m["wcout"]
    rows, sh, a = c[m["rows"]], c[m["shift"]], c[m["a"]]
    if m["has_skip"]:
        skip = _MM(v, c[m["skip_m"]][...]) + rows[5:6, :wcout]
    else:
        skip = v
    a1 = jnp.maximum(v * rows[0:1, :wcin] + rows[1:2, :wcin], 0.0)        # bn1+relu
    a2 = jnp.maximum(_MM(a1, c[m["m1"]][...]) + rows[2:3, :wh], 0.0)      # conv1+bn2+relu
    z0, z1, z2 = _MM(a2, a[0]), _MM(a2, a[1]), _MM(a2, a[2])              # 3x3 taps
    a3 = jnp.maximum(z1 + _MM(sh[0], z0) + _MM(sh[1], z2) + rows[3:4, :wh], 0.0)
    return _MM(a3, c[m["m3"]][...]) + rows[4:5, :wcout] + skip            # conv3+res


def _apply_pool(c, m, v):
    sel, rows = c[m["sel"]], c[m["rows"]]
    xm = jnp.maximum(_MM(v, sel[0]), _MM(v, sel[1]))        # max over x pairs
    return jnp.maximum(_MM(rows[0], xm), _MM(rows[1], xm))  # max over y pairs


def _apply_deconv(c, m, v, u):
    sh, inter, c2 = c[m["shift"]], c[m["inter"]], m["c2"]
    t = c[m["t"]][...]
    if m["merged"]:
        z = _MM(v, c[m["b"]][...])                     # one wide matmul [B1|B2|B3|B0]
        z1, z2 = z[:, 0:c2], z[:, c2:2 * c2]
        z3, z0 = z[:, 2 * c2:3 * c2], z[:, 3 * c2:4 * c2]
    else:
        b = c[m["b"]]
        z0, z1, z2, z3 = _MM(v, b[0]), _MM(v, b[1]), _MM(v, b[2]), _MM(v, b[3])
    even = jnp.maximum(z1 + _MM(sh[0], z3) + t, 0.0)   # output rows 2m   (bn+relu)
    odd = jnp.maximum(z2 + _MM(sh[1], z0) + t, 0.0)    # output rows 2m+1 (bn+relu)
    return _MM(inter[0], even) + _MM(inter[1], odd) + u   # interleave + add up1


def _apply_level(c, level, v):
    up1 = _apply_residual(c, level["up1"], v)
    low = _apply_pool(c, level["pool"], v)
    low = _apply_residual(c, level["low1"], low)
    if "inner" in level:
        low = _apply_level(c, level["inner"], low)
    else:
        low = _apply_residual(c, level["low2"], low)
    low = _apply_residual(c, level["low3"], low)
    return _apply_deconv(c, level["dec"], low, up1)


# ----------------------------------------------------------------- fused pallas call

def hourglass_pallas(prep, bank, x):
    """x: (N, H, W*C) lane-packed f32; returns (N, H, W*C)."""
    batch, rows, lanes = x.shape
    consts = bank.arrays

    def kernel(x_ref, *rest):
        o_ref, crefs = rest[-1], rest[:-1]
        o_ref[...] = _apply_level(crefs, prep, x_ref[...])

    def const_spec(arr):
        nd = arr.ndim
        return pl.BlockSpec(arr.shape, lambda n, _nd=nd: (0,) * _nd)

    in_specs = [pl.BlockSpec((None, rows, lanes), lambda n: (n, 0, 0))]
    in_specs += [const_spec(a) for a in consts]

    return pl.pallas_call(
        kernel,
        grid=(batch,),
        in_specs=in_specs,
        out_specs=pl.BlockSpec((None, rows, lanes), lambda n: (n, 0, 0)),
        out_shape=jax.ShapeDtypeStruct((batch, rows, lanes), jnp.float32),
        compiler_params=pltpu.CompilerParams(dimension_semantics=("parallel",)),
    )(x, *consts)


# ------------------------------------------------------------------------ param init

def init_conv(key, cin, cout, k):
    kw, kb = jax.random.split(key)
    w = jax.random.normal(kw, (k, k, cin, cout), jnp.float32) / np.sqrt(cin * k * k)
    b = jax.random.normal(kb, (cout,), jnp.float32) * 0.01
    if k == 1:
        w = w.reshape(cin, cout)
    return {"w": w, "b": b}


def init_bn(key, c):
    k1, k2, k3, k4 = jax.random.split(key, 4)
    return {"gamma": jax.random.uniform(k1, (c,), jnp.float32, 0.5, 1.5),
            "beta": jax.random.normal(k2, (c,), jnp.float32) * 0.1,
            "mean": jax.random.normal(k3, (c,), jnp.float32) * 0.1,
            "var": jax.random.uniform(k4, (c,), jnp.float32, 0.5, 1.5)}


def init_deconv(key, f):
    kw, kb = jax.random.split(key)
    # PyTorch ConvTranspose2d weight layout: (in_channels, out_channels, kH, kW)
    w = jax.random.normal(kw, (f, f, 4, 4), jnp.float32) / np.sqrt(f * 16)
    return {"w": w, "bn": init_bn(kb, f)}


def init_residual(key, inp, out):
    half = out // 2
    ks = jax.random.split(key, 7)
    return {"bn1": init_bn(ks[0], inp),
            "conv1": init_conv(ks[1], inp, half, 1),
            "bn2": init_bn(ks[2], half),
            "conv2": init_conv(ks[3], half, half, 3),
            "bn3": init_bn(ks[4], half),
            "conv3": init_conv(ks[5], half, out, 1),
            "skip": init_conv(ks[6], inp, out, 1) if inp != out else None}


def init_hourglass(key, n, f, increase=0):
    nf = f + increase
    k1, k2, k3, k4, k5 = jax.random.split(key, 5)
    p = {"up1": init_residual(k1, f, f),
         "low1": init_residual(k2, f, nf),
         "low3": init_residual(k4, nf, f),
         "up2": init_deconv(k5, f)}
    p["low2"] = init_hourglass(k3, n - 1, nf) if n > 1 else init_residual(k3, nf, nf)
    return p


# ------------------------------------------------------------------ pure-JAX reference

def ref_bn_relu(x, bn, eps=1e-5):
    s = bn["gamma"] / jnp.sqrt(bn["var"] + eps)
    t = bn["beta"] - bn["mean"] * s
    return jnp.maximum(x * s + t, 0.0)


def ref_conv1x1(x, w, b):
    return jnp.einsum("nhwc,cd->nhwd", x, w, precision=_PREC) + b


def ref_conv3x3(x, w, b):
    y = lax.conv_general_dilated(x, w, (1, 1), ((1, 1), (1, 1)),
                                 dimension_numbers=("NHWC", "HWIO", "NHWC"),
                                 precision=_PREC)
    return y + b


def ref_residual(p, x):
    residual = x if p["skip"] is None else ref_conv1x1(x, p["skip"]["w"], p["skip"]["b"])
    out = ref_bn_relu(x, p["bn1"])
    out = ref_conv1x1(out, p["conv1"]["w"], p["conv1"]["b"])
    out = ref_bn_relu(out, p["bn2"])
    out = ref_conv3x3(out, p["conv2"]["w"], p["conv2"]["b"])
    out = ref_bn_relu(out, p["bn3"])
    out = ref_conv1x1(out, p["conv3"]["w"], p["conv3"]["b"])
    return out + residual


def ref_maxpool(x):
    n, h, w, c = x.shape
    return x.reshape(n, h // 2, 2, w // 2, 2, c).max(axis=(2, 4))


def ref_deconv_bn_relu(p, x):
    # ConvTranspose2d(k=4, s=2, p=1, bias=False) == dilated conv with flipped kernel
    w = p["w"]                                             # (cin, cout, 4, 4)
    rhs = jnp.flip(w, axis=(2, 3)).transpose(2, 3, 0, 1)   # (4, 4, cin, cout) HWIO
    y = lax.conv_general_dilated(x, rhs, (1, 1), ((2, 2), (2, 2)),
                                 lhs_dilation=(2, 2),
                                 dimension_numbers=("NHWC", "HWIO", "NHWC"),
                                 precision=_PREC)
    return ref_bn_relu(y, p["bn"])


def ref_hourglass(p, x, n):
    up1 = ref_residual(p["up1"], x)
    low1 = ref_residual(p["low1"], ref_maxpool(x))
    low2 = ref_hourglass(p["low2"], low1, n - 1) if n > 1 else ref_residual(p["low2"], low1)
    low3 = ref_residual(p["low3"], low2)
    return up1 + ref_deconv_bn_relu(p["up2"], low3)


# ------------------------------------------------------------------------------- main

if __name__ == "__main__":
    key = jax.random.PRNGKey(0)
    kp, kx = jax.random.split(key)

    n_levels, f = 2, 8          # VModule(n=2, f=8, increase=0)
    N, H, W = 2, 16, 16

    params = init_hourglass(kp, n_levels, f)

    x_nchw = jax.random.normal(kx, (N, f, H, W), jnp.float32)   # PyTorch NCHW input
    x_nhwc = jnp.transpose(x_nchw, (0, 2, 3, 1))                # -> NHWC
    x_packed = x_nhwc.reshape(N, H, W * f)                      # lane-packed (free)

    bank = ConstBank()
    prep = build_hourglass(bank, params, n_levels, H, W, f)

    out_packed = jax.block_until_ready(hourglass_pallas(prep, bank, x_packed))
    out = out_packed.reshape(N, H, W, f)

    ref = jax.block_until_ready(ref_hourglass(params, x_nhwc, n_levels))

    assert out.shape == (N, H, W, f), out.shape
    err = float(jnp.max(jnp.abs(out - ref)))
    assert err < 1e-3, f"max abs err {err}"
    print("KERNEL_OK")
</pallas_src>

<mosaic_0001>
module attributes {stable_mosaic.version = 11 : i64} {
  func.func @kernel(%arg0: i32, %arg1: memref<1x16x128xf32, #tpu.memory_space<vmem>>, %arg2: memref<5x128xf32, #tpu.memory_space<vmem>>, %arg3: memref<128x64xf32, #tpu.memory_space<vmem>>, %arg4: memref<3x64x64xf32, #tpu.memory_space<vmem>>, %arg5: memref<64x128xf32, #tpu.memory_space<vmem>>, %arg6: memref<2x16x16xf32, #tpu.memory_space<vmem>>, %arg7: memref<2x128x64xf32, #tpu.memory_space<vmem>>, %arg8: memref<2x8x16xf32, #tpu.memory_space<vmem>>, %arg9: memref<5x64xf32, #tpu.memory_space<vmem>>, %arg10: memref<64x32xf32, #tpu.memory_space<vmem>>, %arg11: memref<3x32x32xf32, #tpu.memory_space<vmem>>, %arg12: memref<32x64xf32, #tpu.memory_space<vmem>>, %arg13: memref<2x8x8xf32, #tpu.memory_space<vmem>>, %arg14: memref<5x64xf32, #tpu.memory_space<vmem>>, %arg15: memref<64x32xf32, #tpu.memory_space<vmem>>, %arg16: memref<3x32x32xf32, #tpu.memory_space<vmem>>, %arg17: memref<32x64xf32, #tpu.memory_space<vmem>>, %arg18: memref<2x64x32xf32, #tpu.memory_space<vmem>>, %arg19: memref<2x4x8xf32, #tpu.memory_space<vmem>>, %arg20: memref<5x32xf32, #tpu.memory_space<vmem>>, %arg21: memref<32x16xf32, #tpu.memory_space<vmem>>, %arg22: memref<3x16x16xf32, #tpu.memory_space<vmem>>, %arg23: memref<16x32xf32, #tpu.memory_space<vmem>>, %arg24: memref<2x4x4xf32, #tpu.memory_space<vmem>>, %arg25: memref<5x32xf32, #tpu.memory_space<vmem>>, %arg26: memref<32x16xf32, #tpu.memory_space<vmem>>, %arg27: memref<3x16x16xf32, #tpu.memory_space<vmem>>, %arg28: memref<16x32xf32, #tpu.memory_space<vmem>>, %arg29: memref<5x32xf32, #tpu.memory_space<vmem>>, %arg30: memref<32x16xf32, #tpu.memory_space<vmem>>, %arg31: memref<3x16x16xf32, #tpu.memory_space<vmem>>, %arg32: memref<16x32xf32, #tpu.memory_space<vmem>>, %arg33: memref<4x32x64xf32, #tpu.memory_space<vmem>>, %arg34: memref<1x64xf32, #tpu.memory_space<vmem>>, %arg35: memref<2x8x4xf32, #tpu.memory_space<vmem>>, %arg36: memref<5x64xf32, #tpu.memory_space<vmem>>, %arg37: memref<64x32xf32, #tpu.memory_space<vmem>>, %arg38: memref<3x32x32xf32, #tpu.memory_space<vmem>>, %arg39: memref<32x64xf32, #tpu.memory_space<vmem>>, %arg40: memref<64x512xf32, #tpu.memory_space<vmem>>, %arg41: memref<1x128xf32, #tpu.memory_space<vmem>>, %arg42: memref<2x16x8xf32, #tpu.memory_space<vmem>>, %arg43: memref<1x16x128xf32, #tpu.memory_space<vmem>>) attributes {dimension_semantics = [#tpu.dimension_semantics<parallel>], iteration_bounds = array<i64: 2>, scalar_prefetch = 0 : i64, scratch_operands = 0 : i64, tpu.core_type = #tpu.core_type<tc>, window_params = [{transform_indices = @transform_0, window_bounds = array<i64: 1, 16, 128>}, {pipeline_mode = #tpu.pipeline_mode<synchronous>, transform_indices = @transform_1, window_bounds = array<i64: 5, 128>}, {pipeline_mode = #tpu.pipeline_mode<synchronous>, transform_indices = @transform_2, window_bounds = array<i64: 128, 64>}, {pipeline_mode = #tpu.pipeline_mode<synchronous>, transform_indices = @transform_3, window_bounds = array<i64: 3, 64, 64>}, {pipeline_mode = #tpu.pipeline_mode<synchronous>, transform_indices = @transform_4, window_bounds = array<i64: 64, 128>}, {pipeline_mode = #tpu.pipeline_mode<synchronous>, transform_indices = @transform_5, window_bounds = array<i64: 2, 16, 16>}, {pipeline_mode = #tpu.pipeline_mode<synchronous>, transform_indices = @transform_6, window_bounds = array<i64: 2, 128, 64>}, {pipeline_mode = #tpu.pipeline_mode<synchronous>, transform_indices = @transform_7, window_bounds = array<i64: 2, 8, 16>}, {pipeline_mode = #tpu.pipeline_mode<synchronous>, transform_indices = @transform_8, window_bounds = array<i64: 5, 64>}, {pipeline_mode = #tpu.pipeline_mode<synchronous>, transform_indices = @transform_9, window_bounds = array<i64: 64, 32>}, {pipeline_mode = #tpu.pipeline_mode<synchronous>, transform_indices = @transform_10, window_bounds = array<i64: 3, 32, 32>}, {pipeline_mode = #tpu.pipeline_mode<synchronous>, transform_indices = @transform_11, window_bounds = array<i64: 32, 64>}, {pipeline_mode = #tpu.pipeline_mode<synchronous>, transform_indices = @transform_12, window_bounds = array<i64: 2, 8, 8>}, {pipeline_mode = #tpu.pipeline_mode<synchronous>, transform_indices = @transform_13, window_bounds = array<i64: 5, 64>}, {pipeline_mode = #tpu.pipeline_mode<synchronous>, transform_indices = @transform_14, window_bounds = array<i64: 64, 32>}, {pipeline_mode = #tpu.pipeline_mode<synchronous>, transform_indices = @transform_15, window_bounds = array<i64: 3, 32, 32>}, {pipeline_mode = #tpu.pipeline_mode<synchronous>, transform_indices = @transform_16, window_bounds = array<i64: 32, 64>}, {pipeline_mode = #tpu.pipeline_mode<synchronous>, transform_indices = @transform_17, window_bounds = array<i64: 2, 64, 32>}, {pipeline_mode = #tpu.pipeline_mode<synchronous>, transform_indices = @transform_18, window_bounds = array<i64: 2, 4, 8>}, {pipeline_mode = #tpu.pipeline_mode<synchronous>, transform_indices = @transform_19, window_bounds = array<i64: 5, 32>}, {pipeline_mode = #tpu.pipeline_mode<synchronous>, transform_indices = @transform_20, window_bounds = array<i64: 32, 16>}, {pipeline_mode = #tpu.pipeline_mode<synchronous>, transform_indices = @transform_21, window_bounds = array<i64: 3, 16, 16>}, {pipeline_mode = #tpu.pipeline_mode<synchronous>, transform_indices = @transform_22, window_bounds = array<i64: 16, 32>}, {pipeline_mode = #tpu.pipeline_mode<synchronous>, transform_indices = @transform_23, window_bounds = array<i64: 2, 4, 4>}, {pipeline_mode = #tpu.pipeline_mode<synchronous>, transform_indices = @transform_24, window_bounds = array<i64: 5, 32>}, {pipeline_mode = #tpu.pipeline_mode<synchronous>, transform_indices = @transform_25, window_bounds = array<i64: 32, 16>}, {pipeline_mode = #tpu.pipeline_mode<synchronous>, transform_indices = @transform_26, window_bounds = array<i64: 3, 16, 16>}, {pipeline_mode = #tpu.pipeline_mode<synchronous>, transform_indices = @transform_27, window_bounds = array<i64: 16, 32>}, {pipeline_mode = #tpu.pipeline_mode<synchronous>, transform_indices = @transform_28, window_bounds = array<i64: 5, 32>}, {pipeline_mode = #tpu.pipeline_mode<synchronous>, transform_indices = @transform_29, window_bounds = array<i64: 32, 16>}, {pipeline_mode = #tpu.pipeline_mode<synchronous>, transform_indices = @transform_30, window_bounds = array<i64: 3, 16, 16>}, {pipeline_mode = #tpu.pipeline_mode<synchronous>, transform_indices = @transform_31, window_bounds = array<i64: 16, 32>}, {pipeline_mode = #tpu.pipeline_mode<synchronous>, transform_indices = @transform_32, window_bounds = array<i64: 4, 32, 64>}, {pipeline_mode = #tpu.pipeline_mode<synchronous>, transform_indices = @transform_33, window_bounds = array<i64: 1, 64>}, {pipeline_mode = #tpu.pipeline_mode<synchronous>, transform_indices = @transform_34, window_bounds = array<i64: 2, 8, 4>}, {pipeline_mode = #tpu.pipeline_mode<synchronous>, transform_indices = @transform_35, window_bounds = array<i64: 5, 64>}, {pipeline_mode = #tpu.pipeline_mode<synchronous>, transform_indices = @transform_36, window_bounds = array<i64: 64, 32>}, {pipeline_mode = #tpu.pipeline_mode<synchronous>, transform_indices = @transform_37, window_bounds = array<i64: 3, 32, 32>}, {pipeline_mode = #tpu.pipeline_mode<synchronous>, transform_indices = @transform_38, window_bounds = array<i64: 32, 64>}, {pipeline_mode = #tpu.pipeline_mode<synchronous>, transform_indices = @transform_39, window_bounds = array<i64: 64, 512>}, {pipeline_mode = #tpu.pipeline_mode<synchronous>, transform_indices = @transform_40, window_bounds = array<i64: 1, 128>}, {pipeline_mode = #tpu.pipeline_mode<synchronous>, transform_indices = @transform_41, window_bounds = array<i64: 2, 16, 8>}, {transform_indices = @transform_42, window_bounds = array<i64: 1, 16, 128>}]} {
    %c0 = arith.constant 0 : index
    %c0_0 = arith.constant 0 : index
    %c0_1 = arith.constant 0 : index
    %0 = vector.load %arg1[%c0, %c0_0, %c0_1] : memref<1x16x128xf32, #tpu.memory_space<vmem>>, vector<1x16x128xf32>
    %1 = vector.shape_cast %0 : vector<1x16x128xf32> to vector<16x128xf32>
    %c0_2 = arith.constant 0 : index
    %c0_3 = arith.constant 0 : index
    %2 = vector.load %arg2[%c0_2, %c0_3] : memref<5x128xf32, #tpu.memory_space<vmem>>, vector<1x128xf32>
    %3 = vector.broadcast %2 : vector<1x128xf32> to vector<16x128xf32>
    %4 = arith.mulf %1, %3 : vector<16x128xf32>
    %c1 = arith.constant 1 : index
    %c0_4 = arith.constant 0 : index
    %5 = vector.load %arg2[%c1, %c0_4] : memref<5x128xf32, #tpu.memory_space<vmem>>, vector<1x128xf32>
    %6 = vector.broadcast %5 : vector<1x128xf32> to vector<16x128xf32>
    %7 = arith.addf %4, %6 : vector<16x128xf32>
    %cst = arith.constant 0.000000e+00 : f32
    %8 = vector.broadcast %cst : f32 to vector<16x128xf32>
    %9 = arith.maximumf %7, %8 : vector<16x128xf32>
    %c0_5 = arith.constant 0 : index
    %c0_6 = arith.constant 0 : index
    %10 = vector.load %arg3[%c0_5, %c0_6] : memref<128x64xf32, #tpu.memory_space<vmem>>, vector<128x64xf32>
    %cst_7 = arith.constant dense<0.000000e+00> : vector<16x64xf32>
    %11 = tpu.matmul %9, %10, %cst_7 {dimension_numbers = #tpu.dot_dimension_numbers<[1], [0], [0], [1], [0, 0, 1, 1], [], []>} : vector<16x128xf32>, vector<128x64xf32>, vector<16x64xf32> -> vector<16x64xf32>
    %c2 = arith.constant 2 : index
    %c0_8 = arith.constant 0 : index
    %12 = vector.load %arg2[%c2, %c0_8] : memref<5x128xf32, #tpu.memory_space<vmem>>, vector<1x64xf32>
    %13 = vector.broadcast %12 : vector<1x64xf32> to vector<16x64xf32>
    %14 = arith.addf %11, %13 : vector<16x64xf32>
    %cst_9 = arith.constant 0.000000e+00 : f32
    %15 = vector.broadcast %cst_9 : f32 to vector<16x64xf32>
    %16 = arith.maximumf %14, %15 : vector<16x64xf32>
    %c0_10 = arith.constant 0 : index
    %c0_11 = arith.constant 0 : index
    %c0_12 = arith.constant 0 : index
    %17 = vector.load %arg4[%c0_10, %c0_11, %c0_12] : memref<3x64x64xf32, #tpu.memory_space<vmem>>, vector<1x64x64xf32>
    %18 = vector.shape_cast %17 : vector<1x64x64xf32> to vector<64x64xf32>
    %cst_13 = arith.constant dense<0.000000e+00> : vector<16x64xf32>
    %19 = tpu.matmul %16, %18, %cst_13 {dimension_numbers = #tpu.dot_dimension_numbers<[1], [0], [0], [1], [0, 0, 1, 1], [], []>} : vector<16x64xf32>, vector<64x64xf32>, vector<16x64xf32> -> vector<16x64xf32>
    %c1_14 = arith.constant 1 : index
    %c0_15 = arith.constant 0 : index
    %c0_16 = arith.constant 0 : index
    %20 = vector.load %arg4[%c1_14, %c0_15, %c0_16] : memref<3x64x64xf32, #tpu.memory_space<vmem>>, vector<1x64x64xf32>
    %21 = vector.shape_cast %20 : vector<1x64x64xf32> to vector<64x64xf32>
    %cst_17 = arith.constant dense<0.000000e+00> : vector<16x64xf32>
    %22 = tpu.matmul %16, %21, %cst_17 {dimension_numbers = #tpu.dot_dimension_numbers<[1], [0], [0], [1], [0, 0, 1, 1], [], []>} : vector<16x64xf32>, vector<64x64xf32>, vector<16x64xf32> -> vector<16x64xf32>
    %c2_18 = arith.constant 2 : index
    %c0_19 = arith.constant 0 : index
    %c0_20 = arith.constant 0 : index
    %23 = vector.load %arg4[%c2_18, %c0_19, %c0_20] : memref<3x64x64xf32, #tpu.memory_space<vmem>>, vector<1x64x64xf32>
    %24 = vector.shape_cast %23 : vector<1x64x64xf32> to vector<64x64xf32>
    %cst_21 = arith.constant dense<0.000000e+00> : vector<16x64xf32>
    %25 = tpu.matmul %16, %24, %cst_21 {dimension_numbers = #tpu.dot_dimension_numbers<[1], [0], [0], [1], [0, 0, 1, 1], [], []>} : vector<16x64xf32>, vector<64x64xf32>, vector<16x64xf32> -> vector<16x64xf32>
    %c0_22 = arith.constant 0 : index
    %c0_23 = arith.constant 0 : index
    %c0_24 = arith.constant 0 : index
    %26 = vector.load %arg6[%c0_22, %c0_23, %c0_24] : memref<2x16x16xf32, #tpu.memory_space<vmem>>, vector<1x16x16xf32>
    %27 = vector.shape_cast %26 : vector<1x16x16xf32> to vector<16x16xf32>
    %cst_25 = arith.constant dense<0.000000e+00> : vector<16x64xf32>
    %28 = tpu.matmul %27, %19, %cst_25 {dimension_numbers = #tpu.dot_dimension_numbers<[1], [0], [0], [1], [0, 0, 1, 1], [], []>} : vector<16x16xf32>, vector<16x64xf32>, vector<16x64xf32> -> vector<16x64xf32>
    %29 = arith.addf %22, %28 : vector<16x64xf32>
    %c1_26 = arith.constant 1 : index
    %c0_27 = arith.constant 0 : index
    %c0_28 = arith.constant 0 : index
    %30 = vector.load %arg6[%c1_26, %c0_27, %c0_28] : memref<2x16x16xf32, #tpu.memory_space<vmem>>, vector<1x16x16xf32>
    %31 = vector.shape_cast %30 : vector<1x16x16xf32> to vector<16x16xf32>
    %cst_29 = arith.constant dense<0.000000e+00> : vector<16x64xf32>
    %32 = tpu.matmul %31, %25, %cst_29 {dimension_numbers = #tpu.dot_dimension_numbers<[1], [0], [0], [1], [0, 0, 1, 1], [], []>} : vector<16x16xf32>, vector<16x64xf32>, vector<16x64xf32> -> vector<16x64xf32>
    %33 = arith.addf %29, %32 : vector<16x64xf32>
    %c3 = arith.constant 3 : index
    %c0_30 = arith.constant 0 : index
    %34 = vector.load %arg2[%c3, %c0_30] : memref<5x128xf32, #tpu.memory_space<vmem>>, vector<1x64xf32>
    %35 = vector.broadcast %34 : vector<1x64xf32> to vector<16x64xf32>
    %36 = arith.addf %33, %35 : vector<16x64xf32>
    %cst_31 = arith.constant 0.000000e+00 : f32
    %37 = vector.broadcast %cst_31 : f32 to vector<16x64xf32>
    %38 = arith.maximumf %36, %37 : vector<16x64xf32>
    %c0_32 = arith.constant 0 : index
    %c0_33 = arith.constant 0 : index
    %39 = vector.load %arg5[%c0_32, %c0_33] : memref<64x128xf32, #tpu.memory_space<vmem>>, vector<64x128xf32>
    %cst_34 = arith.constant dense<0.000000e+00> : vector<16x128xf32>
    %40 = tpu.matmul %38, %39, %cst_34 {dimension_numbers = #tpu.dot_dimension_numbers<[1], [0], [0], [1], [0, 0, 1, 1], [], []>} : vector<16x64xf32>, vector<64x128xf32>, vector<16x128xf32> -> vector<16x128xf32>
    %c4 = arith.constant 4 : index
    %c0_35 = arith.constant 0 : index
    %41 = vector.load %arg2[%c4, %c0_35] : memref<5x128xf32, #tpu.memory_space<vmem>>, vector<1x128xf32>
    %42 = vector.broadcast %41 : vector<1x128xf32> to vector<16x128xf32>
    %43 = arith.addf %40, %42 : vector<16x128xf32>
    %44 = arith.addf %43, %1 : vector<16x128xf32>
    %c0_36 = arith.constant 0 : index
    %c0_37 = arith.constant 0 : index
    %c0_38 = arith.constant 0 : index
    %45 = vector.load %arg7[%c0_36, %c0_37, %c0_38] : memref<2x128x64xf32, #tpu.memory_space<vmem>>, vector<1x128x64xf32>
    %46 = vector.shape_cast %45 : vector<1x128x64xf32> to vector<128x64xf32>
    %cst_39 = arith.constant dense<0.000000e+00> : vector<16x64xf32>
    %47 = tpu.matmul %1, %46, %cst_39 {dimension_numbers = #tpu.dot_dimension_numbers<[1], [0], [0], [1], [0, 0, 1, 1], [], []>} : vector<16x128xf32>, vector<128x64xf32>, vector<16x64xf32> -> vector<16x64xf32>
    %c1_40 = arith.constant 1 : index
    %c0_41 = arith.constant 0 : index
    %c0_42 = arith.constant 0 : index
    %48 = vector.load %arg7[%c1_40, %c0_41, %c0_42] : memref<2x128x64xf32, #tpu.memory_space<vmem>>, vector<1x128x64xf32>
    %49 = vector.shape_cast %48 : vector<1x128x64xf32> to vector<128x64xf32>
    %cst_43 = arith.constant dense<0.000000e+00> : vector<16x64xf32>
    %50 = tpu.matmul %1, %49, %cst_43 {dimension_numbers = #tpu.dot_dimension_numbers<[1], [0], [0], [1], [0, 0, 1, 1], [], []>} : vector<16x128xf32>, vector<128x64xf32>, vector<16x64xf32> -> vector<16x64xf32>
    %51 = arith.maximumf %47, %50 : vector<16x64xf32>
    %c0_44 = arith.constant 0 : index
    %c0_45 = arith.constant 0 : index
    %c0_46 = arith.constant 0 : index
    %52 = vector.load %arg8[%c0_44, %c0_45, %c0_46] : memref<2x8x16xf32, #tpu.memory_space<vmem>>, vector<1x8x16xf32>
    %53 = vector.shape_cast %52 : vector<1x8x16xf32> to vector<8x16xf32>
    %cst_47 = arith.constant dense<0.000000e+00> : vector<8x64xf32>
    %54 = tpu.matmul %53, %51, %cst_47 {dimension_numbers = #tpu.dot_dimension_numbers<[1], [0], [0], [1], [0, 0, 1, 1], [], []>} : vector<8x16xf32>, vector<16x64xf32>, vector<8x64xf32> -> vector<8x64xf32>
    %c1_48 = arith.constant 1 : index
    %c0_49 = arith.constant 0 : index
    %c0_50 = arith.constant 0 : index
    %55 = vector.load %arg8[%c1_48, %c0_49, %c0_50] : memref<2x8x16xf32, #tpu.memory_space<vmem>>, vector<1x8x16xf32>
    %56 = vector.shape_cast %55 : vector<1x8x16xf32> to vector<8x16xf32>
    %cst_51 = arith.constant dense<0.000000e+00> : vector<8x64xf32>
    %57 = tpu.matmul %56, %51, %cst_51 {dimension_numbers = #tpu.dot_dimension_numbers<[1], [0], [0], [1], [0, 0, 1, 1], [], []>} : vector<8x16xf32>, vector<16x64xf32>, vector<8x64xf32> -> vector<8x64xf32>
    %58 = arith.maximumf %54, %57 : vector<8x64xf32>
    %c0_52 = arith.constant 0 : index
    %c0_53 = arith.constant 0 : index
    %59 = vector.load %arg9[%c0_52, %c0_53] : memref<5x64xf32, #tpu.memory_space<vmem>>, vector<1x64xf32>
    %60 = vector.broadcast %59 : vector<1x64xf32> to vector<8x64xf32>
    %61 = arith.mulf %58, %60 : vector<8x64xf32>
    %c1_54 = arith.constant 1 : index
    %c0_55 = arith.constant 0 : index
    %62 = vector.load %arg9[%c1_54, %c0_55] : memref<5x64xf32, #tpu.memory_space<vmem>>, vector<1x64xf32>
    %63 = vector.broadcast %62 : vector<1x64xf32> to vector<8x64xf32>
    %64 = arith.addf %61, %63 : vector<8x64xf32>
    %cst_56 = arith.constant 0.000000e+00 : f32
    %65 = vector.broadcast %cst_56 : f32 to vector<8x64xf32>
    %66 = arith.maximumf %64, %65 : vector<8x64xf32>
    %c0_57 = arith.constant 0 : index
    %c0_58 = arith.constant 0 : index
    %67 = vector.load %arg10[%c0_57, %c0_58] : memref<64x32xf32, #tpu.memory_space<vmem>>, vector<64x32xf32>
    %cst_59 = arith.constant dense<0.000000e+00> : vector<8x32xf32>
    %68 = tpu.matmul %66, %67, %cst_59 {dimension_numbers = #tpu.dot_dimension_numbers<[1], [0], [0], [1], [0, 0, 1, 1], [], []>} : vector<8x64xf32>, vector<64x32xf32>, vector<8x32xf32> -> vector<8x32xf32>
    %c2_60 = arith.constant 2 : index
    %c0_61 = arith.constant 0 : index
    %69 = vector.load %arg9[%c2_60, %c0_61] : memref<5x64xf32, #tpu.memory_space<vmem>>, vector<1x32xf32>
    %70 = vector.broadcast %69 : vector<1x32xf32> to vector<8x32xf32>
    %71 = arith.addf %68, %70 : vector<8x32xf32>
    %cst_62 = arith.constant 0.000000e+00 : f32
    %72 = vector.broadcast %cst_62 : f32 to vector<8x32xf32>
    %73 = arith.maximumf %71, %72 : vector<8x32xf32>
    %c0_63 = arith.constant 0 : index
    %c0_64 = arith.constant 0 : index
    %c0_65 = arith.constant 0 : index
    %74 = vector.load %arg11[%c0_63, %c0_64, %c0_65] : memref<3x32x32xf32, #tpu.memory_space<vmem>>, vector<1x32x32xf32>
    %75 = vector.shape_cast %74 : vector<1x32x32xf32> to vector<32x32xf32>
    %cst_66 = arith.constant dense<0.000000e+00> : vector<8x32xf32>
    %76 = tpu.matmul %73, %75, %cst_66 {dimension_numbers = #tpu.dot_dimension_numbers<[1], [0], [0], [1], [0, 0, 1, 1], [], []>} : vector<8x32xf32>, vector<32x32xf32>, vector<8x32xf32> -> vector<8x32xf32>
    %c1_67 = arith.constant 1 : index
    %c0_68 = arith.constant 0 : index
    %c0_69 = arith.constant 0 : index
    %77 = vector.load %arg11[%c1_67, %c0_68, %c0_69] : memref<3x32x32xf32, #tpu.memory_space<vmem>>, vector<1x32x32xf32>
    %78 = vector.shape_cast %77 : vector<1x32x32xf32> to vector<32x32xf32>
    %cst_70 = arith.constant dense<0.000000e+00> : vector<8x32xf32>
    %79 = tpu.matmul %73, %78, %cst_70 {dimension_numbers = #tpu.dot_dimension_numbers<[1], [0], [0], [1], [0, 0, 1, 1], [], []>} : vector<8x32xf32>, vector<32x32xf32>, vector<8x32xf32> -> vector<8x32xf32>
    %c2_71 = arith.constant 2 : index
    %c0_72 = arith.constant 0 : index
    %c0_73 = arith.constant 0 : index
    %80 = vector.load %arg11[%c2_71, %c0_72, %c0_73] : memref<3x32x32xf32, #tpu.memory_space<vmem>>, vector<1x32x32xf32>
    %81 = vector.shape_cast %80 : vector<1x32x32xf32> to vector<32x32xf32>
    %cst_74 = arith.constant dense<0.000000e+00> : vector<8x32xf32>
    %82 = tpu.matmul %73, %81, %cst_74 {dimension_numbers = #tpu.dot_dimension_numbers<[1], [0], [0], [1], [0, 0, 1, 1], [], []>} : vector<8x32xf32>, vector<32x32xf32>, vector<8x32xf32> -> vector<8x32xf32>
    %c0_75 = arith.constant 0 : index
    %c0_76 = arith.constant 0 : index
    %c0_77 = arith.constant 0 : index
    %83 = vector.load %arg13[%c0_75, %c0_76, %c0_77] : memref<2x8x8xf32, #tpu.memory_space<vmem>>, vector<1x8x8xf32>
    %84 = vector.shape_cast %83 : vector<1x8x8xf32> to vector<8x8xf32>
    %cst_78 = arith.constant dense<0.000000e+00> : vector<8x32xf32>
    %85 = tpu.matmul %84, %76, %cst_78 {dimension_numbers = #tpu.dot_dimension_numbers<[1], [0], [0], [1], [0, 0, 1, 1], [], []>} : vector<8x8xf32>, vector<8x32xf32>, vector<8x32xf32> -> vector<8x32xf32>
    %86 = arith.addf %79, %85 : vector<8x32xf32>
    %c1_79 = arith.constant 1 : index
    %c0_80 = arith.constant 0 : index
    %c0_81 = arith.constant 0 : index
    %87 = vector.load %arg13[%c1_79, %c0_80, %c0_81] : memref<2x8x8xf32, #tpu.memory_space<vmem>>, vector<1x8x8xf32>
    %88 = vector.shape_cast %87 : vector<1x8x8xf32> to vector<8x8xf32>
    %cst_82 = arith.constant dense<0.000000e+00> : vector<8x32xf32>
    %89 = tpu.matmul %88, %82, %cst_82 {dimension_numbers = #tpu.dot_dimension_numbers<[1], [0], [0], [1], [0, 0, 1, 1], [], []>} : vector<8x8xf32>, vector<8x32xf32>, vector<8x32xf32> -> vector<8x32xf32>
    %90 = arith.addf %86, %89 : vector<8x32xf32>
    %c3_83 = arith.constant 3 : index
    %c0_84 = arith.constant 0 : index
    %91 = vector.load %arg9[%c3_83, %c0_84] : memref<5x64xf32, #tpu.memory_space<vmem>>, vector<1x32xf32>
    %92 = vector.broadcast %91 : vector<1x32xf32> to vector<8x32xf32>
    %93 = arith.addf %90, %92 : vector<8x32xf32>
    %cst_85 = arith.constant 0.000000e+00 : f32
    %94 = vector.broadcast %cst_85 : f32 to vector<8x32xf32>
    %95 = arith.maximumf %93, %94 : vector<8x32xf32>
    %c0_86 = arith.constant 0 : index
    %c0_87 = arith.constant 0 : index
    %96 = vector.load %arg12[%c0_86, %c0_87] : memref<32x64xf32, #tpu.memory_space<vmem>>, vector<32x64xf32>
    %cst_88 = arith.constant dense<0.000000e+00> : vector<8x64xf32>
    %97 = tpu.matmul %95, %96, %cst_88 {dimension_numbers = #tpu.dot_dimension_numbers<[1], [0], [0], [1], [0, 0, 1, 1], [], []>} : vector<8x32xf32>, vector<32x64xf32>, vector<8x64xf32> -> vector<8x64xf32>
    %c4_89 = arith.constant 4 : index
    %c0_90 = arith.constant 0 : index
    %98 = vector.load %arg9[%c4_89, %c0_90] : memref<5x64xf32, #tpu.memory_space<vmem>>, vector<1x64xf32>
    %99 = vector.broadcast %98 : vector<1x64xf32> to vector<8x64xf32>
    %100 = arith.addf %97, %99 : vector<8x64xf32>
    %101 = arith.addf %100, %58 : vector<8x64xf32>
    %c0_91 = arith.constant 0 : index
    %c0_92 = arith.constant 0 : index
    %102 = vector.load %arg14[%c0_91, %c0_92] : memref<5x64xf32, #tpu.memory_space<vmem>>, vector<1x64xf32>
    %103 = vector.broadcast %102 : vector<1x64xf32> to vector<8x64xf32>
    %104 = arith.mulf %101, %103 : vector<8x64xf32>
    %c1_93 = arith.constant 1 : index
    %c0_94 = arith.constant 0 : index
    %105 = vector.load %arg14[%c1_93, %c0_94] : memref<5x64xf32, #tpu.memory_space<vmem>>, vector<1x64xf32>
    %106 = vector.broadcast %105 : vector<1x64xf32> to vector<8x64xf32>
    %107 = arith.addf %104, %106 : vector<8x64xf32>
    %cst_95 = arith.constant 0.000000e+00 : f32
    %108 = vector.broadcast %cst_95 : f32 to vector<8x64xf32>
    %109 = arith.maximumf %107, %108 : vector<8x64xf32>
    %c0_96 = arith.constant 0 : index
    %c0_97 = arith.constant 0 : index
    %110 = vector.load %arg15[%c0_96, %c0_97] : memref<64x32xf32, #tpu.memory_space<vmem>>, vector<64x32xf32>
    %cst_98 = arith.constant dense<0.000000e+00> : vector<8x32xf32>
    %111 = tpu.matmul %109, %110, %cst_98 {dimension_numbers = #tpu.dot_dimension_numbers<[1], [0], [0], [1], [0, 0, 1, 1], [], []>} : vector<8x64xf32>, vector<64x32xf32>, vector<8x32xf32> -> vector<8x32xf32>
    %c2_99 = arith.constant 2 : index
    %c0_100 = arith.constant 0 : index
    %112 = vector.load %arg14[%c2_99, %c0_100] : memref<5x64xf32, #tpu.memory_space<vmem>>, vector<1x32xf32>
    %113 = vector.broadcast %112 : vector<1x32xf32> to vector<8x32xf32>
    %114 = arith.addf %111, %113 : vector<8x32xf32>
    %cst_101 = arith.constant 0.000000e+00 : f32
    %115 = vector.broadcast %cst_101 : f32 to vector<8x32xf32>
    %116 = arith.maximumf %114, %115 : vector<8x32xf32>
    %c0_102 = arith.constant 0 : index
    %c0_103 = arith.constant 0 : index
    %c0_104 = arith.constant 0 : index
    %117 = vector.load %arg16[%c0_102, %c0_103, %c0_104] : memref<3x32x32xf32, #tpu.memory_space<vmem>>, vector<1x32x32xf32>
    %118 = vector.shape_cast %117 : vector<1x32x32xf32> to vector<32x32xf32>
    %cst_105 = arith.constant dense<0.000000e+00> : vector<8x32xf32>
    %119 = tpu.matmul %116, %118, %cst_105 {dimension_numbers = #tpu.dot_dimension_numbers<[1], [0], [0], [1], [0, 0, 1, 1], [], []>} : vector<8x32xf32>, vector<32x32xf32>, vector<8x32xf32> -> vector<8x32xf32>
    %c1_106 = arith.constant 1 : index
    %c0_107 = arith.constant 0 : index
    %c0_108 = arith.constant 0 : index
    %120 = vector.load %arg16[%c1_106, %c0_107, %c0_108] : memref<3x32x32xf32, #tpu.memory_space<vmem>>, vector<1x32x32xf32>
    %121 = vector.shape_cast %120 : vector<1x32x32xf32> to vector<32x32xf32>
    %cst_109 = arith.constant dense<0.000000e+00> : vector<8x32xf32>
    %122 = tpu.matmul %116, %121, %cst_109 {dimension_numbers = #tpu.dot_dimension_numbers<[1], [0], [0], [1], [0, 0, 1, 1], [], []>} : vector<8x32xf32>, vector<32x32xf32>, vector<8x32xf32> -> vector<8x32xf32>
    %c2_110 = arith.constant 2 : index
    %c0_111 = arith.constant 0 : index
    %c0_112 = arith.constant 0 : index
    %123 = vector.load %arg16[%c2_110, %c0_111, %c0_112] : memref<3x32x32xf32, #tpu.memory_space<vmem>>, vector<1x32x32xf32>
    %124 = vector.shape_cast %123 : vector<1x32x32xf32> to vector<32x32xf32>
    %cst_113 = arith.constant dense<0.000000e+00> : vector<8x32xf32>
    %125 = tpu.matmul %116, %124, %cst_113 {dimension_numbers = #tpu.dot_dimension_numbers<[1], [0], [0], [1], [0, 0, 1, 1], [], []>} : vector<8x32xf32>, vector<32x32xf32>, vector<8x32xf32> -> vector<8x32xf32>
    %c0_114 = arith.constant 0 : index
    %c0_115 = arith.constant 0 : index
    %c0_116 = arith.constant 0 : index
    %126 = vector.load %arg13[%c0_114, %c0_115, %c0_116] : memref<2x8x8xf32, #tpu.memory_space<vmem>>, vector<1x8x8xf32>
    %127 = vector.shape_cast %126 : vector<1x8x8xf32> to vector<8x8xf32>
    %cst_117 = arith.constant dense<0.000000e+00> : vector<8x32xf32>
    %128 = tpu.matmul %127, %119, %cst_117 {dimension_numbers = #tpu.dot_dimension_numbers<[1], [0], [0], [1], [0, 0, 1, 1], [], []>} : vector<8x8xf32>, vector<8x32xf32>, vector<8x32xf32> -> vector<8x32xf32>
    %129 = arith.addf %122, %128 : vector<8x32xf32>
    %c1_118 = arith.constant 1 : index
    %c0_119 = arith.constant 0 : index
    %c0_120 = arith.constant 0 : index
    %130 = vector.load %arg13[%c1_118, %c0_119, %c0_120] : memref<2x8x8xf32, #tpu.memory_space<vmem>>, vector<1x8x8xf32>
    %131 = vector.shape_cast %130 : vector<1x8x8xf32> to vector<8x8xf32>
    %cst_121 = arith.constant dense<0.000000e+00> : vector<8x32xf32>
    %132 = tpu.matmul %131, %125, %cst_121 {dimension_numbers = #tpu.dot_dimension_numbers<[1], [0], [0], [1], [0, 0, 1, 1], [], []>} : vector<8x8xf32>, vector<8x32xf32>, vector<8x32xf32> -> vector<8x32xf32>
    %133 = arith.addf %129, %132 : vector<8x32xf32>
    %c3_122 = arith.constant 3 : index
    %c0_123 = arith.constant 0 : index
    %134 = vector.load %arg14[%c3_122, %c0_123] : memref<5x64xf32, #tpu.memory_space<vmem>>, vector<1x32xf32>
    %135 = vector.broadcast %134 : vector<1x32xf32> to vector<8x32xf32>
    %136 = arith.addf %133, %135 : vector<8x32xf32>
    %cst_124 = arith.constant 0.000000e+00 : f32
    %137 = vector.broadcast %cst_124 : f32 to vector<8x32xf32>
    %138 = arith.maximumf %136, %137 : vector<8x32xf32>
    %c0_125 = arith.constant 0 : index
    %c0_126 = arith.constant 0 : index
    %139 = vector.load %arg17[%c0_125, %c0_126] : memref<32x64xf32, #tpu.memory_space<vmem>>, vector<32x64xf32>
    %cst_127 = arith.constant dense<0.000000e+00> : vector<8x64xf32>
    %140 = tpu.matmul %138, %139, %cst_127 {dimension_numbers = #tpu.dot_dimension_numbers<[1], [0], [0], [1], [0, 0, 1, 1], [], []>} : vector<8x32xf32>, vector<32x64xf32>, vector<8x64xf32> -> vector<8x64xf32>
    %c4_128 = arith.constant 4 : index
    %c0_129 = arith.constant 0 : index
    %141 = vector.load %arg14[%c4_128, %c0_129] : memref<5x64xf32, #tpu.memory_space<vmem>>, vector<1x64xf32>
    %142 = vector.broadcast %141 : vector<1x64xf32> to vector<8x64xf32>
    %143 = arith.addf %140, %142 : vector<8x64xf32>
    %144 = arith.addf %143, %101 : vector<8x64xf32>
    %c0_130 = arith.constant 0 : index
    %c0_131 = arith.constant 0 : index
    %c0_132 = arith.constant 0 : index
    %145 = vector.load %arg18[%c0_130, %c0_131, %c0_132] : memref<2x64x32xf32, #tpu.memory_space<vmem>>, vector<1x64x32xf32>
    %146 = vector.shape_cast %145 : vector<1x64x32xf32> to vector<64x32xf32>
    %cst_133 = arith.constant dense<0.000000e+00> : vector<8x32xf32>
    %147 = tpu.matmul %101, %146, %cst_133 {dimension_numbers = #tpu.dot_dimension_numbers<[1], [0], [0], [1], [0, 0, 1, 1], [], []>} : vector<8x64xf32>, vector<64x32xf32>, vector<8x32xf32> -> vector<8x32xf32>
    %c1_134 = arith.constant 1 : index
    %c0_135 = arith.constant 0 : index
    %c0_136 = arith.constant 0 : index
    %148 = vector.load %arg18[%c1_134, %c0_135, %c0_136] : memref<2x64x32xf32, #tpu.memory_space<vmem>>, vector<1x64x32xf32>
    %149 = vector.shape_cast %148 : vector<1x64x32xf32> to vector<64x32xf32>
    %cst_137 = arith.constant dense<0.000000e+00> : vector<8x32xf32>
    %150 = tpu.matmul %101, %149, %cst_137 {dimension_numbers = #tpu.dot_dimension_numbers<[1], [0], [0], [1], [0, 0, 1, 1], [], []>} : vector<8x64xf32>, vector<64x32xf32>, vector<8x32xf32> -> vector<8x32xf32>
    %151 = arith.maximumf %147, %150 : vector<8x32xf32>
    %c0_138 = arith.constant 0 : index
    %c0_139 = arith.constant 0 : index
    %c0_140 = arith.constant 0 : index
    %152 = vector.load %arg19[%c0_138, %c0_139, %c0_140] : memref<2x4x8xf32, #tpu.memory_space<vmem>>, vector<1x4x8xf32>
    %153 = vector.shape_cast %152 : vector<1x4x8xf32> to vector<4x8xf32>
    %cst_141 = arith.constant dense<0.000000e+00> : vector<4x32xf32>
    %154 = tpu.matmul %153, %151, %cst_141 {dimension_numbers = #tpu.dot_dimension_numbers<[1], [0], [0], [1], [0, 0, 1, 1], [], []>} : vector<4x8xf32>, vector<8x32xf32>, vector<4x32xf32> -> vector<4x32xf32>
    %c1_142 = arith.constant 1 : index
    %c0_143 = arith.constant 0 : index
    %c0_144 = arith.constant 0 : index
    %155 = vector.load %arg19[%c1_142, %c0_143, %c0_144] : memref<2x4x8xf32, #tpu.memory_space<vmem>>, vector<1x4x8xf32>
    %156 = vector.shape_cast %155 : vector<1x4x8xf32> to vector<4x8xf32>
    %cst_145 = arith.constant dense<0.000000e+00> : vector<4x32xf32>
    %157 = tpu.matmul %156, %151, %cst_145 {dimension_numbers = #tpu.dot_dimension_numbers<[1], [0], [0], [1], [0, 0, 1, 1], [], []>} : vector<4x8xf32>, vector<8x32xf32>, vector<4x32xf32> -> vector<4x32xf32>
    %158 = arith.maximumf %154, %157 : vector<4x32xf32>
    %c0_146 = arith.constant 0 : index
    %c0_147 = arith.constant 0 : index
    %159 = vector.load %arg20[%c0_146, %c0_147] : memref<5x32xf32, #tpu.memory_space<vmem>>, vector<1x32xf32>
    %160 = vector.broadcast %159 : vector<1x32xf32> to vector<4x32xf32>
    %161 = arith.mulf %158, %160 : vector<4x32xf32>
    %c1_148 = arith.constant 1 : index
    %c0_149 = arith.constant 0 : index
    %162 = vector.load %arg20[%c1_148, %c0_149] : memref<5x32xf32, #tpu.memory_space<vmem>>, vector<1x32xf32>
    %163 = vector.broadcast %162 : vector<1x32xf32> to vector<4x32xf32>
    %164 = arith.addf %161, %163 : vector<4x32xf32>
    %cst_150 = arith.constant 0.000000e+00 : f32
    %165 = vector.broadcast %cst_150 : f32 to vector<4x32xf32>
    %166 = arith.maximumf %164, %165 : vector<4x32xf32>
    %c0_151 = arith.constant 0 : index
    %c0_152 = arith.constant 0 : index
    %167 = vector.load %arg21[%c0_151, %c0_152] : memref<32x16xf32, #tpu.memory_space<vmem>>, vector<32x16xf32>
    %cst_153 = arith.constant dense<0.000000e+00> : vector<4x16xf32>
    %168 = tpu.matmul %166, %167, %cst_153 {dimension_numbers = #tpu.dot_dimension_numbers<[1], [0], [0], [1], [0, 0, 1, 1], [], []>} : vector<4x32xf32>, vector<32x16xf32>, vector<4x16xf32> -> vector<4x16xf32>
    %c2_154 = arith.constant 2 : index
    %c0_155 = arith.constant 0 : index
    %169 = vector.load %arg20[%c2_154, %c0_155] : memref<5x32xf32, #tpu.memory_space<vmem>>, vector<1x16xf32>
    %170 = vector.broadcast %169 : vector<1x16xf32> to vector<4x16xf32>
    %171 = arith.addf %168, %170 : vector<4x16xf32>
    %cst_156 = arith.constant 0.000000e+00 : f32
    %172 = vector.broadcast %cst_156 : f32 to vector<4x16xf32>
    %173 = arith.maximumf %171, %172 : vector<4x16xf32>
    %c0_157 = arith.constant 0 : index
    %c0_158 = arith.constant 0 : index
    %c0_159 = arith.constant 0 : index
    %174 = vector.load %arg22[%c0_157, %c0_158, %c0_159] : memref<3x16x16xf32, #tpu.memory_space<vmem>>, vector<1x16x16xf32>
    %175 = vector.shape_cast %174 : vector<1x16x16xf32> to vector<16x16xf32>
    %cst_160 = arith.constant dense<0.000000e+00> : vector<4x16xf32>
    %176 = tpu.matmul %173, %175, %cst_160 {dimension_numbers = #tpu.dot_dimension_numbers<[1], [0], [0], [1], [0, 0, 1, 1], [], []>} : vector<4x16xf32>, vector<16x16xf32>, vector<4x16xf32> -> vector<4x16xf32>
    %c1_161 = arith.constant 1 : index
    %c0_162 = arith.constant 0 : index
    %c0_163 = arith.constant 0 : index
    %177 = vector.load %arg22[%c1_161, %c0_162, %c0_163] : memref<3x16x16xf32, #tpu.memory_space<vmem>>, vector<1x16x16xf32>
    %178 = vector.shape_cast %177 : vector<1x16x16xf32> to vector<16x16xf32>
    %cst_164 = arith.constant dense<0.000000e+00> : vector<4x16xf32>
    %179 = tpu.matmul %173, %178, %cst_164 {dimension_numbers = #tpu.dot_dimension_numbers<[1], [0], [0], [1], [0, 0, 1, 1], [], []>} : vector<4x16xf32>, vector<16x16xf32>, vector<4x16xf32> -> vector<4x16xf32>
    %c2_165 = arith.constant 2 : index
    %c0_166 = arith.constant 0 : index
    %c0_167 = arith.constant 0 : index
    %180 = vector.load %arg22[%c2_165, %c0_166, %c0_167] : memref<3x16x16xf32, #tpu.memory_space<vmem>>, vector<1x16x16xf32>
    %181 = vector.shape_cast %180 : vector<1x16x16xf32> to vector<16x16xf32>
    %cst_168 = arith.constant dense<0.000000e+00> : vector<4x16xf32>
    %182 = tpu.matmul %173, %181, %cst_168 {dimension_numbers = #tpu.dot_dimension_numbers<[1], [0], [0], [1], [0, 0, 1, 1], [], []>} : vector<4x16xf32>, vector<16x16xf32>, vector<4x16xf32> -> vector<4x16xf32>
    %c0_169 = arith.constant 0 : index
    %c0_170 = arith.constant 0 : index
    %c0_171 = arith.constant 0 : index
    %183 = vector.load %arg24[%c0_169, %c0_170, %c0_171] : memref<2x4x4xf32, #tpu.memory_space<vmem>>, vector<1x4x4xf32>
    %184 = vector.shape_cast %183 : vector<1x4x4xf32> to vector<4x4xf32>
    %cst_172 = arith.constant dense<0.000000e+00> : vector<4x16xf32>
    %185 = tpu.matmul %184, %176, %cst_172 {dimension_numbers = #tpu.dot_dimension_numbers<[1], [0], [0], [1], [0, 0, 1, 1], [], []>} : vector<4x4xf32>, vector<4x16xf32>, vector<4x16xf32> -> vector<4x16xf32>
    %186 = arith.addf %179, %185 : vector<4x16xf32>
    %c1_173 = arith.constant 1 : index
    %c0_174 = arith.constant 0 : index
    %c0_175 = arith.constant 0 : index
    %187 = vector.load %arg24[%c1_173, %c0_174, %c0_175] : memref<2x4x4xf32, #tpu.memory_space<vmem>>, vector<1x4x4xf32>
    %188 = vector.shape_cast %187 : vector<1x4x4xf32> to vector<4x4xf32>
    %cst_176 = arith.constant dense<0.000000e+00> : vector<4x16xf32>
    %189 = tpu.matmul %188, %182, %cst_176 {dimension_numbers = #tpu.dot_dimension_numbers<[1], [0], [0], [1], [0, 0, 1, 1], [], []>} : vector<4x4xf32>, vector<4x16xf32>, vector<4x16xf32> -> vector<4x16xf32>
    %190 = arith.addf %186, %189 : vector<4x16xf32>
    %c3_177 = arith.constant 3 : index
    %c0_178 = arith.constant 0 : index
    %191 = vector.load %arg20[%c3_177, %c0_178] : memref<5x32xf32, #tpu.memory_space<vmem>>, vector<1x16xf32>
    %192 = vector.broadcast %191 : vector<1x16xf32> to vector<4x16xf32>
    %193 = arith.addf %190, %192 : vector<4x16xf32>
    %cst_179 = arith.constant 0.000000e+00 : f32
    %194 = vector.broadcast %cst_179 : f32 to vector<4x16xf32>
    %195 = arith.maximumf %193, %194 : vector<4x16xf32>
    %c0_180 = arith.constant 0 : index
    %c0_181 = arith.constant 0 : index
    %196 = vector.load %arg23[%c0_180, %c0_181] : memref<16x32xf32, #tpu.memory_space<vmem>>, vector<16x32xf32>
    %cst_182 = arith.constant dense<0.000000e+00> : vector<4x32xf32>
    %197 = tpu.matmul %195, %196, %cst_182 {dimension_numbers = #tpu.dot_dimension_numbers<[1], [0], [0], [1], [0, 0, 1, 1], [], []>} : vector<4x16xf32>, vector<16x32xf32>, vector<4x32xf32> -> vector<4x32xf32>
    %c4_183 = arith.constant 4 : index
    %c0_184 = arith.constant 0 : index
    %198 = vector.load %arg20[%c4_183, %c0_184] : memref<5x32xf32, #tpu.memory_space<vmem>>, vector<1x32xf32>
    %199 = vector.broadcast %198 : vector<1x32xf32> to vector<4x32xf32>
    %200 = arith.addf %197, %199 : vector<4x32xf32>
    %201 = arith.addf %200, %158 : vector<4x32xf32>
    %c0_185 = arith.constant 0 : index
    %c0_186 = arith.constant 0 : index
    %202 = vector.load %arg25[%c0_185, %c0_186] : memref<5x32xf32, #tpu.memory_space<vmem>>, vector<1x32xf32>
    %203 = vector.broadcast %202 : vector<1x32xf32> to vector<4x32xf32>
    %204 = arith.mulf %201, %203 : vector<4x32xf32>
    %c1_187 = arith.constant 1 : index
    %c0_188 = arith.constant 0 : index
    %205 = vector.load %arg25[%c1_187, %c0_188] : memref<5x32xf32, #tpu.memory_space<vmem>>, vector<1x32xf32>
    %206 = vector.broadcast %205 : vector<1x32xf32> to vector<4x32xf32>
    %207 = arith.addf %204, %206 : vector<4x32xf32>
    %cst_189 = arith.constant 0.000000e+00 : f32
    %208 = vector.broadcast %cst_189 : f32 to vector<4x32xf32>
    %209 = arith.maximumf %207, %208 : vector<4x32xf32>
    %c0_190 = arith.constant 0 : index
    %c0_191 = arith.constant 0 : index
    %210 = vector.load %arg26[%c0_190, %c0_191] : memref<32x16xf32, #tpu.memory_space<vmem>>, vector<32x16xf32>
    %cst_192 = arith.constant dense<0.000000e+00> : vector<4x16xf32>
    %211 = tpu.matmul %209, %210, %cst_192 {dimension_numbers = #tpu.dot_dimension_numbers<[1], [0], [0], [1], [0, 0, 1, 1], [], []>} : vector<4x32xf32>, vector<32x16xf32>, vector<4x16xf32> -> vector<4x16xf32>
    %c2_193 = arith.constant 2 : index
    %c0_194 = arith.constant 0 : index
    %212 = vector.load %arg25[%c2_193, %c0_194] : memref<5x32xf32, #tpu.memory_space<vmem>>, vector<1x16xf32>
    %213 = vector.broadcast %212 : vector<1x16xf32> to vector<4x16xf32>
    %214 = arith.addf %211, %213 : vector<4x16xf32>
    %cst_195 = arith.constant 0.000000e+00 : f32
    %215 = vector.broadcast %cst_195 : f32 to vector<4x16xf32>
    %216 = arith.maximumf %214, %215 : vector<4x16xf32>
    %c0_196 = arith.constant 0 : index
    %c0_197 = arith.constant 0 : index
    %c0_198 = arith.constant 0 : index
    %217 = vector.load %arg27[%c0_196, %c0_197, %c0_198] : memref<3x16x16xf32, #tpu.memory_space<vmem>>, vector<1x16x16xf32>
    %218 = vector.shape_cast %217 : vector<1x16x16xf32> to vector<16x16xf32>
    %cst_199 = arith.constant dense<0.000000e+00> : vector<4x16xf32>
    %219 = tpu.matmul %216, %218, %cst_199 {dimension_numbers = #tpu.dot_dimension_numbers<[1], [0], [0], [1], [0, 0, 1, 1], [], []>} : vector<4x16xf32>, vector<16x16xf32>, vector<4x16xf32> -> vector<4x16xf32>
    %c1_200 = arith.constant 1 : index
    %c0_201 = arith.constant 0 : index
    %c0_202 = arith.constant 0 : index
    %220 = vector.load %arg27[%c1_200, %c0_201, %c0_202] : memref<3x16x16xf32, #tpu.memory_space<vmem>>, vector<1x16x16xf32>
    %221 = vector.shape_cast %220 : vector<1x16x16xf32> to vector<16x16xf32>
    %cst_203 = arith.constant dense<0.000000e+00> : vector<4x16xf32>
    %222 = tpu.matmul %216, %221, %cst_203 {dimension_numbers = #tpu.dot_dimension_numbers<[1], [0], [0], [1], [0, 0, 1, 1], [], []>} : vector<4x16xf32>, vector<16x16xf32>, vector<4x16xf32> -> vector<4x16xf32>
    %c2_204 = arith.constant 2 : index
    %c0_205 = arith.constant 0 : index
    %c0_206 = arith.constant 0 : index
    %223 = vector.load %arg27[%c2_204, %c0_205, %c0_206] : memref<3x16x16xf32, #tpu.memory_space<vmem>>, vector<1x16x16xf32>
    %224 = vector.shape_cast %223 : vector<1x16x16xf32> to vector<16x16xf32>
    %cst_207 = arith.constant dense<0.000000e+00> : vector<4x16xf32>
    %225 = tpu.matmul %216, %224, %cst_207 {dimension_numbers = #tpu.dot_dimension_numbers<[1], [0], [0], [1], [0, 0, 1, 1], [], []>} : vector<4x16xf32>, vector<16x16xf32>, vector<4x16xf32> -> vector<4x16xf32>
    %c0_208 = arith.constant 0 : index
    %c0_209 = arith.constant 0 : index
    %c0_210 = arith.constant 0 : index
    %226 = vector.load %arg24[%c0_208, %c0_209, %c0_210] : memref<2x4x4xf32, #tpu.memory_space<vmem>>, vector<1x4x4xf32>
    %227 = vector.shape_cast %226 : vector<1x4x4xf32> to vector<4x4xf32>
    %cst_211 = arith.constant dense<0.000000e+00> : vector<4x16xf32>
    %228 = tpu.matmul %227, %219, %cst_211 {dimension_numbers = #tpu.dot_dimension_numbers<[1], [0], [0], [1], [0, 0, 1, 1], [], []>} : vector<4x4xf32>, vector<4x16xf32>, vector<4x16xf32> -> vector<4x16xf32>
    %229 = arith.addf %222, %228 : vector<4x16xf32>
    %c1_212 = arith.constant 1 : index
    %c0_213 = arith.constant 0 : index
    %c0_214 = arith.constant 0 : index
    %230 = vector.load %arg24[%c1_212, %c0_213, %c0_214] : memref<2x4x4xf32, #tpu.memory_space<vmem>>, vector<1x4x4xf32>
    %231 = vector.shape_cast %230 : vector<1x4x4xf32> to vector<4x4xf32>
    %cst_215 = arith.constant dense<0.000000e+00> : vector<4x16xf32>
    %232 = tpu.matmul %231, %225, %cst_215 {dimension_numbers = #tpu.dot_dimension_numbers<[1], [0], [0], [1], [0, 0, 1, 1], [], []>} : vector<4x4xf32>, vector<4x16xf32>, vector<4x16xf32> -> vector<4x16xf32>
    %233 = arith.addf %229, %232 : vector<4x16xf32>
    %c3_216 = arith.constant 3 : index
    %c0_217 = arith.constant 0 : index
    %234 = vector.load %arg25[%c3_216, %c0_217] : memref<5x32xf32, #tpu.memory_space<vmem>>, vector<1x16xf32>
    %235 = vector.broadcast %234 : vector<1x16xf32> to vector<4x16xf32>
    %236 = arith.addf %233, %235 : vector<4x16xf32>
    %cst_218 = arith.constant 0.000000e+00 : f32
    %237 = vector.broadcast %cst_218 : f32 to vector<4x16xf32>
    %238 = arith.maximumf %236, %237 : vector<4x16xf32>
    %c0_219 = arith.constant 0 : index
    %c0_220 = arith.constant 0 : index
    %239 = vector.load %arg28[%c0_219, %c0_220] : memref<16x32xf32, #tpu.memory_space<vmem>>, vector<16x32xf32>
    %cst_221 = arith.constant dense<0.000000e+00> : vector<4x32xf32>
    %240 = tpu.matmul %238, %239, %cst_221 {dimension_numbers = #tpu.dot_dimension_numbers<[1], [0], [0], [1], [0, 0, 1, 1], [], []>} : vector<4x16xf32>, vector<16x32xf32>, vector<4x32xf32> -> vector<4x32xf32>
    %c4_222 = arith.constant 4 : index
    %c0_223 = arith.constant 0 : index
    %241 = vector.load %arg25[%c4_222, %c0_223] : memref<5x32xf32, #tpu.memory_space<vmem>>, vector<1x32xf32>
    %242 = vector.broadcast %241 : vector<1x32xf32> to vector<4x32xf32>
    %243 = arith.addf %240, %242 : vector<4x32xf32>
    %244 = arith.addf %243, %201 : vector<4x32xf32>
    %c0_224 = arith.constant 0 : index
    %c0_225 = arith.constant 0 : index
    %245 = vector.load %arg29[%c0_224, %c0_225] : memref<5x32xf32, #tpu.memory_space<vmem>>, vector<1x32xf32>
    %246 = vector.broadcast %245 : vector<1x32xf32> to vector<4x32xf32>
    %247 = arith.mulf %244, %246 : vector<4x32xf32>
    %c1_226 = arith.constant 1 : index
    %c0_227 = arith.constant 0 : index
    %248 = vector.load %arg29[%c1_226, %c0_227] : memref<5x32xf32, #tpu.memory_space<vmem>>, vector<1x32xf32>
    %249 = vector.broadcast %248 : vector<1x32xf32> to vector<4x32xf32>
    %250 = arith.addf %247, %249 : vector<4x32xf32>
    %cst_228 = arith.constant 0.000000e+00 : f32
    %251 = vector.broadcast %cst_228 : f32 to vector<4x32xf32>
    %252 = arith.maximumf %250, %251 : vector<4x32xf32>
    %c0_229 = arith.constant 0 : index
    %c0_230 = arith.constant 0 : index
    %253 = vector.load %arg30[%c0_229, %c0_230] : memref<32x16xf32, #tpu.memory_space<vmem>>, vector<32x16xf32>
    %cst_231 = arith.constant dense<0.000000e+00> : vector<4x16xf32>
    %254 = tpu.matmul %252, %253, %cst_231 {dimension_numbers = #tpu.dot_dimension_numbers<[1], [0], [0], [1], [0, 0, 1, 1], [], []>} : vector<4x32xf32>, vector<32x16xf32>, vector<4x16xf32> -> vector<4x16xf32>
    %c2_232 = arith.constant 2 : index
    %c0_233 = arith.constant 0 : index
    %255 = vector.load %arg29[%c2_232, %c0_233] : memref<5x32xf32, #tpu.memory_space<vmem>>, vector<1x16xf32>
    %256 = vector.broadcast %255 : vector<1x16xf32> to vector<4x16xf32>
    %257 = arith.addf %254, %256 : vector<4x16xf32>
    %cst_234 = arith.constant 0.000000e+00 : f32
    %258 = vector.broadcast %cst_234 : f32 to vector<4x16xf32>
    %259 = arith.maximumf %257, %258 : vector<4x16xf32>
    %c0_235 = arith.constant 0 : index
    %c0_236 = arith.constant 0 : index
    %c0_237 = arith.constant 0 : index
    %260 = vector.load %arg31[%c0_235, %c0_236, %c0_237] : memref<3x16x16xf32, #tpu.memory_space<vmem>>, vector<1x16x16xf32>
    %261 = vector.shape_cast %260 : vector<1x16x16xf32> to vector<16x16xf32>
    %cst_238 = arith.constant dense<0.000000e+00> : vector<4x16xf32>
    %262 = tpu.matmul %259, %261, %cst_238 {dimension_numbers = #tpu.dot_dimension_numbers<[1], [0], [0], [1], [0, 0, 1, 1], [], []>} : vector<4x16xf32>, vector<16x16xf32>, vector<4x16xf32> -> vector<4x16xf32>
    %c1_239 = arith.constant 1 : index
    %c0_240 = arith.constant 0 : index
    %c0_241 = arith.constant 0 : index
    %263 = vector.load %arg31[%c1_239, %c0_240, %c0_241] : memref<3x16x16xf32, #tpu.memory_space<vmem>>, vector<1x16x16xf32>
    %264 = vector.shape_cast %263 : vector<1x16x16xf32> to vector<16x16xf32>
    %cst_242 = arith.constant dense<0.000000e+00> : vector<4x16xf32>
    %265 = tpu.matmul %259, %264, %cst_242 {dimension_numbers = #tpu.dot_dimension_numbers<[1], [0], [0], [1], [0, 0, 1, 1], [], []>} : vector<4x16xf32>, vector<16x16xf32>, vector<4x16xf32> -> vector<4x16xf32>
    %c2_243 = arith.constant 2 : index
    %c0_244 = arith.constant 0 : index
    %c0_245 = arith.constant 0 : index
    %266 = vector.load %arg31[%c2_243, %c0_244, %c0_245] : memref<3x16x16xf32, #tpu.memory_space<vmem>>, vector<1x16x16xf32>
    %267 = vector.shape_cast %266 : vector<1x16x16xf32> to vector<16x16xf32>
    %cst_246 = arith.constant dense<0.000000e+00> : vector<4x16xf32>
    %268 = tpu.matmul %259, %267, %cst_246 {dimension_numbers = #tpu.dot_dimension_numbers<[1], [0], [0], [1], [0, 0, 1, 1], [], []>} : vector<4x16xf32>, vector<16x16xf32>, vector<4x16xf32> -> vector<4x16xf32>
    %c0_247 = arith.constant 0 : index
    %c0_248 = arith.constant 0 : index
    %c0_249 = arith.constant 0 : index
    %269 = vector.load %arg24[%c0_247, %c0_248, %c0_249] : memref<2x4x4xf32, #tpu.memory_space<vmem>>, vector<1x4x4xf32>
    %270 = vector.shape_cast %269 : vector<1x4x4xf32> to vector<4x4xf32>
    %cst_250 = arith.constant dense<0.000000e+00> : vector<4x16xf32>
    %271 = tpu.matmul %270, %262, %cst_250 {dimension_numbers = #tpu.dot_dimension_numbers<[1], [0], [0], [1], [0, 0, 1, 1], [], []>} : vector<4x4xf32>, vector<4x16xf32>, vector<4x16xf32> -> vector<4x16xf32>
    %272 = arith.addf %265, %271 : vector<4x16xf32>
    %c1_251 = arith.constant 1 : index
    %c0_252 = arith.constant 0 : index
    %c0_253 = arith.constant 0 : index
    %273 = vector.load %arg24[%c1_251, %c0_252, %c0_253] : memref<2x4x4xf32, #tpu.memory_space<vmem>>, vector<1x4x4xf32>
    %274 = vector.shape_cast %273 : vector<1x4x4xf32> to vector<4x4xf32>
    %cst_254 = arith.constant dense<0.000000e+00> : vector<4x16xf32>
    %275 = tpu.matmul %274, %268, %cst_254 {dimension_numbers = #tpu.dot_dimension_numbers<[1], [0], [0], [1], [0, 0, 1, 1], [], []>} : vector<4x4xf32>, vector<4x16xf32>, vector<4x16xf32> -> vector<4x16xf32>
    %276 = arith.addf %272, %275 : vector<4x16xf32>
    %c3_255 = arith.constant 3 : index
    %c0_256 = arith.constant 0 : index
    %277 = vector.load %arg29[%c3_255, %c0_256] : memref<5x32xf32, #tpu.memory_space<vmem>>, vector<1x16xf32>
    %278 = vector.broadcast %277 : vector<1x16xf32> to vector<4x16xf32>
    %279 = arith.addf %276, %278 : vector<4x16xf32>
    %cst_257 = arith.constant 0.000000e+00 : f32
    %280 = vector.broadcast %cst_257 : f32 to vector<4x16xf32>
    %281 = arith.maximumf %279, %280 : vector<4x16xf32>
    %c0_258 = arith.constant 0 : index
    %c0_259 = arith.constant 0 : index
    %282 = vector.load %arg32[%c0_258, %c0_259] : memref<16x32xf32, #tpu.memory_space<vmem>>, vector<16x32xf32>
    %cst_260 = arith.constant dense<0.000000e+00> : vector<4x32xf32>
    %283 = tpu.matmul %281, %282, %cst_260 {dimension_numbers = #tpu.dot_dimension_numbers<[1], [0], [0], [1], [0, 0, 1, 1], [], []>} : vector<4x16xf32>, vector<16x32xf32>, vector<4x32xf32> -> vector<4x32xf32>
    %c4_261 = arith.constant 4 : index
    %c0_262 = arith.constant 0 : index
    %284 = vector.load %arg29[%c4_261, %c0_262] : memref<5x32xf32, #tpu.memory_space<vmem>>, vector<1x32xf32>
    %285 = vector.broadcast %284 : vector<1x32xf32> to vector<4x32xf32>
    %286 = arith.addf %283, %285 : vector<4x32xf32>
    %287 = arith.addf %286, %244 : vector<4x32xf32>
    %c0_263 = arith.constant 0 : index
    %c0_264 = arith.constant 0 : index
    %288 = vector.load %arg34[%c0_263, %c0_264] : memref<1x64xf32, #tpu.memory_space<vmem>>, vector<1x64xf32>
    %c0_265 = arith.constant 0 : index
    %c0_266 = arith.constant 0 : index
    %c0_267 = arith.constant 0 : index
    %289 = vector.load %arg33[%c0_265, %c0_266, %c0_267] : memref<4x32x64xf32, #tpu.memory_space<vmem>>, vector<1x32x64xf32>
    %290 = vector.shape_cast %289 : vector<1x32x64xf32> to vector<32x64xf32>
    %cst_268 = arith.constant dense<0.000000e+00> : vector<4x64xf32>
    %291 = tpu.matmul %287, %290, %cst_268 {dimension_numbers = #tpu.dot_dimension_numbers<[1], [0], [0], [1], [0, 0, 1, 1], [], []>} : vector<4x32xf32>, vector<32x64xf32>, vector<4x64xf32> -> vector<4x64xf32>
    %c1_269 = arith.constant 1 : index
    %c0_270 = arith.constant 0 : index
    %c0_271 = arith.constant 0 : index
    %292 = vector.load %arg33[%c1_269, %c0_270, %c0_271] : memref<4x32x64xf32, #tpu.memory_space<vmem>>, vector<1x32x64xf32>
    %293 = vector.shape_cast %292 : vector<1x32x64xf32> to vector<32x64xf32>
    %cst_272 = arith.constant dense<0.000000e+00> : vector<4x64xf32>
    %294 = tpu.matmul %287, %293, %cst_272 {dimension_numbers = #tpu.dot_dimension_numbers<[1], [0], [0], [1], [0, 0, 1, 1], [], []>} : vector<4x32xf32>, vector<32x64xf32>, vector<4x64xf32> -> vector<4x64xf32>
    %c2_273 = arith.constant 2 : index
    %c0_274 = arith.constant 0 : index
    %c0_275 = arith.constant 0 : index
    %295 = vector.load %arg33[%c2_273, %c0_274, %c0_275] : memref<4x32x64xf32, #tpu.memory_space<vmem>>, vector<1x32x64xf32>
    %296 = vector.shape_cast %295 : vector<1x32x64xf32> to vector<32x64xf32>
    %cst_276 = arith.constant dense<0.000000e+00> : vector<4x64xf32>
    %297 = tpu.matmul %287, %296, %cst_276 {dimension_numbers = #tpu.dot_dimension_numbers<[1], [0], [0], [1], [0, 0, 1, 1], [], []>} : vector<4x32xf32>, vector<32x64xf32>, vector<4x64xf32> -> vector<4x64xf32>
    %c3_277 = arith.constant 3 : index
    %c0_278 = arith.constant 0 : index
    %c0_279 = arith.constant 0 : index
    %298 = vector.load %arg33[%c3_277, %c0_278, %c0_279] : memref<4x32x64xf32, #tpu.memory_space<vmem>>, vector<1x32x64xf32>
    %299 = vector.shape_cast %298 : vector<1x32x64xf32> to vector<32x64xf32>
    %cst_280 = arith.constant dense<0.000000e+00> : vector<4x64xf32>
    %300 = tpu.matmul %287, %299, %cst_280 {dimension_numbers = #tpu.dot_dimension_numbers<[1], [0], [0], [1], [0, 0, 1, 1], [], []>} : vector<4x32xf32>, vector<32x64xf32>, vector<4x64xf32> -> vector<4x64xf32>
    %c0_281 = arith.constant 0 : index
    %c0_282 = arith.constant 0 : index
    %c0_283 = arith.constant 0 : index
    %301 = vector.load %arg24[%c0_281, %c0_282, %c0_283] : memref<2x4x4xf32, #tpu.memory_space<vmem>>, vector<1x4x4xf32>
    %302 = vector.shape_cast %301 : vector<1x4x4xf32> to vector<4x4xf32>
    %cst_284 = arith.constant dense<0.000000e+00> : vector<4x64xf32>
    %303 = tpu.matmul %302, %300, %cst_284 {dimension_numbers = #tpu.dot_dimension_numbers<[1], [0], [0], [1], [0, 0, 1, 1], [], []>} : vector<4x4xf32>, vector<4x64xf32>, vector<4x64xf32> -> vector<4x64xf32>
    %304 = arith.addf %294, %303 : vector<4x64xf32>
    %305 = vector.broadcast %288 : vector<1x64xf32> to vector<4x64xf32>
    %306 = arith.addf %304, %305 : vector<4x64xf32>
    %cst_285 = arith.constant 0.000000e+00 : f32
    %307 = vector.broadcast %cst_285 : f32 to vector<4x64xf32>
    %308 = arith.maximumf %306, %307 : vector<4x64xf32>
    %c1_286 = arith.constant 1 : index
    %c0_287 = arith.constant 0 : index
    %c0_288 = arith.constant 0 : index
    %309 = vector.load %arg24[%c1_286, %c0_287, %c0_288] : memref<2x4x4xf32, #tpu.memory_space<vmem>>, vector<1x4x4xf32>
    %310 = vector.shape_cast %309 : vector<1x4x4xf32> to vector<4x4xf32>
    %cst_289 = arith.constant dense<0.000000e+00> : vector<4x64xf32>
    %311 = tpu.matmul %310, %291, %cst_289 {dimension_numbers = #tpu.dot_dimension_numbers<[1], [0], [0], [1], [0, 0, 1, 1], [], []>} : vector<4x4xf32>, vector<4x64xf32>, vector<4x64xf32> -> vector<4x64xf32>
    %312 = arith.addf %297, %311 : vector<4x64xf32>
    %313 = vector.broadcast %288 : vector<1x64xf32> to vector<4x64xf32>
    %314 = arith.addf %312, %313 : vector<4x64xf32>
    %cst_290 = arith.constant 0.000000e+00 : f32
    %315 = vector.broadcast %cst_290 : f32 to vector<4x64xf32>
    %316 = arith.maximumf %314, %315 : vector<4x64xf32>
    %c0_291 = arith.constant 0 : index
    %c0_292 = arith.constant 0 : index
    %c0_293 = arith.constant 0 : index
    %317 = vector.load %arg35[%c0_291, %c0_292, %c0_293] : memref<2x8x4xf32, #tpu.memory_space<vmem>>, vector<1x8x4xf32>
    %318 = vector.shape_cast %317 : vector<1x8x4xf32> to vector<8x4xf32>
    %cst_294 = arith.constant dense<0.000000e+00> : vector<8x64xf32>
    %319 = tpu.matmul %318, %308, %cst_294 {dimension_numbers = #tpu.dot_dimension_numbers<[1], [0], [0], [1], [0, 0, 1, 1], [], []>} : vector<8x4xf32>, vector<4x64xf32>, vector<8x64xf32> -> vector<8x64xf32>
    %c1_295 = arith.constant 1 : index
    %c0_296 = arith.constant 0 : index
    %c0_297 = arith.constant 0 : index
    %320 = vector.load %arg35[%c1_295, %c0_296, %c0_297] : memref<2x8x4xf32, #tpu.memory_space<vmem>>, vector<1x8x4xf32>
    %321 = vector.shape_cast %320 : vector<1x8x4xf32> to vector<8x4xf32>
    %cst_298 = arith.constant dense<0.000000e+00> : vector<8x64xf32>
    %322 = tpu.matmul %321, %316, %cst_298 {dimension_numbers = #tpu.dot_dimension_numbers<[1], [0], [0], [1], [0, 0, 1, 1], [], []>} : vector<8x4xf32>, vector<4x64xf32>, vector<8x64xf32> -> vector<8x64xf32>
    %323 = arith.addf %319, %322 : vector<8x64xf32>
    %324 = arith.addf %323, %144 : vector<8x64xf32>
    %c0_299 = arith.constant 0 : index
    %c0_300 = arith.constant 0 : index
    %325 = vector.load %arg36[%c0_299, %c0_300] : memref<5x64xf32, #tpu.memory_space<vmem>>, vector<1x64xf32>
    %326 = vector.broadcast %325 : vector<1x64xf32> to vector<8x64xf32>
    %327 = arith.mulf %324, %326 : vector<8x64xf32>
    %c1_301 = arith.constant 1 : index
    %c0_302 = arith.constant 0 : index
    %328 = vector.load %arg36[%c1_301, %c0_302] : memref<5x64xf32, #tpu.memory_space<vmem>>, vector<1x64xf32>
    %329 = vector.broadcast %328 : vector<1x64xf32> to vector<8x64xf32>
    %330 = arith.addf %327, %329 : vector<8x64xf32>
    %cst_303 = arith.constant 0.000000e+00 : f32
    %331 = vector.broadcast %cst_303 : f32 to vector<8x64xf32>
    %332 = arith.maximumf %330, %331 : vector<8x64xf32>
    %c0_304 = arith.constant 0 : index
    %c0_305 = arith.constant 0 : index
    %333 = vector.load %arg37[%c0_304, %c0_305] : memref<64x32xf32, #tpu.memory_space<vmem>>, vector<64x32xf32>
    %cst_306 = arith.constant dense<0.000000e+00> : vector<8x32xf32>
    %334 = tpu.matmul %332, %333, %cst_306 {dimension_numbers = #tpu.dot_dimension_numbers<[1], [0], [0], [1], [0, 0, 1, 1], [], []>} : vector<8x64xf32>, vector<64x32xf32>, vector<8x32xf32> -> vector<8x32xf32>
    %c2_307 = arith.constant 2 : index
    %c0_308 = arith.constant 0 : index
    %335 = vector.load %arg36[%c2_307, %c0_308] : memref<5x64xf32, #tpu.memory_space<vmem>>, vector<1x32xf32>
    %336 = vector.broadcast %335 : vector<1x32xf32> to vector<8x32xf32>
    %337 = arith.addf %334, %336 : vector<8x32xf32>
    %cst_309 = arith.constant 0.000000e+00 : f32
    %338 = vector.broadcast %cst_309 : f32 to vector<8x32xf32>
    %339 = arith.maximumf %337, %338 : vector<8x32xf32>
    %c0_310 = arith.constant 0 : index
    %c0_311 = arith.constant 0 : index
    %c0_312 = arith.constant 0 : index
    %340 = vector.load %arg38[%c0_310, %c0_311, %c0_312] : memref<3x32x32xf32, #tpu.memory_space<vmem>>, vector<1x32x32xf32>
    %341 = vector.shape_cast %340 : vector<1x32x32xf32> to vector<32x32xf32>
    %cst_313 = arith.constant dense<0.000000e+00> : vector<8x32xf32>
    %342 = tpu.matmul %339, %341, %cst_313 {dimension_numbers = #tpu.dot_dimension_numbers<[1], [0], [0], [1], [0, 0, 1, 1], [], []>} : vector<8x32xf32>, vector<32x32xf32>, vector<8x32xf32> -> vector<8x32xf32>
    %c1_314 = arith.constant 1 : index
    %c0_315 = arith.constant 0 : index
    %c0_316 = arith.constant 0 : index
    %343 = vector.load %arg38[%c1_314, %c0_315, %c0_316] : memref<3x32x32xf32, #tpu.memory_space<vmem>>, vector<1x32x32xf32>
    %344 = vector.shape_cast %343 : vector<1x32x32xf32> to vector<32x32xf32>
    %cst_317 = arith.constant dense<0.000000e+00> : vector<8x32xf32>
    %345 = tpu.matmul %339, %344, %cst_317 {dimension_numbers = #tpu.dot_dimension_numbers<[1], [0], [0], [1], [0, 0, 1, 1], [], []>} : vector<8x32xf32>, vector<32x32xf32>, vector<8x32xf32> -> vector<8x32xf32>
    %c2_318 = arith.constant 2 : index
    %c0_319 = arith.constant 0 : index
    %c0_320 = arith.constant 0 : index
    %346 = vector.load %arg38[%c2_318, %c0_319, %c0_320] : memref<3x32x32xf32, #tpu.memory_space<vmem>>, vector<1x32x32xf32>
    %347 = vector.shape_cast %346 : vector<1x32x32xf32> to vector<32x32xf32>
    %cst_321 = arith.constant dense<0.000000e+00> : vector<8x32xf32>
    %348 = tpu.matmul %339, %347, %cst_321 {dimension_numbers = #tpu.dot_dimension_numbers<[1], [0], [0], [1], [0, 0, 1, 1], [], []>} : vector<8x32xf32>, vector<32x32xf32>, vector<8x32xf32> -> vector<8x32xf32>
    %c0_322 = arith.constant 0 : index
    %c0_323 = arith.constant 0 : index
    %c0_324 = arith.constant 0 : index
    %349 = vector.load %arg13[%c0_322, %c0_323, %c0_324] : memref<2x8x8xf32, #tpu.memory_space<vmem>>, vector<1x8x8xf32>
    %350 = vector.shape_cast %349 : vector<1x8x8xf32> to vector<8x8xf32>
    %cst_325 = arith.constant dense<0.000000e+00> : vector<8x32xf32>
    %351 = tpu.matmul %350, %342, %cst_325 {dimension_numbers = #tpu.dot_dimension_numbers<[1], [0], [0], [1], [0, 0, 1, 1], [], []>} : vector<8x8xf32>, vector<8x32xf32>, vector<8x32xf32> -> vector<8x32xf32>
    %352 = arith.addf %345, %351 : vector<8x32xf32>
    %c1_326 = arith.constant 1 : index
    %c0_327 = arith.constant 0 : index
    %c0_328 = arith.constant 0 : index
    %353 = vector.load %arg13[%c1_326, %c0_327, %c0_328] : memref<2x8x8xf32, #tpu.memory_space<vmem>>, vector<1x8x8xf32>
    %354 = vector.shape_cast %353 : vector<1x8x8xf32> to vector<8x8xf32>
    %cst_329 = arith.constant dense<0.000000e+00> : vector<8x32xf32>
    %355 = tpu.matmul %354, %348, %cst_329 {dimension_numbers = #tpu.dot_dimension_numbers<[1], [0], [0], [1], [0, 0, 1, 1], [], []>} : vector<8x8xf32>, vector<8x32xf32>, vector<8x32xf32> -> vector<8x32xf32>
    %356 = arith.addf %352, %355 : vector<8x32xf32>
    %c3_330 = arith.constant 3 : index
    %c0_331 = arith.constant 0 : index
    %357 = vector.load %arg36[%c3_330, %c0_331] : memref<5x64xf32, #tpu.memory_space<vmem>>, vector<1x32xf32>
    %358 = vector.broadcast %357 : vector<1x32xf32> to vector<8x32xf32>
    %359 = arith.addf %356, %358 : vector<8x32xf32>
    %cst_332 = arith.constant 0.000000e+00 : f32
    %360 = vector.broadcast %cst_332 : f32 to vector<8x32xf32>
    %361 = arith.maximumf %359, %360 : vector<8x32xf32>
    %c0_333 = arith.constant 0 : index
    %c0_334 = arith.constant 0 : index
    %362 = vector.load %arg39[%c0_333, %c0_334] : memref<32x64xf32, #tpu.memory_space<vmem>>, vector<32x64xf32>
    %cst_335 = arith.constant dense<0.000000e+00> : vector<8x64xf32>
    %363 = tpu.matmul %361, %362, %cst_335 {dimension_numbers = #tpu.dot_dimension_numbers<[1], [0], [0], [1], [0, 0, 1, 1], [], []>} : vector<8x32xf32>, vector<32x64xf32>, vector<8x64xf32> -> vector<8x64xf32>
    %c4_336 = arith.constant 4 : index
    %c0_337 = arith.constant 0 : index
    %364 = vector.load %arg36[%c4_336, %c0_337] : memref<5x64xf32, #tpu.memory_space<vmem>>, vector<1x64xf32>
    %365 = vector.broadcast %364 : vector<1x64xf32> to vector<8x64xf32>
    %366 = arith.addf %363, %365 : vector<8x64xf32>
    %367 = arith.addf %366, %324 : vector<8x64xf32>
    %c0_338 = arith.constant 0 : index
    %c0_339 = arith.constant 0 : index
    %368 = vector.load %arg41[%c0_338, %c0_339] : memref<1x128xf32, #tpu.memory_space<vmem>>, vector<1x128xf32>
    %c0_340 = arith.constant 0 : index
    %c0_341 = arith.constant 0 : index
    %369 = vector.load %arg40[%c0_340, %c0_341] : memref<64x512xf32, #tpu.memory_space<vmem>>, vector<64x512xf32>
    %cst_342 = arith.constant dense<0.000000e+00> : vector<8x512xf32>
    %370 = tpu.matmul %367, %369, %cst_342 {dimension_numbers = #tpu.dot_dimension_numbers<[1], [0], [0], [1], [0, 0, 1, 1], [], []>} : vector<8x64xf32>, vector<64x512xf32>, vector<8x512xf32> -> vector<8x512xf32>
    %371 = vector.extract_strided_slice %370 {offsets = [0, 0], sizes = [8, 128], strides = [1, 1]} : vector<8x512xf32> to vector<8x128xf32>
    %372 = vector.extract_strided_slice %370 {offsets = [0, 128], sizes = [8, 128], strides = [1, 1]} : vector<8x512xf32> to vector<8x128xf32>
    %373 = vector.extract_strided_slice %370 {offsets = [0, 256], sizes = [8, 128], strides = [1, 1]} : vector<8x512xf32> to vector<8x128xf32>
    %374 = vector.extract_strided_slice %370 {offsets = [0, 384], sizes = [8, 128], strides = [1, 1]} : vector<8x512xf32> to vector<8x128xf32>
    %c0_343 = arith.constant 0 : index
    %c0_344 = arith.constant 0 : index
    %c0_345 = arith.constant 0 : index
    %375 = vector.load %arg13[%c0_343, %c0_344, %c0_345] : memref<2x8x8xf32, #tpu.memory_space<vmem>>, vector<1x8x8xf32>
    %376 = vector.shape_cast %375 : vector<1x8x8xf32> to vector<8x8xf32>
    %cst_346 = arith.constant dense<0.000000e+00> : vector<8x128xf32>
    %377 = tpu.matmul %376, %373, %cst_346 {dimension_numbers = #tpu.dot_dimension_numbers<[1], [0], [0], [1], [0, 0, 1, 1], [], []>} : vector<8x8xf32>, vector<8x128xf32>, vector<8x128xf32> -> vector<8x128xf32>
    %378 = arith.addf %371, %377 : vector<8x128xf32>
    %379 = vector.broadcast %368 : vector<1x128xf32> to vector<8x128xf32>
    %380 = arith.addf %378, %379 : vector<8x128xf32>
    %cst_347 = arith.constant 0.000000e+00 : f32
    %381 = vector.broadcast %cst_347 : f32 to vector<8x128xf32>
    %382 = arith.maximumf %380, %381 : vector<8x128xf32>
    %c1_348 = arith.constant 1 : index
    %c0_349 = arith.constant 0 : index
    %c0_350 = arith.constant 0 : index
    %383 = vector.load %arg13[%c1_348, %c0_349, %c0_350] : memref<2x8x8xf32, #tpu.memory_space<vmem>>, vector<1x8x8xf32>
    %384 = vector.shape_cast %383 : vector<1x8x8xf32> to vector<8x8xf32>
    %cst_351 = arith.constant dense<0.000000e+00> : vector<8x128xf32>
    %385 = tpu.matmul %384, %374, %cst_351 {dimension_numbers = #tpu.dot_dimension_numbers<[1], [0], [0], [1], [0, 0, 1, 1], [], []>} : vector<8x8xf32>, vector<8x128xf32>, vector<8x128xf32> -> vector<8x128xf32>
    %386 = arith.addf %372, %385 : vector<8x128xf32>
    %387 = vector.broadcast %368 : vector<1x128xf32> to vector<8x128xf32>
    %388 = arith.addf %386, %387 : vector<8x128xf32>
    %cst_352 = arith.constant 0.000000e+00 : f32
    %389 = vector.broadcast %cst_352 : f32 to vector<8x128xf32>
    %390 = arith.maximumf %388, %389 : vector<8x128xf32>
    %c0_353 = arith.constant 0 : index
    %c0_354 = arith.constant 0 : index
    %c0_355 = arith.constant 0 : index
    %391 = vector.load %arg42[%c0_353, %c0_354, %c0_355] : memref<2x16x8xf32, #tpu.memory_space<vmem>>, vector<1x16x8xf32>
    %392 = vector.shape_cast %391 : vector<1x16x8xf32> to vector<16x8xf32>
    %cst_356 = arith.constant dense<0.000000e+00> : vector<16x128xf32>
    %393 = tpu.matmul %392, %382, %cst_356 {dimension_numbers = #tpu.dot_dimension_numbers<[1], [0], [0], [1], [0, 0, 1, 1], [], []>} : vector<16x8xf32>, vector<8x128xf32>, vector<16x128xf32> -> vector<16x128xf32>
    %c1_357 = arith.constant 1 : index
    %c0_358 = arith.constant 0 : index
    %c0_359 = arith.constant 0 : index
    %394 = vector.load %arg42[%c1_357, %c0_358, %c0_359] : memref<2x16x8xf32, #tpu.memory_space<vmem>>, vector<1x16x8xf32>
    %395 = vector.shape_cast %394 : vector<1x16x8xf32> to vector<16x8xf32>
    %cst_360 = arith.constant dense<0.000000e+00> : vector<16x128xf32>
    %396 = tpu.matmul %395, %390, %cst_360 {dimension_numbers = #tpu.dot_dimension_numbers<[1], [0], [0], [1], [0, 0, 1, 1], [], []>} : vector<16x8xf32>, vector<8x128xf32>, vector<16x128xf32> -> vector<16x128xf32>
    %397 = arith.addf %393, %396 : vector<16x128xf32>
    %398 = arith.addf %397, %44 : vector<16x128xf32>
    %c0_361 = arith.constant 0 : index
    %c0_362 = arith.constant 0 : index
    %c0_363 = arith.constant 0 : index
    %399 = vector.load %arg43[%c0_361, %c0_362, %c0_363] : memref<1x16x128xf32, #tpu.memory_space<vmem>>, vector<1x16x128xf32>
    %400 = vector.shape_cast %399 : vector<1x16x128xf32> to vector<16x128xf32>
    %401 = vector.shape_cast %398 : vector<16x128xf32> to vector<1x16x128xf32>
    tpu.vector_store %arg43[%c0_361, %c0_362, %c0_363], %401 {strides = array<i32>} : memref<1x16x128xf32, #tpu.memory_space<vmem>>, vector<1x16x128xf32>,
    return
  }
  func.func @transform_0(%arg0: i32) -> (i32, i32, i32) {
    %c0_i32 = arith.constant 0 : i32
    %c0_i32_0 = arith.constant 0 : i32
    %c0_i32_1 = arith.constant 0 : i32
    return %arg0, %c0_i32, %c0_i32_0 : i32, i32, i32
  }
  func.func @transform_1(%arg0: i32) -> (i32, i32) {
    %c0_i32 = arith.constant 0 : i32
    %c0_i32_0 = arith.constant 0 : i32
    %c0_i32_1 = arith.constant 0 : i32
    return %c0_i32, %c0_i32_0 : i32, i32
  }
  func.func @transform_2(%arg0: i32) -> (i32, i32) {
    %c0_i32 = arith.constant 0 : i32
    %c0_i32_0 = arith.constant 0 : i32
    %c0_i32_1 = arith.constant 0 : i32
    return %c0_i32, %c0_i32_0 : i32, i32
  }
  func.func @transform_3(%arg0: i32) -> (i32, i32, i32) {
    %c0_i32 = arith.constant 0 : i32
    %c0_i32_0 = arith.constant 0 : i32
    %c0_i32_1 = arith.constant 0 : i32
    %c0_i32_2 = arith.constant 0 : i32
    return %c0_i32, %c0_i32_0, %c0_i32_1 : i32, i32, i32
  }
  func.func @transform_4(%arg0: i32) -> (i32, i32) {
    %c0_i32 = arith.constant 0 : i32
    %c0_i32_0 = arith.constant 0 : i32
    %c0_i32_1 = arith.constant 0 : i32
    return %c0_i32, %c0_i32_0 : i32, i32
  }
  func.func @transform_5(%arg0: i32) -> (i32, i32, i32) {
    %c0_i32 = arith.constant 0 : i32
    %c0_i32_0 = arith.constant 0 : i32
    %c0_i32_1 = arith.constant 0 : i32
    %c0_i32_2 = arith.constant 0 : i32
    return %c0_i32, %c0_i32_0, %c0_i32_1 : i32, i32, i32
  }
  func.func @transform_6(%arg0: i32) -> (i32, i32, i32) {
    %c0_i32 = arith.constant 0 : i32
    %c0_i32_0 = arith.constant 0 : i32
    %c0_i32_1 = arith.constant 0 : i32
    %c0_i32_2 = arith.constant 0 : i32
    return %c0_i32, %c0_i32_0, %c0_i32_1 : i32, i32, i32
  }
  func.func @transform_7(%arg0: i32) -> (i32, i32, i32) {
    %c0_i32 = arith.constant 0 : i32
    %c0_i32_0 = arith.constant 0 : i32
    %c0_i32_1 = arith.constant 0 : i32
    %c0_i32_2 = arith.constant 0 : i32
    return %c0_i32, %c0_i32_0, %c0_i32_1 : i32, i32, i32
  }
  func.func @transform_8(%arg0: i32) -> (i32, i32) {
    %c0_i32 = arith.constant 0 : i32
    %c0_i32_0 = arith.constant 0 : i32
    %c0_i32_1 = arith.constant 0 : i32
    return %c0_i32, %c0_i32_0 : i32, i32
  }
  func.func @transform_9(%arg0: i32) -> (i32, i32) {
    %c0_i32 = arith.constant 0 : i32
    %c0_i32_0 = arith.constant 0 : i32
    %c0_i32_1 = arith.constant 0 : i32
    return %c0_i32, %c0_i32_0 : i32, i32
  }
  func.func @transform_10(%arg0: i32) -> (i32, i32, i32) {
    %c0_i32 = arith.constant 0 : i32
    %c0_i32_0 = arith.constant 0 : i32
    %c0_i32_1 = arith.constant 0 : i32
    %c0_i32_2 = arith.constant 0 : i32
    return %c0_i32, %c0_i32_0, %c0_i32_1 : i32, i32, i32
  }
  func.func @transform_11(%arg0: i32) -> (i32, i32) {
    %c0_i32 = arith.constant 0 : i32
    %c0_i32_0 = arith.constant 0 : i32
    %c0_i32_1 = arith.constant 0 : i32
    return %c0_i32, %c0_i32_0 : i32, i32
  }
  func.func @transform_12(%arg0: i32) -> (i32, i32, i32) {
    %c0_i32 = arith.constant 0 : i32
    %c0_i32_0 = arith.constant 0 : i32
    %c0_i32_1 = arith.constant 0 : i32
    %c0_i32_2 = arith.constant 0 : i32
    return %c0_i32, %c0_i32_0, %c0_i32_1 : i32, i32, i32
  }
  func.func @transform_13(%arg0: i32) -> (i32, i32) {
    %c0_i32 = arith.constant 0 : i32
    %c0_i32_0 = arith.constant 0 : i32
    %c0_i32_1 = arith.constant 0 : i32
    return %c0_i32, %c0_i32_0 : i32, i32
  }
  func.func @transform_14(%arg0: i32) -> (i32, i32) {
    %c0_i32 = arith.constant 0 : i32
    %c0_i32_0 = arith.constant 0 : i32
    %c0_i32_1 = arith.constant 0 : i32
    return %c0_i32, %c0_i32_0 : i32, i32
  }
  func.func @transform_15(%arg0: i32) -> (i32, i32, i32) {
    %c0_i32 = arith.constant 0 : i32
    %c0_i32_0 = arith.constant 0 : i32
    %c0_i32_1 = arith.constant 0 : i32
    %c0_i32_2 = arith.constant 0 : i32
    return %c0_i32, %c0_i32_0, %c0_i32_1 : i32, i32, i32
  }
  func.func @transform_16(%arg0: i32) -> (i32, i32) {
    %c0_i32 = arith.constant 0 : i32
    %c0_i32_0 = arith.constant 0 : i32
    %c0_i32_1 = arith.constant 0 : i32
    return %c0_i32, %c0_i32_0 : i32, i32
  }
  func.func @transform_17(%arg0: i32) -> (i32, i32, i32) {
    %c0_i32 = arith.constant 0 : i32
    %c0_i32_0 = arith.constant 0 : i32
    %c0_i32_1 = arith.constant 0 : i32
    %c0_i32_2 = arith.constant 0 : i32
    return %c0_i32, %c0_i32_0, %c0_i32_1 : i32, i32, i32
  }
  func.func @transform_18(%arg0: i32) -> (i32, i32, i32) {
    %c0_i32 = arith.constant 0 : i32
    %c0_i32_0 = arith.constant 0 : i32
    %c0_i32_1 = arith.constant 0 : i32
    %c0_i32_2 = arith.constant 0 : i32
    return %c0_i32, %c0_i32_0, %c0_i32_1 : i32, i32, i32
  }
  func.func @transform_19(%arg0: i32) -> (i32, i32) {
    %c0_i32 = arith.constant 0 : i32
    %c0_i32_0 = arith.constant 0 : i32
    %c0_i32_1 = arith.constant 0 : i32
    return %c0_i32, %c0_i32_0 : i32, i32
  }
  func.func @transform_20(%arg0: i32) -> (i32, i32) {
    %c0_i32 = arith.constant 0 : i32
    %c0_i32_0 = arith.constant 0 : i32
    %c0_i32_1 = arith.constant 0 : i32
    return %c0_i32, %c0_i32_0 : i32, i32
  }
  func.func @transform_21(%arg0: i32) -> (i32, i32, i32) {
    %c0_i32 = arith.constant 0 : i32
    %c0_i32_0 = arith.constant 0 : i32
    %c0_i32_1 = arith.constant 0 : i32
    %c0_i32_2 = arith.constant 0 : i32
    return %c0_i32, %c0_i32_0, %c0_i32_1 : i32, i32, i32
  }
  func.func @transform_22(%arg0: i32) -> (i32, i32) {
    %c0_i32 = arith.constant 0 : i32
    %c0_i32_0 = arith.constant 0 : i32
    %c0_i32_1 = arith.constant 0 : i32
    return %c0_i32, %c0_i32_0 : i32, i32
  }
  func.func @transform_23(%arg0: i32) -> (i32, i32, i32) {
    %c0_i32 = arith.constant 0 : i32
    %c0_i32_0 = arith.constant 0 : i32
    %c0_i32_1 = arith.constant 0 : i32
    %c0_i32_2 = arith.constant 0 : i32
    return %c0_i32, %c0_i32_0, %c0_i32_1 : i32, i32, i32
  }
  func.func @transform_24(%arg0: i32) -> (i32, i32) {
    %c0_i32 = arith.constant 0 : i32
    %c0_i32_0 = arith.constant 0 : i32
    %c0_i32_1 = arith.constant 0 : i32
    return %c0_i32, %c0_i32_0 : i32, i32
  }
  func.func @transform_25(%arg0: i32) -> (i32, i32) {
    %c0_i32 = arith.constant 0 : i32
    %c0_i32_0 = arith.constant 0 : i32
    %c0_i32_1 = arith.constant 0 : i32
    return %c0_i32, %c0_i32_0 : i32, i32
  }
  func.func @transform_26(%arg0: i32) -> (i32, i32, i32) {
    %c0_i32 = arith.constant 0 : i32
    %c0_i32_0 = arith.constant 0 : i32
    %c0_i32_1 = arith.constant 0 : i32
    %c0_i32_2 = arith.constant 0 : i32
    return %c0_i32, %c0_i32_0, %c0_i32_1 : i32, i32, i32
  }
  func.func @transform_27(%arg0: i32) -> (i32, i32) {
    %c0_i32 = arith.constant 0 : i32
    %c0_i32_0 = arith.constant 0 : i32
    %c0_i32_1 = arith.constant 0 : i32
    return %c0_i32, %c0_i32_0 : i32, i32
  }
  func.func @transform_28(%arg0: i32) -> (i32, i32) {
    %c0_i32 = arith.constant 0 : i32
    %c0_i32_0 = arith.constant 0 : i32
    %c0_i32_1 = arith.constant 0 : i32
    return %c0_i32, %c0_i32_0 : i32, i32
  }
  func.func @transform_29(%arg0: i32) -> (i32, i32) {
    %c0_i32 = arith.constant 0 : i32
    %c0_i32_0 = arith.constant 0 : i32
    %c0_i32_1 = arith.constant 0 : i32
    return %c0_i32, %c0_i32_0 : i32, i32
  }
  func.func @transform_30(%arg0: i32) -> (i32, i32, i32) {
    %c0_i32 = arith.constant 0 : i32
    %c0_i32_0 = arith.constant 0 : i32
    %c0_i32_1 = arith.constant 0 : i32
    %c0_i32_2 = arith.constant 0 : i32
    return %c0_i32, %c0_i32_0, %c0_i32_1 : i32, i32, i32
  }
  func.func @transform_31(%arg0: i32) -> (i32, i32) {
    %c0_i32 = arith.constant 0 : i32
    %c0_i32_0 = arith.constant 0 : i32
    %c0_i32_1 = arith.constant 0 : i32
    return %c0_i32, %c0_i32_0 : i32, i32
  }
  func.func @transform_32(%arg0: i32) -> (i32, i32, i32) {
    %c0_i32 = arith.constant 0 : i32
    %c0_i32_0 = arith.constant 0 : i32
    %c0_i32_1 = arith.constant 0 : i32
    %c0_i32_2 = arith.constant 0 : i32
    return %c0_i32, %c0_i32_0, %c0_i32_1 : i32, i32, i32
  }
  func.func @transform_33(%arg0: i32) -> (i32, i32) {
    %c0_i32 = arith.constant 0 : i32
    %c0_i32_0 = arith.constant 0 : i32
    %c0_i32_1 = arith.constant 0 : i32
    return %c0_i32, %c0_i32_0 : i32, i32
  }
  func.func @transform_34(%arg0: i32) -> (i32, i32, i32) {
    %c0_i32 = arith.constant 0 : i32
    %c0_i32_0 = arith.constant 0 : i32
    %c0_i32_1 = arith.constant 0 : i32
    %c0_i32_2 = arith.constant 0 : i32
    return %c0_i32, %c0_i32_0, %c0_i32_1 : i32, i32, i32
  }
  func.func @transform_35(%arg0: i32) -> (i32, i32) {
    %c0_i32 = arith.constant 0 : i32
    %c0_i32_0 = arith.constant 0 : i32
    %c0_i32_1 = arith.constant 0 : i32
    return %c0_i32, %c0_i32_0 : i32, i32
  }
  func.func @transform_36(%arg0: i32) -> (i32, i32) {
    %c0_i32 = arith.constant 0 : i32
    %c0_i32_0 = arith.constant 0 : i32
    %c0_i32_1 = arith.constant 0 : i32
    return %c0_i32, %c0_i32_0 : i32, i32
  }
  func.func @transform_37(%arg0: i32) -> (i32, i32, i32) {
    %c0_i32 = arith.constant 0 : i32
    %c0_i32_0 = arith.constant 0 : i32
    %c0_i32_1 = arith.constant 0 : i32
    %c0_i32_2 = arith.constant 0 : i32
    return %c0_i32, %c0_i32_0, %c0_i32_1 : i32, i32, i32
  }
  func.func @transform_38(%arg0: i32) -> (i32, i32) {
    %c0_i32 = arith.constant 0 : i32
    %c0_i32_0 = arith.constant 0 : i32
    %c0_i32_1 = arith.constant 0 : i32
    return %c0_i32, %c0_i32_0 : i32, i32
  }
  func.func @transform_39(%arg0: i32) -> (i32, i32) {
    %c0_i32 = arith.constant 0 : i32
    %c0_i32_0 = arith.constant 0 : i32
    %c0_i32_1 = arith.constant 0 : i32
    return %c0_i32, %c0_i32_0 : i32, i32
  }
  func.func @transform_40(%arg0: i32) -> (i32, i32) {
    %c0_i32 = arith.constant 0 : i32
    %c0_i32_0 = arith.constant 0 : i32
    %c0_i32_1 = arith.constant 0 : i32
    return %c0_i32, %c0_i32_0 : i32, i32
  }
  func.func @transform_41(%arg0: i32) -> (i32, i32, i32) {
    %c0_i32 = arith.constant 0 : i32
    %c0_i32_0 = arith.constant 0 : i32
    %c0_i32_1 = arith.constant 0 : i32
    %c0_i32_2 = arith.constant 0 : i32
    return %c0_i32, %c0_i32_0, %c0_i32_1 : i32, i32, i32
  }
  func.func @transform_42(%arg0: i32) -> (i32, i32, i32) {
    %c0_i32 = arith.constant 0 : i32
    %c0_i32_0 = arith.constant 0 : i32
    %c0_i32_1 = arith.constant 0 : i32
    return %arg0, %c0_i32, %c0_i32_0 : i32, i32, i32
  }
}

</mosaic_0001>

<llo_original>
// kernel: tpu_custom_call.1
$region0: #{tpu_custom_call.1}
  #allocation0 [shape = 'u32[]', space=smem, size = 0x4, offset = 0x4, fixed_abs, tag = 'smem constant byte address 0x4 - core index']
  #allocation1 [shape = 'u32[144,128]{1,0:T(1,128)}', space=vmem, size = 0x12000, scoped, tag = 'internal scratch']
  %s0 = inlined_call_operand.smem [shape: u32[43], index: -1, kind: input, shape index: {}]
  %s1 = sld [smem:[%s0]]
  %s2 = scalar_lea.smem %s0, 1
  %s3 = sld [smem:[%s2]]
  %s4 = scalar_lea.smem %s0, 2
  %s5 = sld [smem:[%s4]]
  %s6 = scalar_lea.smem %s0, 3
  %s7 = sld [smem:[%s6]]
  %s8 = scalar_lea.smem %s0, 4
  %s9 = sld [smem:[%s8]]
  %s10 = scalar_lea.smem %s0, 5
  %s11 = sld [smem:[%s10]]
  %s12 = scalar_lea.smem %s0, 6
  %s13 = sld [smem:[%s12]]
  %s14 = scalar_lea.smem %s0, 7
  %s15 = sld [smem:[%s14]]
  %s16 = scalar_lea.smem %s0, 8
  %s17 = sld [smem:[%s16]]
  %s18 = scalar_lea.smem %s0, 9
  %s19 = sld [smem:[%s18]]
  %s20 = scalar_lea.smem %s0, 10
  %s21 = sld [smem:[%s20]]
  %s22 = scalar_lea.smem %s0, 11
  %s23 = sld [smem:[%s22]]
  %s24 = scalar_lea.smem %s0, 12
  %s25 = sld [smem:[%s24]]
  %s26 = scalar_lea.smem %s0, 13
  %s27 = sld [smem:[%s26]]
  %s28 = scalar_lea.smem %s0, 14
  %s29 = sld [smem:[%s28]]
  %s30 = scalar_lea.smem %s0, 15
  %s31 = sld [smem:[%s30]]
  %s32 = scalar_lea.smem %s0, 16
  %s33 = sld [smem:[%s32]]
  %s34 = scalar_lea.smem %s0, 17
  %s35 = sld [smem:[%s34]]
  %s36 = scalar_lea.smem %s0, 18
  %s37 = sld [smem:[%s36]]
  %s38 = scalar_lea.smem %s0, 19
  %s39 = sld [smem:[%s38]]
  %s40 = scalar_lea.smem %s0, 20
  %s41 = sld [smem:[%s40]]
  %s42 = scalar_lea.smem %s0, 21
  %s43 = sld [smem:[%s42]]
  %s44 = scalar_lea.smem %s0, 22
  %s45 = sld [smem:[%s44]]
  %s46 = scalar_lea.smem %s0, 23
  %s47 = sld [smem:[%s46]]
  %s48 = scalar_lea.smem %s0, 24
  %s49 = sld [smem:[%s48]]
  %s50 = scalar_lea.smem %s0, 25
  %s51 = sld [smem:[%s50]]
  %s52 = scalar_lea.smem %s0, 26
  %s53 = sld [smem:[%s52]]
  %s54 = scalar_lea.smem %s0, 27
  %s55 = sld [smem:[%s54]]
  %s56 = scalar_lea.smem %s0, 28
  %s57 = sld [smem:[%s56]]
  %s58 = scalar_lea.smem %s0, 29
  %s59 = sld [smem:[%s58]]
  %s60 = scalar_lea.smem %s0, 30
  %s61 = sld [smem:[%s60]]
  %s62 = scalar_lea.smem %s0, 31
  %s63 = sld [smem:[%s62]]
  %s64 = scalar_lea.smem %s0, 32
  %s65 = sld [smem:[%s64]]
  %s66 = scalar_lea.smem %s0, 33
  %s67 = sld [smem:[%s66]]
  %s68 = scalar_lea.smem %s0, 34
  %s69 = sld [smem:[%s68]]
  %s70 = scalar_lea.smem %s0, 35
  %s71 = sld [smem:[%s70]]
  %s72 = scalar_lea.smem %s0, 36
  %s73 = sld [smem:[%s72]]
  %s74 = scalar_lea.smem %s0, 37
  %s75 = sld [smem:[%s74]]
  %s76 = scalar_lea.smem %s0, 38
  %s77 = sld [smem:[%s76]]
  %s78 = scalar_lea.smem %s0, 39
  %s79 = sld [smem:[%s78]]
  %s80 = scalar_lea.smem %s0, 40
  %s81 = sld [smem:[%s80]]
  %s82 = scalar_lea.smem %s0, 41
  %s83 = sld [smem:[%s82]]
  %s84 = scalar_lea.smem %s0, 42
  %s85 = sld [smem:[%s84]]
  %s86 = sld [smem:[#allocation0]]
  $region277: #{tpu_custom_call.1} parent=0
    _
  %s88 = ssub.s32 1, %s86
  %s89 = scalar_select 0, %s88, %s86
  $region1: #{tpu_custom_call.1} parent=0
    #allocation2 [shape = 'u8[16384]{0}', space=vmem, size = 0x4000, scoped, tag = 'input window, operand 0']
    #allocation3 [shape = 's32[2]{0}', space=sflag, size = 0x8, scoped, tag = 'scoped memory for tpu_custom_call.1']
    #allocation4 [shape = 's32[2]{0}', space=sflag, size = 0x8, scoped, tag = 'scoped memory for tpu_custom_call.1']
    #allocation5 [shape = 'u8[4096]{0}', space=vmem, size = 0x1000, scoped, tag = 'input window, operand 1, single buffered']
    #allocation6 [shape = 's32[1]{0}', space=sflag, size = 0x4, scoped, tag = 'scoped memory for tpu_custom_call.1']
    #allocation7 [shape = 'u8[16384]{0}', space=vmem, size = 0x4000, scoped, tag = 'input window, operand 5, single buffered']
    #allocation8 [shape = 'u8[8192]{0}', space=vmem, size = 0x2000, scoped, tag = 'input window, operand 7, single buffered']
    #allocation9 [shape = 's32[1]{0}', space=sflag, size = 0x4, scoped, tag = 'scoped memory for tpu_custom_call.1']
    #allocation10 [shape = 'u8[4096]{0}', space=vmem, size = 0x1000, scoped, tag = 'input window, operand 8, single buffered']
    #allocation11 [shape = 'u8[16384]{0}', space=vmem, size = 0x4000, scoped, tag = 'input window, operand 11, single buffered']
    #allocation12 [shape = 's32[1]{0}', space=sflag, size = 0x4, scoped, tag = 'scoped memory for tpu_custom_call.1']
    #allocation13 [shape = 'u8[8192]{0}', space=vmem, size = 0x2000, scoped, tag = 'input window, operand 12, single buffered']
    #allocation14 [shape = 'u8[4096]{0}', space=vmem, size = 0x1000, scoped, tag = 'input window, operand 13, single buffered']
    #allocation15 [shape = 's32[1]{0}', space=sflag, size = 0x4, scoped, tag = 'scoped memory for tpu_custom_call.1']
    #allocation16 [shape = 'u8[16384]{0}', space=vmem, size = 0x4000, scoped, tag = 'input window, operand 16, single buffered']
    #allocation17 [shape = 'u8[4096]{0}', space=vmem, size = 0x1000, scoped, tag = 'input window, operand 18, single buffered']
    #allocation18 [shape = 's32[1]{0}', space=sflag, size = 0x4, scoped, tag = 'scoped memory for tpu_custom_call.1']
    #allocation19 [shape = 'u8[4096]{0}', space=vmem, size = 0x1000, scoped, tag = 'input window, operand 19, single buffered']
    #allocation20 [shape = 'u8[8192]{0}', space=vmem, size = 0x2000, scoped, tag = 'input window, operand 22, single buffered']
    #allocation21 [shape = 's32[1]{0}', space=sflag, size = 0x4, scoped, tag = 'scoped memory for tpu_custom_call.1']
    #allocation22 [shape = 'u8[4096]{0}', space=vmem, size = 0x1000, scoped, tag = 'input window, operand 23, single buffered']
    #allocation23 [shape = 'u8[4096]{0}', space=vmem, size = 0x1000, scoped, tag = 'input window, operand 24, single buffered']
    #allocation24 [shape = 's32[1]{0}', space=sflag, size = 0x4, scoped, tag = 'scoped memory for tpu_custom_call.1']
    #allocation25 [shape = 'u8[8192]{0}', space=vmem, size = 0x2000, scoped, tag = 'input window, operand 27, single buffered']
    #allocation26 [shape = 'u8[4096]{0}', space=vmem, size = 0x1000, scoped, tag = 'input window, operand 28, single buffered']
    #allocation27 [shape = 's32[1]{0}', space=sflag, size = 0x4, scoped, tag = 'scoped memory for tpu_custom_call.1']
    #allocation28 [shape = 'u8[8192]{0}', space=vmem, size = 0x2000, scoped, tag = 'input window, operand 31, single buffered']
    #allocation29 [shape = 'u8[512]{0}', space=vmem, size = 0x400, scoped, tag = 'input window, operand 33, single buffered']
    #allocation30 [shape = 's32[1]{0}', space=sflag, size = 0x4, scoped, tag = 'scoped memory for tpu_custom_call.1']
    #allocation31 [shape = 'u8[4096]{0}', space=vmem, size = 0x1000, scoped, tag = 'input window, operand 35, single buffered']
    #allocation32 [shape = 'u8[16384]{0}', space=vmem, size = 0x4000, scoped, tag = 'output window, operand 0']
    %90 = vsyncpa [#allocation3], 0
    %s91 = scalar_lea.sflag [#allocation3], 1
    %92 = vsyncpa %s91, 0
    %93 = vsyncpa [#allocation6], 0
    %94 = vsyncpa [#allocation9], 0
    %95 = vsyncpa [#allocation12], 0
    %96 = vsyncpa [#allocation15], 0
    %97 = vsyncpa [#allocation18], 0
    %98 = vsyncpa [#allocation21], 0
    %99 = vsyncpa [#allocation24], 0
    %100 = vsyncpa [#allocation27], 0
    %101 = vsyncpa [#allocation30], 0
    %102 = vsyncpa [#allocation4], 0
    %s103 = scalar_lea.sflag [#allocation4], 1
    %104 = vsyncpa %s103, 0
    loop: start=0, step=1, limit=4
    $region2: #{tpu_custom_call.1} parent=1 // loop_pre_header
      _
    $region3: #{tpu_custom_call.1} parent=1 // loop_header
      %s106 = sphi 0, %s110
      %p107 = scmp.ge.s32.totalorder %s106, 4
      %s116 = sphi 0, %s118
      %s119 = sphi 0, %s116
      %s120 = sphi 0, %s119
      %s136 = sphi 0, %s120
      %s140 = sphi 0, %s140
      %s142 = sphi 0, %s140
      %s143 = sphi 0, %s142
      %s157 = sphi 0, %s143
      %s161 = sphi 0, %s161
      %s163 = sphi 0, %s161
      %s164 = sphi 0, %s163
      %s178 = sphi 0, %s164
      %s182 = sphi 0, %s182
      %s184 = sphi 0, %s182
      %s185 = sphi 0, %s184
      %s199 = sphi 0, %s185
      %s203 = sphi 0, %s203
      %s205 = sphi 0, %s203
      %s206 = sphi 0, %s205
      %s220 = sphi 0, %s206
      %s224 = sphi 0, %s224
      %s226 = sphi 0, %s224
      %s227 = sphi 0, %s226
      %s241 = sphi 0, %s227
      %s245 = sphi 0, %s245
      %s247 = sphi 0, %s245
      %s248 = sphi 0, %s247
      %s262 = sphi 0, %s248
      %s266 = sphi 0, %s266
      %s268 = sphi 0, %s266
      %s269 = sphi 0, %s268
      %s283 = sphi 0, %s269
      %s287 = sphi 0, %s287
      %s289 = sphi 0, %s287
      %s290 = sphi 0, %s289
      %s304 = sphi 0, %s290
      %s308 = sphi 0, %s308
      %s310 = sphi 0, %s308
      %s311 = sphi 0, %s310
      %s325 = sphi 0, %s311
      %s329 = sphi 0, %s329
      %s331 = sphi 0, %s329
      %s332 = sphi 0, %s331
      %s346 = sphi 0, %s332
      %s350 = sphi 0, %s350
      %s352 = sphi 0, %s350
      %s353 = sphi 0, %s352
      %s367 = sphi 0, %s353
      %s371 = sphi 0, %s371
      %s373 = sphi 0, %s371
      %s374 = sphi 0, %s373
      %s388 = sphi 0, %s374
      %s392 = sphi 0, %s392
      %s394 = sphi 0, %s392
      %s395 = sphi 0, %s394
      %s409 = sphi 0, %s395
      %s413 = sphi 0, %s413
      %s415 = sphi 0, %s413
      %s416 = sphi 0, %s415
      %s430 = sphi 0, %s416
      %s434 = sphi 0, %s434
      %s436 = sphi 0, %s434
      %s437 = sphi 0, %s436
      %s451 = sphi 0, %s437
      %s455 = sphi 0, %s455
      %s457 = sphi 0, %s455
      %s458 = sphi 0, %s457
      %s472 = sphi 0, %s458
      %s476 = sphi 0, %s476
      %s478 = sphi 0, %s476
      %s479 = sphi 0, %s478
      %s493 = sphi 0, %s479
      %s497 = sphi 0, %s497
      %s499 = sphi 0, %s497
      %s500 = sphi 0, %s499
      %s514 = sphi 0, %s500
      %s518 = sphi 0, %s518
      %s520 = sphi 0, %s518
      %s521 = sphi 0, %s520
      %s535 = sphi 0, %s521
      %s539 = sphi 0, %s539
      %s541 = sphi 0, %s539
      %s542 = sphi 0, %s541
      %s556 = sphi 0, %s542
      %s560 = sphi 0, %s560
      %s562 = sphi 0, %s560
      %s563 = sphi 0, %s562
      %s577 = sphi 0, %s563
      %s581 = sphi 0, %s581
      %s583 = sphi 0, %s581
      %s584 = sphi 0, %s583
      %s598 = sphi 0, %s584
      %s602 = sphi 0, %s602
      %s604 = sphi 0, %s602
      %s605 = sphi 0, %s604
      %s619 = sphi 0, %s605
      %s623 = sphi 0, %s623
      %s625 = sphi 0, %s623
      %s626 = sphi 0, %s625
      %s640 = sphi 0, %s626
      %s644 = sphi 0, %s644
      %s646 = sphi 0, %s644
      %s647 = sphi 0, %s646
      %s661 = sphi 0, %s647
      %s665 = sphi 0, %s665
      %s667 = sphi 0, %s665
      %s668 = sphi 0, %s667
      %s682 = sphi 0, %s668
      %s686 = sphi 0, %s686
      %s688 = sphi 0, %s686
      %s689 = sphi 0, %s688
      %s703 = sphi 0, %s689
      %s707 = sphi 0, %s707
      %s709 = sphi 0, %s707
      %s710 = sphi 0, %s709
      %s724 = sphi 0, %s710
      %s728 = sphi 0, %s728
      %s730 = sphi 0, %s728
      %s731 = sphi 0, %s730
      %s745 = sphi 0, %s731
      %s749 = sphi 0, %s749
      %s751 = sphi 0, %s749
      %s752 = sphi 0, %s751
      %s766 = sphi 0, %s752
      %s770 = sphi 0, %s770
      %s772 = sphi 0, %s770
      %s773 = sphi 0, %s772
      %s787 = sphi 0, %s773
      %s791 = sphi 0, %s791
      %s793 = sphi 0, %s791
      %s794 = sphi 0, %s793
      %s808 = sphi 0, %s794
      %s812 = sphi 0, %s812
      %s814 = sphi 0, %s812
      %s815 = sphi 0, %s814
      %s829 = sphi 0, %s815
      %s833 = sphi 0, %s833
      %s835 = sphi 0, %s833
      %s836 = sphi 0, %s835
      %s850 = sphi 0, %s836
      %s854 = sphi 0, %s854
      %s856 = sphi 0, %s854
      %s857 = sphi 0, %s856
      %s871 = sphi 0, %s857
      %s875 = sphi 0, %s875
      %s877 = sphi 0, %s875
      %s878 = sphi 0, %s877
      %s892 = sphi 0, %s878
      %s896 = sphi 0, %s896
      %s898 = sphi 0, %s896
      %s899 = sphi 0, %s898
      %s913 = sphi 0, %s899
      %s917 = sphi 0, %s917
      %s919 = sphi 0, %s917
      %s920 = sphi 0, %s919
      %s934 = sphi 0, %s920
      %s938 = sphi 0, %s938
      %s940 = sphi 0, %s938
      %s941 = sphi 0, %s940
      %s955 = sphi 0, %s941
      %s959 = sphi 0, %s959
      %s961 = sphi 0, %s959
      %s962 = sphi 0, %s961
      %s976 = sphi 0, %s962
      %s980 = sphi 0, %s980
      %s982 = sphi 0, %s980
      %s983 = sphi 0, %s982
      %s997 = sphi 0, %s983
      %s1003 = sphi 0, %s1005
      %s1006 = sphi 0, %s1003
      %s1007 = sphi 0, %s1006
      %s1023 = sphi 0, %s1007
    $region4: #{tpu_custom_call.1} parent=1 // loop_header_branch
      %109 = sbr.rel (%p107) target = $region8
    $region5: #{tpu_custom_call.1} parent=1 // loop_body
      %s111 = ssub.s32 %s106, 1
      %s112 = ssub.s32 %s106, 2
      %s113 = sadd.s32 %s106, 1
      %s114 = ssub.s32 %s106, %s113
      %p115 = scmp.eq.s32.totalorder %s114, 0
      %s117 = sadd.s32 %s116, 1
      %s118 = scalar_select %p115, %s116, %s117
      %p121 = pneg %p115
      %p122 = scmp.eq.s32.totalorder %s106, 1
      %p123 = por %p121, %p122
      %p124 = scmp.ne.s32.totalorder %s116, %s119
      %p125 = scmp.eq.s32.totalorder %s106, 0
      %p126 = por %p124, %p125
      %p127 = scmp.ne.s32.totalorder %s116, %s119
      %p128 = scmp.eq.s32.totalorder %s111, 1
      %p129 = por %p127, %p128
      %p130 = scmp.ne.s32.totalorder %s119, %s120
      %p131 = scmp.eq.s32.totalorder %s111, 0
      %p132 = por %p130, %p131
      %p133 = scmp.ne.s32.totalorder %s119, %s120
      %p134 = scmp.eq.s32.totalorder %s112, 1
      %p135 = por %p133, %p134
      %p137 = scmp.ne.s32.totalorder %s120, %s136
      %p138 = scmp.eq.s32.totalorder %s112, 0
      %p139 = por %p137, %p138
      %s141 = sadd.s32 %s140, 1
      %p144 = scmp.eq.s32.totalorder %s106, 1
      %p145 = scmp.ne.s32.totalorder %s140, %s142
      %p146 = scmp.eq.s32.totalorder %s106, 0
      %p147 = por %p145, %p146
      %p148 = scmp.ne.s32.totalorder %s140, %s142
      %p149 = scmp.eq.s32.totalorder %s111, 1
      %p150 = por %p148, %p149
      %p151 = scmp.ne.s32.totalorder %s142, %s143
      %p152 = scmp.eq.s32.totalorder %s111, 0
      %p153 = por %p151, %p152
      %p154 = scmp.ne.s32.totalorder %s142, %s143
      %p155 = scmp.eq.s32.totalorder %s112, 1
      %p156 = por %p154, %p155
      %p158 = scmp.ne.s32.totalorder %s143, %s157
      %p159 = scmp.eq.s32.totalorder %s112, 0
      %p160 = por %p158, %p159
      %s162 = sadd.s32 %s161, 1
      %p165 = scmp.eq.s32.totalorder %s106, 1
      %p166 = scmp.ne.s32.totalorder %s161, %s163
      %p167 = scmp.eq.s32.totalorder %s106, 0
      %p168 = por %p166, %p167
      %p169 = scmp.ne.s32.totalorder %s161, %s163
      %p170 = scmp.eq.s32.totalorder %s111, 1
      %p171 = por %p169, %p170
      %p172 = scmp.ne.s32.totalorder %s163, %s164
      %p173 = scmp.eq.s32.totalorder %s111, 0
      %p174 = por %p172, %p173
      %p175 = scmp.ne.s32.totalorder %s163, %s164
      %p176 = scmp.eq.s32.totalorder %s112, 1
      %p177 = por %p175, %p176
      %p179 = scmp.ne.s32.totalorder %s164, %s178
      %p180 = scmp.eq.s32.totalorder %s112, 0
      %p181 = por %p179, %p180
      %s183 = sadd.s32 %s182, 1
      %p186 = scmp.eq.s32.totalorder %s106, 1
      %p187 = scmp.ne.s32.totalorder %s182, %s184
      %p188 = scmp.eq.s32.totalorder %s106, 0
      %p189 = por %p187, %p188
      %p190 = scmp.ne.s32.totalorder %s182, %s184
      %p191 = scmp.eq.s32.totalorder %s111, 1
      %p192 = por %p190, %p191
      %p193 = scmp.ne.s32.totalorder %s184, %s185
      %p194 = scmp.eq.s32.totalorder %s111, 0
      %p195 = por %p193, %p194
      %p196 = scmp.ne.s32.totalorder %s184, %s185
      %p197 = scmp.eq.s32.totalorder %s112, 1
      %p198 = por %p196, %p197
      %p200 = scmp.ne.s32.totalorder %s185, %s199
      %p201 = scmp.eq.s32.totalorder %s112, 0
      %p202 = por %p200, %p201
      %s204 = sadd.s32 %s203, 1
      %p207 = scmp.eq.s32.totalorder %s106, 1
      %p208 = scmp.ne.s32.totalorder %s203, %s205
      %p209 = scmp.eq.s32.totalorder %s106, 0
      %p210 = por %p208, %p209
      %p211 = scmp.ne.s32.totalorder %s203, %s205
      %p212 = scmp.eq.s32.totalorder %s111, 1
      %p213 = por %p211, %p212
      %p214 = scmp.ne.s32.totalorder %s205, %s206
      %p215 = scmp.eq.s32.totalorder %s111, 0
      %p216 = por %p214, %p215
      %p217 = scmp.ne.s32.totalorder %s205, %s206
      %p218 = scmp.eq.s32.totalorder %s112, 1
      %p219 = por %p217, %p218
      %p221 = scmp.ne.s32.totalorder %s206, %s220
      %p222 = scmp.eq.s32.totalorder %s112, 0
      %p223 = por %p221, %p222
      %s225 = sadd.s32 %s224, 1
      %p228 = scmp.eq.s32.totalorder %s106, 1
      %p229 = scmp.ne.s32.totalorder %s224, %s226
      %p230 = scmp.eq.s32.totalorder %s106, 0
      %p231 = por %p229, %p230
      %p232 = scmp.ne.s32.totalorder %s224, %s226
      %p233 = scmp.eq.s32.totalorder %s111, 1
      %p234 = por %p232, %p233
      %p235 = scmp.ne.s32.totalorder %s226, %s227
      %p236 = scmp.eq.s32.totalorder %s111, 0
      %p237 = por %p235, %p236
      %p238 = scmp.ne.s32.totalorder %s226, %s227
      %p239 = scmp.eq.s32.totalorder %s112, 1
      %p240 = por %p238, %p239
      %p242 = scmp.ne.s32.totalorder %s227, %s241
      %p243 = scmp.eq.s32.totalorder %s112, 0
      %p244 = por %p242, %p243
      %s246 = sadd.s32 %s245, 1
      %p249 = scmp.eq.s32.totalorder %s106, 1
      %p250 = scmp.ne.s32.totalorder %s245, %s247
      %p251 = scmp.eq.s32.totalorder %s106, 0
      %p252 = por %p250, %p251
      %p253 = scmp.ne.s32.totalorder %s245, %s247
      %p254 = scmp.eq.s32.totalorder %s111, 1
      %p255 = por %p253, %p254
      %p256 = scmp.ne.s32.totalorder %s247, %s248
      %p257 = scmp.eq.s32.totalorder %s111, 0
      %p258 = por %p256, %p257
      %p259 = scmp.ne.s32.totalorder %s247, %s248
      %p260 = scmp.eq.s32.totalorder %s112, 1
      %p261 = por %p259, %p260
      %p263 = scmp.ne.s32.totalorder %s248, %s262
      %p264 = scmp.eq.s32.totalorder %s112, 0
      %p265 = por %p263, %p264
      %s267 = sadd.s32 %s266, 1
      %p270 = scmp.eq.s32.totalorder %s106, 1
      %p271 = scmp.ne.s32.totalorder %s266, %s268
      %p272 = scmp.eq.s32.totalorder %s106, 0
      %p273 = por %p271, %p272
      %p274 = scmp.ne.s32.totalorder %s266, %s268
      %p275 = scmp.eq.s32.totalorder %s111, 1
      %p276 = por %p274, %p275
      %p277 = scmp.ne.s32.totalorder %s268, %s269
      %p278 = scmp.eq.s32.totalorder %s111, 0
      %p279 = por %p277, %p278
      %p280 = scmp.ne.s32.totalorder %s268, %s269
      %p281 = scmp.eq.s32.totalorder %s112, 1
      %p282 = por %p280, %p281
      %p284 = scmp.ne.s32.totalorder %s269, %s283
      %p285 = scmp.eq.s32.totalorder %s112, 0
      %p286 = por %p284, %p285
      %s288 = sadd.s32 %s287, 1
      %p291 = scmp.eq.s32.totalorder %s106, 1
      %p292 = scmp.ne.s32.totalorder %s287, %s289
      %p293 = scmp.eq.s32.totalorder %s106, 0
      %p294 = por %p292, %p293
      %p295 = scmp.ne.s32.totalorder %s287, %s289
      %p296 = scmp.eq.s32.totalorder %s111, 1
      %p297 = por %p295, %p296
      %p298 = scmp.ne.s32.totalorder %s289, %s290
      %p299 = scmp.eq.s32.totalorder %s111, 0
      %p300 = por %p298, %p299
      %p301 = scmp.ne.s32.totalorder %s289, %s290
      %p302 = scmp.eq.s32.totalorder %s112, 1
      %p303 = por %p301, %p302
      %p305 = scmp.ne.s32.totalorder %s290, %s304
      %p306 = scmp.eq.s32.totalorder %s112, 0
      %p307 = por %p305, %p306
      %s309 = sadd.s32 %s308, 1
      %p312 = scmp.eq.s32.totalorder %s106, 1
      %p313 = scmp.ne.s32.totalorder %s308, %s310
      %p314 = scmp.eq.s32.totalorder %s106, 0
      %p315 = por %p313, %p314
      %p316 = scmp.ne.s32.totalorder %s308, %s310
      %p317 = scmp.eq.s32.totalorder %s111, 1
      %p318 = por %p316, %p317
      %p319 = scmp.ne.s32.totalorder %s310, %s311
      %p320 = scmp.eq.s32.totalorder %s111, 0
      %p321 = por %p319, %p320
      %p322 = scmp.ne.s32.totalorder %s310, %s311
      %p323 = scmp.eq.s32.totalorder %s112, 1
      %p324 = por %p322, %p323
      %p326 = scmp.ne.s32.totalorder %s311, %s325
      %p327 = scmp.eq.s32.totalorder %s112, 0
      %p328 = por %p326, %p327
      %s330 = sadd.s32 %s329, 1
      %p333 = scmp.eq.s32.totalorder %s106, 1
      %p334 = scmp.ne.s32.totalorder %s329, %s331
      %p335 = scmp.eq.s32.totalorder %s106, 0
      %p336 = por %p334, %p335
      %p337 = scmp.ne.s32.totalorder %s329, %s331
      %p338 = scmp.eq.s32.totalorder %s111, 1
      %p339 = por %p337, %p338
      %p340 = scmp.ne.s32.totalorder %s331, %s332
      %p341 = scmp.eq.s32.totalorder %s111, 0
      %p342 = por %p340, %p341
      %p343 = scmp.ne.s32.totalorder %s331, %s332
      %p344 = scmp.eq.s32.totalorder %s112, 1
      %p345 = por %p343, %p344
      %p347 = scmp.ne.s32.totalorder %s332, %s346
      %p348 = scmp.eq.s32.totalorder %s112, 0
      %p349 = por %p347, %p348
      %s351 = sadd.s32 %s350, 1
      %p354 = scmp.eq.s32.totalorder %s106, 1
      %p355 = scmp.ne.s32.totalorder %s350, %s352
      %p356 = scmp.eq.s32.totalorder %s106, 0
      %p357 = por %p355, %p356
      %p358 = scmp.ne.s32.totalorder %s350, %s352
      %p359 = scmp.eq.s32.totalorder %s111, 1
      %p360 = por %p358, %p359
      %p361 = scmp.ne.s32.totalorder %s352, %s353
      %p362 = scmp.eq.s32.totalorder %s111, 0
      %p363 = por %p361, %p362
      %p364 = scmp.ne.s32.totalorder %s352, %s353
      %p365 = scmp.eq.s32.totalorder %s112, 1
      %p366 = por %p364, %p365
      %p368 = scmp.ne.s32.totalorder %s353, %s367
      %p369 = scmp.eq.s32.totalorder %s112, 0
      %p370 = por %p368, %p369
      %s372 = sadd.s32 %s371, 1
      %p375 = scmp.eq.s32.totalorder %s106, 1
      %p376 = scmp.ne.s32.totalorder %s371, %s373
      %p377 = scmp.eq.s32.totalorder %s106, 0
      %p378 = por %p376, %p377
      %p379 = scmp.ne.s32.totalorder %s371, %s373
      %p380 = scmp.eq.s32.totalorder %s111, 1
      %p381 = por %p379, %p380
      %p382 = scmp.ne.s32.totalorder %s373, %s374
      %p383 = scmp.eq.s32.totalorder %s111, 0
      %p384 = por %p382, %p383
      %p385 = scmp.ne.s32.totalorder %s373, %s374
      %p386 = scmp.eq.s32.totalorder %s112, 1
      %p387 = por %p385, %p386
      %p389 = scmp.ne.s32.totalorder %s374, %s388
      %p390 = scmp.eq.s32.totalorder %s112, 0
      %p391 = por %p389, %p390
      %s393 = sadd.s32 %s392, 1
      %p396 = scmp.eq.s32.totalorder %s106, 1
      %p397 = scmp.ne.s32.totalorder %s392, %s394
      %p398 = scmp.eq.s32.totalorder %s106, 0
      %p399 = por %p397, %p398
      %p400 = scmp.ne.s32.totalorder %s392, %s394
      %p401 = scmp.eq.s32.totalorder %s111, 1
      %p402 = por %p400, %p401
      %p403 = scmp.ne.s32.totalorder %s394, %s395
      %p404 = scmp.eq.s32.totalorder %s111, 0
      %p405 = por %p403, %p404
      %p406 = scmp.ne.s32.totalorder %s394, %s395
      %p407 = scmp.eq.s32.totalorder %s112, 1
      %p408 = por %p406, %p407
      %p410 = scmp.ne.s32.totalorder %s395, %s409
      %p411 = scmp.eq.s32.totalorder %s112, 0
      %p412 = por %p410, %p411
      %s414 = sadd.s32 %s413, 1
      %p417 = scmp.eq.s32.totalorder %s106, 1
      %p418 = scmp.ne.s32.totalorder %s413, %s415
      %p419 = scmp.eq.s32.totalorder %s106, 0
      %p420 = por %p418, %p419
      %p421 = scmp.ne.s32.totalorder %s413, %s415
      %p422 = scmp.eq.s32.totalorder %s111, 1
      %p423 = por %p421, %p422
      %p424 = scmp.ne.s32.totalorder %s415, %s416
      %p425 = scmp.eq.s32.totalorder %s111, 0
      %p426 = por %p424, %p425
      %p427 = scmp.ne.s32.totalorder %s415, %s416
      %p428 = scmp.eq.s32.totalorder %s112, 1
      %p429 = por %p427, %p428
      %p431 = scmp.ne.s32.totalorder %s416, %s430
      %p432 = scmp.eq.s32.totalorder %s112, 0
      %p433 = por %p431, %p432
      %s435 = sadd.s32 %s434, 1
      %p438 = scmp.eq.s32.totalorder %s106, 1
      %p439 = scmp.ne.s32.totalorder %s434, %s436
      %p440 = scmp.eq.s32.totalorder %s106, 0
      %p441 = por %p439, %p440
      %p442 = scmp.ne.s32.totalorder %s434, %s436
      %p443 = scmp.eq.s32.totalorder %s111, 1
      %p444 = por %p442, %p443
      %p445 = scmp.ne.s32.totalorder %s436, %s437
      %p446 = scmp.eq.s32.totalorder %s111, 0
      %p447 = por %p445, %p446
      %p448 = scmp.ne.s32.totalorder %s436, %s437
      %p449 = scmp.eq.s32.totalorder %s112, 1
      %p450 = por %p448, %p449
      %p452 = scmp.ne.s32.totalorder %s437, %s451
      %p453 = scmp.eq.s32.totalorder %s112, 0
      %p454 = por %p452, %p453
      %s456 = sadd.s32 %s455, 1
      %p459 = scmp.eq.s32.totalorder %s106, 1
      %p460 = scmp.ne.s32.totalorder %s455, %s457
      %p461 = scmp.eq.s32.totalorder %s106, 0
      %p462 = por %p460, %p461
      %p463 = scmp.ne.s32.totalorder %s455, %s457
      %p464 = scmp.eq.s32.totalorder %s111, 1
      %p465 = por %p463, %p464
      %p466 = scmp.ne.s32.totalorder %s457, %s458
      %p467 = scmp.eq.s32.totalorder %s111, 0
      %p468 = por %p466, %p467
      %p469 = scmp.ne.s32.totalorder %s457, %s458
      %p470 = scmp.eq.s32.totalorder %s112, 1
      %p471 = por %p469, %p470
      %p473 = scmp.ne.s32.totalorder %s458, %s472
      %p474 = scmp.eq.s32.totalorder %s112, 0
      %p475 = por %p473, %p474
      %s477 = sadd.s32 %s476, 1
      %p480 = scmp.eq.s32.totalorder %s106, 1
      %p481 = scmp.ne.s32.totalorder %s476, %s478
      %p482 = scmp.eq.s32.totalorder %s106, 0
      %p483 = por %p481, %p482
      %p484 = scmp.ne.s32.totalorder %s476, %s478
      %p485 = scmp.eq.s32.totalorder %s111, 1
      %p486 = por %p484, %p485
      %p487 = scmp.ne.s32.totalorder %s478, %s479
      %p488 = scmp.eq.s32.totalorder %s111, 0
      %p489 = por %p487, %p488
      %p490 = scmp.ne.s32.totalorder %s478, %s479
      %p491 = scmp.eq.s32.totalorder %s112, 1
      %p492 = por %p490, %p491
      %p494 = scmp.ne.s32.totalorder %s479, %s493
      %p495 = scmp.eq.s32.totalorder %s112, 0
      %p496 = por %p494, %p495
      %s498 = sadd.s32 %s497, 1
      %p501 = scmp.eq.s32.totalorder %s106, 1
      %p502 = scmp.ne.s32.totalorder %s497, %s499
      %p503 = scmp.eq.s32.totalorder %s106, 0
      %p504 = por %p502, %p503
      %p505 = scmp.ne.s32.totalorder %s497, %s499
      %p506 = scmp.eq.s32.totalorder %s111, 1
      %p507 = por %p505, %p506
      %p508 = scmp.ne.s32.totalorder %s499, %s500
      %p509 = scmp.eq.s32.totalorder %s111, 0
      %p510 = por %p508, %p509
      %p511 = scmp.ne.s32.totalorder %s499, %s500
      %p512 = scmp.eq.s32.totalorder %s112, 1
      %p513 = por %p511, %p512
      %p515 = scmp.ne.s32.totalorder %s500, %s514
      %p516 = scmp.eq.s32.totalorder %s112, 0
      %p517 = por %p515, %p516
      %s519 = sadd.s32 %s518, 1
      %p522 = scmp.eq.s32.totalorder %s106, 1
      %p523 = scmp.ne.s32.totalorder %s518, %s520
      %p524 = scmp.eq.s32.totalorder %s106, 0
      %p525 = por %p523, %p524
      %p526 = scmp.ne.s32.totalorder %s518, %s520
      %p527 = scmp.eq.s32.totalorder %s111, 1
      %p528 = por %p526, %p527
      %p529 = scmp.ne.s32.totalorder %s520, %s521
      %p530 = scmp.eq.s32.totalorder %s111, 0
      %p531 = por %p529, %p530
      %p532 = scmp.ne.s32.totalorder %s520, %s521
      %p533 = scmp.eq.s32.totalorder %s112, 1
      %p534 = por %p532, %p533
      %p536 = scmp.ne.s32.totalorder %s521, %s535
      %p537 = scmp.eq.s32.totalorder %s112, 0
      %p538 = por %p536, %p537
      %s540 = sadd.s32 %s539, 1
      %p543 = scmp.eq.s32.totalorder %s106, 1
      %p544 = scmp.ne.s32.totalorder %s539, %s541
      %p545 = scmp.eq.s32.totalorder %s106, 0
      %p546 = por %p544, %p545
      %p547 = scmp.ne.s32.totalorder %s539, %s541
      %p548 = scmp.eq.s32.totalorder %s111, 1
      %p549 = por %p547, %p548
      %p550 = scmp.ne.s32.totalorder %s541, %s542
      %p551 = scmp.eq.s32.totalorder %s111, 0
      %p552 = por %p550, %p551
      %p553 = scmp.ne.s32.totalorder %s541, %s542
      %p554 = scmp.eq.s32.totalorder %s112, 1
      %p555 = por %p553, %p554
      %p557 = scmp.ne.s32.totalorder %s542, %s556
      %p558 = scmp.eq.s32.totalorder %s112, 0
      %p559 = por %p557, %p558
      %s561 = sadd.s32 %s560, 1
      %p564 = scmp.eq.s32.totalorder %s106, 1
      %p565 = scmp.ne.s32.totalorder %s560, %s562
      %p566 = scmp.eq.s32.totalorder %s106, 0
      %p567 = por %p565, %p566
      %p568 = scmp.ne.s32.totalorder %s560, %s562
      %p569 = scmp.eq.s32.totalorder %s111, 1
      %p570 = por %p568, %p569
      %p571 = scmp.ne.s32.totalorder %s562, %s563
      %p572 = scmp.eq.s32.totalorder %s111, 0
      %p573 = por %p571, %p572
      %p574 = scmp.ne.s32.totalorder %s562, %s563
      %p575 = scmp.eq.s32.totalorder %s112, 1
      %p576 = por %p574, %p575
      %p578 = scmp.ne.s32.totalorder %s563, %s577
      %p579 = scmp.eq.s32.totalorder %s112, 0
      %p580 = por %p578, %p579
      %s582 = sadd.s32 %s581, 1
      %p585 = scmp.eq.s32.totalorder %s106, 1
      %p586 = scmp.ne.s32.totalorder %s581, %s583
      %p587 = scmp.eq.s32.totalorder %s106, 0
      %p588 = por %p586, %p587
      %p589 = scmp.ne.s32.totalorder %s581, %s583
      %p590 = scmp.eq.s32.totalorder %s111, 1
      %p591 = por %p589, %p590
      %p592 = scmp.ne.s32.totalorder %s583, %s584
      %p593 = scmp.eq.s32.totalorder %s111, 0
      %p594 = por %p592, %p593
      %p595 = scmp.ne.s32.totalorder %s583, %s584
      %p596 = scmp.eq.s32.totalorder %s112, 1
      %p597 = por %p595, %p596
      %p599 = scmp.ne.s32.totalorder %s584, %s598
      %p600 = scmp.eq.s32.totalorder %s112, 0
      %p601 = por %p599, %p600
      %s603 = sadd.s32 %s602, 1
      %p606 = scmp.eq.s32.totalorder %s106, 1
      %p607 = scmp.ne.s32.totalorder %s602, %s604
      %p608 = scmp.eq.s32.totalorder %s106, 0
      %p609 = por %p607, %p608
      %p610 = scmp.ne.s32.totalorder %s602, %s604
      %p611 = scmp.eq.s32.totalorder %s111, 1
      %p612 = por %p610, %p611
      %p613 = scmp.ne.s32.totalorder %s604, %s605
      %p614 = scmp.eq.s32.totalorder %s111, 0
      %p615 = por %p613, %p614
      %p616 = scmp.ne.s32.totalorder %s604, %s605
      %p617 = scmp.eq.s32.totalorder %s112, 1
      %p618 = por %p616, %p617
      %p620 = scmp.ne.s32.totalorder %s605, %s619
      %p621 = scmp.eq.s32.totalorder %s112, 0
      %p622 = por %p620, %p621
      %s624 = sadd.s32 %s623, 1
      %p627 = scmp.eq.s32.totalorder %s106, 1
      %p628 = scmp.ne.s32.totalorder %s623, %s625
      %p629 = scmp.eq.s32.totalorder %s106, 0
      %p630 = por %p628, %p629
      %p631 = scmp.ne.s32.totalorder %s623, %s625
      %p632 = scmp.eq.s32.totalorder %s111, 1
      %p633 = por %p631, %p632
      %p634 = scmp.ne.s32.totalorder %s625, %s626
      %p635 = scmp.eq.s32.totalorder %s111, 0
      %p636 = por %p634, %p635
      %p637 = scmp.ne.s32.totalorder %s625, %s626
      %p638 = scmp.eq.s32.totalorder %s112, 1
      %p639 = por %p637, %p638
      %p641 = scmp.ne.s32.totalorder %s626, %s640
      %p642 = scmp.eq.s32.totalorder %s112, 0
      %p643 = por %p641, %p642
      %s645 = sadd.s32 %s644, 1
      %p648 = scmp.eq.s32.totalorder %s106, 1
      %p649 = scmp.ne.s32.totalorder %s644, %s646
      %p650 = scmp.eq.s32.totalorder %s106, 0
      %p651 = por %p649, %p650
      %p652 = scmp.ne.s32.totalorder %s644, %s646
      %p653 = scmp.eq.s32.totalorder %s111, 1
      %p654 = por %p652, %p653
      %p655 = scmp.ne.s32.totalorder %s646, %s647
      %p656 = scmp.eq.s32.totalorder %s111, 0
      %p657 = por %p655, %p656
      %p658 = scmp.ne.s32.totalorder %s646, %s647
      %p659 = scmp.eq.s32.totalorder %s112, 1
      %p660 = por %p658, %p659
      %p662 = scmp.ne.s32.totalorder %s647, %s661
      %p663 = scmp.eq.s32.totalorder %s112, 0
      %p664 = por %p662, %p663
      %s666 = sadd.s32 %s665, 1
      %p669 = scmp.eq.s32.totalorder %s106, 1
      %p670 = scmp.ne.s32.totalorder %s665, %s667
      %p671 = scmp.eq.s32.totalorder %s106, 0
      %p672 = por %p670, %p671
      %p673 = scmp.ne.s32.totalorder %s665, %s667
      %p674 = scmp.eq.s32.totalorder %s111, 1
      %p675 = por %p673, %p674
      %p676 = scmp.ne.s32.totalorder %s667, %s668
      %p677 = scmp.eq.s32.totalorder %s111, 0
      %p678 = por %p676, %p677
      %p679 = scmp.ne.s32.totalorder %s667, %s668
      %p680 = scmp.eq.s32.totalorder %s112, 1
      %p681 = por %p679, %p680
      %p683 = scmp.ne.s32.totalorder %s668, %s682
      %p684 = scmp.eq.s32.totalorder %s112, 0
      %p685 = por %p683, %p684
      %s687 = sadd.s32 %s686, 1
      %p690 = scmp.eq.s32.totalorder %s106, 1
      %p691 = scmp.ne.s32.totalorder %s686, %s688
      %p692 = scmp.eq.s32.totalorder %s106, 0
      %p693 = por %p691, %p692
      %p694 = scmp.ne.s32.totalorder %s686, %s688
      %p695 = scmp.eq.s32.totalorder %s111, 1
      %p696 = por %p694, %p695
      %p697 = scmp.ne.s32.totalorder %s688, %s689
      %p698 = scmp.eq.s32.totalorder %s111, 0
      %p699 = por %p697, %p698
      %p700 = scmp.ne.s32.totalorder %s688, %s689
      %p701 = scmp.eq.s32.totalorder %s112, 1
      %p702 = por %p700, %p701
      %p704 = scmp.ne.s32.totalorder %s689, %s703
      %p705 = scmp.eq.s32.totalorder %s112, 0
      %p706 = por %p704, %p705
      %s708 = sadd.s32 %s707, 1
      %p711 = scmp.eq.s32.totalorder %s106, 1
      %p712 = scmp.ne.s32.totalorder %s707, %s709
      %p713 = scmp.eq.s32.totalorder %s106, 0
      %p714 = por %p712, %p713
      %p715 = scmp.ne.s32.totalorder %s707, %s709
      %p716 = scmp.eq.s32.totalorder %s111, 1
      %p717 = por %p715, %p716
      %p718 = scmp.ne.s32.totalorder %s709, %s710
      %p719 = scmp.eq.s32.totalorder %s111, 0
      %p720 = por %p718, %p719
      %p721 = scmp.ne.s32.totalorder %s709, %s710
      %p722 = scmp.eq.s32.totalorder %s112, 1
      %p723 = por %p721, %p722
      %p725 = scmp.ne.s32.totalorder %s710, %s724
      %p726 = scmp.eq.s32.totalorder %s112, 0
      %p727 = por %p725, %p726
      %s729 = sadd.s32 %s728, 1
      %p732 = scmp.eq.s32.totalorder %s106, 1
      %p733 = scmp.ne.s32.totalorder %s728, %s730
      %p734 = scmp.eq.s32.totalorder %s106, 0
      %p735 = por %p733, %p734
      %p736 = scmp.ne.s32.totalorder %s728, %s730
      %p737 = scmp.eq.s32.totalorder %s111, 1
      %p738 = por %p736, %p737
      %p739 = scmp.ne.s32.totalorder %s730, %s731
      %p740 = scmp.eq.s32.totalorder %s111, 0
      %p741 = por %p739, %p740
      %p742 = scmp.ne.s32.totalorder %s730, %s731
      %p743 = scmp.eq.s32.totalorder %s112, 1
      %p744 = por %p742, %p743
      %p746 = scmp.ne.s32.totalorder %s731, %s745
      %p747 = scmp.eq.s32.totalorder %s112, 0
      %p748 = por %p746, %p747
      %s750 = sadd.s32 %s749, 1
      %p753 = scmp.eq.s32.totalorder %s106, 1
      %p754 = scmp.ne.s32.totalorder %s749, %s751
      %p755 = scmp.eq.s32.totalorder %s106, 0
      %p756 = por %p754, %p755
      %p757 = scmp.ne.s32.totalorder %s749, %s751
      %p758 = scmp.eq.s32.totalorder %s111, 1
      %p759 = por %p757, %p758
      %p760 = scmp.ne.s32.totalorder %s751, %s752
      %p761 = scmp.eq.s32.totalorder %s111, 0
      %p762 = por %p760, %p761
      %p763 = scmp.ne.s32.totalorder %s751, %s752
      %p764 = scmp.eq.s32.totalorder %s112, 1
      %p765 = por %p763, %p764
      %p767 = scmp.ne.s32.totalorder %s752, %s766
      %p768 = scmp.eq.s32.totalorder %s112, 0
      %p769 = por %p767, %p768
      %s771 = sadd.s32 %s770, 1
      %p774 = scmp.eq.s32.totalorder %s106, 1
      %p775 = scmp.ne.s32.totalorder %s770, %s772
      %p776 = scmp.eq.s32.totalorder %s106, 0
      %p777 = por %p775, %p776
      %p778 = scmp.ne.s32.totalorder %s770, %s772
      %p779 = scmp.eq.s32.totalorder %s111, 1
      %p780 = por %p778, %p779
      %p781 = scmp.ne.s32.totalorder %s772, %s773
      %p782 = scmp.eq.s32.totalorder %s111, 0
      %p783 = por %p781, %p782
      %p784 = scmp.ne.s32.totalorder %s772, %s773
      %p785 = scmp.eq.s32.totalorder %s112, 1
      %p786 = por %p784, %p785
      %p788 = scmp.ne.s32.totalorder %s773, %s787
      %p789 = scmp.eq.s32.totalorder %s112, 0
      %p790 = por %p788, %p789
      %s792 = sadd.s32 %s791, 1
      %p795 = scmp.eq.s32.totalorder %s106, 1
      %p796 = scmp.ne.s32.totalorder %s791, %s793
      %p797 = scmp.eq.s32.totalorder %s106, 0
      %p798 = por %p796, %p797
      %p799 = scmp.ne.s32.totalorder %s791, %s793
      %p800 = scmp.eq.s32.totalorder %s111, 1
      %p801 = por %p799, %p800
      %p802 = scmp.ne.s32.totalorder %s793, %s794
      %p803 = scmp.eq.s32.totalorder %s111, 0
      %p804 = por %p802, %p803
      %p805 = scmp.ne.s32.totalorder %s793, %s794
      %p806 = scmp.eq.s32.totalorder %s112, 1
      %p807 = por %p805, %p806
      %p809 = scmp.ne.s32.totalorder %s794, %s808
      %p810 = scmp.eq.s32.totalorder %s112, 0
      %p811 = por %p809, %p810
      %s813 = sadd.s32 %s812, 1
      %p816 = scmp.eq.s32.totalorder %s106, 1
      %p817 = scmp.ne.s32.totalorder %s812, %s814
      %p818 = scmp.eq.s32.totalorder %s106, 0
      %p819 = por %p817, %p818
      %p820 = scmp.ne.s32.totalorder %s812, %s814
      %p821 = scmp.eq.s32.totalorder %s111, 1
      %p822 = por %p820, %p821
      %p823 = scmp.ne.s32.totalorder %s814, %s815
      %p824 = scmp.eq.s32.totalorder %s111, 0
      %p825 = por %p823, %p824
      %p826 = scmp.ne.s32.totalorder %s814, %s815
      %p827 = scmp.eq.s32.totalorder %s112, 1
      %p828 = por %p826, %p827
      %p830 = scmp.ne.s32.totalorder %s815, %s829
      %p831 = scmp.eq.s32.totalorder %s112, 0
      %p832 = por %p830, %p831
      %s834 = sadd.s32 %s833, 1
      %p837 = scmp.eq.s32.totalorder %s106, 1
      %p838 = scmp.ne.s32.totalorder %s833, %s835
      %p839 = scmp.eq.s32.totalorder %s106, 0
      %p840 = por %p838, %p839
      %p841 = scmp.ne.s32.totalorder %s833, %s835
      %p842 = scmp.eq.s32.totalorder %s111, 1
      %p843 = por %p841, %p842
      %p844 = scmp.ne.s32.totalorder %s835, %s836
      %p845 = scmp.eq.s32.totalorder %s111, 0
      %p846 = por %p844, %p845
      %p847 = scmp.ne.s32.totalorder %s835, %s836
      %p848 = scmp.eq.s32.totalorder %s112, 1
      %p849 = por %p847, %p848
      %p851 = scmp.ne.s32.totalorder %s836, %s850
      %p852 = scmp.eq.s32.totalorder %s112, 0
      %p853 = por %p851, %p852
      %s855 = sadd.s32 %s854, 1
      %p858 = scmp.eq.s32.totalorder %s106, 1
      %p859 = scmp.ne.s32.totalorder %s854, %s856
      %p860 = scmp.eq.s32.totalorder %s106, 0
      %p861 = por %p859, %p860
      %p862 = scmp.ne.s32.totalorder %s854, %s856
      %p863 = scmp.eq.s32.totalorder %s111, 1
      %p864 = por %p862, %p863
      %p865 = scmp.ne.s32.totalorder %s856, %s857
      %p866 = scmp.eq.s32.totalorder %s111, 0
      %p867 = por %p865, %p866
      %p868 = scmp.ne.s32.totalorder %s856, %s857
      %p869 = scmp.eq.s32.totalorder %s112, 1
      %p870 = por %p868, %p869
      %p872 = scmp.ne.s32.totalorder %s857, %s871
      %p873 = scmp.eq.s32.totalorder %s112, 0
      %p874 = por %p872, %p873
      %s876 = sadd.s32 %s875, 1
      %p879 = scmp.eq.s32.totalorder %s106, 1
      %p880 = scmp.ne.s32.totalorder %s875, %s877
      %p881 = scmp.eq.s32.totalorder %s106, 0
      %p882 = por %p880, %p881
      %p883 = scmp.ne.s32.totalorder %s875, %s877
      %p884 = scmp.eq.s32.totalorder %s111, 1
      %p885 = por %p883, %p884
      %p886 = scmp.ne.s32.totalorder %s877, %s878
      %p887 = scmp.eq.s32.totalorder %s111, 0
      %p888 = por %p886, %p887
      %p889 = scmp.ne.s32.totalorder %s877, %s878
      %p890 = scmp.eq.s32.totalorder %s112, 1
      %p891 = por %p889, %p890
      %p893 = scmp.ne.s32.totalorder %s878, %s892
      %p894 = scmp.eq.s32.totalorder %s112, 0
      %p895 = por %p893, %p894
      %s897 = sadd.s32 %s896, 1
      %p900 = scmp.eq.s32.totalorder %s106, 1
      %p901 = scmp.ne.s32.totalorder %s896, %s898
      %p902 = scmp.eq.s32.totalorder %s106, 0
      %p903 = por %p901, %p902
      %p904 = scmp.ne.s32.totalorder %s896, %s898
      %p905 = scmp.eq.s32.totalorder %s111, 1
      %p906 = por %p904, %p905
      %p907 = scmp.ne.s32.totalorder %s898, %s899
      %p908 = scmp.eq.s32.totalorder %s111, 0
      %p909 = por %p907, %p908
      %p910 = scmp.ne.s32.totalorder %s898, %s899
      %p911 = scmp.eq.s32.totalorder %s112, 1
      %p912 = por %p910, %p911
      %p914 = scmp.ne.s32.totalorder %s899, %s913
      %p915 = scmp.eq.s32.totalorder %s112, 0
      %p916 = por %p914, %p915
      %s918 = sadd.s32 %s917, 1
      %p921 = scmp.eq.s32.totalorder %s106, 1
      %p922 = scmp.ne.s32.totalorder %s917, %s919
      %p923 = scmp.eq.s32.totalorder %s106, 0
      %p924 = por %p922, %p923
      %p925 = scmp.ne.s32.totalorder %s917, %s919
      %p926 = scmp.eq.s32.totalorder %s111, 1
      %p927 = por %p925, %p926
      %p928 = scmp.ne.s32.totalorder %s919, %s920
      %p929 = scmp.eq.s32.totalorder %s111, 0
      %p930 = por %p928, %p929
      %p931 = scmp.ne.s32.totalorder %s919, %s920
      %p932 = scmp.eq.s32.totalorder %s112, 1
      %p933 = por %p931, %p932
      %p935 = scmp.ne.s32.totalorder %s920, %s934
      %p936 = scmp.eq.s32.totalorder %s112, 0
      %p937 = por %p935, %p936
      %s939 = sadd.s32 %s938, 1
      %p942 = scmp.eq.s32.totalorder %s106, 1
      %p943 = scmp.ne.s32.totalorder %s938, %s940
      %p944 = scmp.eq.s32.totalorder %s106, 0
      %p945 = por %p943, %p944
      %p946 = scmp.ne.s32.totalorder %s938, %s940
      %p947 = scmp.eq.s32.totalorder %s111, 1
      %p948 = por %p946, %p947
      %p949 = scmp.ne.s32.totalorder %s940, %s941
      %p950 = scmp.eq.s32.totalorder %s111, 0
      %p951 = por %p949, %p950
      %p952 = scmp.ne.s32.totalorder %s940, %s941
      %p953 = scmp.eq.s32.totalorder %s112, 1
      %p954 = por %p952, %p953
      %p956 = scmp.ne.s32.totalorder %s941, %s955
      %p957 = scmp.eq.s32.totalorder %s112, 0
      %p958 = por %p956, %p957
      %s960 = sadd.s32 %s959, 1
      %p963 = scmp.eq.s32.totalorder %s106, 1
      %p964 = scmp.ne.s32.totalorder %s959, %s961
      %p965 = scmp.eq.s32.totalorder %s106, 0
      %p966 = por %p964, %p965
      %p967 = scmp.ne.s32.totalorder %s959, %s961
      %p968 = scmp.eq.s32.totalorder %s111, 1
      %p969 = por %p967, %p968
      %p970 = scmp.ne.s32.totalorder %s961, %s962
      %p971 = scmp.eq.s32.totalorder %s111, 0
      %p972 = por %p970, %p971
      %p973 = scmp.ne.s32.totalorder %s961, %s962
      %p974 = scmp.eq.s32.totalorder %s112, 1
      %p975 = por %p973, %p974
      %p977 = scmp.ne.s32.totalorder %s962, %s976
      %p978 = scmp.eq.s32.totalorder %s112, 0
      %p979 = por %p977, %p978
      %s981 = sadd.s32 %s980, 1
      %p984 = scmp.eq.s32.totalorder %s106, 1
      %p985 = scmp.ne.s32.totalorder %s980, %s982
      %p986 = scmp.eq.s32.totalorder %s106, 0
      %p987 = por %p985, %p986
      %p988 = scmp.ne.s32.totalorder %s980, %s982
      %p989 = scmp.eq.s32.totalorder %s111, 1
      %p990 = por %p988, %p989
      %p991 = scmp.ne.s32.totalorder %s982, %s983
      %p992 = scmp.eq.s32.totalorder %s111, 0
      %p993 = por %p991, %p992
      %p994 = scmp.ne.s32.totalorder %s982, %s983
      %p995 = scmp.eq.s32.totalorder %s112, 1
      %p996 = por %p994, %p995
      %p998 = scmp.ne.s32.totalorder %s983, %s997
      %p999 = scmp.eq.s32.totalorder %s112, 0
      %p1000 = por %p998, %p999
      %s1001 = ssub.s32 %s106, %s113
      %p1002 = scmp.eq.s32.totalorder %s1001, 0
      %s1004 = sadd.s32 %s1003, 1
      %s1005 = scalar_select %p1002, %s1003, %s1004
      %p1008 = pneg %p1002
      %p1009 = scmp.eq.s32.totalorder %s106, 1
      %p1010 = por %p1008, %p1009
      %p1011 = scmp.ne.s32.totalorder %s1003, %s1006
      %p1012 = scmp.eq.s32.totalorder %s106, 0
      %p1013 = por %p1011, %p1012
      %p1014 = scmp.ne.s32.totalorder %s1003, %s1006
      %p1015 = scmp.eq.s32.totalorder %s111, 1
      %p1016 = por %p1014, %p1015
      %p1017 = scmp.ne.s32.totalorder %s1006, %s1007
      %p1018 = scmp.eq.s32.totalorder %s111, 0
      %p1019 = por %p1017, %p1018
      %p1020 = scmp.ne.s32.totalorder %s1006, %s1007
      %p1021 = scmp.eq.s32.totalorder %s112, 1
      %p1022 = por %p1020, %p1021
      %p1024 = scmp.ne.s32.totalorder %s1007, %s1023
      %p1025 = scmp.eq.s32.totalorder %s112, 0
      %p1026 = por %p1024, %p1025
      %p1027 = scmp.le.s32.totalorder 1, %s106
      %p1028 = scmp.lt.s32.totalorder %s106, 3
      %p1029 = pnand %p1027, %p1028
      %p1030 = pneg %p1029
      // Predicated region
      $region9: #{tpu_custom_call.1} parent=5 // pred_check
        _
      $region10: #{tpu_custom_call.1} parent=5 // pred_check_branch
        %1032 = sbr.rel (%p1029) target = $region12
      $region11: #{tpu_custom_call.1} parent=5 // pred_region
        %s1033 = ssub.s32 %s106, 1
        // Predicated region
        $region13: #{tpu_custom_call.1} parent=11 // pred_check
          %p1034 = pneg %p153
        $region14: #{tpu_custom_call.1} parent=11 // pred_check_branch
          %1036 = sbr.rel (%p1034) target = $region16
        $region15: #{tpu_custom_call.1} parent=11 // pred_region
          %s1038 = ssub.s32 128, 128
          %1039 = vsyncadd [#allocation6], %s1038
          %s1041 = sshll.u32 [#allocation5], 4
          %s1042 = int_to_ptr.vmem [resolvable:$true] %s1041
          %1044 = dma.hbm_to_vmem [thread:$0]  %s3, 128, %s1042, [#allocation6]
        $region16: #{tpu_custom_call.1} parent=11 // pred_fallthru
          _
        // Predicated region
        $region17: #{tpu_custom_call.1} parent=11 // pred_check
          %p1045 = pneg %p174
        $region18: #{tpu_custom_call.1} parent=11 // pred_check_branch
          %1047 = sbr.rel (%p1045) target = $region20
        $region19: #{tpu_custom_call.1} parent=11 // pred_region
          _
        $region20: #{tpu_custom_call.1} parent=11 // pred_fallthru
          _
        // Predicated region
        $region21: #{tpu_custom_call.1} parent=11 // pred_check
          %p1048 = pneg %p195
        $region22: #{tpu_custom_call.1} parent=11 // pred_check_branch
          %1050 = sbr.rel (%p1048) target = $region24
        $region23: #{tpu_custom_call.1} parent=11 // pred_region
          _
        $region24: #{tpu_custom_call.1} parent=11 // pred_fallthru
          _
        // Predicated region
        $region25: #{tpu_custom_call.1} parent=11 // pred_check
          %p1051 = pneg %p216
        $region26: #{tpu_custom_call.1} parent=11 // pred_check_branch
          %1053 = sbr.rel (%p1051) target = $region28
        $region27: #{tpu_custom_call.1} parent=11 // pred_region
          _
        $region28: #{tpu_custom_call.1} parent=11 // pred_fallthru
          _
        // Predicated region
        $region29: #{tpu_custom_call.1} parent=11 // pred_check
          %p1054 = pneg %p237
        $region30: #{tpu_custom_call.1} parent=11 // pred_check_branch
          %1056 = sbr.rel (%p1054) target = $region32
        $region31: #{tpu_custom_call.1} parent=11 // pred_region
          %s1058 = ssub.s32 512, 512
          %1059 = vsyncadd [#allocation6], %s1058
          %s1060 = sshll.u32 [#allocation7], 4
          %s1061 = int_to_ptr.vmem [resolvable:$true] %s1060
          %1066 = dma.hbm_to_vmem [thread:$0]  %s11, 512, %s1061, [#allocation6], 128, 128, 8
        $region32: #{tpu_custom_call.1} parent=11 // pred_fallthru
          _
        // Predicated region
        $region33: #{tpu_custom_call.1} parent=11 // pred_check
          %p1067 = pneg %p258
        $region34: #{tpu_custom_call.1} parent=11 // pred_check_branch
          %1069 = sbr.rel (%p1067) target = $region36
        $region35: #{tpu_custom_call.1} parent=11 // pred_region
          _
        $region36: #{tpu_custom_call.1} parent=11 // pred_fallthru
          _
        // Predicated region
        $region37: #{tpu_custom_call.1} parent=11 // pred_check
          %p1070 = pneg %p279
        $region38: #{tpu_custom_call.1} parent=11 // pred_check_branch
          %1072 = sbr.rel (%p1070) target = $region40
        $region39: #{tpu_custom_call.1} parent=11 // pred_region
          %s1074 = ssub.s32 256, 256
          %1075 = vsyncadd [#allocation9], %s1074
          %s1076 = sshll.u32 [#allocation8], 4
          %s1077 = int_to_ptr.vmem [resolvable:$true] %s1076
          %1082 = dma.hbm_to_vmem [thread:$0]  %s15, 256, %s1077, [#allocation9], 128, 128, 8
        $region40: #{tpu_custom_call.1} parent=11 // pred_fallthru
          _
        // Predicated region
        $region41: #{tpu_custom_call.1} parent=11 // pred_check
          %p1083 = pneg %p300
        $region42: #{tpu_custom_call.1} parent=11 // pred_check_branch
          %1085 = sbr.rel (%p1083) target = $region44
        $region43: #{tpu_custom_call.1} parent=11 // pred_region
          %s1087 = ssub.s32 128, 128
          %1088 = vsyncadd [#allocation9], %s1087
          %s1090 = sshll.u32 [#allocation10], 4
          %s1091 = int_to_ptr.vmem [resolvable:$true] %s1090
          %1093 = dma.hbm_to_vmem [thread:$0]  %s17, 128, %s1091, [#allocation9]
        $region44: #{tpu_custom_call.1} parent=11 // pred_fallthru
          _
        // Predicated region
        $region45: #{tpu_custom_call.1} parent=11 // pred_check
          %p1094 = pneg %p321
        $region46: #{tpu_custom_call.1} parent=11 // pred_check_branch
          %1096 = sbr.rel (%p1094) target = $region48
        $region47: #{tpu_custom_call.1} parent=11 // pred_region
          _
        $region48: #{tpu_custom_call.1} parent=11 // pred_fallthru
          _
        // Predicated region
        $region49: #{tpu_custom_call.1} parent=11 // pred_check
          %p1097 = pneg %p342
        $region50: #{tpu_custom_call.1} parent=11 // pred_check_branch
          %1099 = sbr.rel (%p1097) target = $region52
        $region51: #{tpu_custom_call.1} parent=11 // pred_region
          _
        $region52: #{tpu_custom_call.1} parent=11 // pred_fallthru
          _
        // Predicated region
        $region53: #{tpu_custom_call.1} parent=11 // pred_check
          %p1100 = pneg %p363
        $region54: #{tpu_custom_call.1} parent=11 // pred_check_branch
          %1102 = sbr.rel (%p1100) target = $region56
        $region55: #{tpu_custom_call.1} parent=11 // pred_region
          %s1104 = ssub.s32 512, 512
          %1105 = vsyncadd [#allocation12], %s1104
          %s1106 = sshll.u32 [#allocation11], 4
          %s1107 = int_to_ptr.vmem [resolvable:$true] %s1106
          %1112 = dma.hbm_to_vmem [thread:$0]  %s23, 512, %s1107, [#allocation12], 128, 128, 8
        $region56: #{tpu_custom_call.1} parent=11 // pred_fallthru
          _
        // Predicated region
        $region57: #{tpu_custom_call.1} parent=11 // pred_check
          %p1113 = pneg %p384
        $region58: #{tpu_custom_call.1} parent=11 // pred_check_branch
          %1115 = sbr.rel (%p1113) target = $region60
        $region59: #{tpu_custom_call.1} parent=11 // pred_region
          %s1117 = ssub.s32 256, 256
          %1118 = vsyncadd [#allocation12], %s1117
          %s1119 = sshll.u32 [#allocation13], 4
          %s1120 = int_to_ptr.vmem [resolvable:$true] %s1119
          %1125 = dma.hbm_to_vmem [thread:$0]  %s25, 256, %s1120, [#allocation12], 128, 128, 8
        $region60: #{tpu_custom_call.1} parent=11 // pred_fallthru
          _
        // Predicated region
        $region61: #{tpu_custom_call.1} parent=11 // pred_check
          %p1126 = pneg %p405
        $region62: #{tpu_custom_call.1} parent=11 // pred_check_branch
          %1128 = sbr.rel (%p1126) target = $region64
        $region63: #{tpu_custom_call.1} parent=11 // pred_region
          %s1130 = ssub.s32 128, 128
          %1131 = vsyncadd [#allocation15], %s1130
          %s1133 = sshll.u32 [#allocation14], 4
          %s1134 = int_to_ptr.vmem [resolvable:$true] %s1133
          %1136 = dma.hbm_to_vmem [thread:$0]  %s27, 128, %s1134, [#allocation15]
        $region64: #{tpu_custom_call.1} parent=11 // pred_fallthru
          _
        // Predicated region
        $region65: #{tpu_custom_call.1} parent=11 // pred_check
          %p1137 = pneg %p426
        $region66: #{tpu_custom_call.1} parent=11 // pred_check_branch
          %1139 = sbr.rel (%p1137) target = $region68
        $region67: #{tpu_custom_call.1} parent=11 // pred_region
          _
        $region68: #{tpu_custom_call.1} parent=11 // pred_fallthru
          _
        // Predicated region
        $region69: #{tpu_custom_call.1} parent=11 // pred_check
          %p1140 = pneg %p447
        $region70: #{tpu_custom_call.1} parent=11 // pred_check_branch
          %1142 = sbr.rel (%p1140) target = $region72
        $region71: #{tpu_custom_call.1} parent=11 // pred_region
          _
        $region72: #{tpu_custom_call.1} parent=11 // pred_fallthru
          _
        // Predicated region
        $region73: #{tpu_custom_call.1} parent=11 // pred_check
          %p1143 = pneg %p468
        $region74: #{tpu_custom_call.1} parent=11 // pred_check_branch
          %1145 = sbr.rel (%p1143) target = $region76
        $region75: #{tpu_custom_call.1} parent=11 // pred_region
          %s1147 = ssub.s32 512, 512
          %1148 = vsyncadd [#allocation15], %s1147
          %s1149 = sshll.u32 [#allocation16], 4
          %s1150 = int_to_ptr.vmem [resolvable:$true] %s1149
          %1155 = dma.hbm_to_vmem [thread:$0]  %s33, 512, %s1150, [#allocation15], 128, 128, 8
        $region76: #{tpu_custom_call.1} parent=11 // pred_fallthru
          _
        // Predicated region
        $region77: #{tpu_custom_call.1} parent=11 // pred_check
          %p1156 = pneg %p489
        $region78: #{tpu_custom_call.1} parent=11 // pred_check_branch
          %1158 = sbr.rel (%p1156) target = $region80
        $region79: #{tpu_custom_call.1} parent=11 // pred_region
          _
        $region80: #{tpu_custom_call.1} parent=11 // pred_fallthru
          _
        // Predicated region
        $region81: #{tpu_custom_call.1} parent=11 // pred_check
          %p1159 = pneg %p510
        $region82: #{tpu_custom_call.1} parent=11 // pred_check_branch
          %1161 = sbr.rel (%p1159) target = $region84
        $region83: #{tpu_custom_call.1} parent=11 // pred_region
          %s1163 = ssub.s32 128, 128
          %1164 = vsyncadd [#allocation18], %s1163
          %s1165 = sshll.u32 [#allocation17], 4
          %s1166 = int_to_ptr.vmem [resolvable:$true] %s1165
          %1171 = dma.hbm_to_vmem [thread:$0]  %s37, 128, %s1166, [#allocation18], 64, 64, 4
        $region84: #{tpu_custom_call.1} parent=11 // pred_fallthru
          _
        // Predicated region
        $region85: #{tpu_custom_call.1} parent=11 // pred_check
          %p1172 = pneg %p531
        $region86: #{tpu_custom_call.1} parent=11 // pred_check_branch
          %1174 = sbr.rel (%p1172) target = $region88
        $region87: #{tpu_custom_call.1} parent=11 // pred_region
          %s1176 = ssub.s32 128, 128
          %1177 = vsyncadd [#allocation18], %s1176
          %s1179 = sshll.u32 [#allocation19], 4
          %s1180 = int_to_ptr.vmem [resolvable:$true] %s1179
          %1182 = dma.hbm_to_vmem [thread:$0]  %s39, 128, %s1180, [#allocation18]
        $region88: #{tpu_custom_call.1} parent=11 // pred_fallthru
          _
        // Predicated region
        $region89: #{tpu_custom_call.1} parent=11 // pred_check
          %p1183 = pneg %p552
        $region90: #{tpu_custom_call.1} parent=11 // pred_check_branch
          %1185 = sbr.rel (%p1183) target = $region92
        $region91: #{tpu_custom_call.1} parent=11 // pred_region
          _
        $region92: #{tpu_custom_call.1} parent=11 // pred_fallthru
          _
        // Predicated region
        $region93: #{tpu_custom_call.1} parent=11 // pred_check
          %p1186 = pneg %p573
        $region94: #{tpu_custom_call.1} parent=11 // pred_check_branch
          %1188 = sbr.rel (%p1186) target = $region96
        $region95: #{tpu_custom_call.1} parent=11 // pred_region
          _
        $region96: #{tpu_custom_call.1} parent=11 // pred_fallthru
          _
        // Predicated region
        $region97: #{tpu_custom_call.1} parent=11 // pred_check
          %p1189 = pneg %p594
        $region98: #{tpu_custom_call.1} parent=11 // pred_check_branch
          %1191 = sbr.rel (%p1189) target = $region100
        $region99: #{tpu_custom_call.1} parent=11 // pred_region
          %s1193 = ssub.s32 256, 256
          %1194 = vsyncadd [#allocation21], %s1193
          %s1195 = sshll.u32 [#allocation20], 4
          %s1196 = int_to_ptr.vmem [resolvable:$true] %s1195
          %1201 = dma.hbm_to_vmem [thread:$0]  %s45, 256, %s1196, [#allocation21], 128, 128, 8
        $region100: #{tpu_custom_call.1} parent=11 // pred_fallthru
          _
        // Predicated region
        $region101: #{tpu_custom_call.1} parent=11 // pred_check
          %p1202 = pneg %p615
        $region102: #{tpu_custom_call.1} parent=11 // pred_check_branch
          %1204 = sbr.rel (%p1202) target = $region104
        $region103: #{tpu_custom_call.1} parent=11 // pred_region
          %s1206 = ssub.s32 128, 128
          %1207 = vsyncadd [#allocation21], %s1206
          %s1208 = sshll.u32 [#allocation22], 4
          %s1209 = int_to_ptr.vmem [resolvable:$true] %s1208
          %1214 = dma.hbm_to_vmem [thread:$0]  %s47, 128, %s1209, [#allocation21], 64, 64, 4
        $region104: #{tpu_custom_call.1} parent=11 // pred_fallthru
          _
        // Predicated region
        $region105: #{tpu_custom_call.1} parent=11 // pred_check
          %p1215 = pneg %p636
        $region106: #{tpu_custom_call.1} parent=11 // pred_check_branch
          %1217 = sbr.rel (%p1215) target = $region108
        $region107: #{tpu_custom_call.1} parent=11 // pred_region
          %s1219 = ssub.s32 128, 128
          %1220 = vsyncadd [#allocation24], %s1219
          %s1222 = sshll.u32 [#allocation23], 4
          %s1223 = int_to_ptr.vmem [resolvable:$true] %s1222
          %1225 = dma.hbm_to_vmem [thread:$0]  %s49, 128, %s1223, [#allocation24]
        $region108: #{tpu_custom_call.1} parent=11 // pred_fallthru
          _
        // Predicated region
        $region109: #{tpu_custom_call.1} parent=11 // pred_check
          %p1226 = pneg %p657
        $region110: #{tpu_custom_call.1} parent=11 // pred_check_branch
          %1228 = sbr.rel (%p1226) target = $region112
        $region111: #{tpu_custom_call.1} parent=11 // pred_region
          _
        $region112: #{tpu_custom_call.1} parent=11 // pred_fallthru
          _
        // Predicated region
        $region113: #{tpu_custom_call.1} parent=11 // pred_check
          %p1229 = pneg %p678
        $region114: #{tpu_custom_call.1} parent=11 // pred_check_branch
          %1231 = sbr.rel (%p1229) target = $region116
        $region115: #{tpu_custom_call.1} parent=11 // pred_region
          _
        $region116: #{tpu_custom_call.1} parent=11 // pred_fallthru
          _
        // Predicated region
        $region117: #{tpu_custom_call.1} parent=11 // pred_check
          %p1232 = pneg %p699
        $region118: #{tpu_custom_call.1} parent=11 // pred_check_branch
          %1234 = sbr.rel (%p1232) target = $region120
        $region119: #{tpu_custom_call.1} parent=11 // pred_region
          %s1236 = ssub.s32 256, 256
          %1237 = vsyncadd [#allocation24], %s1236
          %s1238 = sshll.u32 [#allocation25], 4
          %s1239 = int_to_ptr.vmem [resolvable:$true] %s1238
          %1244 = dma.hbm_to_vmem [thread:$0]  %s55, 256, %s1239, [#allocation24], 128, 128, 8
        $region120: #{tpu_custom_call.1} parent=11 // pred_fallthru
          _
        // Predicated region
        $region121: #{tpu_custom_call.1} parent=11 // pred_check
          %p1245 = pneg %p720
        $region122: #{tpu_custom_call.1} parent=11 // pred_check_branch
          %1247 = sbr.rel (%p1245) target = $region124
        $region123: #{tpu_custom_call.1} parent=11 // pred_region
          %s1249 = ssub.s32 128, 128
          %1250 = vsyncadd [#allocation27], %s1249
          %s1252 = sshll.u32 [#allocation26], 4
          %s1253 = int_to_ptr.vmem [resolvable:$true] %s1252
          %1255 = dma.hbm_to_vmem [thread:$0]  %s57, 128, %s1253, [#allocation27]
        $region124: #{tpu_custom_call.1} parent=11 // pred_fallthru
          _
        // Predicated region
        $region125: #{tpu_custom_call.1} parent=11 // pred_check
          %p1256 = pneg %p741
        $region126: #{tpu_custom_call.1} parent=11 // pred_check_branch
          %1258 = sbr.rel (%p1256) target = $region128
        $region127: #{tpu_custom_call.1} parent=11 // pred_region
          _
        $region128: #{tpu_custom_call.1} parent=11 // pred_fallthru
          _
        // Predicated region
        $region129: #{tpu_custom_call.1} parent=11 // pred_check
          %p1259 = pneg %p762
        $region130: #{tpu_custom_call.1} parent=11 // pred_check_branch
          %1261 = sbr.rel (%p1259) target = $region132
        $region131: #{tpu_custom_call.1} parent=11 // pred_region
          _
        $region132: #{tpu_custom_call.1} parent=11 // pred_fallthru
          _
        // Predicated region
        $region133: #{tpu_custom_call.1} parent=11 // pred_check
          %p1262 = pneg %p783
        $region134: #{tpu_custom_call.1} parent=11 // pred_check_branch
          %1264 = sbr.rel (%p1262) target = $region136
        $region135: #{tpu_custom_call.1} parent=11 // pred_region
          %s1266 = ssub.s32 256, 256
          %1267 = vsyncadd [#allocation27], %s1266
          %s1268 = sshll.u32 [#allocation28], 4
          %s1269 = int_to_ptr.vmem [resolvable:$true] %s1268
          %1274 = dma.hbm_to_vmem [thread:$0]  %s63, 256, %s1269, [#allocation27], 128, 128, 8
        $region136: #{tpu_custom_call.1} parent=11 // pred_fallthru
          _
        // Predicated region
        $region137: #{tpu_custom_call.1} parent=11 // pred_check
          %p1275 = pneg %p804
        $region138: #{tpu_custom_call.1} parent=11 // pred_check_branch
          %1277 = sbr.rel (%p1275) target = $region140
        $region139: #{tpu_custom_call.1} parent=11 // pred_region
          _
        $region140: #{tpu_custom_call.1} parent=11 // pred_fallthru
          _
        // Predicated region
        $region141: #{tpu_custom_call.1} parent=11 // pred_check
          %p1278 = pneg %p825
        $region142: #{tpu_custom_call.1} parent=11 // pred_check_branch
          %1280 = sbr.rel (%p1278) target = $region144
        $region143: #{tpu_custom_call.1} parent=11 // pred_region
          %s1282 = ssub.s32 16, 16
          %1283 = vsyncadd [#allocation30], %s1282
          %s1285 = sshll.u32 [#allocation29], 4
          %s1286 = int_to_ptr.vmem [resolvable:$true] %s1285
          %1288 = dma.hbm_to_vmem [thread:$0]  %s67, 16, %s1286, [#allocation30]
        $region144: #{tpu_custom_call.1} parent=11 // pred_fallthru
          _
        // Predicated region
        $region145: #{tpu_custom_call.1} parent=11 // pred_check
          %p1289 = pneg %p846
        $region146: #{tpu_custom_call.1} parent=11 // pred_check_branch
          %1291 = sbr.rel (%p1289) target = $region148
        $region147: #{tpu_custom_call.1} parent=11 // pred_region
          _
        $region148: #{tpu_custom_call.1} parent=11 // pred_fallthru
          _
        // Predicated region
        $region149: #{tpu_custom_call.1} parent=11 // pred_check
          %p1292 = pneg %p867
        $region150: #{tpu_custom_call.1} parent=11 // pred_check_branch
          %1294 = sbr.rel (%p1292) target = $region152
        $region151: #{tpu_custom_call.1} parent=11 // pred_region
          %s1296 = ssub.s32 128, 128
          %1297 = vsyncadd [#allocation30], %s1296
          %s1299 = sshll.u32 [#allocation31], 4
          %s1300 = int_to_ptr.vmem [resolvable:$true] %s1299
          %1302 = dma.hbm_to_vmem [thread:$0]  %s71, 128, %s1300, [#allocation30]
        $region152: #{tpu_custom_call.1} parent=11 // pred_fallthru
          _
        // Predicated region
        $region153: #{tpu_custom_call.1} parent=11 // pred_check
          %p1303 = pneg %p888
        $region154: #{tpu_custom_call.1} parent=11 // pred_check_branch
          %1305 = sbr.rel (%p1303) target = $region156
        $region155: #{tpu_custom_call.1} parent=11 // pred_region
          _
        $region156: #{tpu_custom_call.1} parent=11 // pred_fallthru
          _
        // Predicated region
        $region157: #{tpu_custom_call.1} parent=11 // pred_check
          %p1306 = pneg %p909
        $region158: #{tpu_custom_call.1} parent=11 // pred_check_branch
          %1308 = sbr.rel (%p1306) target = $region160
        $region159: #{tpu_custom_call.1} parent=11 // pred_region
          _
        $region160: #{tpu_custom_call.1} parent=11 // pred_fallthru
          _
        // Predicated region
        $region161: #{tpu_custom_call.1} parent=11 // pred_check
          %p1309 = pneg %p930
        $region162: #{tpu_custom_call.1} parent=11 // pred_check_branch
          %1311 = sbr.rel (%p1309) target = $region164
        $region163: #{tpu_custom_call.1} parent=11 // pred_region
          _
        $region164: #{tpu_custom_call.1} parent=11 // pred_fallthru
          _
        // Predicated region
        $region165: #{tpu_custom_call.1} parent=11 // pred_check
          %p1312 = pneg %p951
        $region166: #{tpu_custom_call.1} parent=11 // pred_check_branch
          %1314 = sbr.rel (%p1312) target = $region168
        $region167: #{tpu_custom_call.1} parent=11 // pred_region
          _
        $region168: #{tpu_custom_call.1} parent=11 // pred_fallthru
          _
        // Predicated region
        $region169: #{tpu_custom_call.1} parent=11 // pred_check
          %p1315 = pneg %p972
        $region170: #{tpu_custom_call.1} parent=11 // pred_check_branch
          %1317 = sbr.rel (%p1315) target = $region172
        $region171: #{tpu_custom_call.1} parent=11 // pred_region
          _
        $region172: #{tpu_custom_call.1} parent=11 // pred_fallthru
          _
        // Predicated region
        $region173: #{tpu_custom_call.1} parent=11 // pred_check
          %p1318 = pneg %p993
        $region174: #{tpu_custom_call.1} parent=11 // pred_check_branch
          %1320 = sbr.rel (%p1318) target = $region176
        $region175: #{tpu_custom_call.1} parent=11 // pred_region
          _
        $region176: #{tpu_custom_call.1} parent=11 // pred_fallthru
          _
      $region12: #{tpu_custom_call.1} parent=5 // pred_fallthru
        _
      %p1321 = scmp.lt.s32.totalorder %s106, 2
      // Predicated region
      $region177: #{tpu_custom_call.1} parent=5 // pred_check
        %p1322 = pneg %p1321
      $region178: #{tpu_custom_call.1} parent=5 // pred_check_branch
        %1324 = sbr.rel (%p1322) target = $region180
      $region179: #{tpu_custom_call.1} parent=5 // pred_region
        // Predicated region
        $region181: #{tpu_custom_call.1} parent=179 // pred_check
          %p1325 = pneg %p126
        $region182: #{tpu_custom_call.1} parent=179 // pred_check_branch
          %1327 = sbr.rel (%p1325) target = $region184
        $region183: #{tpu_custom_call.1} parent=179 // pred_region
          %s1328 = sand.u32 %s116, 1
          %s1329 = scalar_lea.sflag [#allocation3], %s1328
          %s1330 = sand.u32 %s116, 1
          %s1331 = smul.addr %s1330, 16
          %s1332 = scalar_lea.vmem [#allocation2], %s1331
          %s1334 = ssub.s32 256, 256
          %1335 = vsyncadd %s1329, %s1334
          %s1336 = smul.addr %s106, 2
          %s1337 = smul.addr %s1336, 128
          %s1338 = scalar_lea.hbm %s1, %s1337
          %s1339 = sshll.u32 %s1332, 4
          %s1340 = int_to_ptr.vmem [resolvable:$true] %s1339
          %1345 = dma.hbm_to_vmem [thread:$0]  %s1338, 256, %s1340, %s1329, 128, 128, 8
        $region184: #{tpu_custom_call.1} parent=179 // pred_fallthru
          _
      $region180: #{tpu_custom_call.1} parent=5 // pred_fallthru
        _
      %p1346 = scmp.le.s32.totalorder 1, %s106
      %p1347 = scmp.lt.s32.totalorder %s106, 3
      %p1348 = pnand %p1346, %p1347
      %p1349 = pneg %p1348
      // Predicated region
      $region185: #{tpu_custom_call.1} parent=5 // pred_check
        _
      $region186: #{tpu_custom_call.1} parent=5 // pred_check_branch
        %1351 = sbr.rel (%p1348) target = $region188
      $region187: #{tpu_custom_call.1} parent=5 // pred_region
        %s1352 = ssub.s32 %s106, 1
        %s1353 = sand.u32 %s119, 1
        %s1354 = scalar_lea.sflag [#allocation3], %s1353
        %s1355 = sand.u32 %s119, 1
        %s1356 = smul.addr %s1355, 16
        %s1357 = scalar_lea.vmem [#allocation2], %s1356
        // Predicated region
        $region189: #{tpu_custom_call.1} parent=187 // pred_check
          %p1358 = pneg %p132
        $region190: #{tpu_custom_call.1} parent=187 // pred_check_branch
          %1360 = sbr.rel (%p1358) target = $region192
        $region191: #{tpu_custom_call.1} parent=187 // pred_region
          %1361 = dma.done %s1354, 256
        $region192: #{tpu_custom_call.1} parent=187 // pred_fallthru
          _
        // Predicated region
        $region193: #{tpu_custom_call.1} parent=187 // pred_check
          %p1362 = pneg %p153
        $region194: #{tpu_custom_call.1} parent=187 // pred_check_branch
          %1364 = sbr.rel (%p1362) target = $region196
        $region195: #{tpu_custom_call.1} parent=187 // pred_region
          %1365 = dma.done [#allocation6], 128
        $region196: #{tpu_custom_call.1} parent=187 // pred_fallthru
          _
        // Predicated region
        $region197: #{tpu_custom_call.1} parent=187 // pred_check
          %p1366 = pneg %p237
        $region198: #{tpu_custom_call.1} parent=187 // pred_check_branch
          %1368 = sbr.rel (%p1366) target = $region200
        $region199: #{tpu_custom_call.1} parent=187 // pred_region
          %1369 = dma.done [#allocation6], 512
        $region200: #{tpu_custom_call.1} parent=187 // pred_fallthru
          _
        // Predicated region
        $region201: #{tpu_custom_call.1} parent=187 // pred_check
          %p1370 = pneg %p279
        $region202: #{tpu_custom_call.1} parent=187 // pred_check_branch
          %1372 = sbr.rel (%p1370) target = $region204
        $region203: #{tpu_custom_call.1} parent=187 // pred_region
          %1373 = dma.done [#allocation9], 256
        $region204: #{tpu_custom_call.1} parent=187 // pred_fallthru
          _
        // Predicated region
        $region205: #{tpu_custom_call.1} parent=187 // pred_check
          %p1374 = pneg %p300
        $region206: #{tpu_custom_call.1} parent=187 // pred_check_branch
          %1376 = sbr.rel (%p1374) target = $region208
        $region207: #{tpu_custom_call.1} parent=187 // pred_region
          %1377 = dma.done [#allocation9], 128
        $region208: #{tpu_custom_call.1} parent=187 // pred_fallthru
          _
        // Predicated region
        $region209: #{tpu_custom_call.1} parent=187 // pred_check
          %p1378 = pneg %p363
        $region210: #{tpu_custom_call.1} parent=187 // pred_check_branch
          %1380 = sbr.rel (%p1378) target = $region212
        $region211: #{tpu_custom_call.1} parent=187 // pred_region
          %1381 = dma.done [#allocation12], 512
        $region212: #{tpu_custom_call.1} parent=187 // pred_fallthru
          _
        // Predicated region
        $region213: #{tpu_custom_call.1} parent=187 // pred_check
          %p1382 = pneg %p384
        $region214: #{tpu_custom_call.1} parent=187 // pred_check_branch
          %1384 = sbr.rel (%p1382) target = $region216
        $region215: #{tpu_custom_call.1} parent=187 // pred_region
          %1385 = dma.done [#allocation12], 256
        $region216: #{tpu_custom_call.1} parent=187 // pred_fallthru
          _
        // Predicated region
        $region217: #{tpu_custom_call.1} parent=187 // pred_check
          %p1386 = pneg %p405
        $region218: #{tpu_custom_call.1} parent=187 // pred_check_branch
          %1388 = sbr.rel (%p1386) target = $region220
        $region219: #{tpu_custom_call.1} parent=187 // pred_region
          %1389 = dma.done [#allocation15], 128
        $region220: #{tpu_custom_call.1} parent=187 // pred_fallthru
          _
        // Predicated region
        $region221: #{tpu_custom_call.1} parent=187 // pred_check
          %p1390 = pneg %p468
        $region222: #{tpu_custom_call.1} parent=187 // pred_check_branch
          %1392 = sbr.rel (%p1390) target = $region224
        $region223: #{tpu_custom_call.1} parent=187 // pred_region
          %1393 = dma.done [#allocation15], 512
        $region224: #{tpu_custom_call.1} parent=187 // pred_fallthru
          _
        // Predicated region
        $region225: #{tpu_custom_call.1} parent=187 // pred_check
          %p1394 = pneg %p510
        $region226: #{tpu_custom_call.1} parent=187 // pred_check_branch
          %1396 = sbr.rel (%p1394) target = $region228
        $region227: #{tpu_custom_call.1} parent=187 // pred_region
          %1397 = dma.done [#allocation18], 128
        $region228: #{tpu_custom_call.1} parent=187 // pred_fallthru
          _
        // Predicated region
        $region229: #{tpu_custom_call.1} parent=187 // pred_check
          %p1398 = pneg %p531
        $region230: #{tpu_custom_call.1} parent=187 // pred_check_branch
          %1400 = sbr.rel (%p1398) target = $region232
        $region231: #{tpu_custom_call.1} parent=187 // pred_region
          %1401 = dma.done [#allocation18], 128
        $region232: #{tpu_custom_call.1} parent=187 // pred_fallthru
          _
        // Predicated region
        $region233: #{tpu_custom_call.1} parent=187 // pred_check
          %p1402 = pneg %p594
        $region234: #{tpu_custom_call.1} parent=187 // pred_check_branch
          %1404 = sbr.rel (%p1402) target = $region236
        $region235: #{tpu_custom_call.1} parent=187 // pred_region
          %1405 = dma.done [#allocation21], 256
        $region236: #{tpu_custom_call.1} parent=187 // pred_fallthru
          _
        // Predicated region
        $region237: #{tpu_custom_call.1} parent=187 // pred_check
          %p1406 = pneg %p615
        $region238: #{tpu_custom_call.1} parent=187 // pred_check_branch
          %1408 = sbr.rel (%p1406) target = $region240
        $region239: #{tpu_custom_call.1} parent=187 // pred_region
          %1409 = dma.done [#allocation21], 128
        $region240: #{tpu_custom_call.1} parent=187 // pred_fallthru
          _
        // Predicated region
        $region241: #{tpu_custom_call.1} parent=187 // pred_check
          %p1410 = pneg %p636
        $region242: #{tpu_custom_call.1} parent=187 // pred_check_branch
          %1412 = sbr.rel (%p1410) target = $region244
        $region243: #{tpu_custom_call.1} parent=187 // pred_region
          %1413 = dma.done [#allocation24], 128
        $region244: #{tpu_custom_call.1} parent=187 // pred_fallthru
          _
        // Predicated region
        $region245: #{tpu_custom_call.1} parent=187 // pred_check
          %p1414 = pneg %p699
        $region246: #{tpu_custom_call.1} parent=187 // pred_check_branch
          %1416 = sbr.rel (%p1414) target = $region248
        $region247: #{tpu_custom_call.1} parent=187 // pred_region
          %1417 = dma.done [#allocation24], 256
        $region248: #{tpu_custom_call.1} parent=187 // pred_fallthru
          _
        // Predicated region
        $region249: #{tpu_custom_call.1} parent=187 // pred_check
          %p1418 = pneg %p720
        $region250: #{tpu_custom_call.1} parent=187 // pred_check_branch
          %1420 = sbr.rel (%p1418) target = $region252
        $region251: #{tpu_custom_call.1} parent=187 // pred_region
          %1421 = dma.done [#allocation27], 128
        $region252: #{tpu_custom_call.1} parent=187 // pred_fallthru
          _
        // Predicated region
        $region253: #{tpu_custom_call.1} parent=187 // pred_check
          %p1422 = pneg %p783
        $region254: #{tpu_custom_call.1} parent=187 // pred_check_branch
          %1424 = sbr.rel (%p1422) target = $region256
        $region255: #{tpu_custom_call.1} parent=187 // pred_region
          %1425 = dma.done [#allocation27], 256
        $region256: #{tpu_custom_call.1} parent=187 // pred_fallthru
          _
        // Predicated region
        $region257: #{tpu_custom_call.1} parent=187 // pred_check
          %p1426 = pneg %p825
        $region258: #{tpu_custom_call.1} parent=187 // pred_check_branch
          %1428 = sbr.rel (%p1426) target = $region260
        $region259: #{tpu_custom_call.1} parent=187 // pred_region
          %1429 = dma.done [#allocation30], 16
        $region260: #{tpu_custom_call.1} parent=187 // pred_fallthru
          _
        // Predicated region
        $region261: #{tpu_custom_call.1} parent=187 // pred_check
          %p1430 = pneg %p867
        $region262: #{tpu_custom_call.1} parent=187 // pred_check_branch
          %1432 = sbr.rel (%p1430) target = $region264
        $region263: #{tpu_custom_call.1} parent=187 // pred_region
          %1433 = dma.done [#allocation30], 128
        $region264: #{tpu_custom_call.1} parent=187 // pred_fallthru
          _
        %s1434 = sand.u32 %s119, 1
        %s1435 = scalar_lea.sflag [#allocation3], %s1434
        %s1436 = sand.u32 %s119, 1
        %s1437 = smul.addr %s1436, 16
        %s1438 = scalar_lea.vmem [#allocation2], %s1437
        %p1439 = pneg %p132
        %p1440 = pneg %p129
        %p1441 = pneg %p153
        %p1442 = pneg %p150
        %p1443 = pneg %p174
        %p1444 = pneg %p171
        %p1445 = pneg %p195
        %p1446 = pneg %p192
        %p1447 = pneg %p216
        %p1448 = pneg %p213
        %p1449 = pneg %p237
        %p1450 = pneg %p234
        %p1451 = pneg %p258
        %p1452 = pneg %p255
        %p1453 = pneg %p279
        %p1454 = pneg %p276
        %p1455 = pneg %p300
        %p1456 = pneg %p297
        %p1457 = pneg %p321
        %p1458 = pneg %p318
        %p1459 = pneg %p342
        %p1460 = pneg %p339
        %p1461 = pneg %p363
        %p1462 = pneg %p360
        %p1463 = pneg %p384
        %p1464 = pneg %p381
        %p1465 = pneg %p405
        %p1466 = pneg %p402
        %p1467 = pneg %p426
        %p1468 = pneg %p423
        %p1469 = pneg %p447
        %p1470 = pneg %p444
        %p1471 = pneg %p468
        %p1472 = pneg %p465
        %p1473 = pneg %p489
        %p1474 = pneg %p486
        %p1475 = pneg %p510
        %p1476 = pneg %p507
        %p1477 = pneg %p531
        %p1478 = pneg %p528
        %p1479 = pneg %p552
        %p1480 = pneg %p549
        %p1481 = pneg %p573
        %p1482 = pneg %p570
        %p1483 = pneg %p594
        %p1484 = pneg %p591
        %p1485 = pneg %p615
        %p1486 = pneg %p612
        %p1487 = pneg %p636
        %p1488 = pneg %p633
        %p1489 = pneg %p657
        %p1490 = pneg %p654
        %p1491 = pneg %p678
        %p1492 = pneg %p675
        %p1493 = pneg %p699
        %p1494 = pneg %p696
        %p1495 = pneg %p720
        %p1496 = pneg %p717
        %p1497 = pneg %p741
        %p1498 = pneg %p738
        %p1499 = pneg %p762
        %p1500 = pneg %p759
        %p1501 = pneg %p783
        %p1502 = pneg %p780
        %p1503 = pneg %p804
        %p1504 = pneg %p801
        %p1505 = pneg %p825
        %p1506 = pneg %p822
        %p1507 = pneg %p846
        %p1508 = pneg %p843
        %p1509 = pneg %p867
        %p1510 = pneg %p864
        %p1511 = pneg %p888
        %p1512 = pneg %p885
        %p1513 = pneg %p909
        %p1514 = pneg %p906
        %p1515 = pneg %p930
        %p1516 = pneg %p927
        %p1517 = pneg %p951
        %p1518 = pneg %p948
        %p1519 = pneg %p972
        %p1520 = pneg %p969
        %p1521 = pneg %p993
        %p1522 = pneg %p990
        %p1523 = pneg %p1019
        %p1524 = pneg %p1016
        %s1525 = sand.u32 %s1006, 1
        %s1526 = scalar_lea.sflag [#allocation4], %s1525
        %s1527 = sand.u32 %s1006, 1
        %s1528 = smul.addr %s1527, 16
        %s1529 = scalar_lea.vmem [#allocation32], %s1528
        %v1530 = vld [vmem:[%s1357] sm:$0xff]
        %v1531 = vld [vmem:[%s1357 + $0x8] sm:$0xff]
        %v1532 = vld [vmem:[#allocation5] sm:$0x1]
        %v1533 = vlaneseq
        %v1534 = vshrl.u32 %v1533, 7
        %v1535 = vsub.s32 0, %v1534
        %v1536 = vrot.slane %v1532, %v1535
        %v1537 = vmul.f32 %v1530, %v1536
        %v1538 = vmul.f32 %v1531, %v1536
        %v1539 = vld [vmem:[#allocation5 + $0x1] sm:$0x1]
        %v1540 = vlaneseq
        %v1541 = vshrl.u32 %v1540, 7
        %v1542 = vsub.s32 0, %v1541
        %v1543 = vrot.slane %v1539, %v1542
        %v1544 = vadd.f32 %v1537, %v1543
        %v1545 = vadd.f32 %v1538, %v1543
        %v1546 = vmax.f32 %v1544, 0.0
        %v1547 = vmax.f32 %v1545, 0.0
        %v1548 = vld [vmem:[%s5] sm:$0xff]
        %v1549 = vld [vmem:[%s5 + $0x8] sm:$0xff]
        %v1550 = vld [vmem:[%s5 + $0x10] sm:$0xff]
        %v1551 = vld [vmem:[%s5 + $0x18] sm:$0xff]
        %v1552 = vld [vmem:[%s5 + $0x20] sm:$0xff]
        %v1553 = vld [vmem:[%s5 + $0x28] sm:$0xff]
        %v1554 = vld [vmem:[%s5 + $0x30] sm:$0xff]
        %v1555 = vld [vmem:[%s5 + $0x38] sm:$0xff]
        %v1556 = vld [vmem:[%s5 + $0x40] sm:$0xff]
        %v1557 = vld [vmem:[%s5 + $0x48] sm:$0xff]
        %v1558 = vld [vmem:[%s5 + $0x50] sm:$0xff]
        %v1559 = vld [vmem:[%s5 + $0x58] sm:$0xff]
        %v1560 = vld [vmem:[%s5 + $0x60] sm:$0xff]
        %v1561 = vld [vmem:[%s5 + $0x68] sm:$0xff]
        %v1562 = vld [vmem:[%s5 + $0x70] sm:$0xff]
        %v1563 = vld [vmem:[%s5 + $0x78] sm:$0xff]
        %v1564 = vld [vmem:[#allocation5 + $0x2] sm:$0x1]
        %v1565 = vlaneseq
        %v1566 = vshrl.u32 %v1565, 7
        %v1567 = vsub.s32 0, %v1566
        %v1568 = vrot.slane %v1564, %v1567
        %1569 = vmatprep.subr.mxu0 0.0
        %1570 = vmatpush1.msra.mxu0 %v1548
        %1571 = vmatprep.subr.mxu0 0.0
        %1572 = vmatpush1.msra.mxu0 %v1549
        %1573 = vmatprep.subr.mxu0 0.0
        %1574 = vmatpush1.msra.mxu0 %v1550
        %1575 = vmatprep.subr.mxu0 0.0
        %1576 = vmatpush1.msra.mxu0 %v1551
        %1577 = vmatprep.subr.mxu0 0.0
        %1578 = vmatpush1.msra.mxu0 %v1552
        %1579 = vmatprep.subr.mxu0 0.0
        %1580 = vmatpush1.msra.mxu0 %v1553
        %1581 = vmatprep.subr.mxu0 0.0
        %1582 = vmatpush1.msra.mxu0 %v1554
        %1583 = vmatprep.subr.mxu0 0.0
        %1584 = vmatpush1.msra.mxu0 %v1555
        %1585 = vmatprep.subr.mxu0 0.0
        %1586 = vmatpush1.msra.mxu0 %v1556
        %1587 = vmatprep.subr.mxu0 0.0
        %1588 = vmatpush1.msra.mxu0 %v1557
        %1589 = vmatprep.subr.mxu0 0.0
        %1590 = vmatpush1.msra.mxu0 %v1558
        %1591 = vmatprep.subr.mxu0 0.0
        %1592 = vmatpush1.msra.mxu0 %v1559
        %1593 = vmatprep.subr.mxu0 0.0
        %1594 = vmatpush1.msra.mxu0 %v1560
        %1595 = vmatprep.subr.mxu0 0.0
        %1596 = vmatpush1.msra.mxu0 %v1561
        %1597 = vmatprep.subr.mxu0 0.0
        %1598 = vmatpush1.msra.mxu0 %v1562
        %1599 = vmatprep.subr.mxu0 0.0
        %1600 = vmatpush1.msra.mxu0 %v1563
        %1601 = vmatprep.subr.mxu0 0.0
        %1602 = vmatpush1.msra.mxu0 0.0
        %1603 = vmatprep.subr.mxu0 0.0
        %1604 = vmatpush1.msra.mxu0 0.0
        %1605 = vmatprep.subr.mxu0 0.0
        %1606 = vmatpush1.msra.mxu0 0.0
        %1607 = vmatprep.subr.mxu0 0.0
        %1608 = vmatpush1.msra.mxu0 0.0
        %1609 = vmatprep.subr.mxu0 0.0
        %1610 = vmatpush1.msra.mxu0 0.0
        %1611 = vmatprep.subr.mxu0 0.0
        %1612 = vmatpush1.msra.mxu0 0.0
        %1613 = vmatprep.subr.mxu0 0.0
        %1614 = vmatpush1.msra.mxu0 0.0
        %1615 = vmatprep.subr.mxu0 0.0
        %1616 = vmatpush1.msra.mxu0 0.0
        %1617 = vmatprep.subr.mxu0 0.0
        %1618 = vmatpush1.msra.mxu0 0.0
        %1619 = vmatprep.subr.mxu0 0.0
        %1620 = vmatpush1.msra.mxu0 0.0
        %1621 = vmatprep.subr.mxu0 0.0
        %1622 = vmatpush1.msra.mxu0 0.0
        %1623 = vmatprep.subr.mxu0 0.0
        %1624 = vmatpush1.msra.mxu0 0.0
        %1625 = vmatprep.subr.mxu0 0.0
        %1626 = vmatpush1.msra.mxu0 0.0
        %1627 = vmatprep.subr.mxu0 0.0
        %1628 = vmatpush1.msra.mxu0 0.0
        %1629 = vmatprep.subr.mxu0 0.0
        %1630 = vmatpush1.msra.mxu0 0.0
        %1631 = vmatprep.subr.mxu0 0.0
        %1632 = vmatpush1.msra.mxu0 0.0
        %1633 = vmatprep.mubr.f32.mxu0 0.0
        %1634 = vmatmul.mubr.f32.gmra.mrb[0].mxu0 %v1546
        %v1635 = vpop.f32.mrb[0].mxu0
        %v1636 = vadd.f32 %v1568, %v1635
        %v1637 = vpop.f32.mrb[0].mxu0
        %1638 = vmatprep.mubr.f32.mxu0 0.0
        %1639 = vmatmul.mubr.f32.gmra.mrb[0].mxu0 %v1547
        %v1640 = vpop.f32.mrb[0].mxu0
        %v1641 = vadd.f32 %v1568, %v1640
        %v1642 = vpop.f32.mrb[0].mxu0
        %1643 = vdwg.mxu0
        %v1644 = vmax.f32 %v1636, 0.0
        %v1645 = vmax.f32 %v1641, 0.0
        %v1646 = vld [vmem:[%s7] sm:$0xff]
        %v1647 = vld [vmem:[%s7 + $0x8] sm:$0xff]
        %v1648 = vld [vmem:[%s7 + $0x10] sm:$0xff]
        %v1649 = vld [vmem:[%s7 + $0x18] sm:$0xff]
        %v1650 = vld [vmem:[%s7 + $0x20] sm:$0xff]
        %v1651 = vld [vmem:[%s7 + $0x28] sm:$0xff]
        %v1652 = vld [vmem:[%s7 + $0x30] sm:$0xff]
        %v1653 = vld [vmem:[%s7 + $0x38] sm:$0xff]
        %vm1654 = vcmask 523264
        %v1656 = vsel %vm1654, %v1644, 0
        %v1659 = vsel %vm1654, %v1645, 0
        %1661 = vmatprep.subr.mxu0 0.0
        %1662 = vmatpush1.msra.mxu0 %v1646
        %1663 = vmatprep.subr.mxu0 0.0
        %1664 = vmatpush1.msra.mxu0 %v1647
        %1665 = vmatprep.subr.mxu0 0.0
        %1666 = vmatpush1.msra.mxu0 %v1648
        %1667 = vmatprep.subr.mxu0 0.0
        %1668 = vmatpush1.msra.mxu0 %v1649
        %1669 = vmatprep.subr.mxu0 0.0
        %1670 = vmatpush1.msra.mxu0 %v1650
        %1671 = vmatprep.subr.mxu0 0.0
        %1672 = vmatpush1.msra.mxu0 %v1651
        %1673 = vmatprep.subr.mxu0 0.0
        %1674 = vmatpush1.msra.mxu0 %v1652
        %1675 = vmatprep.subr.mxu0 0.0
        %1676 = vmatpush1.msra.mxu0 %v1653
        %1677 = vmatprep.subr.mxu0 0.0
        %1678 = vmatpush1.msra.mxu0 0.0
        %1679 = vmatprep.subr.mxu0 0.0
        %1680 = vmatpush1.msra.mxu0 0.0
        %1681 = vmatprep.subr.mxu0 0.0
        %1682 = vmatpush1.msra.mxu0 0.0
        %1683 = vmatprep.subr.mxu0 0.0
        %1684 = vmatpush1.msra.mxu0 0.0
        %1685 = vmatprep.subr.mxu0 0.0
        %1686 = vmatpush1.msra.mxu0 0.0
        %1687 = vmatprep.subr.mxu0 0.0
        %1688 = vmatpush1.msra.mxu0 0.0
        %1689 = vmatprep.subr.mxu0 0.0
        %1690 = vmatpush1.msra.mxu0 0.0
        %1691 = vmatprep.subr.mxu0 0.0
        %1692 = vmatpush1.msra.mxu0 0.0
        %1693 = vmatprep.subr.mxu0 0.0
        %1694 = vmatpush1.msra.mxu0 0.0
        %1695 = vmatprep.subr.mxu0 0.0
        %1696 = vmatpush1.msra.mxu0 0.0
        %1697 = vmatprep.subr.mxu0 0.0
        %1698 = vmatpush1.msra.mxu0 0.0
        %1699 = vmatprep.subr.mxu0 0.0
        %1700 = vmatpush1.msra.mxu0 0.0
        %1701 = vmatprep.subr.mxu0 0.0
        %1702 = vmatpush1.msra.mxu0 0.0
        %1703 = vmatprep.subr.mxu0 0.0
        %1704 = vmatpush1.msra.mxu0 0.0
        %1705 = vmatprep.subr.mxu0 0.0
        %1706 = vmatpush1.msra.mxu0 0.0
        %1707 = vmatprep.subr.mxu0 0.0
        %1708 = vmatpush1.msra.mxu0 0.0
        %1709 = vmatprep.subr.mxu0 0.0
        %1710 = vmatpush1.msra.mxu0 0.0
        %1711 = vmatprep.subr.mxu0 0.0
        %1712 = vmatpush1.msra.mxu0 0.0
        %1713 = vmatprep.subr.mxu0 0.0
        %1714 = vmatpush1.msra.mxu0 0.0
        %1715 = vmatprep.subr.mxu0 0.0
        %1716 = vmatpush1.msra.mxu0 0.0
        %1717 = vmatprep.subr.mxu0 0.0
        %1718 = vmatpush1.msra.mxu0 0.0
        %1719 = vmatprep.subr.mxu0 0.0
        %1720 = vmatpush1.msra.mxu0 0.0
        %1721 = vmatprep.subr.mxu0 0.0
        %1722 = vmatpush1.msra.mxu0 0.0
        %1723 = vmatprep.subr.mxu0 0.0
        %1724 = vmatpush1.msra.mxu0 0.0
        %1725 = vmatprep.mubr.f32.mxu0 0.0
        %1726 = vmatmul.mubr.f32.gmra.mrb[0].mxu0 %v1656
        %v1727 = vpop.f32.mrb[0].mxu0
        %v1728 = vadd.f32 0.0, %v1727
        %v1729 = vpop.f32.mrb[0].mxu0
        %1730 = vmatprep.mubr.f32.mxu0 0.0
        %1731 = vmatmul.mubr.f32.gmra.mrb[0].mxu0 %v1659
        %v1732 = vpop.f32.mrb[0].mxu0
        %v1733 = vadd.f32 0.0, %v1732
        %v1734 = vpop.f32.mrb[0].mxu0
        %1735 = vdwg.mxu0
        %s1736 = scalar_lea.vmem %s7, 64
        %v1737 = vld [vmem:[%s1736] sm:$0xff]
        %v1738 = vld [vmem:[%s1736 + $0x8] sm:$0xff]
        %v1739 = vld [vmem:[%s1736 + $0x10] sm:$0xff]
        %v1740 = vld [vmem:[%s1736 + $0x18] sm:$0xff]
        %v1741 = vld [vmem:[%s1736 + $0x20] sm:$0xff]
        %v1742 = vld [vmem:[%s1736 + $0x28] sm:$0xff]
        %v1743 = vld [vmem:[%s1736 + $0x30] sm:$0xff]
        %v1744 = vld [vmem:[%s1736 + $0x38] sm:$0xff]
        %s1745 = scalar_lea.vmem %s7, 128
        %v1746 = vld [vmem:[%s1745] sm:$0xff]
        %v1747 = vld [vmem:[%s1745 + $0x8] sm:$0xff]
        %v1748 = vld [vmem:[%s1745 + $0x10] sm:$0xff]
        %v1749 = vld [vmem:[%s1745 + $0x18] sm:$0xff]
        %v1750 = vld [vmem:[%s1745 + $0x20] sm:$0xff]
        %v1751 = vld [vmem:[%s1745 + $0x28] sm:$0xff]
        %v1752 = vld [vmem:[%s1745 + $0x30] sm:$0xff]
        %v1753 = vld [vmem:[%s1745 + $0x38] sm:$0xff]
        %1754 = vmatprep.subr.mxu0 0.0
        %1755 = vmatpush1.msra.mxu0 %v1746
        %1756 = vmatprep.subr.mxu0 0.0
        %1757 = vmatpush1.msra.mxu0 %v1747
        %1758 = vmatprep.subr.mxu0 0.0
        %1759 = vmatpush1.msra.mxu0 %v1748
        %1760 = vmatprep.subr.mxu0 0.0
        %1761 = vmatpush1.msra.mxu0 %v1749
        %1762 = vmatprep.subr.mxu0 0.0
        %1763 = vmatpush1.msra.mxu0 %v1750
        %1764 = vmatprep.subr.mxu0 0.0
        %1765 = vmatpush1.msra.mxu0 %v1751
        %1766 = vmatprep.subr.mxu0 0.0
        %1767 = vmatpush1.msra.mxu0 %v1752
        %1768 = vmatprep.subr.mxu0 0.0
        %1769 = vmatpush1.msra.mxu0 %v1753
        %1770 = vmatprep.subr.mxu0 0.0
        %1771 = vmatpush1.msra.mxu0 0.0
        %1772 = vmatprep.subr.mxu0 0.0
        %1773 = vmatpush1.msra.mxu0 0.0
        %1774 = vmatprep.subr.mxu0 0.0
        %1775 = vmatpush1.msra.mxu0 0.0
        %1776 = vmatprep.subr.mxu0 0.0
        %1777 = vmatpush1.msra.mxu0 0.0
        %1778 = vmatprep.subr.mxu0 0.0
        %1779 = vmatpush1.msra.mxu0 0.0
        %1780 = vmatprep.subr.mxu0 0.0
        %1781 = vmatpush1.msra.mxu0 0.0
        %1782 = vmatprep.subr.mxu0 0.0
        %1783 = vmatpush1.msra.mxu0 0.0
        %1784 = vmatprep.subr.mxu0 0.0
        %1785 = vmatpush1.msra.mxu0 0.0
        %1786 = vmatprep.subr.mxu0 0.0
        %1787 = vmatpush1.msra.mxu0 0.0
        %1788 = vmatprep.subr.mxu0 0.0
        %1789 = vmatpush1.msra.mxu0 0.0
        %1790 = vmatprep.subr.mxu0 0.0
        %1791 = vmatpush1.msra.mxu0 0.0
        %1792 = vmatprep.subr.mxu0 0.0
        %1793 = vmatpush1.msra.mxu0 0.0
        %1794 = vmatprep.subr.mxu0 0.0
        %1795 = vmatpush1.msra.mxu0 0.0
        %1796 = vmatprep.subr.mxu0 0.0
        %1797 = vmatpush1.msra.mxu0 0.0
        %1798 = vmatprep.subr.mxu0 0.0
        %1799 = vmatpush1.msra.mxu0 0.0
        %1800 = vmatprep.subr.mxu0 0.0
        %1801 = vmatpush1.msra.mxu0 0.0
        %1802 = vmatprep.subr.mxu0 0.0
        %1803 = vmatpush1.msra.mxu0 0.0
        %1804 = vmatprep.subr.mxu0 0.0
        %1805 = vmatpush1.msra.mxu0 0.0
        %1806 = vmatprep.subr.mxu0 0.0
        %1807 = vmatpush1.msra.mxu0 0.0
        %1808 = vmatprep.subr.mxu0 0.0
        %1809 = vmatpush1.msra.mxu0 0.0
        %1810 = vmatprep.subr.mxu0 0.0
        %1811 = vmatpush1.msra.mxu0 0.0
        %1812 = vmatprep.subr.mxu0 0.0
        %1813 = vmatpush1.msra.mxu0 0.0
        %1814 = vmatprep.subr.mxu0 0.0
        %1815 = vmatpush1.msra.mxu0 0.0
        %1816 = vmatprep.subr.mxu0 0.0
        %1817 = vmatpush1.msra.mxu0 0.0
        %1818 = vmatprep.mubr.f32.mxu0 0.0
        %1819 = vmatmul.mubr.f32.gmra.mrb[0].mxu0 %v1656
        %v1820 = vpop.f32.mrb[0].mxu0
        %v1821 = vadd.f32 0.0, %v1820
        %v1822 = vpop.f32.mrb[0].mxu0
        %1823 = vmatprep.mubr.f32.mxu0 0.0
        %1824 = vmatmul.mubr.f32.gmra.mrb[0].mxu0 %v1659
        %v1825 = vpop.f32.mrb[0].mxu0
        %v1826 = vadd.f32 0.0, %v1825
        %v1827 = vpop.f32.mrb[0].mxu0
        %1828 = vdwg.mxu0
        %v1829 = vld [vmem:[#allocation7] sm:$0xff]
        %v1830 = vld [vmem:[#allocation7 + $0x8] sm:$0xff]
        %vm1831 = vcmask 130048
        %v1833 = vsel %vm1831, %v1829, 0
        %v1836 = vsel %vm1831, %v1830, 0
        %1838 = vmatprep.subr.mxu0 0.0
        %1839 = vmatpush1.msra.mxu0 %v1728
        %1840 = vmatprep.subr.mxu0 0.0
        %1841 = vmatpush1.msra.mxu0 %v1733
        %1842 = vmatprep.subr.mxu0 0.0
        %1843 = vmatpush1.msra.mxu0 0.0
        %1844 = vmatprep.subr.mxu0 0.0
        %1845 = vmatpush1.msra.mxu0 0.0
        %1846 = vmatprep.subr.mxu0 0.0
        %1847 = vmatpush1.msra.mxu0 0.0
        %1848 = vmatprep.subr.mxu0 0.0
        %1849 = vmatpush1.msra.mxu0 0.0
        %1850 = vmatprep.subr.mxu0 0.0
        %1851 = vmatpush1.msra.mxu0 0.0
        %1852 = vmatprep.subr.mxu0 0.0
        %1853 = vmatpush1.msra.mxu0 0.0
        %1854 = vmatprep.subr.mxu0 0.0
        %1855 = vmatpush1.msra.mxu0 0.0
        %1856 = vmatprep.subr.mxu0 0.0
        %1857 = vmatpush1.msra.mxu0 0.0
        %1858 = vmatprep.subr.mxu0 0.0
        %1859 = vmatpush1.msra.mxu0 0.0
        %1860 = vmatprep.subr.mxu0 0.0
        %1861 = vmatpush1.msra.mxu0 0.0
        %1862 = vmatprep.subr.mxu0 0.0
        %1863 = vmatpush1.msra.mxu0 0.0
        %1864 = vmatprep.subr.mxu0 0.0
        %1865 = vmatpush1.msra.mxu0 0.0
        %1866 = vmatprep.subr.mxu0 0.0
        %1867 = vmatpush1.msra.mxu0 0.0
        %1868 = vmatprep.subr.mxu0 0.0
        %1869 = vmatpush1.msra.mxu0 0.0
        %1870 = vmatprep.subr.mxu0 0.0
        %1871 = vmatpush1.msra.mxu0 0.0
        %1872 = vmatprep.subr.mxu0 0.0
        %1873 = vmatpush1.msra.mxu0 0.0
        %1874 = vmatprep.subr.mxu0 0.0
        %1875 = vmatpush1.msra.mxu0 0.0
        %1876 = vmatprep.subr.mxu0 0.0
        %1877 = vmatpush1.msra.mxu0 0.0
        %1878 = vmatprep.subr.mxu0 0.0
        %1879 = vmatpush1.msra.mxu0 0.0
        %1880 = vmatprep.subr.mxu0 0.0
        %1881 = vmatpush1.msra.mxu0 0.0
        %1882 = vmatprep.subr.mxu0 0.0
        %1883 = vmatpush1.msra.mxu0 0.0
        %1884 = vmatprep.subr.mxu0 0.0
        %1885 = vmatpush1.msra.mxu0 0.0
        %1886 = vmatprep.subr.mxu0 0.0
        %1887 = vmatpush1.msra.mxu0 0.0
        %1888 = vmatprep.subr.mxu0 0.0
        %1889 = vmatpush1.msra.mxu0 0.0
        %1890 = vmatprep.subr.mxu0 0.0
        %1891 = vmatpush1.msra.mxu0 0.0
        %1892 = vmatprep.subr.mxu0 0.0
        %1893 = vmatpush1.msra.mxu0 0.0
        %1894 = vmatprep.subr.mxu0 0.0
        %1895 = vmatpush1.msra.mxu0 0.0
        %1896 = vmatprep.subr.mxu0 0.0
        %1897 = vmatpush1.msra.mxu0 0.0
        %1898 = vmatprep.subr.mxu0 0.0
        %1899 = vmatpush1.msra.mxu0 0.0
        %1900 = vmatprep.subr.mxu0 0.0
        %1901 = vmatpush1.msra.mxu0 0.0
        %1902 = vmatprep.mubr.f32.mxu0 0.0
        %1903 = vmatmul.mubr.f32.gmra.mrb[0].mxu0 %v1833
        %v1904 = vpop.f32.mrb[0].mxu0
        %v1905 = vadd.f32 0.0, %v1904
        %v1906 = vpop.f32.mrb[0].mxu0
        %1907 = vmatprep.mubr.f32.mxu0 0.0
        %1908 = vmatmul.mubr.f32.gmra.mrb[0].mxu0 %v1836
        %v1909 = vpop.f32.mrb[0].mxu0
        %v1910 = vadd.f32 0.0, %v1909
        %v1911 = vpop.f32.mrb[0].mxu0
        %1912 = vdwg.mxu0
        %1913 = vmatprep.subr.mxu0 0.0
        %1914 = vmatpush1.msra.mxu0 %v1737
        %1915 = vmatprep.subr.mxu0 0.0
        %1916 = vmatpush1.msra.mxu0 %v1738
        %1917 = vmatprep.subr.mxu0 0.0
        %1918 = vmatpush1.msra.mxu0 %v1739
        %1919 = vmatprep.subr.mxu0 0.0
        %1920 = vmatpush1.msra.mxu0 %v1740
        %1921 = vmatprep.subr.mxu0 0.0
        %1922 = vmatpush1.msra.mxu0 %v1741
        %1923 = vmatprep.subr.mxu0 0.0
        %1924 = vmatpush1.msra.mxu0 %v1742
        %1925 = vmatprep.subr.mxu0 0.0
        %1926 = vmatpush1.msra.mxu0 %v1743
        %1927 = vmatprep.subr.mxu0 0.0
        %1928 = vmatpush1.msra.mxu0 %v1744
        %1929 = vmatprep.subr.mxu0 0.0
        %1930 = vmatpush1.msra.mxu0 0.0
        %1931 = vmatprep.subr.mxu0 0.0
        %1932 = vmatpush1.msra.mxu0 0.0
        %1933 = vmatprep.subr.mxu0 0.0
        %1934 = vmatpush1.msra.mxu0 0.0
        %1935 = vmatprep.subr.mxu0 0.0
        %1936 = vmatpush1.msra.mxu0 0.0
        %1937 = vmatprep.subr.mxu0 0.0
        %1938 = vmatpush1.msra.mxu0 0.0
        %1939 = vmatprep.subr.mxu0 0.0
        %1940 = vmatpush1.msra.mxu0 0.0
        %1941 = vmatprep.subr.mxu0 0.0
        %1942 = vmatpush1.msra.mxu0 0.0
        %1943 = vmatprep.subr.mxu0 0.0
        %1944 = vmatpush1.msra.mxu0 0.0
        %1945 = vmatprep.subr.mxu0 0.0
        %1946 = vmatpush1.msra.mxu0 0.0
        %1947 = vmatprep.subr.mxu0 0.0
        %1948 = vmatpush1.msra.mxu0 0.0
        %1949 = vmatprep.subr.mxu0 0.0
        %1950 = vmatpush1.msra.mxu0 0.0
        %1951 = vmatprep.subr.mxu0 0.0
        %1952 = vmatpush1.msra.mxu0 0.0
        %1953 = vmatprep.subr.mxu0 0.0
        %1954 = vmatpush1.msra.mxu0 0.0
        %1955 = vmatprep.subr.mxu0 0.0
        %1956 = vmatpush1.msra.mxu0 0.0
        %1957 = vmatprep.subr.mxu0 0.0
        %1958 = vmatpush1.msra.mxu0 0.0
        %1959 = vmatprep.subr.mxu0 0.0
        %1960 = vmatpush1.msra.mxu0 0.0
        %1961 = vmatprep.subr.mxu0 0.0
        %1962 = vmatpush1.msra.mxu0 0.0
        %1963 = vmatprep.subr.mxu0 0.0
        %1964 = vmatpush1.msra.mxu0 0.0
        %1965 = vmatprep.subr.mxu0 0.0
        %1966 = vmatpush1.msra.mxu0 0.0
        %1967 = vmatprep.subr.mxu0 0.0
        %1968 = vmatpush1.msra.mxu0 0.0
        %1969 = vmatprep.subr.mxu0 0.0
        %1970 = vmatpush1.msra.mxu0 0.0
        %1971 = vmatprep.subr.mxu0 0.0
        %1972 = vmatpush1.msra.mxu0 0.0
        %1973 = vmatprep.subr.mxu0 0.0
        %1974 = vmatpush1.msra.mxu0 0.0
        %1975 = vmatprep.subr.mxu0 0.0
        %1976 = vmatpush1.msra.mxu0 0.0
        %1977 = vmatprep.mubr.f32.mxu0 0.0
        %1978 = vmatmul.mubr.f32.gmra.mrb[0].mxu0 %v1656
        %v1979 = vpop.f32.mrb[0].mxu0
        %v1980 = vadd.f32 %v1905, %v1979
        %v1981 = vpop.f32.mrb[0].mxu0
        %1982 = vmatprep.mubr.f32.mxu0 0.0
        %1983 = vmatmul.mubr.f32.gmra.mrb[0].mxu0 %v1659
        %v1984 = vpop.f32.mrb[0].mxu0
        %v1985 = vadd.f32 %v1910, %v1984
        %v1986 = vpop.f32.mrb[0].mxu0
        %1987 = vdwg.mxu0
        %s1988 = scalar_lea.vmem [#allocation7], 16
        %v1989 = vld [vmem:[%s1988] sm:$0xff]
        %v1990 = vld [vmem:[%s1988 + $0x8] sm:$0xff]
        %v1992 = vsel %vm1831, %v1989, 0
        %v1995 = vsel %vm1831, %v1990, 0
        %1997 = vmatprep.subr.mxu0 0.0
        %1998 = vmatpush1.msra.mxu0 %v1821
        %1999 = vmatprep.subr.mxu0 0.0
        %2000 = vmatpush1.msra.mxu0 %v1826
        %2001 = vmatprep.subr.mxu0 0.0
        %2002 = vmatpush1.msra.mxu0 0.0
        %2003 = vmatprep.subr.mxu0 0.0
        %2004 = vmatpush1.msra.mxu0 0.0
        %2005 = vmatprep.subr.mxu0 0.0
        %2006 = vmatpush1.msra.mxu0 0.0
        %2007 = vmatprep.subr.mxu0 0.0
        %2008 = vmatpush1.msra.mxu0 0.0
        %2009 = vmatprep.subr.mxu0 0.0
        %2010 = vmatpush1.msra.mxu0 0.0
        %2011 = vmatprep.subr.mxu0 0.0
        %2012 = vmatpush1.msra.mxu0 0.0
        %2013 = vmatprep.subr.mxu0 0.0
        %2014 = vmatpush1.msra.mxu0 0.0
        %2015 = vmatprep.subr.mxu0 0.0
        %2016 = vmatpush1.msra.mxu0 0.0
        %2017 = vmatprep.subr.mxu0 0.0
        %2018 = vmatpush1.msra.mxu0 0.0
        %2019 = vmatprep.subr.mxu0 0.0
        %2020 = vmatpush1.msra.mxu0 0.0
        %2021 = vmatprep.subr.mxu0 0.0
        %2022 = vmatpush1.msra.mxu0 0.0
        %2023 = vmatprep.subr.mxu0 0.0
        %2024 = vmatpush1.msra.mxu0 0.0
        %2025 = vmatprep.subr.mxu0 0.0
        %2026 = vmatpush1.msra.mxu0 0.0
        %2027 = vmatprep.subr.mxu0 0.0
        %2028 = vmatpush1.msra.mxu0 0.0
        %2029 = vmatprep.subr.mxu0 0.0
        %2030 = vmatpush1.msra.mxu0 0.0
        %2031 = vmatprep.subr.mxu0 0.0
        %2032 = vmatpush1.msra.mxu0 0.0
        %2033 = vmatprep.subr.mxu0 0.0
        %2034 = vmatpush1.msra.mxu0 0.0
        %2035 = vmatprep.subr.mxu0 0.0
        %2036 = vmatpush1.msra.mxu0 0.0
        %2037 = vmatprep.subr.mxu0 0.0
        %2038 = vmatpush1.msra.mxu0 0.0
        %2039 = vmatprep.subr.mxu0 0.0
        %2040 = vmatpush1.msra.mxu0 0.0
        %2041 = vmatprep.subr.mxu0 0.0
        %2042 = vmatpush1.msra.mxu0 0.0
        %2043 = vmatprep.subr.mxu0 0.0
        %2044 = vmatpush1.msra.mxu0 0.0
        %2045 = vmatprep.subr.mxu0 0.0
        %2046 = vmatpush1.msra.mxu0 0.0
        %2047 = vmatprep.subr.mxu0 0.0
        %2048 = vmatpush1.msra.mxu0 0.0
        %2049 = vmatprep.subr.mxu0 0.0
        %2050 = vmatpush1.msra.mxu0 0.0
        %2051 = vmatprep.subr.mxu0 0.0
        %2052 = vmatpush1.msra.mxu0 0.0
        %2053 = vmatprep.subr.mxu0 0.0
        %2054 = vmatpush1.msra.mxu0 0.0
        %2055 = vmatprep.subr.mxu0 0.0
        %2056 = vmatpush1.msra.mxu0 0.0
        %2057 = vmatprep.subr.mxu0 0.0
        %2058 = vmatpush1.msra.mxu0 0.0
        %2059 = vmatprep.subr.mxu0 0.0
        %2060 = vmatpush1.msra.mxu0 0.0
        %2061 = vmatprep.mubr.f32.mxu0 0.0
        %2062 = vmatmul.mubr.f32.gmra.mrb[0].mxu0 %v1992
        %v2063 = vpop.f32.mrb[0].mxu0
        %v2064 = vadd.f32 0.0, %v2063
        %v2065 = vpop.f32.mrb[0].mxu0
        %2066 = vmatprep.mubr.f32.mxu0 0.0
        %2067 = vmatmul.mubr.f32.gmra.mrb[0].mxu0 %v1995
        %v2068 = vpop.f32.mrb[0].mxu0
        %v2069 = vadd.f32 0.0, %v2068
        %v2070 = vpop.f32.mrb[0].mxu0
        %2071 = vdwg.mxu0
        %v2072 = vadd.f32 %v1980, %v2064
        %v2073 = vadd.f32 %v1985, %v2069
        %v2074 = vld [vmem:[#allocation5 + $0x3] sm:$0x1]
        %v2075 = vlaneseq
        %v2076 = vshrl.u32 %v2075, 7
        %v2077 = vsub.s32 0, %v2076
        %v2078 = vrot.slane %v2074, %v2077
        %v2079 = vadd.f32 %v2072, %v2078
        %v2080 = vadd.f32 %v2073, %v2078
        %v2081 = vmax.f32 %v2079, 0.0
        %v2082 = vmax.f32 %v2080, 0.0
        %v2083 = vld [vmem:[%s9] sm:$0xff]
        %v2084 = vld [vmem:[%s9 + $0x8] sm:$0xff]
        %v2085 = vld [vmem:[%s9 + $0x10] sm:$0xff]
        %v2086 = vld [vmem:[%s9 + $0x18] sm:$0xff]
        %v2087 = vld [vmem:[%s9 + $0x20] sm:$0xff]
        %v2088 = vld [vmem:[%s9 + $0x28] sm:$0xff]
        %v2089 = vld [vmem:[%s9 + $0x30] sm:$0xff]
        %v2090 = vld [vmem:[%s9 + $0x38] sm:$0xff]
        %v2091 = vld [vmem:[#allocation5 + $0x4] sm:$0x1]
        %v2092 = vlaneseq
        %v2093 = vshrl.u32 %v2092, 7
        %v2094 = vsub.s32 0, %v2093
        %v2095 = vrot.slane %v2091, %v2094
        %v2097 = vsel %vm1654, %v2081, 0
        %v2100 = vsel %vm1654, %v2082, 0
        %2102 = vmatprep.subr.mxu0 0.0
        %2103 = vmatpush1.msra.mxu0 %v2083
        %2104 = vmatprep.subr.mxu0 0.0
        %2105 = vmatpush1.msra.mxu0 %v2084
        %2106 = vmatprep.subr.mxu0 0.0
        %2107 = vmatpush1.msra.mxu0 %v2085
        %2108 = vmatprep.subr.mxu0 0.0
        %2109 = vmatpush1.msra.mxu0 %v2086
        %2110 = vmatprep.subr.mxu0 0.0
        %2111 = vmatpush1.msra.mxu0 %v2087
        %2112 = vmatprep.subr.mxu0 0.0
        %2113 = vmatpush1.msra.mxu0 %v2088
        %2114 = vmatprep.subr.mxu0 0.0
        %2115 = vmatpush1.msra.mxu0 %v2089
        %2116 = vmatprep.subr.mxu0 0.0
        %2117 = vmatpush1.msra.mxu0 %v2090
        %2118 = vmatprep.subr.mxu0 0.0
        %2119 = vmatpush1.msra.mxu0 0.0
        %2120 = vmatprep.subr.mxu0 0.0
        %2121 = vmatpush1.msra.mxu0 0.0
        %2122 = vmatprep.subr.mxu0 0.0
        %2123 = vmatpush1.msra.mxu0 0.0
        %2124 = vmatprep.subr.mxu0 0.0
        %2125 = vmatpush1.msra.mxu0 0.0
        %2126 = vmatprep.subr.mxu0 0.0
        %2127 = vmatpush1.msra.mxu0 0.0
        %2128 = vmatprep.subr.mxu0 0.0
        %2129 = vmatpush1.msra.mxu0 0.0
        %2130 = vmatprep.subr.mxu0 0.0
        %2131 = vmatpush1.msra.mxu0 0.0
        %2132 = vmatprep.subr.mxu0 0.0
        %2133 = vmatpush1.msra.mxu0 0.0
        %2134 = vmatprep.subr.mxu0 0.0
        %2135 = vmatpush1.msra.mxu0 0.0
        %2136 = vmatprep.subr.mxu0 0.0
        %2137 = vmatpush1.msra.mxu0 0.0
        %2138 = vmatprep.subr.mxu0 0.0
        %2139 = vmatpush1.msra.mxu0 0.0
        %2140 = vmatprep.subr.mxu0 0.0
        %2141 = vmatpush1.msra.mxu0 0.0
        %2142 = vmatprep.subr.mxu0 0.0
        %2143 = vmatpush1.msra.mxu0 0.0
        %2144 = vmatprep.subr.mxu0 0.0
        %2145 = vmatpush1.msra.mxu0 0.0
        %2146 = vmatprep.subr.mxu0 0.0
        %2147 = vmatpush1.msra.mxu0 0.0
        %2148 = vmatprep.subr.mxu0 0.0
        %2149 = vmatpush1.msra.mxu0 0.0
        %2150 = vmatprep.subr.mxu0 0.0
        %2151 = vmatpush1.msra.mxu0 0.0
        %2152 = vmatprep.subr.mxu0 0.0
        %2153 = vmatpush1.msra.mxu0 0.0
        %2154 = vmatprep.subr.mxu0 0.0
        %2155 = vmatpush1.msra.mxu0 0.0
        %2156 = vmatprep.subr.mxu0 0.0
        %2157 = vmatpush1.msra.mxu0 0.0
        %2158 = vmatprep.subr.mxu0 0.0
        %2159 = vmatpush1.msra.mxu0 0.0
        %2160 = vmatprep.subr.mxu0 0.0
        %2161 = vmatpush1.msra.mxu0 0.0
        %2162 = vmatprep.subr.mxu0 0.0
        %2163 = vmatpush1.msra.mxu0 0.0
        %2164 = vmatprep.subr.mxu0 0.0
        %2165 = vmatpush1.msra.mxu0 0.0
        %2166 = vmatprep.mubr.f32.mxu0 0.0
        %2167 = vmatmul.mubr.f32.gmra.mrb[0].mxu0 %v2097
        %v2168 = vpop.f32.mrb[0].mxu0
        %v2169 = vadd.f32 %v2095, %v2168
        %v2170 = vpop.f32.mrb[0].mxu0
        %2171 = vmatprep.mubr.f32.mxu0 0.0
        %2172 = vmatmul.mubr.f32.gmra.mrb[0].mxu0 %v2100
        %v2173 = vpop.f32.mrb[0].mxu0
        %v2174 = vadd.f32 %v2095, %v2173
        %v2175 = vpop.f32.mrb[0].mxu0
        %2176 = vdwg.mxu0
        %v2177 = vadd.f32 %v2169, %v1530
        %v2178 = vadd.f32 %v2174, %v1531
        %v2179 = vld [vmem:[%s13] sm:$0xff]
        %v2180 = vld [vmem:[%s13 + $0x8] sm:$0xff]
        %v2181 = vld [vmem:[%s13 + $0x10] sm:$0xff]
        %v2182 = vld [vmem:[%s13 + $0x18] sm:$0xff]
        %v2183 = vld [vmem:[%s13 + $0x20] sm:$0xff]
        %v2184 = vld [vmem:[%s13 + $0x28] sm:$0xff]
        %v2185 = vld [vmem:[%s13 + $0x30] sm:$0xff]
        %v2186 = vld [vmem:[%s13 + $0x38] sm:$0xff]
        %v2187 = vld [vmem:[%s13 + $0x40] sm:$0xff]
        %v2188 = vld [vmem:[%s13 + $0x48] sm:$0xff]
        %v2189 = vld [vmem:[%s13 + $0x50] sm:$0xff]
        %v2190 = vld [vmem:[%s13 + $0x58] sm:$0xff]
        %v2191 = vld [vmem:[%s13 + $0x60] sm:$0xff]
        %v2192 = vld [vmem:[%s13 + $0x68] sm:$0xff]
        %v2193 = vld [vmem:[%s13 + $0x70] sm:$0xff]
        %v2194 = vld [vmem:[%s13 + $0x78] sm:$0xff]
        %2195 = vmatprep.subr.mxu0 0.0
        %2196 = vmatpush1.msra.mxu0 %v2179
        %2197 = vmatprep.subr.mxu0 0.0
        %2198 = vmatpush1.msra.mxu0 %v2180
        %2199 = vmatprep.subr.mxu0 0.0
        %2200 = vmatpush1.msra.mxu0 %v2181
        %2201 = vmatprep.subr.mxu0 0.0
        %2202 = vmatpush1.msra.mxu0 %v2182
        %2203 = vmatprep.subr.mxu0 0.0
        %2204 = vmatpush1.msra.mxu0 %v2183
        %2205 = vmatprep.subr.mxu0 0.0
        %2206 = vmatpush1.msra.mxu0 %v2184
        %2207 = vmatprep.subr.mxu0 0.0
        %2208 = vmatpush1.msra.mxu0 %v2185
        %2209 = vmatprep.subr.mxu0 0.0
        %2210 = vmatpush1.msra.mxu0 %v2186
        %2211 = vmatprep.subr.mxu0 0.0
        %2212 = vmatpush1.msra.mxu0 %v2187
        %2213 = vmatprep.subr.mxu0 0.0
        %2214 = vmatpush1.msra.mxu0 %v2188
        %2215 = vmatprep.subr.mxu0 0.0
        %2216 = vmatpush1.msra.mxu0 %v2189
        %2217 = vmatprep.subr.mxu0 0.0
        %2218 = vmatpush1.msra.mxu0 %v2190
        %2219 = vmatprep.subr.mxu0 0.0
        %2220 = vmatpush1.msra.mxu0 %v2191
        %2221 = vmatprep.subr.mxu0 0.0
        %2222 = vmatpush1.msra.mxu0 %v2192
        %2223 = vmatprep.subr.mxu0 0.0
        %2224 = vmatpush1.msra.mxu0 %v2193
        %2225 = vmatprep.subr.mxu0 0.0
        %2226 = vmatpush1.msra.mxu0 %v2194
        %2227 = vmatprep.subr.mxu0 0.0
        %2228 = vmatpush1.msra.mxu0 0.0
        %2229 = vmatprep.subr.mxu0 0.0
        %2230 = vmatpush1.msra.mxu0 0.0
        %2231 = vmatprep.subr.mxu0 0.0
        %2232 = vmatpush1.msra.mxu0 0.0
        %2233 = vmatprep.subr.mxu0 0.0
        %2234 = vmatpush1.msra.mxu0 0.0
        %2235 = vmatprep.subr.mxu0 0.0
        %2236 = vmatpush1.msra.mxu0 0.0
        %2237 = vmatprep.subr.mxu0 0.0
        %2238 = vmatpush1.msra.mxu0 0.0
        %2239 = vmatprep.subr.mxu0 0.0
        %2240 = vmatpush1.msra.mxu0 0.0
        %2241 = vmatprep.subr.mxu0 0.0
        %2242 = vmatpush1.msra.mxu0 0.0
        %2243 = vmatprep.subr.mxu0 0.0
        %2244 = vmatpush1.msra.mxu0 0.0
        %2245 = vmatprep.subr.mxu0 0.0
        %2246 = vmatpush1.msra.mxu0 0.0
        %2247 = vmatprep.subr.mxu0 0.0
        %2248 = vmatpush1.msra.mxu0 0.0
        %2249 = vmatprep.subr.mxu0 0.0
        %2250 = vmatpush1.msra.mxu0 0.0
        %2251 = vmatprep.subr.mxu0 0.0
        %2252 = vmatpush1.msra.mxu0 0.0
        %2253 = vmatprep.subr.mxu0 0.0
        %2254 = vmatpush1.msra.mxu0 0.0
        %2255 = vmatprep.subr.mxu0 0.0
        %2256 = vmatpush1.msra.mxu0 0.0
        %2257 = vmatprep.subr.mxu0 0.0
        %2258 = vmatpush1.msra.mxu0 0.0
        %2259 = vmatprep.mubr.f32.mxu0 0.0
        %2260 = vmatmul.mubr.f32.gmra.mrb[0].mxu0 %v1530
        %v2261 = vpop.f32.mrb[0].mxu0
        %v2262 = vadd.f32 0.0, %v2261
        %v2263 = vpop.f32.mrb[0].mxu0
        %2264 = vmatprep.mubr.f32.mxu0 0.0
        %2265 = vmatmul.mubr.f32.gmra.mrb[0].mxu0 %v1531
        %v2266 = vpop.f32.mrb[0].mxu0
        %v2267 = vadd.f32 0.0, %v2266
        %v2268 = vpop.f32.mrb[0].mxu0
        %2269 = vdwg.mxu0
        %s2270 = scalar_lea.vmem %s13, 128
        %v2271 = vld [vmem:[%s2270] sm:$0xff]
        %v2272 = vld [vmem:[%s2270 + $0x8] sm:$0xff]
        %v2273 = vld [vmem:[%s2270 + $0x10] sm:$0xff]
        %v2274 = vld [vmem:[%s2270 + $0x18] sm:$0xff]
        %v2275 = vld [vmem:[%s2270 + $0x20] sm:$0xff]
        %v2276 = vld [vmem:[%s2270 + $0x28] sm:$0xff]
        %v2277 = vld [vmem:[%s2270 + $0x30] sm:$0xff]
        %v2278 = vld [vmem:[%s2270 + $0x38] sm:$0xff]
        %v2279 = vld [vmem:[%s2270 + $0x40] sm:$0xff]
        %v2280 = vld [vmem:[%s2270 + $0x48] sm:$0xff]
        %v2281 = vld [vmem:[%s2270 + $0x50] sm:$0xff]
        %v2282 = vld [vmem:[%s2270 + $0x58] sm:$0xff]
        %v2283 = vld [vmem:[%s2270 + $0x60] sm:$0xff]
        %v2284 = vld [vmem:[%s2270 + $0x68] sm:$0xff]
        %v2285 = vld [vmem:[%s2270 + $0x70] sm:$0xff]
        %v2286 = vld [vmem:[%s2270 + $0x78] sm:$0xff]
        %2287 = vmatprep.subr.mxu0 0.0
        %2288 = vmatpush1.msra.mxu0 %v2271
        %2289 = vmatprep.subr.mxu0 0.0
        %2290 = vmatpush1.msra.mxu0 %v2272
        %2291 = vmatprep.subr.mxu0 0.0
        %2292 = vmatpush1.msra.mxu0 %v2273
        %2293 = vmatprep.subr.mxu0 0.0
        %2294 = vmatpush1.msra.mxu0 %v2274
        %2295 = vmatprep.subr.mxu0 0.0
        %2296 = vmatpush1.msra.mxu0 %v2275
        %2297 = vmatprep.subr.mxu0 0.0
        %2298 = vmatpush1.msra.mxu0 %v2276
        %2299 = vmatprep.subr.mxu0 0.0
        %2300 = vmatpush1.msra.mxu0 %v2277
        %2301 = vmatprep.subr.mxu0 0.0
        %2302 = vmatpush1.msra.mxu0 %v2278
        %2303 = vmatprep.subr.mxu0 0.0
        %2304 = vmatpush1.msra.mxu0 %v2279
        %2305 = vmatprep.subr.mxu0 0.0
        %2306 = vmatpush1.msra.mxu0 %v2280
        %2307 = vmatprep.subr.mxu0 0.0
        %2308 = vmatpush1.msra.mxu0 %v2281
        %2309 = vmatprep.subr.mxu0 0.0
        %2310 = vmatpush1.msra.mxu0 %v2282
        %2311 = vmatprep.subr.mxu0 0.0
        %2312 = vmatpush1.msra.mxu0 %v2283
        %2313 = vmatprep.subr.mxu0 0.0
        %2314 = vmatpush1.msra.mxu0 %v2284
        %2315 = vmatprep.subr.mxu0 0.0
        %2316 = vmatpush1.msra.mxu0 %v2285
        %2317 = vmatprep.subr.mxu0 0.0
        %2318 = vmatpush1.msra.mxu0 %v2286
        %2319 = vmatprep.subr.mxu0 0.0
        %2320 = vmatpush1.msra.mxu0 0.0
        %2321 = vmatprep.subr.mxu0 0.0
        %2322 = vmatpush1.msra.mxu0 0.0
        %2323 = vmatprep.subr.mxu0 0.0
        %2324 = vmatpush1.msra.mxu0 0.0
        %2325 = vmatprep.subr.mxu0 0.0
        %2326 = vmatpush1.msra.mxu0 0.0
        %2327 = vmatprep.subr.mxu0 0.0
        %2328 = vmatpush1.msra.mxu0 0.0
        %2329 = vmatprep.subr.mxu0 0.0
        %2330 = vmatpush1.msra.mxu0 0.0
        %2331 = vmatprep.subr.mxu0 0.0
        %2332 = vmatpush1.msra.mxu0 0.0
        %2333 = vmatprep.subr.mxu0 0.0
        %2334 = vmatpush1.msra.mxu0 0.0
        %2335 = vmatprep.subr.mxu0 0.0
        %2336 = vmatpush1.msra.mxu0 0.0
        %2337 = vmatprep.subr.mxu0 0.0
        %2338 = vmatpush1.msra.mxu0 0.0
        %2339 = vmatprep.subr.mxu0 0.0
        %2340 = vmatpush1.msra.mxu0 0.0
        %2341 = vmatprep.subr.mxu0 0.0
        %2342 = vmatpush1.msra.mxu0 0.0
        %2343 = vmatprep.subr.mxu0 0.0
        %2344 = vmatpush1.msra.mxu0 0.0
        %2345 = vmatprep.subr.mxu0 0.0
        %2346 = vmatpush1.msra.mxu0 0.0
        %2347 = vmatprep.subr.mxu0 0.0
        %2348 = vmatpush1.msra.mxu0 0.0
        %2349 = vmatprep.subr.mxu0 0.0
        %2350 = vmatpush1.msra.mxu0 0.0
        %2351 = vmatprep.mubr.f32.mxu0 0.0
        %2352 = vmatmul.mubr.f32.gmra.mrb[0].mxu0 %v1530
        %v2353 = vpop.f32.mrb[0].mxu0
        %v2354 = vadd.f32 0.0, %v2353
        %v2355 = vpop.f32.mrb[0].mxu0
        %2356 = vmatprep.mubr.f32.mxu0 0.0
        %2357 = vmatmul.mubr.f32.gmra.mrb[0].mxu0 %v1531
        %v2358 = vpop.f32.mrb[0].mxu0
        %v2359 = vadd.f32 0.0, %v2358
        %v2360 = vpop.f32.mrb[0].mxu0
        %2361 = vdwg.mxu0
        %v2362 = vmax.f32 %v2262, %v2354
        %v2363 = vmax.f32 %v2267, %v2359
        %v2364 = vld [vmem:[#allocation8] sm:$0xff]
        %v2366 = vsel %vm1831, %v2364, 0
        %2368 = vmatprep.subr.mxu0 0.0
        %2369 = vmatpush1.msra.mxu0 %v2362
        %2370 = vmatprep.subr.mxu0 0.0
        %2371 = vmatpush1.msra.mxu0 %v2363
        %2372 = vmatprep.subr.mxu0 0.0
        %2373 = vmatpush1.msra.mxu0 0.0
        %2374 = vmatprep.subr.mxu0 0.0
        %2375 = vmatpush1.msra.mxu0 0.0
        %2376 = vmatprep.subr.mxu0 0.0
        %2377 = vmatpush1.msra.mxu0 0.0
        %2378 = vmatprep.subr.mxu0 0.0
        %2379 = vmatpush1.msra.mxu0 0.0
        %2380 = vmatprep.subr.mxu0 0.0
        %2381 = vmatpush1.msra.mxu0 0.0
        %2382 = vmatprep.subr.mxu0 0.0
        %2383 = vmatpush1.msra.mxu0 0.0
        %2384 = vmatprep.subr.mxu0 0.0
        %2385 = vmatpush1.msra.mxu0 0.0
        %2386 = vmatprep.subr.mxu0 0.0
        %2387 = vmatpush1.msra.mxu0 0.0
        %2388 = vmatprep.subr.mxu0 0.0
        %2389 = vmatpush1.msra.mxu0 0.0
        %2390 = vmatprep.subr.mxu0 0.0
        %2391 = vmatpush1.msra.mxu0 0.0
        %2392 = vmatprep.subr.mxu0 0.0
        %2393 = vmatpush1.msra.mxu0 0.0
        %2394 = vmatprep.subr.mxu0 0.0
        %2395 = vmatpush1.msra.mxu0 0.0
        %2396 = vmatprep.subr.mxu0 0.0
        %2397 = vmatpush1.msra.mxu0 0.0
        %2398 = vmatprep.subr.mxu0 0.0
        %2399 = vmatpush1.msra.mxu0 0.0
        %2400 = vmatprep.subr.mxu0 0.0
        %2401 = vmatpush1.msra.mxu0 0.0
        %2402 = vmatprep.subr.mxu0 0.0
        %2403 = vmatpush1.msra.mxu0 0.0
        %2404 = vmatprep.subr.mxu0 0.0
        %2405 = vmatpush1.msra.mxu0 0.0
        %2406 = vmatprep.subr.mxu0 0.0
        %2407 = vmatpush1.msra.mxu0 0.0
        %2408 = vmatprep.subr.mxu0 0.0
        %2409 = vmatpush1.msra.mxu0 0.0
        %2410 = vmatprep.subr.mxu0 0.0
        %2411 = vmatpush1.msra.mxu0 0.0
        %2412 = vmatprep.subr.mxu0 0.0
        %2413 = vmatpush1.msra.mxu0 0.0
        %2414 = vmatprep.subr.mxu0 0.0
        %2415 = vmatpush1.msra.mxu0 0.0
        %2416 = vmatprep.subr.mxu0 0.0
        %2417 = vmatpush1.msra.mxu0 0.0
        %2418 = vmatprep.subr.mxu0 0.0
        %2419 = vmatpush1.msra.mxu0 0.0
        %2420 = vmatprep.subr.mxu0 0.0
        %2421 = vmatpush1.msra.mxu0 0.0
        %2422 = vmatprep.subr.mxu0 0.0
        %2423 = vmatpush1.msra.mxu0 0.0
        %2424 = vmatprep.subr.mxu0 0.0
        %2425 = vmatpush1.msra.mxu0 0.0
        %2426 = vmatprep.subr.mxu0 0.0
        %2427 = vmatpush1.msra.mxu0 0.0
        %2428 = vmatprep.subr.mxu0 0.0
        %2429 = vmatpush1.msra.mxu0 0.0
        %2430 = vmatprep.subr.mxu0 0.0
        %2431 = vmatpush1.msra.mxu0 0.0
        %2432 = vmatprep.mubr.f32.mxu0 0.0
        %2433 = vmatmul.mubr.f32.gmra.mrb[0].mxu0 %v2366
        %v2434 = vpop.f32.mrb[0].mxu0
        %v2435 = vadd.f32 0.0, %v2434
        %v2436 = vpop.f32.mrb[0].mxu0
        %2437 = vdwg.mxu0
        %s2438 = scalar_lea.vmem [#allocation8], 8
        %v2439 = vld [vmem:[%s2438] sm:$0xff]
        %v2441 = vsel %vm1831, %v2439, 0
        %2443 = vmatprep.subr.mxu0 0.0
        %2444 = vmatpush1.msra.mxu0 %v2362
        %2445 = vmatprep.subr.mxu0 0.0
        %2446 = vmatpush1.msra.mxu0 %v2363
        %2447 = vmatprep.subr.mxu0 0.0
        %2448 = vmatpush1.msra.mxu0 0.0
        %2449 = vmatprep.subr.mxu0 0.0
        %2450 = vmatpush1.msra.mxu0 0.0
        %2451 = vmatprep.subr.mxu0 0.0
        %2452 = vmatpush1.msra.mxu0 0.0
        %2453 = vmatprep.subr.mxu0 0.0
        %2454 = vmatpush1.msra.mxu0 0.0
        %2455 = vmatprep.subr.mxu0 0.0
        %2456 = vmatpush1.msra.mxu0 0.0
        %2457 = vmatprep.subr.mxu0 0.0
        %2458 = vmatpush1.msra.mxu0 0.0
        %2459 = vmatprep.subr.mxu0 0.0
        %2460 = vmatpush1.msra.mxu0 0.0
        %2461 = vmatprep.subr.mxu0 0.0
        %2462 = vmatpush1.msra.mxu0 0.0
        %2463 = vmatprep.subr.mxu0 0.0
        %2464 = vmatpush1.msra.mxu0 0.0
        %2465 = vmatprep.subr.mxu0 0.0
        %2466 = vmatpush1.msra.mxu0 0.0
        %2467 = vmatprep.subr.mxu0 0.0
        %2468 = vmatpush1.msra.mxu0 0.0
        %2469 = vmatprep.subr.mxu0 0.0
        %2470 = vmatpush1.msra.mxu0 0.0
        %2471 = vmatprep.subr.mxu0 0.0
        %2472 = vmatpush1.msra.mxu0 0.0
        %2473 = vmatprep.subr.mxu0 0.0
        %2474 = vmatpush1.msra.mxu0 0.0
        %2475 = vmatprep.subr.mxu0 0.0
        %2476 = vmatpush1.msra.mxu0 0.0
        %2477 = vmatprep.subr.mxu0 0.0
        %2478 = vmatpush1.msra.mxu0 0.0
        %2479 = vmatprep.subr.mxu0 0.0
        %2480 = vmatpush1.msra.mxu0 0.0
        %2481 = vmatprep.subr.mxu0 0.0
        %2482 = vmatpush1.msra.mxu0 0.0
        %2483 = vmatprep.subr.mxu0 0.0
        %2484 = vmatpush1.msra.mxu0 0.0
        %2485 = vmatprep.subr.mxu0 0.0
        %2486 = vmatpush1.msra.mxu0 0.0
        %2487 = vmatprep.subr.mxu0 0.0
        %2488 = vmatpush1.msra.mxu0 0.0
        %2489 = vmatprep.subr.mxu0 0.0
        %2490 = vmatpush1.msra.mxu0 0.0
        %2491 = vmatprep.subr.mxu0 0.0
        %2492 = vmatpush1.msra.mxu0 0.0
        %2493 = vmatprep.subr.mxu0 0.0
        %2494 = vmatpush1.msra.mxu0 0.0
        %2495 = vmatprep.subr.mxu0 0.0
        %2496 = vmatpush1.msra.mxu0 0.0
        %2497 = vmatprep.subr.mxu0 0.0
        %2498 = vmatpush1.msra.mxu0 0.0
        %2499 = vmatprep.subr.mxu0 0.0
        %2500 = vmatpush1.msra.mxu0 0.0
        %2501 = vmatprep.subr.mxu0 0.0
        %2502 = vmatpush1.msra.mxu0 0.0
        %2503 = vmatprep.subr.mxu0 0.0
        %2504 = vmatpush1.msra.mxu0 0.0
        %2505 = vmatprep.subr.mxu0 0.0
        %2506 = vmatpush1.msra.mxu0 0.0
        %2507 = vmatprep.mubr.f32.mxu0 0.0
        %2508 = vmatmul.mubr.f32.gmra.mrb[0].mxu0 %v2441
        %v2509 = vpop.f32.mrb[0].mxu0
        %v2510 = vadd.f32 0.0, %v2509
        %v2511 = vpop.f32.mrb[0].mxu0
        %2512 = vdwg.mxu0
        %v2513 = vmax.f32 %v2435, %v2510
        %v2514 = vld [vmem:[#allocation10] sm:$0x1]
        %v2515 = vlaneseq
        %v2516 = vshrl.u32 %v2515, 7
        %v2517 = vsub.s32 0, %v2516
        %v2518 = vrot.slane %v2514, %v2517
        %v2519 = vmul.f32 %v2513, %v2518
        %v2520 = vld [vmem:[#allocation10 + $0x1] sm:$0x1]
        %v2521 = vlaneseq
        %v2522 = vshrl.u32 %v2521, 7
        %v2523 = vsub.s32 0, %v2522
        %v2524 = vrot.slane %v2520, %v2523
        %v2525 = vadd.f32 %v2519, %v2524
        %v2526 = vmax.f32 %v2525, 0.0
        %v2527 = vld [vmem:[%s19] sm:$0xff]
        %v2528 = vld [vmem:[%s19 + $0x8] sm:$0xff]
        %v2529 = vld [vmem:[%s19 + $0x10] sm:$0xff]
        %v2530 = vld [vmem:[%s19 + $0x18] sm:$0xff]
        %v2531 = vld [vmem:[%s19 + $0x20] sm:$0xff]
        %v2532 = vld [vmem:[%s19 + $0x28] sm:$0xff]
        %v2533 = vld [vmem:[%s19 + $0x30] sm:$0xff]
        %v2534 = vld [vmem:[%s19 + $0x38] sm:$0xff]
        %v2535 = vld [vmem:[#allocation10 + $0x2] sm:$0x1]
        %v2536 = vlaneseq
        %v2537 = vshrl.u32 %v2536, 7
        %v2538 = vsub.s32 0, %v2537
        %v2539 = vrot.slane %v2535, %v2538
        %v2541 = vsel %vm1654, %v2526, 0
        %2543 = vmatprep.subr.mxu0 0.0
        %2544 = vmatpush1.msra.mxu0 %v2527
        %2545 = vmatprep.subr.mxu0 0.0
        %2546 = vmatpush1.msra.mxu0 %v2528
        %2547 = vmatprep.subr.mxu0 0.0
        %2548 = vmatpush1.msra.mxu0 %v2529
        %2549 = vmatprep.subr.mxu0 0.0
        %2550 = vmatpush1.msra.mxu0 %v2530
        %2551 = vmatprep.subr.mxu0 0.0
        %2552 = vmatpush1.msra.mxu0 %v2531
        %2553 = vmatprep.subr.mxu0 0.0
        %2554 = vmatpush1.msra.mxu0 %v2532
        %2555 = vmatprep.subr.mxu0 0.0
        %2556 = vmatpush1.msra.mxu0 %v2533
        %2557 = vmatprep.subr.mxu0 0.0
        %2558 = vmatpush1.msra.mxu0 %v2534
        %2559 = vmatprep.subr.mxu0 0.0
        %2560 = vmatpush1.msra.mxu0 0.0
        %2561 = vmatprep.subr.mxu0 0.0
        %2562 = vmatpush1.msra.mxu0 0.0
        %2563 = vmatprep.subr.mxu0 0.0
        %2564 = vmatpush1.msra.mxu0 0.0
        %2565 = vmatprep.subr.mxu0 0.0
        %2566 = vmatpush1.msra.mxu0 0.0
        %2567 = vmatprep.subr.mxu0 0.0
        %2568 = vmatpush1.msra.mxu0 0.0
        %2569 = vmatprep.subr.mxu0 0.0
        %2570 = vmatpush1.msra.mxu0 0.0
        %2571 = vmatprep.subr.mxu0 0.0
        %2572 = vmatpush1.msra.mxu0 0.0
        %2573 = vmatprep.subr.mxu0 0.0
        %2574 = vmatpush1.msra.mxu0 0.0
        %2575 = vmatprep.subr.mxu0 0.0
        %2576 = vmatpush1.msra.mxu0 0.0
        %2577 = vmatprep.subr.mxu0 0.0
        %2578 = vmatpush1.msra.mxu0 0.0
        %2579 = vmatprep.subr.mxu0 0.0
        %2580 = vmatpush1.msra.mxu0 0.0
        %2581 = vmatprep.subr.mxu0 0.0
        %2582 = vmatpush1.msra.mxu0 0.0
        %2583 = vmatprep.subr.mxu0 0.0
        %2584 = vmatpush1.msra.mxu0 0.0
        %2585 = vmatprep.subr.mxu0 0.0
        %2586 = vmatpush1.msra.mxu0 0.0
        %2587 = vmatprep.subr.mxu0 0.0
        %2588 = vmatpush1.msra.mxu0 0.0
        %2589 = vmatprep.subr.mxu0 0.0
        %2590 = vmatpush1.msra.mxu0 0.0
        %2591 = vmatprep.subr.mxu0 0.0
        %2592 = vmatpush1.msra.mxu0 0.0
        %2593 = vmatprep.subr.mxu0 0.0
        %2594 = vmatpush1.msra.mxu0 0.0
        %2595 = vmatprep.subr.mxu0 0.0
        %2596 = vmatpush1.msra.mxu0 0.0
        %2597 = vmatprep.subr.mxu0 0.0
        %2598 = vmatpush1.msra.mxu0 0.0
        %2599 = vmatprep.subr.mxu0 0.0
        %2600 = vmatpush1.msra.mxu0 0.0
        %2601 = vmatprep.subr.mxu0 0.0
        %2602 = vmatpush1.msra.mxu0 0.0
        %2603 = vmatprep.subr.mxu0 0.0
        %2604 = vmatpush1.msra.mxu0 0.0
        %2605 = vmatprep.subr.mxu0 0.0
        %2606 = vmatpush1.msra.mxu0 0.0
        %2607 = vmatprep.mubr.f32.mxu0 0.0
        %2608 = vmatmul.mubr.f32.gmra.mrb[0].mxu0 %v2541
        %v2609 = vpop.f32.mrb[0].mxu0
        %v2610 = vadd.f32 %v2539, %v2609
        %v2611 = vpop.f32.mrb[0].mxu0
        %2612 = vdwg.mxu0
        %v2613 = vmax.f32 %v2610, 0.0
        %v2614 = vld [vmem:[%s21] sm:$0xff]
        %v2615 = vld [vmem:[%s21 + $0x8] sm:$0xff]
        %v2616 = vld [vmem:[%s21 + $0x10] sm:$0xff]
        %v2617 = vld [vmem:[%s21 + $0x18] sm:$0xff]
        %vm2618 = vcmask 261120
        %v2620 = vsel %vm2618, %v2613, 0
        %2622 = vmatprep.subr.mxu0 0.0
        %2623 = vmatpush1.msra.mxu0 %v2614
        %2624 = vmatprep.subr.mxu0 0.0
        %2625 = vmatpush1.msra.mxu0 %v2615
        %2626 = vmatprep.subr.mxu0 0.0
        %2627 = vmatpush1.msra.mxu0 %v2616
        %2628 = vmatprep.subr.mxu0 0.0
        %2629 = vmatpush1.msra.mxu0 %v2617
        %2630 = vmatprep.subr.mxu0 0.0
        %2631 = vmatpush1.msra.mxu0 0.0
        %2632 = vmatprep.subr.mxu0 0.0
        %2633 = vmatpush1.msra.mxu0 0.0
        %2634 = vmatprep.subr.mxu0 0.0
        %2635 = vmatpush1.msra.mxu0 0.0
        %2636 = vmatprep.subr.mxu0 0.0
        %2637 = vmatpush1.msra.mxu0 0.0
        %2638 = vmatprep.subr.mxu0 0.0
        %2639 = vmatpush1.msra.mxu0 0.0
        %2640 = vmatprep.subr.mxu0 0.0
        %2641 = vmatpush1.msra.mxu0 0.0
        %2642 = vmatprep.subr.mxu0 0.0
        %2643 = vmatpush1.msra.mxu0 0.0
        %2644 = vmatprep.subr.mxu0 0.0
        %2645 = vmatpush1.msra.mxu0 0.0
        %2646 = vmatprep.subr.mxu0 0.0
        %2647 = vmatpush1.msra.mxu0 0.0
        %2648 = vmatprep.subr.mxu0 0.0
        %2649 = vmatpush1.msra.mxu0 0.0
        %2650 = vmatprep.subr.mxu0 0.0
        %2651 = vmatpush1.msra.mxu0 0.0
        %2652 = vmatprep.subr.mxu0 0.0
        %2653 = vmatpush1.msra.mxu0 0.0
        %2654 = vmatprep.subr.mxu0 0.0
        %2655 = vmatpush1.msra.mxu0 0.0
        %2656 = vmatprep.subr.mxu0 0.0
        %2657 = vmatpush1.msra.mxu0 0.0
        %2658 = vmatprep.subr.mxu0 0.0
        %2659 = vmatpush1.msra.mxu0 0.0
        %2660 = vmatprep.subr.mxu0 0.0
        %2661 = vmatpush1.msra.mxu0 0.0
        %2662 = vmatprep.subr.mxu0 0.0
        %2663 = vmatpush1.msra.mxu0 0.0
        %2664 = vmatprep.subr.mxu0 0.0
        %2665 = vmatpush1.msra.mxu0 0.0
        %2666 = vmatprep.subr.mxu0 0.0
        %2667 = vmatpush1.msra.mxu0 0.0
        %2668 = vmatprep.subr.mxu0 0.0
        %2669 = vmatpush1.msra.mxu0 0.0
        %2670 = vmatprep.subr.mxu0 0.0
        %2671 = vmatpush1.msra.mxu0 0.0
        %2672 = vmatprep.subr.mxu0 0.0
        %2673 = vmatpush1.msra.mxu0 0.0
        %2674 = vmatprep.subr.mxu0 0.0
        %2675 = vmatpush1.msra.mxu0 0.0
        %2676 = vmatprep.subr.mxu0 0.0
        %2677 = vmatpush1.msra.mxu0 0.0
        %2678 = vmatprep.subr.mxu0 0.0
        %2679 = vmatpush1.msra.mxu0 0.0
        %2680 = vmatprep.subr.mxu0 0.0
        %2681 = vmatpush1.msra.mxu0 0.0
        %2682 = vmatprep.subr.mxu0 0.0
        %2683 = vmatpush1.msra.mxu0 0.0
        %2684 = vmatprep.subr.mxu0 0.0
        %2685 = vmatpush1.msra.mxu0 0.0
        %2686 = vmatprep.mubr.f32.mxu0 0.0
        %2687 = vmatmul.mubr.f32.gmra.mrb[0].mxu0 %v2620
        %v2688 = vpop.f32.mrb[0].mxu0
        %v2689 = vadd.f32 0.0, %v2688
        %v2690 = vpop.f32.mrb[0].mxu0
        %2691 = vdwg.mxu0
        %s2692 = scalar_lea.vmem %s21, 32
        %v2693 = vld [vmem:[%s2692] sm:$0xff]
        %v2694 = vld [vmem:[%s2692 + $0x8] sm:$0xff]
        %v2695 = vld [vmem:[%s2692 + $0x10] sm:$0xff]
        %v2696 = vld [vmem:[%s2692 + $0x18] sm:$0xff]
        %s2697 = scalar_lea.vmem %s21, 64
        %v2698 = vld [vmem:[%s2697] sm:$0xff]
        %v2699 = vld [vmem:[%s2697 + $0x8] sm:$0xff]
        %v2700 = vld [vmem:[%s2697 + $0x10] sm:$0xff]
        %v2701 = vld [vmem:[%s2697 + $0x18] sm:$0xff]
        %2702 = vmatprep.subr.mxu0 0.0
        %2703 = vmatpush1.msra.mxu0 %v2698
        %2704 = vmatprep.subr.mxu0 0.0
        %2705 = vmatpush1.msra.mxu0 %v2699
        %2706 = vmatprep.subr.mxu0 0.0
        %2707 = vmatpush1.msra.mxu0 %v2700
        %2708 = vmatprep.subr.mxu0 0.0
        %2709 = vmatpush1.msra.mxu0 %v2701
        %2710 = vmatprep.subr.mxu0 0.0
        %2711 = vmatpush1.msra.mxu0 0.0
        %2712 = vmatprep.subr.mxu0 0.0
        %2713 = vmatpush1.msra.mxu0 0.0
        %2714 = vmatprep.subr.mxu0 0.0
        %2715 = vmatpush1.msra.mxu0 0.0
        %2716 = vmatprep.subr.mxu0 0.0
        %2717 = vmatpush1.msra.mxu0 0.0
        %2718 = vmatprep.subr.mxu0 0.0
        %2719 = vmatpush1.msra.mxu0 0.0
        %2720 = vmatprep.subr.mxu0 0.0
        %2721 = vmatpush1.msra.mxu0 0.0
        %2722 = vmatprep.subr.mxu0 0.0
        %2723 = vmatpush1.msra.mxu0 0.0
        %2724 = vmatprep.subr.mxu0 0.0
        %2725 = vmatpush1.msra.mxu0 0.0
        %2726 = vmatprep.subr.mxu0 0.0
        %2727 = vmatpush1.msra.mxu0 0.0
        %2728 = vmatprep.subr.mxu0 0.0
        %2729 = vmatpush1.msra.mxu0 0.0
        %2730 = vmatprep.subr.mxu0 0.0
        %2731 = vmatpush1.msra.mxu0 0.0
        %2732 = vmatprep.subr.mxu0 0.0
        %2733 = vmatpush1.msra.mxu0 0.0
        %2734 = vmatprep.subr.mxu0 0.0
        %2735 = vmatpush1.msra.mxu0 0.0
        %2736 = vmatprep.subr.mxu0 0.0
        %2737 = vmatpush1.msra.mxu0 0.0
        %2738 = vmatprep.subr.mxu0 0.0
        %2739 = vmatpush1.msra.mxu0 0.0
        %2740 = vmatprep.subr.mxu0 0.0
        %2741 = vmatpush1.msra.mxu0 0.0
        %2742 = vmatprep.subr.mxu0 0.0
        %2743 = vmatpush1.msra.mxu0 0.0
        %2744 = vmatprep.subr.mxu0 0.0
        %2745 = vmatpush1.msra.mxu0 0.0
        %2746 = vmatprep.subr.mxu0 0.0
        %2747 = vmatpush1.msra.mxu0 0.0
        %2748 = vmatprep.subr.mxu0 0.0
        %2749 = vmatpush1.msra.mxu0 0.0
        %2750 = vmatprep.subr.mxu0 0.0
        %2751 = vmatpush1.msra.mxu0 0.0
        %2752 = vmatprep.subr.mxu0 0.0
        %2753 = vmatpush1.msra.mxu0 0.0
        %2754 = vmatprep.subr.mxu0 0.0
        %2755 = vmatpush1.msra.mxu0 0.0
        %2756 = vmatprep.subr.mxu0 0.0
        %2757 = vmatpush1.msra.mxu0 0.0
        %2758 = vmatprep.subr.mxu0 0.0
        %2759 = vmatpush1.msra.mxu0 0.0
        %2760 = vmatprep.subr.mxu0 0.0
        %2761 = vmatpush1.msra.mxu0 0.0
        %2762 = vmatprep.subr.mxu0 0.0
        %2763 = vmatpush1.msra.mxu0 0.0
        %2764 = vmatprep.subr.mxu0 0.0
        %2765 = vmatpush1.msra.mxu0 0.0
        %2766 = vmatprep.mubr.f32.mxu0 0.0
        %2767 = vmatmul.mubr.f32.gmra.mrb[0].mxu0 %v2620
        %v2768 = vpop.f32.mrb[0].mxu0
        %v2769 = vadd.f32 0.0, %v2768
        %v2770 = vpop.f32.mrb[0].mxu0
        %2771 = vdwg.mxu0
        %v2772 = vld [vmem:[#allocation13] sm:$0xff]
        %vm2773 = vcmask 64512
        %v2775 = vsel %vm2773, %v2772, 0
        %2777 = vmatprep.subr.mxu0 0.0
        %2778 = vmatpush1.msra.mxu0 %v2689
        %2779 = vmatprep.subr.mxu0 0.0
        %2780 = vmatpush1.msra.mxu0 0.0
        %2781 = vmatprep.subr.mxu0 0.0
        %2782 = vmatpush1.msra.mxu0 0.0
        %2783 = vmatprep.subr.mxu0 0.0
        %2784 = vmatpush1.msra.mxu0 0.0
        %2785 = vmatprep.subr.mxu0 0.0
        %2786 = vmatpush1.msra.mxu0 0.0
        %2787 = vmatprep.subr.mxu0 0.0
        %2788 = vmatpush1.msra.mxu0 0.0
        %2789 = vmatprep.subr.mxu0 0.0
        %2790 = vmatpush1.msra.mxu0 0.0
        %2791 = vmatprep.subr.mxu0 0.0
        %2792 = vmatpush1.msra.mxu0 0.0
        %2793 = vmatprep.subr.mxu0 0.0
        %2794 = vmatpush1.msra.mxu0 0.0
        %2795 = vmatprep.subr.mxu0 0.0
        %2796 = vmatpush1.msra.mxu0 0.0
        %2797 = vmatprep.subr.mxu0 0.0
        %2798 = vmatpush1.msra.mxu0 0.0
        %2799 = vmatprep.subr.mxu0 0.0
        %2800 = vmatpush1.msra.mxu0 0.0
        %2801 = vmatprep.subr.mxu0 0.0
        %2802 = vmatpush1.msra.mxu0 0.0
        %2803 = vmatprep.subr.mxu0 0.0
        %2804 = vmatpush1.msra.mxu0 0.0
        %2805 = vmatprep.subr.mxu0 0.0
        %2806 = vmatpush1.msra.mxu0 0.0
        %2807 = vmatprep.subr.mxu0 0.0
        %2808 = vmatpush1.msra.mxu0 0.0
        %2809 = vmatprep.subr.mxu0 0.0
        %2810 = vmatpush1.msra.mxu0 0.0
        %2811 = vmatprep.subr.mxu0 0.0
        %2812 = vmatpush1.msra.mxu0 0.0
        %2813 = vmatprep.subr.mxu0 0.0
        %2814 = vmatpush1.msra.mxu0 0.0
        %2815 = vmatprep.subr.mxu0 0.0
        %2816 = vmatpush1.msra.mxu0 0.0
        %2817 = vmatprep.subr.mxu0 0.0
        %2818 = vmatpush1.msra.mxu0 0.0
        %2819 = vmatprep.subr.mxu0 0.0
        %2820 = vmatpush1.msra.mxu0 0.0
        %2821 = vmatprep.subr.mxu0 0.0
        %2822 = vmatpush1.msra.mxu0 0.0
        %2823 = vmatprep.subr.mxu0 0.0
        %2824 = vmatpush1.msra.mxu0 0.0
        %2825 = vmatprep.subr.mxu0 0.0
        %2826 = vmatpush1.msra.mxu0 0.0
        %2827 = vmatprep.subr.mxu0 0.0
        %2828 = vmatpush1.msra.mxu0 0.0
        %2829 = vmatprep.subr.mxu0 0.0
        %2830 = vmatpush1.msra.mxu0 0.0
        %2831 = vmatprep.subr.mxu0 0.0
        %2832 = vmatpush1.msra.mxu0 0.0
        %2833 = vmatprep.subr.mxu0 0.0
        %2834 = vmatpush1.msra.mxu0 0.0
        %2835 = vmatprep.subr.mxu0 0.0
        %2836 = vmatpush1.msra.mxu0 0.0
        %2837 = vmatprep.subr.mxu0 0.0
        %2838 = vmatpush1.msra.mxu0 0.0
        %2839 = vmatprep.subr.mxu0 0.0
        %2840 = vmatpush1.msra.mxu0 0.0
        %2841 = vmatprep.mubr.f32.mxu0 0.0
        %2842 = vmatmul.mubr.f32.gmra.mrb[0].mxu0 %v2775
        %v2843 = vpop.f32.mrb[0].mxu0
        %v2844 = vadd.f32 0.0, %v2843
        %v2845 = vpop.f32.mrb[0].mxu0
        %2846 = vdwg.mxu0
        %2847 = vmatprep.subr.mxu0 0.0
        %2848 = vmatpush1.msra.mxu0 %v2693
        %2849 = vmatprep.subr.mxu0 0.0
        %2850 = vmatpush1.msra.mxu0 %v2694
        %2851 = vmatprep.subr.mxu0 0.0
        %2852 = vmatpush1.msra.mxu0 %v2695
        %2853 = vmatprep.subr.mxu0 0.0
        %2854 = vmatpush1.msra.mxu0 %v2696
        %2855 = vmatprep.subr.mxu0 0.0
        %2856 = vmatpush1.msra.mxu0 0.0
        %2857 = vmatprep.subr.mxu0 0.0
        %2858 = vmatpush1.msra.mxu0 0.0
        %2859 = vmatprep.subr.mxu0 0.0
        %2860 = vmatpush1.msra.mxu0 0.0
        %2861 = vmatprep.subr.mxu0 0.0
        %2862 = vmatpush1.msra.mxu0 0.0
        %2863 = vmatprep.subr.mxu0 0.0
        %2864 = vmatpush1.msra.mxu0 0.0
        %2865 = vmatprep.subr.mxu0 0.0
        %2866 = vmatpush1.msra.mxu0 0.0
        %2867 = vmatprep.subr.mxu0 0.0
        %2868 = vmatpush1.msra.mxu0 0.0
        %2869 = vmatprep.subr.mxu0 0.0
        %2870 = vmatpush1.msra.mxu0 0.0
        %2871 = vmatprep.subr.mxu0 0.0
        %2872 = vmatpush1.msra.mxu0 0.0
        %2873 = vmatprep.subr.mxu0 0.0
        %2874 = vmatpush1.msra.mxu0 0.0
        %2875 = vmatprep.subr.mxu0 0.0
        %2876 = vmatpush1.msra.mxu0 0.0
        %2877 = vmatprep.subr.mxu0 0.0
        %2878 = vmatpush1.msra.mxu0 0.0
        %2879 = vmatprep.subr.mxu0 0.0
        %2880 = vmatpush1.msra.mxu0 0.0
        %2881 = vmatprep.subr.mxu0 0.0
        %2882 = vmatpush1.msra.mxu0 0.0
        %2883 = vmatprep.subr.mxu0 0.0
        %2884 = vmatpush1.msra.mxu0 0.0
        %2885 = vmatprep.subr.mxu0 0.0
        %2886 = vmatpush1.msra.mxu0 0.0
        %2887 = vmatprep.subr.mxu0 0.0
        %2888 = vmatpush1.msra.mxu0 0.0
        %2889 = vmatprep.subr.mxu0 0.0
        %2890 = vmatpush1.msra.mxu0 0.0
        %2891 = vmatprep.subr.mxu0 0.0
        %2892 = vmatpush1.msra.mxu0 0.0
        %2893 = vmatprep.subr.mxu0 0.0
        %2894 = vmatpush1.msra.mxu0 0.0
        %2895 = vmatprep.subr.mxu0 0.0
        %2896 = vmatpush1.msra.mxu0 0.0
        %2897 = vmatprep.subr.mxu0 0.0
        %2898 = vmatpush1.msra.mxu0 0.0
        %2899 = vmatprep.subr.mxu0 0.0
        %2900 = vmatpush1.msra.mxu0 0.0
        %2901 = vmatprep.subr.mxu0 0.0
        %2902 = vmatpush1.msra.mxu0 0.0
        %2903 = vmatprep.subr.mxu0 0.0
        %2904 = vmatpush1.msra.mxu0 0.0
        %2905 = vmatprep.subr.mxu0 0.0
        %2906 = vmatpush1.msra.mxu0 0.0
        %2907 = vmatprep.subr.mxu0 0.0
        %2908 = vmatpush1.msra.mxu0 0.0
        %2909 = vmatprep.subr.mxu0 0.0
        %2910 = vmatpush1.msra.mxu0 0.0
        %2911 = vmatprep.mubr.f32.mxu0 0.0
        %2912 = vmatmul.mubr.f32.gmra.mrb[0].mxu0 %v2620
        %v2913 = vpop.f32.mrb[0].mxu0
        %v2914 = vadd.f32 %v2844, %v2913
        %v2915 = vpop.f32.mrb[0].mxu0
        %2916 = vdwg.mxu0
        %s2917 = scalar_lea.vmem [#allocation13], 8
        %v2918 = vld [vmem:[%s2917] sm:$0xff]
        %v2920 = vsel %vm2773, %v2918, 0
        %2922 = vmatprep.subr.mxu0 0.0
        %2923 = vmatpush1.msra.mxu0 %v2769
        %2924 = vmatprep.subr.mxu0 0.0
        %2925 = vmatpush1.msra.mxu0 0.0
        %2926 = vmatprep.subr.mxu0 0.0
        %2927 = vmatpush1.msra.mxu0 0.0
        %2928 = vmatprep.subr.mxu0 0.0
        %2929 = vmatpush1.msra.mxu0 0.0
        %2930 = vmatprep.subr.mxu0 0.0
        %2931 = vmatpush1.msra.mxu0 0.0
        %2932 = vmatprep.subr.mxu0 0.0
        %2933 = vmatpush1.msra.mxu0 0.0
        %2934 = vmatprep.subr.mxu0 0.0
        %2935 = vmatpush1.msra.mxu0 0.0
        %2936 = vmatprep.subr.mxu0 0.0
        %2937 = vmatpush1.msra.mxu0 0.0
        %2938 = vmatprep.subr.mxu0 0.0
        %2939 = vmatpush1.msra.mxu0 0.0
        %2940 = vmatprep.subr.mxu0 0.0
        %2941 = vmatpush1.msra.mxu0 0.0
        %2942 = vmatprep.subr.mxu0 0.0
        %2943 = vmatpush1.msra.mxu0 0.0
        %2944 = vmatprep.subr.mxu0 0.0
        %2945 = vmatpush1.msra.mxu0 0.0
        %2946 = vmatprep.subr.mxu0 0.0
        %2947 = vmatpush1.msra.mxu0 0.0
        %2948 = vmatprep.subr.mxu0 0.0
        %2949 = vmatpush1.msra.mxu0 0.0
        %2950 = vmatprep.subr.mxu0 0.0
        %2951 = vmatpush1.msra.mxu0 0.0
        %2952 = vmatprep.subr.mxu0 0.0
        %2953 = vmatpush1.msra.mxu0 0.0
        %2954 = vmatprep.subr.mxu0 0.0
        %2955 = vmatpush1.msra.mxu0 0.0
        %2956 = vmatprep.subr.mxu0 0.0
        %2957 = vmatpush1.msra.mxu0 0.0
        %2958 = vmatprep.subr.mxu0 0.0
        %2959 = vmatpush1.msra.mxu0 0.0
        %2960 = vmatprep.subr.mxu0 0.0
        %2961 = vmatpush1.msra.mxu0 0.0
        %2962 = vmatprep.subr.mxu0 0.0
        %2963 = vmatpush1.msra.mxu0 0.0
        %2964 = vmatprep.subr.mxu0 0.0
        %2965 = vmatpush1.msra.mxu0 0.0
        %2966 = vmatprep.subr.mxu0 0.0
        %2967 = vmatpush1.msra.mxu0 0.0
        %2968 = vmatprep.subr.mxu0 0.0
        %2969 = vmatpush1.msra.mxu0 0.0
        %2970 = vmatprep.subr.mxu0 0.0
        %2971 = vmatpush1.msra.mxu0 0.0
        %2972 = vmatprep.subr.mxu0 0.0
        %2973 = vmatpush1.msra.mxu0 0.0
        %2974 = vmatprep.subr.mxu0 0.0
        %2975 = vmatpush1.msra.mxu0 0.0
        %2976 = vmatprep.subr.mxu0 0.0
        %2977 = vmatpush1.msra.mxu0 0.0
        %2978 = vmatprep.subr.mxu0 0.0
        %2979 = vmatpush1.msra.mxu0 0.0
        %2980 = vmatprep.subr.mxu0 0.0
        %2981 = vmatpush1.msra.mxu0 0.0
        %2982 = vmatprep.subr.mxu0 0.0
        %2983 = vmatpush1.msra.mxu0 0.0
        %2984 = vmatprep.subr.mxu0 0.0
        %2985 = vmatpush1.msra.mxu0 0.0
        %2986 = vmatprep.mubr.f32.mxu0 0.0
        %2987 = vmatmul.mubr.f32.gmra.mrb[0].mxu0 %v2920
        %v2988 = vpop.f32.mrb[0].mxu0
        %v2989 = vadd.f32 0.0, %v2988
        %v2990 = vpop.f32.mrb[0].mxu0
        %2991 = vdwg.mxu0
        %v2992 = vadd.f32 %v2914, %v2989
        %v2993 = vld [vmem:[#allocation10 + $0x3] sm:$0x1]
        %v2994 = vlaneseq
        %v2995 = vshrl.u32 %v2994, 7
        %v2996 = vsub.s32 0, %v2995
        %v2997 = vrot.slane %v2993, %v2996
        %v2998 = vadd.f32 %v2992, %v2997
        %v2999 = vmax.f32 %v2998, 0.0
        %v3000 = vld [vmem:[#allocation11] sm:$0xff]
        %v3001 = vld [vmem:[#allocation11 + $0x8] sm:$0xff]
        %v3002 = vld [vmem:[#allocation11 + $0x10] sm:$0xff]
        %v3003 = vld [vmem:[#allocation11 + $0x18] sm:$0xff]
        %v3004 = vld [vmem:[#allocation10 + $0x4] sm:$0x1]
        %v3005 = vlaneseq
        %v3006 = vshrl.u32 %v3005, 7
        %v3007 = vsub.s32 0, %v3006
        %v3008 = vrot.slane %v3004, %v3007
        %v3010 = vsel %vm2618, %v2999, 0
        %3012 = vmatprep.subr.mxu0 0.0
        %3013 = vmatpush1.msra.mxu0 %v3000
        %3014 = vmatprep.subr.mxu0 0.0
        %3015 = vmatpush1.msra.mxu0 %v3001
        %3016 = vmatprep.subr.mxu0 0.0
        %3017 = vmatpush1.msra.mxu0 %v3002
        %3018 = vmatprep.subr.mxu0 0.0
        %3019 = vmatpush1.msra.mxu0 %v3003
        %3020 = vmatprep.subr.mxu0 0.0
        %3021 = vmatpush1.msra.mxu0 0.0
        %3022 = vmatprep.subr.mxu0 0.0
        %3023 = vmatpush1.msra.mxu0 0.0
        %3024 = vmatprep.subr.mxu0 0.0
        %3025 = vmatpush1.msra.mxu0 0.0
        %3026 = vmatprep.subr.mxu0 0.0
        %3027 = vmatpush1.msra.mxu0 0.0
        %3028 = vmatprep.subr.mxu0 0.0
        %3029 = vmatpush1.msra.mxu0 0.0
        %3030 = vmatprep.subr.mxu0 0.0
        %3031 = vmatpush1.msra.mxu0 0.0
        %3032 = vmatprep.subr.mxu0 0.0
        %3033 = vmatpush1.msra.mxu0 0.0
        %3034 = vmatprep.subr.mxu0 0.0
        %3035 = vmatpush1.msra.mxu0 0.0
        %3036 = vmatprep.subr.mxu0 0.0
        %3037 = vmatpush1.msra.mxu0 0.0
        %3038 = vmatprep.subr.mxu0 0.0
        %3039 = vmatpush1.msra.mxu0 0.0
        %3040 = vmatprep.subr.mxu0 0.0
        %3041 = vmatpush1.msra.mxu0 0.0
        %3042 = vmatprep.subr.mxu0 0.0
        %3043 = vmatpush1.msra.mxu0 0.0
        %3044 = vmatprep.subr.mxu0 0.0
        %3045 = vmatpush1.msra.mxu0 0.0
        %3046 = vmatprep.subr.mxu0 0.0
        %3047 = vmatpush1.msra.mxu0 0.0
        %3048 = vmatprep.subr.mxu0 0.0
        %3049 = vmatpush1.msra.mxu0 0.0
        %3050 = vmatprep.subr.mxu0 0.0
        %3051 = vmatpush1.msra.mxu0 0.0
        %3052 = vmatprep.subr.mxu0 0.0
        %3053 = vmatpush1.msra.mxu0 0.0
        %3054 = vmatprep.subr.mxu0 0.0
        %3055 = vmatpush1.msra.mxu0 0.0
        %3056 = vmatprep.subr.mxu0 0.0
        %3057 = vmatpush1.msra.mxu0 0.0
        %3058 = vmatprep.subr.mxu0 0.0
        %3059 = vmatpush1.msra.mxu0 0.0
        %3060 = vmatprep.subr.mxu0 0.0
        %3061 = vmatpush1.msra.mxu0 0.0
        %3062 = vmatprep.subr.mxu0 0.0
        %3063 = vmatpush1.msra.mxu0 0.0
        %3064 = vmatprep.subr.mxu0 0.0
        %3065 = vmatpush1.msra.mxu0 0.0
        %3066 = vmatprep.subr.mxu0 0.0
        %3067 = vmatpush1.msra.mxu0 0.0
        %3068 = vmatprep.subr.mxu0 0.0
        %3069 = vmatpush1.msra.mxu0 0.0
        %3070 = vmatprep.subr.mxu0 0.0
        %3071 = vmatpush1.msra.mxu0 0.0
        %3072 = vmatprep.subr.mxu0 0.0
        %3073 = vmatpush1.msra.mxu0 0.0
        %3074 = vmatprep.subr.mxu0 0.0
        %3075 = vmatpush1.msra.mxu0 0.0
        %3076 = vmatprep.mubr.f32.mxu0 0.0
        %3077 = vmatmul.mubr.f32.gmra.mrb[0].mxu0 %v3010
        %v3078 = vpop.f32.mrb[0].mxu0
        %v3079 = vadd.f32 %v3008, %v3078
        %v3080 = vpop.f32.mrb[0].mxu0
        %3081 = vdwg.mxu0
        %v3082 = vadd.f32 %v3079, %v2513
        %v3083 = vld [vmem:[#allocation14] sm:$0x1]
        %v3084 = vlaneseq
        %v3085 = vshrl.u32 %v3084, 7
        %v3086 = vsub.s32 0, %v3085
        %v3087 = vrot.slane %v3083, %v3086
        %v3088 = vmul.f32 %v3082, %v3087
        %v3089 = vld [vmem:[#allocation14 + $0x1] sm:$0x1]
        %v3090 = vlaneseq
        %v3091 = vshrl.u32 %v3090, 7
        %v3092 = vsub.s32 0, %v3091
        %v3093 = vrot.slane %v3089, %v3092
        %v3094 = vadd.f32 %v3088, %v3093
        %v3095 = vmax.f32 %v3094, 0.0
        %v3096 = vld [vmem:[%s29] sm:$0xff]
        %v3097 = vld [vmem:[%s29 + $0x8] sm:$0xff]
        %v3098 = vld [vmem:[%s29 + $0x10] sm:$0xff]
        %v3099 = vld [vmem:[%s29 + $0x18] sm:$0xff]
        %v3100 = vld [vmem:[%s29 + $0x20] sm:$0xff]
        %v3101 = vld [vmem:[%s29 + $0x28] sm:$0xff]
        %v3102 = vld [vmem:[%s29 + $0x30] sm:$0xff]
        %v3103 = vld [vmem:[%s29 + $0x38] sm:$0xff]
        %v3104 = vld [vmem:[#allocation14 + $0x2] sm:$0x1]
        %v3105 = vlaneseq
        %v3106 = vshrl.u32 %v3105, 7
        %v3107 = vsub.s32 0, %v3106
        %v3108 = vrot.slane %v3104, %v3107
        %v3110 = vsel %vm1654, %v3095, 0
        %3112 = vmatprep.subr.mxu0 0.0
        %3113 = vmatpush1.msra.mxu0 %v3096
        %3114 = vmatprep.subr.mxu0 0.0
        %3115 = vmatpush1.msra.mxu0 %v3097
        %3116 = vmatprep.subr.mxu0 0.0
        %3117 = vmatpush1.msra.mxu0 %v3098
        %3118 = vmatprep.subr.mxu0 0.0
        %3119 = vmatpush1.msra.mxu0 %v3099
        %3120 = vmatprep.subr.mxu0 0.0
        %3121 = vmatpush1.msra.mxu0 %v3100
        %3122 = vmatprep.subr.mxu0 0.0
        %3123 = vmatpush1.msra.mxu0 %v3101
        %3124 = vmatprep.subr.mxu0 0.0
        %3125 = vmatpush1.msra.mxu0 %v3102
        %3126 = vmatprep.subr.mxu0 0.0
        %3127 = vmatpush1.msra.mxu0 %v3103
        %3128 = vmatprep.subr.mxu0 0.0
        %3129 = vmatpush1.msra.mxu0 0.0
        %3130 = vmatprep.subr.mxu0 0.0
        %3131 = vmatpush1.msra.mxu0 0.0
        %3132 = vmatprep.subr.mxu0 0.0
        %3133 = vmatpush1.msra.mxu0 0.0
        %3134 = vmatprep.subr.mxu0 0.0
        %3135 = vmatpush1.msra.mxu0 0.0
        %3136 = vmatprep.subr.mxu0 0.0
        %3137 = vmatpush1.msra.mxu0 0.0
        %3138 = vmatprep.subr.mxu0 0.0
        %3139 = vmatpush1.msra.mxu0 0.0
        %3140 = vmatprep.subr.mxu0 0.0
        %3141 = vmatpush1.msra.mxu0 0.0
        %3142 = vmatprep.subr.mxu0 0.0
        %3143 = vmatpush1.msra.mxu0 0.0
        %3144 = vmatprep.subr.mxu0 0.0
        %3145 = vmatpush1.msra.mxu0 0.0
        %3146 = vmatprep.subr.mxu0 0.0
        %3147 = vmatpush1.msra.mxu0 0.0
        %3148 = vmatprep.subr.mxu0 0.0
        %3149 = vmatpush1.msra.mxu0 0.0
        %3150 = vmatprep.subr.mxu0 0.0
        %3151 = vmatpush1.msra.mxu0 0.0
        %3152 = vmatprep.subr.mxu0 0.0
        %3153 = vmatpush1.msra.mxu0 0.0
        %3154 = vmatprep.subr.mxu0 0.0
        %3155 = vmatpush1.msra.mxu0 0.0
        %3156 = vmatprep.subr.mxu0 0.0
        %3157 = vmatpush1.msra.mxu0 0.0
        %3158 = vmatprep.subr.mxu0 0.0
        %3159 = vmatpush1.msra.mxu0 0.0
        %3160 = vmatprep.subr.mxu0 0.0
        %3161 = vmatpush1.msra.mxu0 0.0
        %3162 = vmatprep.subr.mxu0 0.0
        %3163 = vmatpush1.msra.mxu0 0.0
        %3164 = vmatprep.subr.mxu0 0.0
        %3165 = vmatpush1.msra.mxu0 0.0
        %3166 = vmatprep.subr.mxu0 0.0
        %3167 = vmatpush1.msra.mxu0 0.0
        %3168 = vmatprep.subr.mxu0 0.0
        %3169 = vmatpush1.msra.mxu0 0.0
        %3170 = vmatprep.subr.mxu0 0.0
        %3171 = vmatpush1.msra.mxu0 0.0
        %3172 = vmatprep.subr.mxu0 0.0
        %3173 = vmatpush1.msra.mxu0 0.0
        %3174 = vmatprep.subr.mxu0 0.0
        %3175 = vmatpush1.msra.mxu0 0.0
        %3176 = vmatprep.mubr.f32.mxu0 0.0
        %3177 = vmatmul.mubr.f32.gmra.mrb[0].mxu0 %v3110
        %v3178 = vpop.f32.mrb[0].mxu0
        %v3179 = vadd.f32 %v3108, %v3178
        %v3180 = vpop.f32.mrb[0].mxu0
        %3181 = vdwg.mxu0
        %v3182 = vmax.f32 %v3179, 0.0
        %v3183 = vld [vmem:[%s31] sm:$0xff]
        %v3184 = vld [vmem:[%s31 + $0x8] sm:$0xff]
        %v3185 = vld [vmem:[%s31 + $0x10] sm:$0xff]
        %v3186 = vld [vmem:[%s31 + $0x18] sm:$0xff]
        %v3188 = vsel %vm2618, %v3182, 0
        %3190 = vmatprep.subr.mxu0 0.0
        %3191 = vmatpush1.msra.mxu0 %v3183
        %3192 = vmatprep.subr.mxu0 0.0
        %3193 = vmatpush1.msra.mxu0 %v3184
        %3194 = vmatprep.subr.mxu0 0.0
        %3195 = vmatpush1.msra.mxu0 %v3185
        %3196 = vmatprep.subr.mxu0 0.0
        %3197 = vmatpush1.msra.mxu0 %v3186
        %3198 = vmatprep.subr.mxu0 0.0
        %3199 = vmatpush1.msra.mxu0 0.0
        %3200 = vmatprep.subr.mxu0 0.0
        %3201 = vmatpush1.msra.mxu0 0.0
        %3202 = vmatprep.subr.mxu0 0.0
        %3203 = vmatpush1.msra.mxu0 0.0
        %3204 = vmatprep.subr.mxu0 0.0
        %3205 = vmatpush1.msra.mxu0 0.0
        %3206 = vmatprep.subr.mxu0 0.0
        %3207 = vmatpush1.msra.mxu0 0.0
        %3208 = vmatprep.subr.mxu0 0.0
        %3209 = vmatpush1.msra.mxu0 0.0
        %3210 = vmatprep.subr.mxu0 0.0
        %3211 = vmatpush1.msra.mxu0 0.0
        %3212 = vmatprep.subr.mxu0 0.0
        %3213 = vmatpush1.msra.mxu0 0.0
        %3214 = vmatprep.subr.mxu0 0.0
        %3215 = vmatpush1.msra.mxu0 0.0
        %3216 = vmatprep.subr.mxu0 0.0
        %3217 = vmatpush1.msra.mxu0 0.0
        %3218 = vmatprep.subr.mxu0 0.0
        %3219 = vmatpush1.msra.mxu0 0.0
        %3220 = vmatprep.subr.mxu0 0.0
        %3221 = vmatpush1.msra.mxu0 0.0
        %3222 = vmatprep.subr.mxu0 0.0
        %3223 = vmatpush1.msra.mxu0 0.0
        %3224 = vmatprep.subr.mxu0 0.0
        %3225 = vmatpush1.msra.mxu0 0.0
        %3226 = vmatprep.subr.mxu0 0.0
        %3227 = vmatpush1.msra.mxu0 0.0
        %3228 = vmatprep.subr.mxu0 0.0
        %3229 = vmatpush1.msra.mxu0 0.0
        %3230 = vmatprep.subr.mxu0 0.0
        %3231 = vmatpush1.msra.mxu0 0.0
        %3232 = vmatprep.subr.mxu0 0.0
        %3233 = vmatpush1.msra.mxu0 0.0
        %3234 = vmatprep.subr.mxu0 0.0
        %3235 = vmatpush1.msra.mxu0 0.0
        %3236 = vmatprep.subr.mxu0 0.0
        %3237 = vmatpush1.msra.mxu0 0.0
        %3238 = vmatprep.subr.mxu0 0.0
        %3239 = vmatpush1.msra.mxu0 0.0
        %3240 = vmatprep.subr.mxu0 0.0
        %3241 = vmatpush1.msra.mxu0 0.0
        %3242 = vmatprep.subr.mxu0 0.0
        %3243 = vmatpush1.msra.mxu0 0.0
        %3244 = vmatprep.subr.mxu0 0.0
        %3245 = vmatpush1.msra.mxu0 0.0
        %3246 = vmatprep.subr.mxu0 0.0
        %3247 = vmatpush1.msra.mxu0 0.0
        %3248 = vmatprep.subr.mxu0 0.0
        %3249 = vmatpush1.msra.mxu0 0.0
        %3250 = vmatprep.subr.mxu0 0.0
        %3251 = vmatpush1.msra.mxu0 0.0
        %3252 = vmatprep.subr.mxu0 0.0
        %3253 = vmatpush1.msra.mxu0 0.0
        %3254 = vmatprep.mubr.f32.mxu0 0.0
        %3255 = vmatmul.mubr.f32.gmra.mrb[0].mxu0 %v3188
        %v3256 = vpop.f32.mrb[0].mxu0
        %v3257 = vadd.f32 0.0, %v3256
        %v3258 = vpop.f32.mrb[0].mxu0
        %3259 = vdwg.mxu0
        %s3260 = scalar_lea.vmem %s31, 32
        %v3261 = vld [vmem:[%s3260] sm:$0xff]
        %v3262 = vld [vmem:[%s3260 + $0x8] sm:$0xff]
        %v3263 = vld [vmem:[%s3260 + $0x10] sm:$0xff]
        %v3264 = vld [vmem:[%s3260 + $0x18] sm:$0xff]
        %s3265 = scalar_lea.vmem %s31, 64
        %v3266 = vld [vmem:[%s3265] sm:$0xff]
        %v3267 = vld [vmem:[%s3265 + $0x8] sm:$0xff]
        %v3268 = vld [vmem:[%s3265 + $0x10] sm:$0xff]
        %v3269 = vld [vmem:[%s3265 + $0x18] sm:$0xff]
        %3270 = vmatprep.subr.mxu0 0.0
        %3271 = vmatpush1.msra.mxu0 %v3266
        %3272 = vmatprep.subr.mxu0 0.0
        %3273 = vmatpush1.msra.mxu0 %v3267
        %3274 = vmatprep.subr.mxu0 0.0
        %3275 = vmatpush1.msra.mxu0 %v3268
        %3276 = vmatprep.subr.mxu0 0.0
        %3277 = vmatpush1.msra.mxu0 %v3269
        %3278 = vmatprep.subr.mxu0 0.0
        %3279 = vmatpush1.msra.mxu0 0.0
        %3280 = vmatprep.subr.mxu0 0.0
        %3281 = vmatpush1.msra.mxu0 0.0
        %3282 = vmatprep.subr.mxu0 0.0
        %3283 = vmatpush1.msra.mxu0 0.0
        %3284 = vmatprep.subr.mxu0 0.0
        %3285 = vmatpush1.msra.mxu0 0.0
        %3286 = vmatprep.subr.mxu0 0.0
        %3287 = vmatpush1.msra.mxu0 0.0
        %3288 = vmatprep.subr.mxu0 0.0
        %3289 = vmatpush1.msra.mxu0 0.0
        %3290 = vmatprep.subr.mxu0 0.0
        %3291 = vmatpush1.msra.mxu0 0.0
        %3292 = vmatprep.subr.mxu0 0.0
        %3293 = vmatpush1.msra.mxu0 0.0
        %3294 = vmatprep.subr.mxu0 0.0
        %3295 = vmatpush1.msra.mxu0 0.0
        %3296 = vmatprep.subr.mxu0 0.0
        %3297 = vmatpush1.msra.mxu0 0.0
        %3298 = vmatprep.subr.mxu0 0.0
        %3299 = vmatpush1.msra.mxu0 0.0
        %3300 = vmatprep.subr.mxu0 0.0
        %3301 = vmatpush1.msra.mxu0 0.0
        %3302 = vmatprep.subr.mxu0 0.0
        %3303 = vmatpush1.msra.mxu0 0.0
        %3304 = vmatprep.subr.mxu0 0.0
        %3305 = vmatpush1.msra.mxu0 0.0
        %3306 = vmatprep.subr.mxu0 0.0
        %3307 = vmatpush1.msra.mxu0 0.0
        %3308 = vmatprep.subr.mxu0 0.0
        %3309 = vmatpush1.msra.mxu0 0.0
        %3310 = vmatprep.subr.mxu0 0.0
        %3311 = vmatpush1.msra.mxu0 0.0
        %3312 = vmatprep.subr.mxu0 0.0
        %3313 = vmatpush1.msra.mxu0 0.0
        %3314 = vmatprep.subr.mxu0 0.0
        %3315 = vmatpush1.msra.mxu0 0.0
        %3316 = vmatprep.subr.mxu0 0.0
        %3317 = vmatpush1.msra.mxu0 0.0
        %3318 = vmatprep.subr.mxu0 0.0
        %3319 = vmatpush1.msra.mxu0 0.0
        %3320 = vmatprep.subr.mxu0 0.0
        %3321 = vmatpush1.msra.mxu0 0.0
        %3322 = vmatprep.subr.mxu0 0.0
        %3323 = vmatpush1.msra.mxu0 0.0
        %3324 = vmatprep.subr.mxu0 0.0
        %3325 = vmatpush1.msra.mxu0 0.0
        %3326 = vmatprep.subr.mxu0 0.0
        %3327 = vmatpush1.msra.mxu0 0.0
        %3328 = vmatprep.subr.mxu0 0.0
        %3329 = vmatpush1.msra.mxu0 0.0
        %3330 = vmatprep.subr.mxu0 0.0
        %3331 = vmatpush1.msra.mxu0 0.0
        %3332 = vmatprep.subr.mxu0 0.0
        %3333 = vmatpush1.msra.mxu0 0.0
        %3334 = vmatprep.mubr.f32.mxu0 0.0
        %3335 = vmatmul.mubr.f32.gmra.mrb[0].mxu0 %v3188
        %v3336 = vpop.f32.mrb[0].mxu0
        %v3337 = vadd.f32 0.0, %v3336
        %v3338 = vpop.f32.mrb[0].mxu0
        %3339 = vdwg.mxu0
        %3340 = vmatprep.subr.mxu0 0.0
        %3341 = vmatpush1.msra.mxu0 %v3257
        %3342 = vmatprep.subr.mxu0 0.0
        %3343 = vmatpush1.msra.mxu0 0.0
        %3344 = vmatprep.subr.mxu0 0.0
        %3345 = vmatpush1.msra.mxu0 0.0
        %3346 = vmatprep.subr.mxu0 0.0
        %3347 = vmatpush1.msra.mxu0 0.0
        %3348 = vmatprep.subr.mxu0 0.0
        %3349 = vmatpush1.msra.mxu0 0.0
        %3350 = vmatprep.subr.mxu0 0.0
        %3351 = vmatpush1.msra.mxu0 0.0
        %3352 = vmatprep.subr.mxu0 0.0
        %3353 = vmatpush1.msra.mxu0 0.0
        %3354 = vmatprep.subr.mxu0 0.0
        %3355 = vmatpush1.msra.mxu0 0.0
        %3356 = vmatprep.subr.mxu0 0.0
        %3357 = vmatpush1.msra.mxu0 0.0
        %3358 = vmatprep.subr.mxu0 0.0
        %3359 = vmatpush1.msra.mxu0 0.0
        %3360 = vmatprep.subr.mxu0 0.0
        %3361 = vmatpush1.msra.mxu0 0.0
        %3362 = vmatprep.subr.mxu0 0.0
        %3363 = vmatpush1.msra.mxu0 0.0
        %3364 = vmatprep.subr.mxu0 0.0
        %3365 = vmatpush1.msra.mxu0 0.0
        %3366 = vmatprep.subr.mxu0 0.0
        %3367 = vmatpush1.msra.mxu0 0.0
        %3368 = vmatprep.subr.mxu0 0.0
        %3369 = vmatpush1.msra.mxu0 0.0
        %3370 = vmatprep.subr.mxu0 0.0
        %3371 = vmatpush1.msra.mxu0 0.0
        %3372 = vmatprep.subr.mxu0 0.0
        %3373 = vmatpush1.msra.mxu0 0.0
        %3374 = vmatprep.subr.mxu0 0.0
        %3375 = vmatpush1.msra.mxu0 0.0
        %3376 = vmatprep.subr.mxu0 0.0
        %3377 = vmatpush1.msra.mxu0 0.0
        %3378 = vmatprep.subr.mxu0 0.0
        %3379 = vmatpush1.msra.mxu0 0.0
        %3380 = vmatprep.subr.mxu0 0.0
        %3381 = vmatpush1.msra.mxu0 0.0
        %3382 = vmatprep.subr.mxu0 0.0
        %3383 = vmatpush1.msra.mxu0 0.0
        %3384 = vmatprep.subr.mxu0 0.0
        %3385 = vmatpush1.msra.mxu0 0.0
        %3386 = vmatprep.subr.mxu0 0.0
        %3387 = vmatpush1.msra.mxu0 0.0
        %3388 = vmatprep.subr.mxu0 0.0
        %3389 = vmatpush1.msra.mxu0 0.0
        %3390 = vmatprep.subr.mxu0 0.0
        %3391 = vmatpush1.msra.mxu0 0.0
        %3392 = vmatprep.subr.mxu0 0.0
        %3393 = vmatpush1.msra.mxu0 0.0
        %3394 = vmatprep.subr.mxu0 0.0
        %3395 = vmatpush1.msra.mxu0 0.0
        %3396 = vmatprep.subr.mxu0 0.0
        %3397 = vmatpush1.msra.mxu0 0.0
        %3398 = vmatprep.subr.mxu0 0.0
        %3399 = vmatpush1.msra.mxu0 0.0
        %3400 = vmatprep.subr.mxu0 0.0
        %3401 = vmatpush1.msra.mxu0 0.0
        %3402 = vmatprep.subr.mxu0 0.0
        %3403 = vmatpush1.msra.mxu0 0.0
        %3404 = vmatprep.mubr.f32.mxu0 0.0
        %3405 = vmatmul.mubr.f32.gmra.mrb[0].mxu0 %v2775
        %v3406 = vpop.f32.mrb[0].mxu0
        %v3407 = vadd.f32 0.0, %v3406
        %v3408 = vpop.f32.mrb[0].mxu0
        %3409 = vdwg.mxu0
        %3410 = vmatprep.subr.mxu0 0.0
        %3411 = vmatpush1.msra.mxu0 %v3261
        %3412 = vmatprep.subr.mxu0 0.0
        %3413 = vmatpush1.msra.mxu0 %v3262
        %3414 = vmatprep.subr.mxu0 0.0
        %3415 = vmatpush1.msra.mxu0 %v3263
        %3416 = vmatprep.subr.mxu0 0.0
        %3417 = vmatpush1.msra.mxu0 %v3264
        %3418 = vmatprep.subr.mxu0 0.0
        %3419 = vmatpush1.msra.mxu0 0.0
        %3420 = vmatprep.subr.mxu0 0.0
        %3421 = vmatpush1.msra.mxu0 0.0
        %3422 = vmatprep.subr.mxu0 0.0
        %3423 = vmatpush1.msra.mxu0 0.0
        %3424 = vmatprep.subr.mxu0 0.0
        %3425 = vmatpush1.msra.mxu0 0.0
        %3426 = vmatprep.subr.mxu0 0.0
        %3427 = vmatpush1.msra.mxu0 0.0
        %3428 = vmatprep.subr.mxu0 0.0
        %3429 = vmatpush1.msra.mxu0 0.0
        %3430 = vmatprep.subr.mxu0 0.0
        %3431 = vmatpush1.msra.mxu0 0.0
        %3432 = vmatprep.subr.mxu0 0.0
        %3433 = vmatpush1.msra.mxu0 0.0
        %3434 = vmatprep.subr.mxu0 0.0
        %3435 = vmatpush1.msra.mxu0 0.0
        %3436 = vmatprep.subr.mxu0 0.0
        %3437 = vmatpush1.msra.mxu0 0.0
        %3438 = vmatprep.subr.mxu0 0.0
        %3439 = vmatpush1.msra.mxu0 0.0
        %3440 = vmatprep.subr.mxu0 0.0
        %3441 = vmatpush1.msra.mxu0 0.0
        %3442 = vmatprep.subr.mxu0 0.0
        %3443 = vmatpush1.msra.mxu0 0.0
        %3444 = vmatprep.subr.mxu0 0.0
        %3445 = vmatpush1.msra.mxu0 0.0
        %3446 = vmatprep.subr.mxu0 0.0
        %3447 = vmatpush1.msra.mxu0 0.0
        %3448 = vmatprep.subr.mxu0 0.0
        %3449 = vmatpush1.msra.mxu0 0.0
        %3450 = vmatprep.subr.mxu0 0.0
        %3451 = vmatpush1.msra.mxu0 0.0
        %3452 = vmatprep.subr.mxu0 0.0
        %3453 = vmatpush1.msra.mxu0 0.0
        %3454 = vmatprep.subr.mxu0 0.0
        %3455 = vmatpush1.msra.mxu0 0.0
        %3456 = vmatprep.subr.mxu0 0.0
        %3457 = vmatpush1.msra.mxu0 0.0
        %3458 = vmatprep.subr.mxu0 0.0
        %3459 = vmatpush1.msra.mxu0 0.0
        %3460 = vmatprep.subr.mxu0 0.0
        %3461 = vmatpush1.msra.mxu0 0.0
        %3462 = vmatprep.subr.mxu0 0.0
        %3463 = vmatpush1.msra.mxu0 0.0
        %3464 = vmatprep.subr.mxu0 0.0
        %3465 = vmatpush1.msra.mxu0 0.0
        %3466 = vmatprep.subr.mxu0 0.0
        %3467 = vmatpush1.msra.mxu0 0.0
        %3468 = vmatprep.subr.mxu0 0.0
        %3469 = vmatpush1.msra.mxu0 0.0
        %3470 = vmatprep.subr.mxu0 0.0
        %3471 = vmatpush1.msra.mxu0 0.0
        %3472 = vmatprep.subr.mxu0 0.0
        %3473 = vmatpush1.msra.mxu0 0.0
        %3474 = vmatprep.mubr.f32.mxu0 0.0
        %3475 = vmatmul.mubr.f32.gmra.mrb[0].mxu0 %v3188
        %v3476 = vpop.f32.mrb[0].mxu0
        %v3477 = vadd.f32 %v3407, %v3476
        %v3478 = vpop.f32.mrb[0].mxu0
        %3479 = vdwg.mxu0
        %3480 = vmatprep.subr.mxu0 0.0
        %3481 = vmatpush1.msra.mxu0 %v3337
        %3482 = vmatprep.subr.mxu0 0.0
        %3483 = vmatpush1.msra.mxu0 0.0
        %3484 = vmatprep.subr.mxu0 0.0
        %3485 = vmatpush1.msra.mxu0 0.0
        %3486 = vmatprep.subr.mxu0 0.0
        %3487 = vmatpush1.msra.mxu0 0.0
        %3488 = vmatprep.subr.mxu0 0.0
        %3489 = vmatpush1.msra.mxu0 0.0
        %3490 = vmatprep.subr.mxu0 0.0
        %3491 = vmatpush1.msra.mxu0 0.0
        %3492 = vmatprep.subr.mxu0 0.0
        %3493 = vmatpush1.msra.mxu0 0.0
        %3494 = vmatprep.subr.mxu0 0.0
        %3495 = vmatpush1.msra.mxu0 0.0
        %3496 = vmatprep.subr.mxu0 0.0
        %3497 = vmatpush1.msra.mxu0 0.0
        %3498 = vmatprep.subr.mxu0 0.0
        %3499 = vmatpush1.msra.mxu0 0.0
        %3500 = vmatprep.subr.mxu0 0.0
        %3501 = vmatpush1.msra.mxu0 0.0
        %3502 = vmatprep.subr.mxu0 0.0
        %3503 = vmatpush1.msra.mxu0 0.0
        %3504 = vmatprep.subr.mxu0 0.0
        %3505 = vmatpush1.msra.mxu0 0.0
        %3506 = vmatprep.subr.mxu0 0.0
        %3507 = vmatpush1.msra.mxu0 0.0
        %3508 = vmatprep.subr.mxu0 0.0
        %3509 = vmatpush1.msra.mxu0 0.0
        %3510 = vmatprep.subr.mxu0 0.0
        %3511 = vmatpush1.msra.mxu0 0.0
        %3512 = vmatprep.subr.mxu0 0.0
        %3513 = vmatpush1.msra.mxu0 0.0
        %3514 = vmatprep.subr.mxu0 0.0
        %3515 = vmatpush1.msra.mxu0 0.0
        %3516 = vmatprep.subr.mxu0 0.0
        %3517 = vmatpush1.msra.mxu0 0.0
        %3518 = vmatprep.subr.mxu0 0.0
        %3519 = vmatpush1.msra.mxu0 0.0
        %3520 = vmatprep.subr.mxu0 0.0
        %3521 = vmatpush1.msra.mxu0 0.0
        %3522 = vmatprep.subr.mxu0 0.0
        %3523 = vmatpush1.msra.mxu0 0.0
        %3524 = vmatprep.subr.mxu0 0.0
        %3525 = vmatpush1.msra.mxu0 0.0
        %3526 = vmatprep.subr.mxu0 0.0
        %3527 = vmatpush1.msra.mxu0 0.0
        %3528 = vmatprep.subr.mxu0 0.0
        %3529 = vmatpush1.msra.mxu0 0.0
        %3530 = vmatprep.subr.mxu0 0.0
        %3531 = vmatpush1.msra.mxu0 0.0
        %3532 = vmatprep.subr.mxu0 0.0
        %3533 = vmatpush1.msra.mxu0 0.0
        %3534 = vmatprep.subr.mxu0 0.0
        %3535 = vmatpush1.msra.mxu0 0.0
        %3536 = vmatprep.subr.mxu0 0.0
        %3537 = vmatpush1.msra.mxu0 0.0
        %3538 = vmatprep.subr.mxu0 0.0
        %3539 = vmatpush1.msra.mxu0 0.0
        %3540 = vmatprep.subr.mxu0 0.0
        %3541 = vmatpush1.msra.mxu0 0.0
        %3542 = vmatprep.subr.mxu0 0.0
        %3543 = vmatpush1.msra.mxu0 0.0
        %3544 = vmatprep.mubr.f32.mxu0 0.0
        %3545 = vmatmul.mubr.f32.gmra.mrb[0].mxu0 %v2920
        %v3546 = vpop.f32.mrb[0].mxu0
        %v3547 = vadd.f32 0.0, %v3546
        %v3548 = vpop.f32.mrb[0].mxu0
        %3549 = vdwg.mxu0
        %v3550 = vadd.f32 %v3477, %v3547
        %v3551 = vld [vmem:[#allocation14 + $0x3] sm:$0x1]
        %v3552 = vlaneseq
        %v3553 = vshrl.u32 %v3552, 7
        %v3554 = vsub.s32 0, %v3553
        %v3555 = vrot.slane %v3551, %v3554
        %v3556 = vadd.f32 %v3550, %v3555
        %v3557 = vmax.f32 %v3556, 0.0
        %v3558 = vld [vmem:[#allocation16] sm:$0xff]
        %v3559 = vld [vmem:[#allocation16 + $0x8] sm:$0xff]
        %v3560 = vld [vmem:[#allocation16 + $0x10] sm:$0xff]
        %v3561 = vld [vmem:[#allocation16 + $0x18] sm:$0xff]
        %v3562 = vld [vmem:[#allocation14 + $0x4] sm:$0x1]
        %v3563 = vlaneseq
        %v3564 = vshrl.u32 %v3563, 7
        %v3565 = vsub.s32 0, %v3564
        %v3566 = vrot.slane %v3562, %v3565
        %v3568 = vsel %vm2618, %v3557, 0
        %3570 = vmatprep.subr.mxu0 0.0
        %3571 = vmatpush1.msra.mxu0 %v3558
        %3572 = vmatprep.subr.mxu0 0.0
        %3573 = vmatpush1.msra.mxu0 %v3559
        %3574 = vmatprep.subr.mxu0 0.0
        %3575 = vmatpush1.msra.mxu0 %v3560
        %3576 = vmatprep.subr.mxu0 0.0
        %3577 = vmatpush1.msra.mxu0 %v3561
        %3578 = vmatprep.subr.mxu0 0.0
        %3579 = vmatpush1.msra.mxu0 0.0
        %3580 = vmatprep.subr.mxu0 0.0
        %3581 = vmatpush1.msra.mxu0 0.0
        %3582 = vmatprep.subr.mxu0 0.0
        %3583 = vmatpush1.msra.mxu0 0.0
        %3584 = vmatprep.subr.mxu0 0.0
        %3585 = vmatpush1.msra.mxu0 0.0
        %3586 = vmatprep.subr.mxu0 0.0
        %3587 = vmatpush1.msra.mxu0 0.0
        %3588 = vmatprep.subr.mxu0 0.0
        %3589 = vmatpush1.msra.mxu0 0.0
        %3590 = vmatprep.subr.mxu0 0.0
        %3591 = vmatpush1.msra.mxu0 0.0
        %3592 = vmatprep.subr.mxu0 0.0
        %3593 = vmatpush1.msra.mxu0 0.0
        %3594 = vmatprep.subr.mxu0 0.0
        %3595 = vmatpush1.msra.mxu0 0.0
        %3596 = vmatprep.subr.mxu0 0.0
        %3597 = vmatpush1.msra.mxu0 0.0
        %3598 = vmatprep.subr.mxu0 0.0
        %3599 = vmatpush1.msra.mxu0 0.0
        %3600 = vmatprep.subr.mxu0 0.0
        %3601 = vmatpush1.msra.mxu0 0.0
        %3602 = vmatprep.subr.mxu0 0.0
        %3603 = vmatpush1.msra.mxu0 0.0
        %3604 = vmatprep.subr.mxu0 0.0
        %3605 = vmatpush1.msra.mxu0 0.0
        %3606 = vmatprep.subr.mxu0 0.0
        %3607 = vmatpush1.msra.mxu0 0.0
        %3608 = vmatprep.subr.mxu0 0.0
        %3609 = vmatpush1.msra.mxu0 0.0
        %3610 = vmatprep.subr.mxu0 0.0
        %3611 = vmatpush1.msra.mxu0 0.0
        %3612 = vmatprep.subr.mxu0 0.0
        %3613 = vmatpush1.msra.mxu0 0.0
        %3614 = vmatprep.subr.mxu0 0.0
        %3615 = vmatpush1.msra.mxu0 0.0
        %3616 = vmatprep.subr.mxu0 0.0
        %3617 = vmatpush1.msra.mxu0 0.0
        %3618 = vmatprep.subr.mxu0 0.0
        %3619 = vmatpush1.msra.mxu0 0.0
        %3620 = vmatprep.subr.mxu0 0.0
        %3621 = vmatpush1.msra.mxu0 0.0
        %3622 = vmatprep.subr.mxu0 0.0
        %3623 = vmatpush1.msra.mxu0 0.0
        %3624 = vmatprep.subr.mxu0 0.0
        %3625 = vmatpush1.msra.mxu0 0.0
        %3626 = vmatprep.subr.mxu0 0.0
        %3627 = vmatpush1.msra.mxu0 0.0
        %3628 = vmatprep.subr.mxu0 0.0
        %3629 = vmatpush1.msra.mxu0 0.0
        %3630 = vmatprep.subr.mxu0 0.0
        %3631 = vmatpush1.msra.mxu0 0.0
        %3632 = vmatprep.subr.mxu0 0.0
        %3633 = vmatpush1.msra.mxu0 0.0
        %3634 = vmatprep.mubr.f32.mxu0 0.0
        %3635 = vmatmul.mubr.f32.gmra.mrb[0].mxu0 %v3568
        %v3636 = vpop.f32.mrb[0].mxu0
        %v3637 = vadd.f32 %v3566, %v3636
        %v3638 = vpop.f32.mrb[0].mxu0
        %3639 = vdwg.mxu0
        %v3640 = vadd.f32 %v3637, %v3082
        %v3641 = vld [vmem:[%s35] sm:$0xff]
        %v3642 = vld [vmem:[%s35 + $0x8] sm:$0xff]
        %v3643 = vld [vmem:[%s35 + $0x10] sm:$0xff]
        %v3644 = vld [vmem:[%s35 + $0x18] sm:$0xff]
        %v3645 = vld [vmem:[%s35 + $0x20] sm:$0xff]
        %v3646 = vld [vmem:[%s35 + $0x28] sm:$0xff]
        %v3647 = vld [vmem:[%s35 + $0x30] sm:$0xff]
        %v3648 = vld [vmem:[%s35 + $0x38] sm:$0xff]
        %v3650 = vsel %vm1654, %v3082, 0
        %3652 = vmatprep.subr.mxu0 0.0
        %3653 = vmatpush1.msra.mxu0 %v3641
        %3654 = vmatprep.subr.mxu0 0.0
        %3655 = vmatpush1.msra.mxu0 %v3642
        %3656 = vmatprep.subr.mxu0 0.0
        %3657 = vmatpush1.msra.mxu0 %v3643
        %3658 = vmatprep.subr.mxu0 0.0
        %3659 = vmatpush1.msra.mxu0 %v3644
        %3660 = vmatprep.subr.mxu0 0.0
        %3661 = vmatpush1.msra.mxu0 %v3645
        %3662 = vmatprep.subr.mxu0 0.0
        %3663 = vmatpush1.msra.mxu0 %v3646
        %3664 = vmatprep.subr.mxu0 0.0
        %3665 = vmatpush1.msra.mxu0 %v3647
        %3666 = vmatprep.subr.mxu0 0.0
        %3667 = vmatpush1.msra.mxu0 %v3648
        %3668 = vmatprep.subr.mxu0 0.0
        %3669 = vmatpush1.msra.mxu0 0.0
        %3670 = vmatprep.subr.mxu0 0.0
        %3671 = vmatpush1.msra.mxu0 0.0
        %3672 = vmatprep.subr.mxu0 0.0
        %3673 = vmatpush1.msra.mxu0 0.0
        %3674 = vmatprep.subr.mxu0 0.0
        %3675 = vmatpush1.msra.mxu0 0.0
        %3676 = vmatprep.subr.mxu0 0.0
        %3677 = vmatpush1.msra.mxu0 0.0
        %3678 = vmatprep.subr.mxu0 0.0
        %3679 = vmatpush1.msra.mxu0 0.0
        %3680 = vmatprep.subr.mxu0 0.0
        %3681 = vmatpush1.msra.mxu0 0.0
        %3682 = vmatprep.subr.mxu0 0.0
        %3683 = vmatpush1.msra.mxu0 0.0
        %3684 = vmatprep.subr.mxu0 0.0
        %3685 = vmatpush1.msra.mxu0 0.0
        %3686 = vmatprep.subr.mxu0 0.0
        %3687 = vmatpush1.msra.mxu0 0.0
        %3688 = vmatprep.subr.mxu0 0.0
        %3689 = vmatpush1.msra.mxu0 0.0
        %3690 = vmatprep.subr.mxu0 0.0
        %3691 = vmatpush1.msra.mxu0 0.0
        %3692 = vmatprep.subr.mxu0 0.0
        %3693 = vmatpush1.msra.mxu0 0.0
        %3694 = vmatprep.subr.mxu0 0.0
        %3695 = vmatpush1.msra.mxu0 0.0
        %3696 = vmatprep.subr.mxu0 0.0
        %3697 = vmatpush1.msra.mxu0 0.0
        %3698 = vmatprep.subr.mxu0 0.0
        %3699 = vmatpush1.msra.mxu0 0.0
        %3700 = vmatprep.subr.mxu0 0.0
        %3701 = vmatpush1.msra.mxu0 0.0
        %3702 = vmatprep.subr.mxu0 0.0
        %3703 = vmatpush1.msra.mxu0 0.0
        %3704 = vmatprep.subr.mxu0 0.0
        %3705 = vmatpush1.msra.mxu0 0.0
        %3706 = vmatprep.subr.mxu0 0.0
        %3707 = vmatpush1.msra.mxu0 0.0
        %3708 = vmatprep.subr.mxu0 0.0
        %3709 = vmatpush1.msra.mxu0 0.0
        %3710 = vmatprep.subr.mxu0 0.0
        %3711 = vmatpush1.msra.mxu0 0.0
        %3712 = vmatprep.subr.mxu0 0.0
        %3713 = vmatpush1.msra.mxu0 0.0
        %3714 = vmatprep.subr.mxu0 0.0
        %3715 = vmatpush1.msra.mxu0 0.0
        %3716 = vmatprep.mubr.f32.mxu0 0.0
        %3717 = vmatmul.mubr.f32.gmra.mrb[0].mxu0 %v3650
        %v3718 = vpop.f32.mrb[0].mxu0
        %v3719 = vadd.f32 0.0, %v3718
        %v3720 = vpop.f32.mrb[0].mxu0
        %3721 = vdwg.mxu0
        %s3722 = scalar_lea.vmem %s35, 64
        %v3723 = vld [vmem:[%s3722] sm:$0xff]
        %v3724 = vld [vmem:[%s3722 + $0x8] sm:$0xff]
        %v3725 = vld [vmem:[%s3722 + $0x10] sm:$0xff]
        %v3726 = vld [vmem:[%s3722 + $0x18] sm:$0xff]
        %v3727 = vld [vmem:[%s3722 + $0x20] sm:$0xff]
        %v3728 = vld [vmem:[%s3722 + $0x28] sm:$0xff]
        %v3729 = vld [vmem:[%s3722 + $0x30] sm:$0xff]
        %v3730 = vld [vmem:[%s3722 + $0x38] sm:$0xff]
        %3731 = vmatprep.subr.mxu0 0.0
        %3732 = vmatpush1.msra.mxu0 %v3723
        %3733 = vmatprep.subr.mxu0 0.0
        %3734 = vmatpush1.msra.mxu0 %v3724
        %3735 = vmatprep.subr.mxu0 0.0
        %3736 = vmatpush1.msra.mxu0 %v3725
        %3737 = vmatprep.subr.mxu0 0.0
        %3738 = vmatpush1.msra.mxu0 %v3726
        %3739 = vmatprep.subr.mxu0 0.0
        %3740 = vmatpush1.msra.mxu0 %v3727
        %3741 = vmatprep.subr.mxu0 0.0
        %3742 = vmatpush1.msra.mxu0 %v3728
        %3743 = vmatprep.subr.mxu0 0.0
        %3744 = vmatpush1.msra.mxu0 %v3729
        %3745 = vmatprep.subr.mxu0 0.0
        %3746 = vmatpush1.msra.mxu0 %v3730
        %3747 = vmatprep.subr.mxu0 0.0
        %3748 = vmatpush1.msra.mxu0 0.0
        %3749 = vmatprep.subr.mxu0 0.0
        %3750 = vmatpush1.msra.mxu0 0.0
        %3751 = vmatprep.subr.mxu0 0.0
        %3752 = vmatpush1.msra.mxu0 0.0
        %3753 = vmatprep.subr.mxu0 0.0
        %3754 = vmatpush1.msra.mxu0 0.0
        %3755 = vmatprep.subr.mxu0 0.0
        %3756 = vmatpush1.msra.mxu0 0.0
        %3757 = vmatprep.subr.mxu0 0.0
        %3758 = vmatpush1.msra.mxu0 0.0
        %3759 = vmatprep.subr.mxu0 0.0
        %3760 = vmatpush1.msra.mxu0 0.0
        %3761 = vmatprep.subr.mxu0 0.0
        %3762 = vmatpush1.msra.mxu0 0.0
        %3763 = vmatprep.subr.mxu0 0.0
        %3764 = vmatpush1.msra.mxu0 0.0
        %3765 = vmatprep.subr.mxu0 0.0
        %3766 = vmatpush1.msra.mxu0 0.0
        %3767 = vmatprep.subr.mxu0 0.0
        %3768 = vmatpush1.msra.mxu0 0.0
        %3769 = vmatprep.subr.mxu0 0.0
        %3770 = vmatpush1.msra.mxu0 0.0
        %3771 = vmatprep.subr.mxu0 0.0
        %3772 = vmatpush1.msra.mxu0 0.0
        %3773 = vmatprep.subr.mxu0 0.0
        %3774 = vmatpush1.msra.mxu0 0.0
        %3775 = vmatprep.subr.mxu0 0.0
        %3776 = vmatpush1.msra.mxu0 0.0
        %3777 = vmatprep.subr.mxu0 0.0
        %3778 = vmatpush1.msra.mxu0 0.0
        %3779 = vmatprep.subr.mxu0 0.0
        %3780 = vmatpush1.msra.mxu0 0.0
        %3781 = vmatprep.subr.mxu0 0.0
        %3782 = vmatpush1.msra.mxu0 0.0
        %3783 = vmatprep.subr.mxu0 0.0
        %3784 = vmatpush1.msra.mxu0 0.0
        %3785 = vmatprep.subr.mxu0 0.0
        %3786 = vmatpush1.msra.mxu0 0.0
        %3787 = vmatprep.subr.mxu0 0.0
        %3788 = vmatpush1.msra.mxu0 0.0
        %3789 = vmatprep.subr.mxu0 0.0
        %3790 = vmatpush1.msra.mxu0 0.0
        %3791 = vmatprep.subr.mxu0 0.0
        %3792 = vmatpush1.msra.mxu0 0.0
        %3793 = vmatprep.subr.mxu0 0.0
        %3794 = vmatpush1.msra.mxu0 0.0
        %3795 = vmatprep.mubr.f32.mxu0 0.0
        %3796 = vmatmul.mubr.f32.gmra.mrb[0].mxu0 %v3650
        %v3797 = vpop.f32.mrb[0].mxu0
        %v3798 = vadd.f32 0.0, %v3797
        %v3799 = vpop.f32.mrb[0].mxu0
        %3800 = vdwg.mxu0
        %v3801 = vmax.f32 %v3719, %v3798
        %v3802 = vld [vmem:[#allocation17] sm:$0xf]
        %v3804 = vsel %vm2773, %v3802, 0
        %3806 = vmatprep.subr.mxu0 0.0
        %3807 = vmatpush1.msra.mxu0 %v3801
        %3808 = vmatprep.subr.mxu0 0.0
        %3809 = vmatpush1.msra.mxu0 0.0
        %3810 = vmatprep.subr.mxu0 0.0
        %3811 = vmatpush1.msra.mxu0 0.0
        %3812 = vmatprep.subr.mxu0 0.0
        %3813 = vmatpush1.msra.mxu0 0.0
        %3814 = vmatprep.subr.mxu0 0.0
        %3815 = vmatpush1.msra.mxu0 0.0
        %3816 = vmatprep.subr.mxu0 0.0
        %3817 = vmatpush1.msra.mxu0 0.0
        %3818 = vmatprep.subr.mxu0 0.0
        %3819 = vmatpush1.msra.mxu0 0.0
        %3820 = vmatprep.subr.mxu0 0.0
        %3821 = vmatpush1.msra.mxu0 0.0
        %3822 = vmatprep.subr.mxu0 0.0
        %3823 = vmatpush1.msra.mxu0 0.0
        %3824 = vmatprep.subr.mxu0 0.0
        %3825 = vmatpush1.msra.mxu0 0.0
        %3826 = vmatprep.subr.mxu0 0.0
        %3827 = vmatpush1.msra.mxu0 0.0
        %3828 = vmatprep.subr.mxu0 0.0
        %3829 = vmatpush1.msra.mxu0 0.0
        %3830 = vmatprep.subr.mxu0 0.0
        %3831 = vmatpush1.msra.mxu0 0.0
        %3832 = vmatprep.subr.mxu0 0.0
        %3833 = vmatpush1.msra.mxu0 0.0
        %3834 = vmatprep.subr.mxu0 0.0
        %3835 = vmatpush1.msra.mxu0 0.0
        %3836 = vmatprep.subr.mxu0 0.0
        %3837 = vmatpush1.msra.mxu0 0.0
        %3838 = vmatprep.subr.mxu0 0.0
        %3839 = vmatpush1.msra.mxu0 0.0
        %3840 = vmatprep.subr.mxu0 0.0
        %3841 = vmatpush1.msra.mxu0 0.0
        %3842 = vmatprep.subr.mxu0 0.0
        %3843 = vmatpush1.msra.mxu0 0.0
        %3844 = vmatprep.subr.mxu0 0.0
        %3845 = vmatpush1.msra.mxu0 0.0
        %3846 = vmatprep.subr.mxu0 0.0
        %3847 = vmatpush1.msra.mxu0 0.0
        %3848 = vmatprep.subr.mxu0 0.0
        %3849 = vmatpush1.msra.mxu0 0.0
        %3850 = vmatprep.subr.mxu0 0.0
        %3851 = vmatpush1.msra.mxu0 0.0
        %3852 = vmatprep.subr.mxu0 0.0
        %3853 = vmatpush1.msra.mxu0 0.0
        %3854 = vmatprep.subr.mxu0 0.0
        %3855 = vmatpush1.msra.mxu0 0.0
        %3856 = vmatprep.subr.mxu0 0.0
        %3857 = vmatpush1.msra.mxu0 0.0
        %3858 = vmatprep.subr.mxu0 0.0
        %3859 = vmatpush1.msra.mxu0 0.0
        %3860 = vmatprep.subr.mxu0 0.0
        %3861 = vmatpush1.msra.mxu0 0.0
        %3862 = vmatprep.subr.mxu0 0.0
        %3863 = vmatpush1.msra.mxu0 0.0
        %3864 = vmatprep.subr.mxu0 0.0
        %3865 = vmatpush1.msra.mxu0 0.0
        %3866 = vmatprep.subr.mxu0 0.0
        %3867 = vmatpush1.msra.mxu0 0.0
        %3868 = vmatprep.subr.mxu0 0.0
        %3869 = vmatpush1.msra.mxu0 0.0
        %3870 = vmatprep.mubr.f32.mxu0 0.0
        %3871 = vmatmul.mubr.f32.gmra.mrb[0].mxu0 %v3804
        %v3872 = vpop.f32.mrb[0].mxu0
        %v3873 = vadd.f32 0.0, %v3872
        %v3874 = vpop.f32.mrb[0].mxu0
        %3875 = vdwg.mxu0
        %s3876 = scalar_lea.vmem [#allocation17], 4
        %v3877 = vld [vmem:[%s3876] sm:$0xf]
        %v3879 = vsel %vm2773, %v3877, 0
        %3881 = vmatprep.subr.mxu0 0.0
        %3882 = vmatpush1.msra.mxu0 %v3801
        %3883 = vmatprep.subr.mxu0 0.0
        %3884 = vmatpush1.msra.mxu0 0.0
        %3885 = vmatprep.subr.mxu0 0.0
        %3886 = vmatpush1.msra.mxu0 0.0
        %3887 = vmatprep.subr.mxu0 0.0
        %3888 = vmatpush1.msra.mxu0 0.0
        %3889 = vmatprep.subr.mxu0 0.0
        %3890 = vmatpush1.msra.mxu0 0.0
        %3891 = vmatprep.subr.mxu0 0.0
        %3892 = vmatpush1.msra.mxu0 0.0
        %3893 = vmatprep.subr.mxu0 0.0
        %3894 = vmatpush1.msra.mxu0 0.0
        %3895 = vmatprep.subr.mxu0 0.0
        %3896 = vmatpush1.msra.mxu0 0.0
        %3897 = vmatprep.subr.mxu0 0.0
        %3898 = vmatpush1.msra.mxu0 0.0
        %3899 = vmatprep.subr.mxu0 0.0
        %3900 = vmatpush1.msra.mxu0 0.0
        %3901 = vmatprep.subr.mxu0 0.0
        %3902 = vmatpush1.msra.mxu0 0.0
        %3903 = vmatprep.subr.mxu0 0.0
        %3904 = vmatpush1.msra.mxu0 0.0
        %3905 = vmatprep.subr.mxu0 0.0
        %3906 = vmatpush1.msra.mxu0 0.0
        %3907 = vmatprep.subr.mxu0 0.0
        %3908 = vmatpush1.msra.mxu0 0.0
        %3909 = vmatprep.subr.mxu0 0.0
        %3910 = vmatpush1.msra.mxu0 0.0
        %3911 = vmatprep.subr.mxu0 0.0
        %3912 = vmatpush1.msra.mxu0 0.0
        %3913 = vmatprep.subr.mxu0 0.0
        %3914 = vmatpush1.msra.mxu0 0.0
        %3915 = vmatprep.subr.mxu0 0.0
        %3916 = vmatpush1.msra.mxu0 0.0
        %3917 = vmatprep.subr.mxu0 0.0
        %3918 = vmatpush1.msra.mxu0 0.0
        %3919 = vmatprep.subr.mxu0 0.0
        %3920 = vmatpush1.msra.mxu0 0.0
        %3921 = vmatprep.subr.mxu0 0.0
        %3922 = vmatpush1.msra.mxu0 0.0
        %3923 = vmatprep.subr.mxu0 0.0
        %3924 = vmatpush1.msra.mxu0 0.0
        %3925 = vmatprep.subr.mxu0 0.0
        %3926 = vmatpush1.msra.mxu0 0.0
        %3927 = vmatprep.subr.mxu0 0.0
        %3928 = vmatpush1.msra.mxu0 0.0
        %3929 = vmatprep.subr.mxu0 0.0
        %3930 = vmatpush1.msra.mxu0 0.0
        %3931 = vmatprep.subr.mxu0 0.0
        %3932 = vmatpush1.msra.mxu0 0.0
        %3933 = vmatprep.subr.mxu0 0.0
        %3934 = vmatpush1.msra.mxu0 0.0
        %3935 = vmatprep.subr.mxu0 0.0
        %3936 = vmatpush1.msra.mxu0 0.0
        %3937 = vmatprep.subr.mxu0 0.0
        %3938 = vmatpush1.msra.mxu0 0.0
        %3939 = vmatprep.subr.mxu0 0.0
        %3940 = vmatpush1.msra.mxu0 0.0
        %3941 = vmatprep.subr.mxu0 0.0
        %3942 = vmatpush1.msra.mxu0 0.0
        %3943 = vmatprep.subr.mxu0 0.0
        %3944 = vmatpush1.msra.mxu0 0.0
        %3945 = vmatprep.mubr.f32.mxu0 0.0
        %3946 = vmatmul.mubr.f32.gmra.mrb[0].mxu0 %v3879
        %v3947 = vpop.f32.mrb[0].mxu0
        %v3948 = vadd.f32 0.0, %v3947
        %v3949 = vpop.f32.mrb[0].mxu0
        %3950 = vdwg.mxu0
        %v3951 = vmax.f32 %v3873, %v3948
        %v3952 = vld [vmem:[#allocation19] sm:$0x1]
        %v3953 = vlaneseq
        %v3954 = vshrl.u32 %v3953, 7
        %v3955 = vsub.s32 0, %v3954
        %v3956 = vrot.slane %v3952, %v3955
        %v3957 = vmul.f32 %v3951, %v3956
        %v3958 = vld [vmem:[#allocation19 + $0x1] sm:$0x1]
        %v3959 = vlaneseq
        %v3960 = vshrl.u32 %v3959, 7
        %v3961 = vsub.s32 0, %v3960
        %v3962 = vrot.slane %v3958, %v3961
        %v3963 = vadd.f32 %v3957, %v3962
        %v3964 = vmax.f32 %v3963, 0.0
        %v3965 = vld [vmem:[%s41] sm:$0xff]
        %v3966 = vld [vmem:[%s41 + $0x8] sm:$0xff]
        %v3967 = vld [vmem:[%s41 + $0x10] sm:$0xff]
        %v3968 = vld [vmem:[%s41 + $0x18] sm:$0xff]
        %v3969 = vld [vmem:[#allocation19 + $0x2] sm:$0x1]
        %v3970 = vlaneseq
        %v3971 = vshrl.u32 %v3970, 7
        %v3972 = vsub.s32 0, %v3971
        %v3973 = vrot.slane %v3969, %v3972
        %v3975 = vsel %vm2618, %v3964, 0
        %3977 = vmatprep.subr.mxu0 0.0
        %3978 = vmatpush1.msra.mxu0 %v3965
        %3979 = vmatprep.subr.mxu0 0.0
        %3980 = vmatpush1.msra.mxu0 %v3966
        %3981 = vmatprep.subr.mxu0 0.0
        %3982 = vmatpush1.msra.mxu0 %v3967
        %3983 = vmatprep.subr.mxu0 0.0
        %3984 = vmatpush1.msra.mxu0 %v3968
        %3985 = vmatprep.subr.mxu0 0.0
        %3986 = vmatpush1.msra.mxu0 0.0
        %3987 = vmatprep.subr.mxu0 0.0
        %3988 = vmatpush1.msra.mxu0 0.0
        %3989 = vmatprep.subr.mxu0 0.0
        %3990 = vmatpush1.msra.mxu0 0.0
        %3991 = vmatprep.subr.mxu0 0.0
        %3992 = vmatpush1.msra.mxu0 0.0
        %3993 = vmatprep.subr.mxu0 0.0
        %3994 = vmatpush1.msra.mxu0 0.0
        %3995 = vmatprep.subr.mxu0 0.0
        %3996 = vmatpush1.msra.mxu0 0.0
        %3997 = vmatprep.subr.mxu0 0.0
        %3998 = vmatpush1.msra.mxu0 0.0
        %3999 = vmatprep.subr.mxu0 0.0
        %4000 = vmatpush1.msra.mxu0 0.0
        %4001 = vmatprep.subr.mxu0 0.0
        %4002 = vmatpush1.msra.mxu0 0.0
        %4003 = vmatprep.subr.mxu0 0.0
        %4004 = vmatpush1.msra.mxu0 0.0
        %4005 = vmatprep.subr.mxu0 0.0
        %4006 = vmatpush1.msra.mxu0 0.0
        %4007 = vmatprep.subr.mxu0 0.0
        %4008 = vmatpush1.msra.mxu0 0.0
        %4009 = vmatprep.subr.mxu0 0.0
        %4010 = vmatpush1.msra.mxu0 0.0
        %4011 = vmatprep.subr.mxu0 0.0
        %4012 = vmatpush1.msra.mxu0 0.0
        %4013 = vmatprep.subr.mxu0 0.0
        %4014 = vmatpush1.msra.mxu0 0.0
        %4015 = vmatprep.subr.mxu0 0.0
        %4016 = vmatpush1.msra.mxu0 0.0
        %4017 = vmatprep.subr.mxu0 0.0
        %4018 = vmatpush1.msra.mxu0 0.0
        %4019 = vmatprep.subr.mxu0 0.0
        %4020 = vmatpush1.msra.mxu0 0.0
        %4021 = vmatprep.subr.mxu0 0.0
        %4022 = vmatpush1.msra.mxu0 0.0
        %4023 = vmatprep.subr.mxu0 0.0
        %4024 = vmatpush1.msra.mxu0 0.0
        %4025 = vmatprep.subr.mxu0 0.0
        %4026 = vmatpush1.msra.mxu0 0.0
        %4027 = vmatprep.subr.mxu0 0.0
        %4028 = vmatpush1.msra.mxu0 0.0
        %4029 = vmatprep.subr.mxu0 0.0
        %4030 = vmatpush1.msra.mxu0 0.0
        %4031 = vmatprep.subr.mxu0 0.0
        %4032 = vmatpush1.msra.mxu0 0.0
        %4033 = vmatprep.subr.mxu0 0.0
        %4034 = vmatpush1.msra.mxu0 0.0
        %4035 = vmatprep.subr.mxu0 0.0
        %4036 = vmatpush1.msra.mxu0 0.0
        %4037 = vmatprep.subr.mxu0 0.0
        %4038 = vmatpush1.msra.mxu0 0.0
        %4039 = vmatprep.subr.mxu0 0.0
        %4040 = vmatpush1.msra.mxu0 0.0
        %4041 = vmatprep.mubr.f32.mxu0 0.0
        %4042 = vmatmul.mubr.f32.gmra.mrb[0].mxu0 %v3975
        %v4043 = vpop.f32.mrb[0].mxu0
        %v4044 = vadd.f32 %v3973, %v4043
        %v4045 = vpop.f32.mrb[0].mxu0
        %4046 = vdwg.mxu0
        %v4047 = vmax.f32 %v4044, 0.0
        %v4048 = vld [vmem:[%s43] sm:$0xff]
        %v4049 = vld [vmem:[%s43 + $0x8] sm:$0xff]
        %v4051 = vsel %vm1831, %v4047, 0
        %4053 = vmatprep.subr.mxu0 0.0
        %4054 = vmatpush1.msra.mxu0 %v4048
        %4055 = vmatprep.subr.mxu0 0.0
        %4056 = vmatpush1.msra.mxu0 %v4049
        %4057 = vmatprep.subr.mxu0 0.0
        %4058 = vmatpush1.msra.mxu0 0.0
        %4059 = vmatprep.subr.mxu0 0.0
        %4060 = vmatpush1.msra.mxu0 0.0
        %4061 = vmatprep.subr.mxu0 0.0
        %4062 = vmatpush1.msra.mxu0 0.0
        %4063 = vmatprep.subr.mxu0 0.0
        %4064 = vmatpush1.msra.mxu0 0.0
        %4065 = vmatprep.subr.mxu0 0.0
        %4066 = vmatpush1.msra.mxu0 0.0
        %4067 = vmatprep.subr.mxu0 0.0
        %4068 = vmatpush1.msra.mxu0 0.0
        %4069 = vmatprep.subr.mxu0 0.0
        %4070 = vmatpush1.msra.mxu0 0.0
        %4071 = vmatprep.subr.mxu0 0.0
        %4072 = vmatpush1.msra.mxu0 0.0
        %4073 = vmatprep.subr.mxu0 0.0
        %4074 = vmatpush1.msra.mxu0 0.0
        %4075 = vmatprep.subr.mxu0 0.0
        %4076 = vmatpush1.msra.mxu0 0.0
        %4077 = vmatprep.subr.mxu0 0.0
        %4078 = vmatpush1.msra.mxu0 0.0
        %4079 = vmatprep.subr.mxu0 0.0
        %4080 = vmatpush1.msra.mxu0 0.0
        %4081 = vmatprep.subr.mxu0 0.0
        %4082 = vmatpush1.msra.mxu0 0.0
        %4083 = vmatprep.subr.mxu0 0.0
        %4084 = vmatpush1.msra.mxu0 0.0
        %4085 = vmatprep.subr.mxu0 0.0
        %4086 = vmatpush1.msra.mxu0 0.0
        %4087 = vmatprep.subr.mxu0 0.0
        %4088 = vmatpush1.msra.mxu0 0.0
        %4089 = vmatprep.subr.mxu0 0.0
        %4090 = vmatpush1.msra.mxu0 0.0
        %4091 = vmatprep.subr.mxu0 0.0
        %4092 = vmatpush1.msra.mxu0 0.0
        %4093 = vmatprep.subr.mxu0 0.0
        %4094 = vmatpush1.msra.mxu0 0.0
        %4095 = vmatprep.subr.mxu0 0.0
        %4096 = vmatpush1.msra.mxu0 0.0
        %4097 = vmatprep.subr.mxu0 0.0
        %4098 = vmatpush1.msra.mxu0 0.0
        %4099 = vmatprep.subr.mxu0 0.0
        %4100 = vmatpush1.msra.mxu0 0.0
        %4101 = vmatprep.subr.mxu0 0.0
        %4102 = vmatpush1.msra.mxu0 0.0
        %4103 = vmatprep.subr.mxu0 0.0
        %4104 = vmatpush1.msra.mxu0 0.0
        %4105 = vmatprep.subr.mxu0 0.0
        %4106 = vmatpush1.msra.mxu0 0.0
        %4107 = vmatprep.subr.mxu0 0.0
        %4108 = vmatpush1.msra.mxu0 0.0
        %4109 = vmatprep.subr.mxu0 0.0
        %4110 = vmatpush1.msra.mxu0 0.0
        %4111 = vmatprep.subr.mxu0 0.0
        %4112 = vmatpush1.msra.mxu0 0.0
        %4113 = vmatprep.subr.mxu0 0.0
        %4114 = vmatpush1.msra.mxu0 0.0
        %4115 = vmatprep.subr.mxu0 0.0
        %4116 = vmatpush1.msra.mxu0 0.0
        %4117 = vmatprep.mubr.f32.mxu0 0.0
        %4118 = vmatmul.mubr.f32.gmra.mrb[0].mxu0 %v4051
        %v4119 = vpop.f32.mrb[0].mxu0
        %v4120 = vadd.f32 0.0, %v4119
        %v4121 = vpop.f32.mrb[0].mxu0
        %4122 = vdwg.mxu0
        %s4123 = scalar_lea.vmem %s43, 16
        %v4124 = vld [vmem:[%s4123] sm:$0xff]
        %v4125 = vld [vmem:[%s4123 + $0x8] sm:$0xff]
        %s4126 = scalar_lea.vmem %s43, 32
        %v4127 = vld [vmem:[%s4126] sm:$0xff]
        %v4128 = vld [vmem:[%s4126 + $0x8] sm:$0xff]
        %4129 = vmatprep.subr.mxu0 0.0
        %4130 = vmatpush1.msra.mxu0 %v4127
        %4131 = vmatprep.subr.mxu0 0.0
        %4132 = vmatpush1.msra.mxu0 %v4128
        %4133 = vmatprep.subr.mxu0 0.0
        %4134 = vmatpush1.msra.mxu0 0.0
        %4135 = vmatprep.subr.mxu0 0.0
        %4136 = vmatpush1.msra.mxu0 0.0
        %4137 = vmatprep.subr.mxu0 0.0
        %4138 = vmatpush1.msra.mxu0 0.0
        %4139 = vmatprep.subr.mxu0 0.0
        %4140 = vmatpush1.msra.mxu0 0.0
        %4141 = vmatprep.subr.mxu0 0.0
        %4142 = vmatpush1.msra.mxu0 0.0
        %4143 = vmatprep.subr.mxu0 0.0
        %4144 = vmatpush1.msra.mxu0 0.0
        %4145 = vmatprep.subr.mxu0 0.0
        %4146 = vmatpush1.msra.mxu0 0.0
        %4147 = vmatprep.subr.mxu0 0.0
        %4148 = vmatpush1.msra.mxu0 0.0
        %4149 = vmatprep.subr.mxu0 0.0
        %4150 = vmatpush1.msra.mxu0 0.0
        %4151 = vmatprep.subr.mxu0 0.0
        %4152 = vmatpush1.msra.mxu0 0.0
        %4153 = vmatprep.subr.mxu0 0.0
        %4154 = vmatpush1.msra.mxu0 0.0
        %4155 = vmatprep.subr.mxu0 0.0
        %4156 = vmatpush1.msra.mxu0 0.0
        %4157 = vmatprep.subr.mxu0 0.0
        %4158 = vmatpush1.msra.mxu0 0.0
        %4159 = vmatprep.subr.mxu0 0.0
        %4160 = vmatpush1.msra.mxu0 0.0
        %4161 = vmatprep.subr.mxu0 0.0
        %4162 = vmatpush1.msra.mxu0 0.0
        %4163 = vmatprep.subr.mxu0 0.0
        %4164 = vmatpush1.msra.mxu0 0.0
        %4165 = vmatprep.subr.mxu0 0.0
        %4166 = vmatpush1.msra.mxu0 0.0
        %4167 = vmatprep.subr.mxu0 0.0
        %4168 = vmatpush1.msra.mxu0 0.0
        %4169 = vmatprep.subr.mxu0 0.0
        %4170 = vmatpush1.msra.mxu0 0.0
        %4171 = vmatprep.subr.mxu0 0.0
        %4172 = vmatpush1.msra.mxu0 0.0
        %4173 = vmatprep.subr.mxu0 0.0
        %4174 = vmatpush1.msra.mxu0 0.0
        %4175 = vmatprep.subr.mxu0 0.0
        %4176 = vmatpush1.msra.mxu0 0.0
        %4177 = vmatprep.subr.mxu0 0.0
        %4178 = vmatpush1.msra.mxu0 0.0
        %4179 = vmatprep.subr.mxu0 0.0
        %4180 = vmatpush1.msra.mxu0 0.0
        %4181 = vmatprep.subr.mxu0 0.0
        %4182 = vmatpush1.msra.mxu0 0.0
        %4183 = vmatprep.subr.mxu0 0.0
        %4184 = vmatpush1.msra.mxu0 0.0
        %4185 = vmatprep.subr.mxu0 0.0
        %4186 = vmatpush1.msra.mxu0 0.0
        %4187 = vmatprep.subr.mxu0 0.0
        %4188 = vmatpush1.msra.mxu0 0.0
        %4189 = vmatprep.subr.mxu0 0.0
        %4190 = vmatpush1.msra.mxu0 0.0
        %4191 = vmatprep.subr.mxu0 0.0
        %4192 = vmatpush1.msra.mxu0 0.0
        %4193 = vmatprep.mubr.f32.mxu0 0.0
        %4194 = vmatmul.mubr.f32.gmra.mrb[0].mxu0 %v4051
        %v4195 = vpop.f32.mrb[0].mxu0
        %v4196 = vadd.f32 0.0, %v4195
        %v4197 = vpop.f32.mrb[0].mxu0
        %4198 = vdwg.mxu0
        %v4199 = vld [vmem:[#allocation22] sm:$0xf]
        %vm4200 = vcmask 31744
        %v4202 = vsel %vm4200, %v4199, 0
        %vm4204 = vcmask 1043456
        %v4206 = vsel %vm4204, %v4120, 0
        %4208 = vmatprep.subr.mxu0 0.0
        %4209 = vmatpush1.msra.mxu0 %v4206
        %4210 = vmatprep.subr.mxu0 0.0
        %4211 = vmatpush1.msra.mxu0 0.0
        %4212 = vmatprep.subr.mxu0 0.0
        %4213 = vmatpush1.msra.mxu0 0.0
        %4214 = vmatprep.subr.mxu0 0.0
        %4215 = vmatpush1.msra.mxu0 0.0
        %4216 = vmatprep.subr.mxu0 0.0
        %4217 = vmatpush1.msra.mxu0 0.0
        %4218 = vmatprep.subr.mxu0 0.0
        %4219 = vmatpush1.msra.mxu0 0.0
        %4220 = vmatprep.subr.mxu0 0.0
        %4221 = vmatpush1.msra.mxu0 0.0
        %4222 = vmatprep.subr.mxu0 0.0
        %4223 = vmatpush1.msra.mxu0 0.0
        %4224 = vmatprep.subr.mxu0 0.0
        %4225 = vmatpush1.msra.mxu0 0.0
        %4226 = vmatprep.subr.mxu0 0.0
        %4227 = vmatpush1.msra.mxu0 0.0
        %4228 = vmatprep.subr.mxu0 0.0
        %4229 = vmatpush1.msra.mxu0 0.0
        %4230 = vmatprep.subr.mxu0 0.0
        %4231 = vmatpush1.msra.mxu0 0.0
        %4232 = vmatprep.subr.mxu0 0.0
        %4233 = vmatpush1.msra.mxu0 0.0
        %4234 = vmatprep.subr.mxu0 0.0
        %4235 = vmatpush1.msra.mxu0 0.0
        %4236 = vmatprep.subr.mxu0 0.0
        %4237 = vmatpush1.msra.mxu0 0.0
        %4238 = vmatprep.subr.mxu0 0.0
        %4239 = vmatpush1.msra.mxu0 0.0
        %4240 = vmatprep.subr.mxu0 0.0
        %4241 = vmatpush1.msra.mxu0 0.0
        %4242 = vmatprep.subr.mxu0 0.0
        %4243 = vmatpush1.msra.mxu0 0.0
        %4244 = vmatprep.subr.mxu0 0.0
        %4245 = vmatpush1.msra.mxu0 0.0
        %4246 = vmatprep.subr.mxu0 0.0
        %4247 = vmatpush1.msra.mxu0 0.0
        %4248 = vmatprep.subr.mxu0 0.0
        %4249 = vmatpush1.msra.mxu0 0.0
        %4250 = vmatprep.subr.mxu0 0.0
        %4251 = vmatpush1.msra.mxu0 0.0
        %4252 = vmatprep.subr.mxu0 0.0
        %4253 = vmatpush1.msra.mxu0 0.0
        %4254 = vmatprep.subr.mxu0 0.0
        %4255 = vmatpush1.msra.mxu0 0.0
        %4256 = vmatprep.subr.mxu0 0.0
        %4257 = vmatpush1.msra.mxu0 0.0
        %4258 = vmatprep.subr.mxu0 0.0
        %4259 = vmatpush1.msra.mxu0 0.0
        %4260 = vmatprep.subr.mxu0 0.0
        %4261 = vmatpush1.msra.mxu0 0.0
        %4262 = vmatprep.subr.mxu0 0.0
        %4263 = vmatpush1.msra.mxu0 0.0
        %4264 = vmatprep.subr.mxu0 0.0
        %4265 = vmatpush1.msra.mxu0 0.0
        %4266 = vmatprep.subr.mxu0 0.0
        %4267 = vmatpush1.msra.mxu0 0.0
        %4268 = vmatprep.subr.mxu0 0.0
        %4269 = vmatpush1.msra.mxu0 0.0
        %4270 = vmatprep.subr.mxu0 0.0
        %4271 = vmatpush1.msra.mxu0 0.0
        %4272 = vmatprep.mubr.f32.mxu0 0.0
        %4273 = vmatmul.mubr.f32.gmra.mrb[0].mxu0 %v4202
        %v4274 = vpop.f32.mrb[0].mxu0
        %v4275 = vadd.f32 0.0, %v4274
        %v4276 = vpop.f32.mrb[0].mxu0
        %4277 = vdwg.mxu0
        %4278 = vmatprep.subr.mxu0 0.0
        %4279 = vmatpush1.msra.mxu0 %v4124
        %4280 = vmatprep.subr.mxu0 0.0
        %4281 = vmatpush1.msra.mxu0 %v4125
        %4282 = vmatprep.subr.mxu0 0.0
        %4283 = vmatpush1.msra.mxu0 0.0
        %4284 = vmatprep.subr.mxu0 0.0
        %4285 = vmatpush1.msra.mxu0 0.0
        %4286 = vmatprep.subr.mxu0 0.0
        %4287 = vmatpush1.msra.mxu0 0.0
        %4288 = vmatprep.subr.mxu0 0.0
        %4289 = vmatpush1.msra.mxu0 0.0
        %4290 = vmatprep.subr.mxu0 0.0
        %4291 = vmatpush1.msra.mxu0 0.0
        %4292 = vmatprep.subr.mxu0 0.0
        %4293 = vmatpush1.msra.mxu0 0.0
        %4294 = vmatprep.subr.mxu0 0.0
        %4295 = vmatpush1.msra.mxu0 0.0
        %4296 = vmatprep.subr.mxu0 0.0
        %4297 = vmatpush1.msra.mxu0 0.0
        %4298 = vmatprep.subr.mxu0 0.0
        %4299 = vmatpush1.msra.mxu0 0.0
        %4300 = vmatprep.subr.mxu0 0.0
        %4301 = vmatpush1.msra.mxu0 0.0
        %4302 = vmatprep.subr.mxu0 0.0
        %4303 = vmatpush1.msra.mxu0 0.0
        %4304 = vmatprep.subr.mxu0 0.0
        %4305 = vmatpush1.msra.mxu0 0.0
        %4306 = vmatprep.subr.mxu0 0.0
        %4307 = vmatpush1.msra.mxu0 0.0
        %4308 = vmatprep.subr.mxu0 0.0
        %4309 = vmatpush1.msra.mxu0 0.0
        %4310 = vmatprep.subr.mxu0 0.0
        %4311 = vmatpush1.msra.mxu0 0.0
        %4312 = vmatprep.subr.mxu0 0.0
        %4313 = vmatpush1.msra.mxu0 0.0
        %4314 = vmatprep.subr.mxu0 0.0
        %4315 = vmatpush1.msra.mxu0 0.0
        %4316 = vmatprep.subr.mxu0 0.0
        %4317 = vmatpush1.msra.mxu0 0.0
        %4318 = vmatprep.subr.mxu0 0.0
        %4319 = vmatpush1.msra.mxu0 0.0
        %4320 = vmatprep.subr.mxu0 0.0
        %4321 = vmatpush1.msra.mxu0 0.0
        %4322 = vmatprep.subr.mxu0 0.0
        %4323 = vmatpush1.msra.mxu0 0.0
        %4324 = vmatprep.subr.mxu0 0.0
        %4325 = vmatpush1.msra.mxu0 0.0
        %4326 = vmatprep.subr.mxu0 0.0
        %4327 = vmatpush1.msra.mxu0 0.0
        %4328 = vmatprep.subr.mxu0 0.0
        %4329 = vmatpush1.msra.mxu0 0.0
        %4330 = vmatprep.subr.mxu0 0.0
        %4331 = vmatpush1.msra.mxu0 0.0
        %4332 = vmatprep.subr.mxu0 0.0
        %4333 = vmatpush1.msra.mxu0 0.0
        %4334 = vmatprep.subr.mxu0 0.0
        %4335 = vmatpush1.msra.mxu0 0.0
        %4336 = vmatprep.subr.mxu0 0.0
        %4337 = vmatpush1.msra.mxu0 0.0
        %4338 = vmatprep.subr.mxu0 0.0
        %4339 = vmatpush1.msra.mxu0 0.0
        %4340 = vmatprep.subr.mxu0 0.0
        %4341 = vmatpush1.msra.mxu0 0.0
        %4342 = vmatprep.mubr.f32.mxu0 0.0
        %4343 = vmatmul.mubr.f32.gmra.mrb[0].mxu0 %v4051
        %v4344 = vpop.f32.mrb[0].mxu0
        %v4345 = vadd.f32 %v4275, %v4344
        %v4346 = vpop.f32.mrb[0].mxu0
        %4347 = vdwg.mxu0
        %s4348 = scalar_lea.vmem [#allocation22], 4
        %v4349 = vld [vmem:[%s4348] sm:$0xf]
        %v4351 = vsel %vm4200, %v4349, 0
        %v4354 = vsel %vm4204, %v4196, 0
        %4356 = vmatprep.subr.mxu0 0.0
        %4357 = vmatpush1.msra.mxu0 %v4354
        %4358 = vmatprep.subr.mxu0 0.0
        %4359 = vmatpush1.msra.mxu0 0.0
        %4360 = vmatprep.subr.mxu0 0.0
        %4361 = vmatpush1.msra.mxu0 0.0
        %4362 = vmatprep.subr.mxu0 0.0
        %4363 = vmatpush1.msra.mxu0 0.0
        %4364 = vmatprep.subr.mxu0 0.0
        %4365 = vmatpush1.msra.mxu0 0.0
        %4366 = vmatprep.subr.mxu0 0.0
        %4367 = vmatpush1.msra.mxu0 0.0
        %4368 = vmatprep.subr.mxu0 0.0
        %4369 = vmatpush1.msra.mxu0 0.0
        %4370 = vmatprep.subr.mxu0 0.0
        %4371 = vmatpush1.msra.mxu0 0.0
        %4372 = vmatprep.subr.mxu0 0.0
        %4373 = vmatpush1.msra.mxu0 0.0
        %4374 = vmatprep.subr.mxu0 0.0
        %4375 = vmatpush1.msra.mxu0 0.0
        %4376 = vmatprep.subr.mxu0 0.0
        %4377 = vmatpush1.msra.mxu0 0.0
        %4378 = vmatprep.subr.mxu0 0.0
        %4379 = vmatpush1.msra.mxu0 0.0
        %4380 = vmatprep.subr.mxu0 0.0
        %4381 = vmatpush1.msra.mxu0 0.0
        %4382 = vmatprep.subr.mxu0 0.0
        %4383 = vmatpush1.msra.mxu0 0.0
        %4384 = vmatprep.subr.mxu0 0.0
        %4385 = vmatpush1.msra.mxu0 0.0
        %4386 = vmatprep.subr.mxu0 0.0
        %4387 = vmatpush1.msra.mxu0 0.0
        %4388 = vmatprep.subr.mxu0 0.0
        %4389 = vmatpush1.msra.mxu0 0.0
        %4390 = vmatprep.subr.mxu0 0.0
        %4391 = vmatpush1.msra.mxu0 0.0
        %4392 = vmatprep.subr.mxu0 0.0
        %4393 = vmatpush1.msra.mxu0 0.0
        %4394 = vmatprep.subr.mxu0 0.0
        %4395 = vmatpush1.msra.mxu0 0.0
        %4396 = vmatprep.subr.mxu0 0.0
        %4397 = vmatpush1.msra.mxu0 0.0
        %4398 = vmatprep.subr.mxu0 0.0
        %4399 = vmatpush1.msra.mxu0 0.0
        %4400 = vmatprep.subr.mxu0 0.0
        %4401 = vmatpush1.msra.mxu0 0.0
        %4402 = vmatprep.subr.mxu0 0.0
        %4403 = vmatpush1.msra.mxu0 0.0
        %4404 = vmatprep.subr.mxu0 0.0
        %4405 = vmatpush1.msra.mxu0 0.0
        %4406 = vmatprep.subr.mxu0 0.0
        %4407 = vmatpush1.msra.mxu0 0.0
        %4408 = vmatprep.subr.mxu0 0.0
        %4409 = vmatpush1.msra.mxu0 0.0
        %4410 = vmatprep.subr.mxu0 0.0
        %4411 = vmatpush1.msra.mxu0 0.0
        %4412 = vmatprep.subr.mxu0 0.0
        %4413 = vmatpush1.msra.mxu0 0.0
        %4414 = vmatprep.subr.mxu0 0.0
        %4415 = vmatpush1.msra.mxu0 0.0
        %4416 = vmatprep.subr.mxu0 0.0
        %4417 = vmatpush1.msra.mxu0 0.0
        %4418 = vmatprep.subr.mxu0 0.0
        %4419 = vmatpush1.msra.mxu0 0.0
        %4420 = vmatprep.mubr.f32.mxu0 0.0
        %4421 = vmatmul.mubr.f32.gmra.mrb[0].mxu0 %v4351
        %v4422 = vpop.f32.mrb[0].mxu0
        %v4423 = vadd.f32 0.0, %v4422
        %v4424 = vpop.f32.mrb[0].mxu0
        %4425 = vdwg.mxu0
        %v4426 = vadd.f32 %v4345, %v4423
        %v4427 = vld [vmem:[#allocation19 + $0x3] sm:$0x1]
        %v4428 = vlaneseq
        %v4429 = vshrl.u32 %v4428, 7
        %v4430 = vsub.s32 0, %v4429
        %v4431 = vrot.slane %v4427, %v4430
        %v4432 = vadd.f32 %v4426, %v4431
        %v4433 = vmax.f32 %v4432, 0.0
        %v4434 = vld [vmem:[#allocation20] sm:$0xff]
        %v4435 = vld [vmem:[#allocation20 + $0x8] sm:$0xff]
        %v4436 = vld [vmem:[#allocation19 + $0x4] sm:$0x1]
        %v4437 = vlaneseq
        %v4438 = vshrl.u32 %v4437, 7
        %v4439 = vsub.s32 0, %v4438
        %v4440 = vrot.slane %v4436, %v4439
        %v4442 = vsel %vm1831, %v4433, 0
        %4444 = vmatprep.subr.mxu0 0.0
        %4445 = vmatpush1.msra.mxu0 %v4434
        %4446 = vmatprep.subr.mxu0 0.0
        %4447 = vmatpush1.msra.mxu0 %v4435
        %4448 = vmatprep.subr.mxu0 0.0
        %4449 = vmatpush1.msra.mxu0 0.0
        %4450 = vmatprep.subr.mxu0 0.0
        %4451 = vmatpush1.msra.mxu0 0.0
        %4452 = vmatprep.subr.mxu0 0.0
        %4453 = vmatpush1.msra.mxu0 0.0
        %4454 = vmatprep.subr.mxu0 0.0
        %4455 = vmatpush1.msra.mxu0 0.0
        %4456 = vmatprep.subr.mxu0 0.0
        %4457 = vmatpush1.msra.mxu0 0.0
        %4458 = vmatprep.subr.mxu0 0.0
        %4459 = vmatpush1.msra.mxu0 0.0
        %4460 = vmatprep.subr.mxu0 0.0
        %4461 = vmatpush1.msra.mxu0 0.0
        %4462 = vmatprep.subr.mxu0 0.0
        %4463 = vmatpush1.msra.mxu0 0.0
        %4464 = vmatprep.subr.mxu0 0.0
        %4465 = vmatpush1.msra.mxu0 0.0
        %4466 = vmatprep.subr.mxu0 0.0
        %4467 = vmatpush1.msra.mxu0 0.0
        %4468 = vmatprep.subr.mxu0 0.0
        %4469 = vmatpush1.msra.mxu0 0.0
        %4470 = vmatprep.subr.mxu0 0.0
        %4471 = vmatpush1.msra.mxu0 0.0
        %4472 = vmatprep.subr.mxu0 0.0
        %4473 = vmatpush1.msra.mxu0 0.0
        %4474 = vmatprep.subr.mxu0 0.0
        %4475 = vmatpush1.msra.mxu0 0.0
        %4476 = vmatprep.subr.mxu0 0.0
        %4477 = vmatpush1.msra.mxu0 0.0
        %4478 = vmatprep.subr.mxu0 0.0
        %4479 = vmatpush1.msra.mxu0 0.0
        %4480 = vmatprep.subr.mxu0 0.0
        %4481 = vmatpush1.msra.mxu0 0.0
        %4482 = vmatprep.subr.mxu0 0.0
        %4483 = vmatpush1.msra.mxu0 0.0
        %4484 = vmatprep.subr.mxu0 0.0
        %4485 = vmatpush1.msra.mxu0 0.0
        %4486 = vmatprep.subr.mxu0 0.0
        %4487 = vmatpush1.msra.mxu0 0.0
        %4488 = vmatprep.subr.mxu0 0.0
        %4489 = vmatpush1.msra.mxu0 0.0
        %4490 = vmatprep.subr.mxu0 0.0
        %4491 = vmatpush1.msra.mxu0 0.0
        %4492 = vmatprep.subr.mxu0 0.0
        %4493 = vmatpush1.msra.mxu0 0.0
        %4494 = vmatprep.subr.mxu0 0.0
        %4495 = vmatpush1.msra.mxu0 0.0
        %4496 = vmatprep.subr.mxu0 0.0
        %4497 = vmatpush1.msra.mxu0 0.0
        %4498 = vmatprep.subr.mxu0 0.0
        %4499 = vmatpush1.msra.mxu0 0.0
        %4500 = vmatprep.subr.mxu0 0.0
        %4501 = vmatpush1.msra.mxu0 0.0
        %4502 = vmatprep.subr.mxu0 0.0
        %4503 = vmatpush1.msra.mxu0 0.0
        %4504 = vmatprep.subr.mxu0 0.0
        %4505 = vmatpush1.msra.mxu0 0.0
        %4506 = vmatprep.subr.mxu0 0.0
        %4507 = vmatpush1.msra.mxu0 0.0
        %4508 = vmatprep.mubr.f32.mxu0 0.0
        %4509 = vmatmul.mubr.f32.gmra.mrb[0].mxu0 %v4442
        %v4510 = vpop.f32.mrb[0].mxu0
        %v4511 = vadd.f32 %v4440, %v4510
        %v4512 = vpop.f32.mrb[0].mxu0
        %4513 = vdwg.mxu0
        %v4514 = vadd.f32 %v4511, %v3951
        %v4515 = vld [vmem:[#allocation23] sm:$0x1]
        %v4516 = vlaneseq
        %v4517 = vshrl.u32 %v4516, 7
        %v4518 = vsub.s32 0, %v4517
        %v4519 = vrot.slane %v4515, %v4518
        %v4520 = vmul.f32 %v4514, %v4519
        %v4521 = vld [vmem:[#allocation23 + $0x1] sm:$0x1]
        %v4522 = vlaneseq
        %v4523 = vshrl.u32 %v4522, 7
        %v4524 = vsub.s32 0, %v4523
        %v4525 = vrot.slane %v4521, %v4524
        %v4526 = vadd.f32 %v4520, %v4525
        %v4527 = vmax.f32 %v4526, 0.0
        %v4528 = vld [vmem:[%s51] sm:$0xff]
        %v4529 = vld [vmem:[%s51 + $0x8] sm:$0xff]
        %v4530 = vld [vmem:[%s51 + $0x10] sm:$0xff]
        %v4531 = vld [vmem:[%s51 + $0x18] sm:$0xff]
        %v4532 = vld [vmem:[#allocation23 + $0x2] sm:$0x1]
        %v4533 = vlaneseq
        %v4534 = vshrl.u32 %v4533, 7
        %v4535 = vsub.s32 0, %v4534
        %v4536 = vrot.slane %v4532, %v4535
        %v4538 = vsel %vm2618, %v4527, 0
        %4540 = vmatprep.subr.mxu0 0.0
        %4541 = vmatpush1.msra.mxu0 %v4528
        %4542 = vmatprep.subr.mxu0 0.0
        %4543 = vmatpush1.msra.mxu0 %v4529
        %4544 = vmatprep.subr.mxu0 0.0
        %4545 = vmatpush1.msra.mxu0 %v4530
        %4546 = vmatprep.subr.mxu0 0.0
        %4547 = vmatpush1.msra.mxu0 %v4531
        %4548 = vmatprep.subr.mxu0 0.0
        %4549 = vmatpush1.msra.mxu0 0.0
        %4550 = vmatprep.subr.mxu0 0.0
        %4551 = vmatpush1.msra.mxu0 0.0
        %4552 = vmatprep.subr.mxu0 0.0
        %4553 = vmatpush1.msra.mxu0 0.0
        %4554 = vmatprep.subr.mxu0 0.0
        %4555 = vmatpush1.msra.mxu0 0.0
        %4556 = vmatprep.subr.mxu0 0.0
        %4557 = vmatpush1.msra.mxu0 0.0
        %4558 = vmatprep.subr.mxu0 0.0
        %4559 = vmatpush1.msra.mxu0 0.0
        %4560 = vmatprep.subr.mxu0 0.0
        %4561 = vmatpush1.msra.mxu0 0.0
        %4562 = vmatprep.subr.mxu0 0.0
        %4563 = vmatpush1.msra.mxu0 0.0
        %4564 = vmatprep.subr.mxu0 0.0
        %4565 = vmatpush1.msra.mxu0 0.0
        %4566 = vmatprep.subr.mxu0 0.0
        %4567 = vmatpush1.msra.mxu0 0.0
        %4568 = vmatprep.subr.mxu0 0.0
        %4569 = vmatpush1.msra.mxu0 0.0
        %4570 = vmatprep.subr.mxu0 0.0
        %4571 = vmatpush1.msra.mxu0 0.0
        %4572 = vmatprep.subr.mxu0 0.0
        %4573 = vmatpush1.msra.mxu0 0.0
        %4574 = vmatprep.subr.mxu0 0.0
        %4575 = vmatpush1.msra.mxu0 0.0
        %4576 = vmatprep.subr.mxu0 0.0
        %4577 = vmatpush1.msra.mxu0 0.0
        %4578 = vmatprep.subr.mxu0 0.0
        %4579 = vmatpush1.msra.mxu0 0.0
        %4580 = vmatprep.subr.mxu0 0.0
        %4581 = vmatpush1.msra.mxu0 0.0
        %4582 = vmatprep.subr.mxu0 0.0
        %4583 = vmatpush1.msra.mxu0 0.0
        %4584 = vmatprep.subr.mxu0 0.0
        %4585 = vmatpush1.msra.mxu0 0.0
        %4586 = vmatprep.subr.mxu0 0.0
        %4587 = vmatpush1.msra.mxu0 0.0
        %4588 = vmatprep.subr.mxu0 0.0
        %4589 = vmatpush1.msra.mxu0 0.0
        %4590 = vmatprep.subr.mxu0 0.0
        %4591 = vmatpush1.msra.mxu0 0.0
        %4592 = vmatprep.subr.mxu0 0.0
        %4593 = vmatpush1.msra.mxu0 0.0
        %4594 = vmatprep.subr.mxu0 0.0
        %4595 = vmatpush1.msra.mxu0 0.0
        %4596 = vmatprep.subr.mxu0 0.0
        %4597 = vmatpush1.msra.mxu0 0.0
        %4598 = vmatprep.subr.mxu0 0.0
        %4599 = vmatpush1.msra.mxu0 0.0
        %4600 = vmatprep.subr.mxu0 0.0
        %4601 = vmatpush1.msra.mxu0 0.0
        %4602 = vmatprep.subr.mxu0 0.0
        %4603 = vmatpush1.msra.mxu0 0.0
        %4604 = vmatprep.mubr.f32.mxu0 0.0
        %4605 = vmatmul.mubr.f32.gmra.mrb[0].mxu0 %v4538
        %v4606 = vpop.f32.mrb[0].mxu0
        %v4607 = vadd.f32 %v4536, %v4606
        %v4608 = vpop.f32.mrb[0].mxu0
        %4609 = vdwg.mxu0
        %v4610 = vmax.f32 %v4607, 0.0
        %v4611 = vld [vmem:[%s53] sm:$0xff]
        %v4612 = vld [vmem:[%s53 + $0x8] sm:$0xff]
        %v4614 = vsel %vm1831, %v4610, 0
        %4616 = vmatprep.subr.mxu0 0.0
        %4617 = vmatpush1.msra.mxu0 %v4611
        %4618 = vmatprep.subr.mxu0 0.0
        %4619 = vmatpush1.msra.mxu0 %v4612
        %4620 = vmatprep.subr.mxu0 0.0
        %4621 = vmatpush1.msra.mxu0 0.0
        %4622 = vmatprep.subr.mxu0 0.0
        %4623 = vmatpush1.msra.mxu0 0.0
        %4624 = vmatprep.subr.mxu0 0.0
        %4625 = vmatpush1.msra.mxu0 0.0
        %4626 = vmatprep.subr.mxu0 0.0
        %4627 = vmatpush1.msra.mxu0 0.0
        %4628 = vmatprep.subr.mxu0 0.0
        %4629 = vmatpush1.msra.mxu0 0.0
        %4630 = vmatprep.subr.mxu0 0.0
        %4631 = vmatpush1.msra.mxu0 0.0
        %4632 = vmatprep.subr.mxu0 0.0
        %4633 = vmatpush1.msra.mxu0 0.0
        %4634 = vmatprep.subr.mxu0 0.0
        %4635 = vmatpush1.msra.mxu0 0.0
        %4636 = vmatprep.subr.mxu0 0.0
        %4637 = vmatpush1.msra.mxu0 0.0
        %4638 = vmatprep.subr.mxu0 0.0
        %4639 = vmatpush1.msra.mxu0 0.0
        %4640 = vmatprep.subr.mxu0 0.0
        %4641 = vmatpush1.msra.mxu0 0.0
        %4642 = vmatprep.subr.mxu0 0.0
        %4643 = vmatpush1.msra.mxu0 0.0
        %4644 = vmatprep.subr.mxu0 0.0
        %4645 = vmatpush1.msra.mxu0 0.0
        %4646 = vmatprep.subr.mxu0 0.0
        %4647 = vmatpush1.msra.mxu0 0.0
        %4648 = vmatprep.subr.mxu0 0.0
        %4649 = vmatpush1.msra.mxu0 0.0
        %4650 = vmatprep.subr.mxu0 0.0
        %4651 = vmatpush1.msra.mxu0 0.0
        %4652 = vmatprep.subr.mxu0 0.0
        %4653 = vmatpush1.msra.mxu0 0.0
        %4654 = vmatprep.subr.mxu0 0.0
        %4655 = vmatpush1.msra.mxu0 0.0
        %4656 = vmatprep.subr.mxu0 0.0
        %4657 = vmatpush1.msra.mxu0 0.0
        %4658 = vmatprep.subr.mxu0 0.0
        %4659 = vmatpush1.msra.mxu0 0.0
        %4660 = vmatprep.subr.mxu0 0.0
        %4661 = vmatpush1.msra.mxu0 0.0
        %4662 = vmatprep.subr.mxu0 0.0
        %4663 = vmatpush1.msra.mxu0 0.0
        %4664 = vmatprep.subr.mxu0 0.0
        %4665 = vmatpush1.msra.mxu0 0.0
        %4666 = vmatprep.subr.mxu0 0.0
        %4667 = vmatpush1.msra.mxu0 0.0
        %4668 = vmatprep.subr.mxu0 0.0
        %4669 = vmatpush1.msra.mxu0 0.0
        %4670 = vmatprep.subr.mxu0 0.0
        %4671 = vmatpush1.msra.mxu0 0.0
        %4672 = vmatprep.subr.mxu0 0.0
        %4673 = vmatpush1.msra.mxu0 0.0
        %4674 = vmatprep.subr.mxu0 0.0
        %4675 = vmatpush1.msra.mxu0 0.0
        %4676 = vmatprep.subr.mxu0 0.0
        %4677 = vmatpush1.msra.mxu0 0.0
        %4678 = vmatprep.subr.mxu0 0.0
        %4679 = vmatpush1.msra.mxu0 0.0
        %4680 = vmatprep.mubr.f32.mxu0 0.0
        %4681 = vmatmul.mubr.f32.gmra.mrb[0].mxu0 %v4614
        %v4682 = vpop.f32.mrb[0].mxu0
        %v4683 = vadd.f32 0.0, %v4682
        %v4684 = vpop.f32.mrb[0].mxu0
        %4685 = vdwg.mxu0
        %s4686 = scalar_lea.vmem %s53, 16
        %v4687 = vld [vmem:[%s4686] sm:$0xff]
        %v4688 = vld [vmem:[%s4686 + $0x8] sm:$0xff]
        %s4689 = scalar_lea.vmem %s53, 32
        %v4690 = vld [vmem:[%s4689] sm:$0xff]
        %v4691 = vld [vmem:[%s4689 + $0x8] sm:$0xff]
        %4692 = vmatprep.subr.mxu0 0.0
        %4693 = vmatpush1.msra.mxu0 %v4690
        %4694 = vmatprep.subr.mxu0 0.0
        %4695 = vmatpush1.msra.mxu0 %v4691
        %4696 = vmatprep.subr.mxu0 0.0
        %4697 = vmatpush1.msra.mxu0 0.0
        %4698 = vmatprep.subr.mxu0 0.0
        %4699 = vmatpush1.msra.mxu0 0.0
        %4700 = vmatprep.subr.mxu0 0.0
        %4701 = vmatpush1.msra.mxu0 0.0
        %4702 = vmatprep.subr.mxu0 0.0
        %4703 = vmatpush1.msra.mxu0 0.0
        %4704 = vmatprep.subr.mxu0 0.0
        %4705 = vmatpush1.msra.mxu0 0.0
        %4706 = vmatprep.subr.mxu0 0.0
        %4707 = vmatpush1.msra.mxu0 0.0
        %4708 = vmatprep.subr.mxu0 0.0
        %4709 = vmatpush1.msra.mxu0 0.0
        %4710 = vmatprep.subr.mxu0 0.0
        %4711 = vmatpush1.msra.mxu0 0.0
        %4712 = vmatprep.subr.mxu0 0.0
        %4713 = vmatpush1.msra.mxu0 0.0
        %4714 = vmatprep.subr.mxu0 0.0
        %4715 = vmatpush1.msra.mxu0 0.0
        %4716 = vmatprep.subr.mxu0 0.0
        %4717 = vmatpush1.msra.mxu0 0.0
        %4718 = vmatprep.subr.mxu0 0.0
        %4719 = vmatpush1.msra.mxu0 0.0
        %4720 = vmatprep.subr.mxu0 0.0
        %4721 = vmatpush1.msra.mxu0 0.0
        %4722 = vmatprep.subr.mxu0 0.0
        %4723 = vmatpush1.msra.mxu0 0.0
        %4724 = vmatprep.subr.mxu0 0.0
        %4725 = vmatpush1.msra.mxu0 0.0
        %4726 = vmatprep.subr.mxu0 0.0
        %4727 = vmatpush1.msra.mxu0 0.0
        %4728 = vmatprep.subr.mxu0 0.0
        %4729 = vmatpush1.msra.mxu0 0.0
        %4730 = vmatprep.subr.mxu0 0.0
        %4731 = vmatpush1.msra.mxu0 0.0
        %4732 = vmatprep.subr.mxu0 0.0
        %4733 = vmatpush1.msra.mxu0 0.0
        %4734 = vmatprep.subr.mxu0 0.0
        %4735 = vmatpush1.msra.mxu0 0.0
        %4736 = vmatprep.subr.mxu0 0.0
        %4737 = vmatpush1.msra.mxu0 0.0
        %4738 = vmatprep.subr.mxu0 0.0
        %4739 = vmatpush1.msra.mxu0 0.0
        %4740 = vmatprep.subr.mxu0 0.0
        %4741 = vmatpush1.msra.mxu0 0.0
        %4742 = vmatprep.subr.mxu0 0.0
        %4743 = vmatpush1.msra.mxu0 0.0
        %4744 = vmatprep.subr.mxu0 0.0
        %4745 = vmatpush1.msra.mxu0 0.0
        %4746 = vmatprep.subr.mxu0 0.0
        %4747 = vmatpush1.msra.mxu0 0.0
        %4748 = vmatprep.subr.mxu0 0.0
        %4749 = vmatpush1.msra.mxu0 0.0
        %4750 = vmatprep.subr.mxu0 0.0
        %4751 = vmatpush1.msra.mxu0 0.0
        %4752 = vmatprep.subr.mxu0 0.0
        %4753 = vmatpush1.msra.mxu0 0.0
        %4754 = vmatprep.subr.mxu0 0.0
        %4755 = vmatpush1.msra.mxu0 0.0
        %4756 = vmatprep.mubr.f32.mxu0 0.0
        %4757 = vmatmul.mubr.f32.gmra.mrb[0].mxu0 %v4614
        %v4758 = vpop.f32.mrb[0].mxu0
        %v4759 = vadd.f32 0.0, %v4758
        %v4760 = vpop.f32.mrb[0].mxu0
        %4761 = vdwg.mxu0
        %v4763 = vsel %vm4204, %v4683, 0
        %4765 = vmatprep.subr.mxu0 0.0
        %4766 = vmatpush1.msra.mxu0 %v4763
        %4767 = vmatprep.subr.mxu0 0.0
        %4768 = vmatpush1.msra.mxu0 0.0
        %4769 = vmatprep.subr.mxu0 0.0
        %4770 = vmatpush1.msra.mxu0 0.0
        %4771 = vmatprep.subr.mxu0 0.0
        %4772 = vmatpush1.msra.mxu0 0.0
        %4773 = vmatprep.subr.mxu0 0.0
        %4774 = vmatpush1.msra.mxu0 0.0
        %4775 = vmatprep.subr.mxu0 0.0
        %4776 = vmatpush1.msra.mxu0 0.0
        %4777 = vmatprep.subr.mxu0 0.0
        %4778 = vmatpush1.msra.mxu0 0.0
        %4779 = vmatprep.subr.mxu0 0.0
        %4780 = vmatpush1.msra.mxu0 0.0
        %4781 = vmatprep.subr.mxu0 0.0
        %4782 = vmatpush1.msra.mxu0 0.0
        %4783 = vmatprep.subr.mxu0 0.0
        %4784 = vmatpush1.msra.mxu0 0.0
        %4785 = vmatprep.subr.mxu0 0.0
        %4786 = vmatpush1.msra.mxu0 0.0
        %4787 = vmatprep.subr.mxu0 0.0
        %4788 = vmatpush1.msra.mxu0 0.0
        %4789 = vmatprep.subr.mxu0 0.0
        %4790 = vmatpush1.msra.mxu0 0.0
        %4791 = vmatprep.subr.mxu0 0.0
        %4792 = vmatpush1.msra.mxu0 0.0
        %4793 = vmatprep.subr.mxu0 0.0
        %4794 = vmatpush1.msra.mxu0 0.0
        %4795 = vmatprep.subr.mxu0 0.0
        %4796 = vmatpush1.msra.mxu0 0.0
        %4797 = vmatprep.subr.mxu0 0.0
        %4798 = vmatpush1.msra.mxu0 0.0
        %4799 = vmatprep.subr.mxu0 0.0
        %4800 = vmatpush1.msra.mxu0 0.0
        %4801 = vmatprep.subr.mxu0 0.0
        %4802 = vmatpush1.msra.mxu0 0.0
        %4803 = vmatprep.subr.mxu0 0.0
        %4804 = vmatpush1.msra.mxu0 0.0
        %4805 = vmatprep.subr.mxu0 0.0
        %4806 = vmatpush1.msra.mxu0 0.0
        %4807 = vmatprep.subr.mxu0 0.0
        %4808 = vmatpush1.msra.mxu0 0.0
        %4809 = vmatprep.subr.mxu0 0.0
        %4810 = vmatpush1.msra.mxu0 0.0
        %4811 = vmatprep.subr.mxu0 0.0
        %4812 = vmatpush1.msra.mxu0 0.0
        %4813 = vmatprep.subr.mxu0 0.0
        %4814 = vmatpush1.msra.mxu0 0.0
        %4815 = vmatprep.subr.mxu0 0.0
        %4816 = vmatpush1.msra.mxu0 0.0
        %4817 = vmatprep.subr.mxu0 0.0
        %4818 = vmatpush1.msra.mxu0 0.0
        %4819 = vmatprep.subr.mxu0 0.0
        %4820 = vmatpush1.msra.mxu0 0.0
        %4821 = vmatprep.subr.mxu0 0.0
        %4822 = vmatpush1.msra.mxu0 0.0
        %4823 = vmatprep.subr.mxu0 0.0
        %4824 = vmatpush1.msra.mxu0 0.0
        %4825 = vmatprep.subr.mxu0 0.0
        %4826 = vmatpush1.msra.mxu0 0.0
        %4827 = vmatprep.subr.mxu0 0.0
        %4828 = vmatpush1.msra.mxu0 0.0
        %4829 = vmatprep.mubr.f32.mxu0 0.0
        %4830 = vmatmul.mubr.f32.gmra.mrb[0].mxu0 %v4202
        %v4831 = vpop.f32.mrb[0].mxu0
        %v4832 = vadd.f32 0.0, %v4831
        %v4833 = vpop.f32.mrb[0].mxu0
        %4834 = vdwg.mxu0
        %4835 = vmatprep.subr.mxu0 0.0
        %4836 = vmatpush1.msra.mxu0 %v4687
        %4837 = vmatprep.subr.mxu0 0.0
        %4838 = vmatpush1.msra.mxu0 %v4688
        %4839 = vmatprep.subr.mxu0 0.0
        %4840 = vmatpush1.msra.mxu0 0.0
        %4841 = vmatprep.subr.mxu0 0.0
        %4842 = vmatpush1.msra.mxu0 0.0
        %4843 = vmatprep.subr.mxu0 0.0
        %4844 = vmatpush1.msra.mxu0 0.0
        %4845 = vmatprep.subr.mxu0 0.0
        %4846 = vmatpush1.msra.mxu0 0.0
        %4847 = vmatprep.subr.mxu0 0.0
        %4848 = vmatpush1.msra.mxu0 0.0
        %4849 = vmatprep.subr.mxu0 0.0
        %4850 = vmatpush1.msra.mxu0 0.0
        %4851 = vmatprep.subr.mxu0 0.0
        %4852 = vmatpush1.msra.mxu0 0.0
        %4853 = vmatprep.subr.mxu0 0.0
        %4854 = vmatpush1.msra.mxu0 0.0
        %4855 = vmatprep.subr.mxu0 0.0
        %4856 = vmatpush1.msra.mxu0 0.0
        %4857 = vmatprep.subr.mxu0 0.0
        %4858 = vmatpush1.msra.mxu0 0.0
        %4859 = vmatprep.subr.mxu0 0.0
        %4860 = vmatpush1.msra.mxu0 0.0
        %4861 = vmatprep.subr.mxu0 0.0
        %4862 = vmatpush1.msra.mxu0 0.0
        %4863 = vmatprep.subr.mxu0 0.0
        %4864 = vmatpush1.msra.mxu0 0.0
        %4865 = vmatprep.subr.mxu0 0.0
        %4866 = vmatpush1.msra.mxu0 0.0
        %4867 = vmatprep.subr.mxu0 0.0
        %4868 = vmatpush1.msra.mxu0 0.0
        %4869 = vmatprep.subr.mxu0 0.0
        %4870 = vmatpush1.msra.mxu0 0.0
        %4871 = vmatprep.subr.mxu0 0.0
        %4872 = vmatpush1.msra.mxu0 0.0
        %4873 = vmatprep.subr.mxu0 0.0
        %4874 = vmatpush1.msra.mxu0 0.0
        %4875 = vmatprep.subr.mxu0 0.0
        %4876 = vmatpush1.msra.mxu0 0.0
        %4877 = vmatprep.subr.mxu0 0.0
        %4878 = vmatpush1.msra.mxu0 0.0
        %4879 = vmatprep.subr.mxu0 0.0
        %4880 = vmatpush1.msra.mxu0 0.0
        %4881 = vmatprep.subr.mxu0 0.0
        %4882 = vmatpush1.msra.mxu0 0.0
        %4883 = vmatprep.subr.mxu0 0.0
        %4884 = vmatpush1.msra.mxu0 0.0
        %4885 = vmatprep.subr.mxu0 0.0
        %4886 = vmatpush1.msra.mxu0 0.0
        %4887 = vmatprep.subr.mxu0 0.0
        %4888 = vmatpush1.msra.mxu0 0.0
        %4889 = vmatprep.subr.mxu0 0.0
        %4890 = vmatpush1.msra.mxu0 0.0
        %4891 = vmatprep.subr.mxu0 0.0
        %4892 = vmatpush1.msra.mxu0 0.0
        %4893 = vmatprep.subr.mxu0 0.0
        %4894 = vmatpush1.msra.mxu0 0.0
        %4895 = vmatprep.subr.mxu0 0.0
        %4896 = vmatpush1.msra.mxu0 0.0
        %4897 = vmatprep.subr.mxu0 0.0
        %4898 = vmatpush1.msra.mxu0 0.0
        %4899 = vmatprep.mubr.f32.mxu0 0.0
        %4900 = vmatmul.mubr.f32.gmra.mrb[0].mxu0 %v4614
        %v4901 = vpop.f32.mrb[0].mxu0
        %v4902 = vadd.f32 %v4832, %v4901
        %v4903 = vpop.f32.mrb[0].mxu0
        %4904 = vdwg.mxu0
        %v4906 = vsel %vm4204, %v4759, 0
        %4908 = vmatprep.subr.mxu0 0.0
        %4909 = vmatpush1.msra.mxu0 %v4906
        %4910 = vmatprep.subr.mxu0 0.0
        %4911 = vmatpush1.msra.mxu0 0.0
        %4912 = vmatprep.subr.mxu0 0.0
        %4913 = vmatpush1.msra.mxu0 0.0
        %4914 = vmatprep.subr.mxu0 0.0
        %4915 = vmatpush1.msra.mxu0 0.0
        %4916 = vmatprep.subr.mxu0 0.0
        %4917 = vmatpush1.msra.mxu0 0.0
        %4918 = vmatprep.subr.mxu0 0.0
        %4919 = vmatpush1.msra.mxu0 0.0
        %4920 = vmatprep.subr.mxu0 0.0
        %4921 = vmatpush1.msra.mxu0 0.0
        %4922 = vmatprep.subr.mxu0 0.0
        %4923 = vmatpush1.msra.mxu0 0.0
        %4924 = vmatprep.subr.mxu0 0.0
        %4925 = vmatpush1.msra.mxu0 0.0
        %4926 = vmatprep.subr.mxu0 0.0
        %4927 = vmatpush1.msra.mxu0 0.0
        %4928 = vmatprep.subr.mxu0 0.0
        %4929 = vmatpush1.msra.mxu0 0.0
        %4930 = vmatprep.subr.mxu0 0.0
        %4931 = vmatpush1.msra.mxu0 0.0
        %4932 = vmatprep.subr.mxu0 0.0
        %4933 = vmatpush1.msra.mxu0 0.0
        %4934 = vmatprep.subr.mxu0 0.0
        %4935 = vmatpush1.msra.mxu0 0.0
        %4936 = vmatprep.subr.mxu0 0.0
        %4937 = vmatpush1.msra.mxu0 0.0
        %4938 = vmatprep.subr.mxu0 0.0
        %4939 = vmatpush1.msra.mxu0 0.0
        %4940 = vmatprep.subr.mxu0 0.0
        %4941 = vmatpush1.msra.mxu0 0.0
        %4942 = vmatprep.subr.mxu0 0.0
        %4943 = vmatpush1.msra.mxu0 0.0
        %4944 = vmatprep.subr.mxu0 0.0
        %4945 = vmatpush1.msra.mxu0 0.0
        %4946 = vmatprep.subr.mxu0 0.0
        %4947 = vmatpush1.msra.mxu0 0.0
        %4948 = vmatprep.subr.mxu0 0.0
        %4949 = vmatpush1.msra.mxu0 0.0
        %4950 = vmatprep.subr.mxu0 0.0
        %4951 = vmatpush1.msra.mxu0 0.0
        %4952 = vmatprep.subr.mxu0 0.0
        %4953 = vmatpush1.msra.mxu0 0.0
        %4954 = vmatprep.subr.mxu0 0.0
        %4955 = vmatpush1.msra.mxu0 0.0
        %4956 = vmatprep.subr.mxu0 0.0
        %4957 = vmatpush1.msra.mxu0 0.0
        %4958 = vmatprep.subr.mxu0 0.0
        %4959 = vmatpush1.msra.mxu0 0.0
        %4960 = vmatprep.subr.mxu0 0.0
        %4961 = vmatpush1.msra.mxu0 0.0
        %4962 = vmatprep.subr.mxu0 0.0
        %4963 = vmatpush1.msra.mxu0 0.0
        %4964 = vmatprep.subr.mxu0 0.0
        %4965 = vmatpush1.msra.mxu0 0.0
        %4966 = vmatprep.subr.mxu0 0.0
        %4967 = vmatpush1.msra.mxu0 0.0
        %4968 = vmatprep.subr.mxu0 0.0
        %4969 = vmatpush1.msra.mxu0 0.0
        %4970 = vmatprep.subr.mxu0 0.0
        %4971 = vmatpush1.msra.mxu0 0.0
        %4972 = vmatprep.mubr.f32.mxu0 0.0
        %4973 = vmatmul.mubr.f32.gmra.mrb[0].mxu0 %v4351
        %v4974 = vpop.f32.mrb[0].mxu0
        %v4975 = vadd.f32 0.0, %v4974
        %v4976 = vpop.f32.mrb[0].mxu0
        %4977 = vdwg.mxu0
        %v4978 = vadd.f32 %v4902, %v4975
        %v4979 = vld [vmem:[#allocation23 + $0x3] sm:$0x1]
        %v4980 = vlaneseq
        %v4981 = vshrl.u32 %v4980, 7
        %v4982 = vsub.s32 0, %v4981
        %v4983 = vrot.slane %v4979, %v4982
        %v4984 = vadd.f32 %v4978, %v4983
        %v4985 = vmax.f32 %v4984, 0.0
        %v4986 = vld [vmem:[#allocation25] sm:$0xff]
        %v4987 = vld [vmem:[#allocation25 + $0x8] sm:$0xff]
        %v4988 = vld [vmem:[#allocation23 + $0x4] sm:$0x1]
        %v4989 = vlaneseq
        %v4990 = vshrl.u32 %v4989, 7
        %v4991 = vsub.s32 0, %v4990
        %v4992 = vrot.slane %v4988, %v4991
        %v4994 = vsel %vm1831, %v4985, 0
        %4996 = vmatprep.subr.mxu0 0.0
        %4997 = vmatpush1.msra.mxu0 %v4986
        %4998 = vmatprep.subr.mxu0 0.0
        %4999 = vmatpush1.msra.mxu0 %v4987
        %5000 = vmatprep.subr.mxu0 0.0
        %5001 = vmatpush1.msra.mxu0 0.0
        %5002 = vmatprep.subr.mxu0 0.0
        %5003 = vmatpush1.msra.mxu0 0.0
        %5004 = vmatprep.subr.mxu0 0.0
        %5005 = vmatpush1.msra.mxu0 0.0
        %5006 = vmatprep.subr.mxu0 0.0
        %5007 = vmatpush1.msra.mxu0 0.0
        %5008 = vmatprep.subr.mxu0 0.0
        %5009 = vmatpush1.msra.mxu0 0.0
        %5010 = vmatprep.subr.mxu0 0.0
        %5011 = vmatpush1.msra.mxu0 0.0
        %5012 = vmatprep.subr.mxu0 0.0
        %5013 = vmatpush1.msra.mxu0 0.0
        %5014 = vmatprep.subr.mxu0 0.0
        %5015 = vmatpush1.msra.mxu0 0.0
        %5016 = vmatprep.subr.mxu0 0.0
        %5017 = vmatpush1.msra.mxu0 0.0
        %5018 = vmatprep.subr.mxu0 0.0
        %5019 = vmatpush1.msra.mxu0 0.0
        %5020 = vmatprep.subr.mxu0 0.0
        %5021 = vmatpush1.msra.mxu0 0.0
        %5022 = vmatprep.subr.mxu0 0.0
        %5023 = vmatpush1.msra.mxu0 0.0
        %5024 = vmatprep.subr.mxu0 0.0
        %5025 = vmatpush1.msra.mxu0 0.0
        %5026 = vmatprep.subr.mxu0 0.0
        %5027 = vmatpush1.msra.mxu0 0.0
        %5028 = vmatprep.subr.mxu0 0.0
        %5029 = vmatpush1.msra.mxu0 0.0
        %5030 = vmatprep.subr.mxu0 0.0
        %5031 = vmatpush1.msra.mxu0 0.0
        %5032 = vmatprep.subr.mxu0 0.0
        %5033 = vmatpush1.msra.mxu0 0.0
        %5034 = vmatprep.subr.mxu0 0.0
        %5035 = vmatpush1.msra.mxu0 0.0
        %5036 = vmatprep.subr.mxu0 0.0
        %5037 = vmatpush1.msra.mxu0 0.0
        %5038 = vmatprep.subr.mxu0 0.0
        %5039 = vmatpush1.msra.mxu0 0.0
        %5040 = vmatprep.subr.mxu0 0.0
        %5041 = vmatpush1.msra.mxu0 0.0
        %5042 = vmatprep.subr.mxu0 0.0
        %5043 = vmatpush1.msra.mxu0 0.0
        %5044 = vmatprep.subr.mxu0 0.0
        %5045 = vmatpush1.msra.mxu0 0.0
        %5046 = vmatprep.subr.mxu0 0.0
        %5047 = vmatpush1.msra.mxu0 0.0
        %5048 = vmatprep.subr.mxu0 0.0
        %5049 = vmatpush1.msra.mxu0 0.0
        %5050 = vmatprep.subr.mxu0 0.0
        %5051 = vmatpush1.msra.mxu0 0.0
        %5052 = vmatprep.subr.mxu0 0.0
        %5053 = vmatpush1.msra.mxu0 0.0
        %5054 = vmatprep.subr.mxu0 0.0
        %5055 = vmatpush1.msra.mxu0 0.0
        %5056 = vmatprep.subr.mxu0 0.0
        %5057 = vmatpush1.msra.mxu0 0.0
        %5058 = vmatprep.subr.mxu0 0.0
        %5059 = vmatpush1.msra.mxu0 0.0
        %5060 = vmatprep.mubr.f32.mxu0 0.0
        %5061 = vmatmul.mubr.f32.gmra.mrb[0].mxu0 %v4994
        %v5062 = vpop.f32.mrb[0].mxu0
        %v5063 = vadd.f32 %v4992, %v5062
        %v5064 = vpop.f32.mrb[0].mxu0
        %5065 = vdwg.mxu0
        %v5066 = vadd.f32 %v5063, %v4514
        %v5067 = vld [vmem:[#allocation26] sm:$0x1]
        %v5068 = vlaneseq
        %v5069 = vshrl.u32 %v5068, 7
        %v5070 = vsub.s32 0, %v5069
        %v5071 = vrot.slane %v5067, %v5070
        %v5072 = vmul.f32 %v5066, %v5071
        %v5073 = vld [vmem:[#allocation26 + $0x1] sm:$0x1]
        %v5074 = vlaneseq
        %v5075 = vshrl.u32 %v5074, 7
        %v5076 = vsub.s32 0, %v5075
        %v5077 = vrot.slane %v5073, %v5076
        %v5078 = vadd.f32 %v5072, %v5077
        %v5079 = vmax.f32 %v5078, 0.0
        %v5080 = vld [vmem:[%s59] sm:$0xff]
        %v5081 = vld [vmem:[%s59 + $0x8] sm:$0xff]
        %v5082 = vld [vmem:[%s59 + $0x10] sm:$0xff]
        %v5083 = vld [vmem:[%s59 + $0x18] sm:$0xff]
        %v5084 = vld [vmem:[#allocation26 + $0x2] sm:$0x1]
        %v5085 = vlaneseq
        %v5086 = vshrl.u32 %v5085, 7
        %v5087 = vsub.s32 0, %v5086
        %v5088 = vrot.slane %v5084, %v5087
        %v5090 = vsel %vm2618, %v5079, 0
        %5092 = vmatprep.subr.mxu0 0.0
        %5093 = vmatpush1.msra.mxu0 %v5080
        %5094 = vmatprep.subr.mxu0 0.0
        %5095 = vmatpush1.msra.mxu0 %v5081
        %5096 = vmatprep.subr.mxu0 0.0
        %5097 = vmatpush1.msra.mxu0 %v5082
        %5098 = vmatprep.subr.mxu0 0.0
        %5099 = vmatpush1.msra.mxu0 %v5083
        %5100 = vmatprep.subr.mxu0 0.0
        %5101 = vmatpush1.msra.mxu0 0.0
        %5102 = vmatprep.subr.mxu0 0.0
        %5103 = vmatpush1.msra.mxu0 0.0
        %5104 = vmatprep.subr.mxu0 0.0
        %5105 = vmatpush1.msra.mxu0 0.0
        %5106 = vmatprep.subr.mxu0 0.0
        %5107 = vmatpush1.msra.mxu0 0.0
        %5108 = vmatprep.subr.mxu0 0.0
        %5109 = vmatpush1.msra.mxu0 0.0
        %5110 = vmatprep.subr.mxu0 0.0
        %5111 = vmatpush1.msra.mxu0 0.0
        %5112 = vmatprep.subr.mxu0 0.0
        %5113 = vmatpush1.msra.mxu0 0.0
        %5114 = vmatprep.subr.mxu0 0.0
        %5115 = vmatpush1.msra.mxu0 0.0
        %5116 = vmatprep.subr.mxu0 0.0
        %5117 = vmatpush1.msra.mxu0 0.0
        %5118 = vmatprep.subr.mxu0 0.0
        %5119 = vmatpush1.msra.mxu0 0.0
        %5120 = vmatprep.subr.mxu0 0.0
        %5121 = vmatpush1.msra.mxu0 0.0
        %5122 = vmatprep.subr.mxu0 0.0
        %5123 = vmatpush1.msra.mxu0 0.0
        %5124 = vmatprep.subr.mxu0 0.0
        %5125 = vmatpush1.msra.mxu0 0.0
        %5126 = vmatprep.subr.mxu0 0.0
        %5127 = vmatpush1.msra.mxu0 0.0
        %5128 = vmatprep.subr.mxu0 0.0
        %5129 = vmatpush1.msra.mxu0 0.0
        %5130 = vmatprep.subr.mxu0 0.0
        %5131 = vmatpush1.msra.mxu0 0.0
        %5132 = vmatprep.subr.mxu0 0.0
        %5133 = vmatpush1.msra.mxu0 0.0
        %5134 = vmatprep.subr.mxu0 0.0
        %5135 = vmatpush1.msra.mxu0 0.0
        %5136 = vmatprep.subr.mxu0 0.0
        %5137 = vmatpush1.msra.mxu0 0.0
        %5138 = vmatprep.subr.mxu0 0.0
        %5139 = vmatpush1.msra.mxu0 0.0
        %5140 = vmatprep.subr.mxu0 0.0
        %5141 = vmatpush1.msra.mxu0 0.0
        %5142 = vmatprep.subr.mxu0 0.0
        %5143 = vmatpush1.msra.mxu0 0.0
        %5144 = vmatprep.subr.mxu0 0.0
        %5145 = vmatpush1.msra.mxu0 0.0
        %5146 = vmatprep.subr.mxu0 0.0
        %5147 = vmatpush1.msra.mxu0 0.0
        %5148 = vmatprep.subr.mxu0 0.0
        %5149 = vmatpush1.msra.mxu0 0.0
        %5150 = vmatprep.subr.mxu0 0.0
        %5151 = vmatpush1.msra.mxu0 0.0
        %5152 = vmatprep.subr.mxu0 0.0
        %5153 = vmatpush1.msra.mxu0 0.0
        %5154 = vmatprep.subr.mxu0 0.0
        %5155 = vmatpush1.msra.mxu0 0.0
        %5156 = vmatprep.mubr.f32.mxu0 0.0
        %5157 = vmatmul.mubr.f32.gmra.mrb[0].mxu0 %v5090
        %v5158 = vpop.f32.mrb[0].mxu0
        %v5159 = vadd.f32 %v5088, %v5158
        %v5160 = vpop.f32.mrb[0].mxu0
        %5161 = vdwg.mxu0
        %v5162 = vmax.f32 %v5159, 0.0
        %v5163 = vld [vmem:[%s61] sm:$0xff]
        %v5164 = vld [vmem:[%s61 + $0x8] sm:$0xff]
        %v5166 = vsel %vm1831, %v5162, 0
        %5168 = vmatprep.subr.mxu0 0.0
        %5169 = vmatpush1.msra.mxu0 %v5163
        %5170 = vmatprep.subr.mxu0 0.0
        %5171 = vmatpush1.msra.mxu0 %v5164
        %5172 = vmatprep.subr.mxu0 0.0
        %5173 = vmatpush1.msra.mxu0 0.0
        %5174 = vmatprep.subr.mxu0 0.0
        %5175 = vmatpush1.msra.mxu0 0.0
        %5176 = vmatprep.subr.mxu0 0.0
        %5177 = vmatpush1.msra.mxu0 0.0
        %5178 = vmatprep.subr.mxu0 0.0
        %5179 = vmatpush1.msra.mxu0 0.0
        %5180 = vmatprep.subr.mxu0 0.0
        %5181 = vmatpush1.msra.mxu0 0.0
        %5182 = vmatprep.subr.mxu0 0.0
        %5183 = vmatpush1.msra.mxu0 0.0
        %5184 = vmatprep.subr.mxu0 0.0
        %5185 = vmatpush1.msra.mxu0 0.0
        %5186 = vmatprep.subr.mxu0 0.0
        %5187 = vmatpush1.msra.mxu0 0.0
        %5188 = vmatprep.subr.mxu0 0.0
        %5189 = vmatpush1.msra.mxu0 0.0
        %5190 = vmatprep.subr.mxu0 0.0
        %5191 = vmatpush1.msra.mxu0 0.0
        %5192 = vmatprep.subr.mxu0 0.0
        %5193 = vmatpush1.msra.mxu0 0.0
        %5194 = vmatprep.subr.mxu0 0.0
        %5195 = vmatpush1.msra.mxu0 0.0
        %5196 = vmatprep.subr.mxu0 0.0
        %5197 = vmatpush1.msra.mxu0 0.0
        %5198 = vmatprep.subr.mxu0 0.0
        %5199 = vmatpush1.msra.mxu0 0.0
        %5200 = vmatprep.subr.mxu0 0.0
        %5201 = vmatpush1.msra.mxu0 0.0
        %5202 = vmatprep.subr.mxu0 0.0
        %5203 = vmatpush1.msra.mxu0 0.0
        %5204 = vmatprep.subr.mxu0 0.0
        %5205 = vmatpush1.msra.mxu0 0.0
        %5206 = vmatprep.subr.mxu0 0.0
        %5207 = vmatpush1.msra.mxu0 0.0
        %5208 = vmatprep.subr.mxu0 0.0
        %5209 = vmatpush1.msra.mxu0 0.0
        %5210 = vmatprep.subr.mxu0 0.0
        %5211 = vmatpush1.msra.mxu0 0.0
        %5212 = vmatprep.subr.mxu0 0.0
        %5213 = vmatpush1.msra.mxu0 0.0
        %5214 = vmatprep.subr.mxu0 0.0
        %5215 = vmatpush1.msra.mxu0 0.0
        %5216 = vmatprep.subr.mxu0 0.0
        %5217 = vmatpush1.msra.mxu0 0.0
        %5218 = vmatprep.subr.mxu0 0.0
        %5219 = vmatpush1.msra.mxu0 0.0
        %5220 = vmatprep.subr.mxu0 0.0
        %5221 = vmatpush1.msra.mxu0 0.0
        %5222 = vmatprep.subr.mxu0 0.0
        %5223 = vmatpush1.msra.mxu0 0.0
        %5224 = vmatprep.subr.mxu0 0.0
        %5225 = vmatpush1.msra.mxu0 0.0
        %5226 = vmatprep.subr.mxu0 0.0
        %5227 = vmatpush1.msra.mxu0 0.0
        %5228 = vmatprep.subr.mxu0 0.0
        %5229 = vmatpush1.msra.mxu0 0.0
        %5230 = vmatprep.subr.mxu0 0.0
        %5231 = vmatpush1.msra.mxu0 0.0
        %5232 = vmatprep.mubr.f32.mxu0 0.0
        %5233 = vmatmul.mubr.f32.gmra.mrb[0].mxu0 %v5166
        %v5234 = vpop.f32.mrb[0].mxu0
        %v5235 = vadd.f32 0.0, %v5234
        %v5236 = vpop.f32.mrb[0].mxu0
        %5237 = vdwg.mxu0
        %s5238 = scalar_lea.vmem %s61, 16
        %v5239 = vld [vmem:[%s5238] sm:$0xff]
        %v5240 = vld [vmem:[%s5238 + $0x8] sm:$0xff]
        %s5241 = scalar_lea.vmem %s61, 32
        %v5242 = vld [vmem:[%s5241] sm:$0xff]
        %v5243 = vld [vmem:[%s5241 + $0x8] sm:$0xff]
        %5244 = vmatprep.subr.mxu0 0.0
        %5245 = vmatpush1.msra.mxu0 %v5242
        %5246 = vmatprep.subr.mxu0 0.0
        %5247 = vmatpush1.msra.mxu0 %v5243
        %5248 = vmatprep.subr.mxu0 0.0
        %5249 = vmatpush1.msra.mxu0 0.0
        %5250 = vmatprep.subr.mxu0 0.0
        %5251 = vmatpush1.msra.mxu0 0.0
        %5252 = vmatprep.subr.mxu0 0.0
        %5253 = vmatpush1.msra.mxu0 0.0
        %5254 = vmatprep.subr.mxu0 0.0
        %5255 = vmatpush1.msra.mxu0 0.0
        %5256 = vmatprep.subr.mxu0 0.0
        %5257 = vmatpush1.msra.mxu0 0.0
        %5258 = vmatprep.subr.mxu0 0.0
        %5259 = vmatpush1.msra.mxu0 0.0
        %5260 = vmatprep.subr.mxu0 0.0
        %5261 = vmatpush1.msra.mxu0 0.0
        %5262 = vmatprep.subr.mxu0 0.0
        %5263 = vmatpush1.msra.mxu0 0.0
        %5264 = vmatprep.subr.mxu0 0.0
        %5265 = vmatpush1.msra.mxu0 0.0
        %5266 = vmatprep.subr.mxu0 0.0
        %5267 = vmatpush1.msra.mxu0 0.0
        %5268 = vmatprep.subr.mxu0 0.0
        %5269 = vmatpush1.msra.mxu0 0.0
        %5270 = vmatprep.subr.mxu0 0.0
        %5271 = vmatpush1.msra.mxu0 0.0
        %5272 = vmatprep.subr.mxu0 0.0
        %5273 = vmatpush1.msra.mxu0 0.0
        %5274 = vmatprep.subr.mxu0 0.0
        %5275 = vmatpush1.msra.mxu0 0.0
        %5276 = vmatprep.subr.mxu0 0.0
        %5277 = vmatpush1.msra.mxu0 0.0
        %5278 = vmatprep.subr.mxu0 0.0
        %5279 = vmatpush1.msra.mxu0 0.0
        %5280 = vmatprep.subr.mxu0 0.0
        %5281 = vmatpush1.msra.mxu0 0.0
        %5282 = vmatprep.subr.mxu0 0.0
        %5283 = vmatpush1.msra.mxu0 0.0
        %5284 = vmatprep.subr.mxu0 0.0
        %5285 = vmatpush1.msra.mxu0 0.0
        %5286 = vmatprep.subr.mxu0 0.0
        %5287 = vmatpush1.msra.mxu0 0.0
        %5288 = vmatprep.subr.mxu0 0.0
        %5289 = vmatpush1.msra.mxu0 0.0
        %5290 = vmatprep.subr.mxu0 0.0
        %5291 = vmatpush1.msra.mxu0 0.0
        %5292 = vmatprep.subr.mxu0 0.0
        %5293 = vmatpush1.msra.mxu0 0.0
        %5294 = vmatprep.subr.mxu0 0.0
        %5295 = vmatpush1.msra.mxu0 0.0
        %5296 = vmatprep.subr.mxu0 0.0
        %5297 = vmatpush1.msra.mxu0 0.0
        %5298 = vmatprep.subr.mxu0 0.0
        %5299 = vmatpush1.msra.mxu0 0.0
        %5300 = vmatprep.subr.mxu0 0.0
        %5301 = vmatpush1.msra.mxu0 0.0
        %5302 = vmatprep.subr.mxu0 0.0
        %5303 = vmatpush1.msra.mxu0 0.0
        %5304 = vmatprep.subr.mxu0 0.0
        %5305 = vmatpush1.msra.mxu0 0.0
        %5306 = vmatprep.subr.mxu0 0.0
        %5307 = vmatpush1.msra.mxu0 0.0
        %5308 = vmatprep.mubr.f32.mxu0 0.0
        %5309 = vmatmul.mubr.f32.gmra.mrb[0].mxu0 %v5166
        %v5310 = vpop.f32.mrb[0].mxu0
        %v5311 = vadd.f32 0.0, %v5310
        %v5312 = vpop.f32.mrb[0].mxu0
        %5313 = vdwg.mxu0
        %v5315 = vsel %vm4204, %v5235, 0
        %5317 = vmatprep.subr.mxu0 0.0
        %5318 = vmatpush1.msra.mxu0 %v5315
        %5319 = vmatprep.subr.mxu0 0.0
        %5320 = vmatpush1.msra.mxu0 0.0
        %5321 = vmatprep.subr.mxu0 0.0
        %5322 = vmatpush1.msra.mxu0 0.0
        %5323 = vmatprep.subr.mxu0 0.0
        %5324 = vmatpush1.msra.mxu0 0.0
        %5325 = vmatprep.subr.mxu0 0.0
        %5326 = vmatpush1.msra.mxu0 0.0
        %5327 = vmatprep.subr.mxu0 0.0
        %5328 = vmatpush1.msra.mxu0 0.0
        %5329 = vmatprep.subr.mxu0 0.0
        %5330 = vmatpush1.msra.mxu0 0.0
        %5331 = vmatprep.subr.mxu0 0.0
        %5332 = vmatpush1.msra.mxu0 0.0
        %5333 = vmatprep.subr.mxu0 0.0
        %5334 = vmatpush1.msra.mxu0 0.0
        %5335 = vmatprep.subr.mxu0 0.0
        %5336 = vmatpush1.msra.mxu0 0.0
        %5337 = vmatprep.subr.mxu0 0.0
        %5338 = vmatpush1.msra.mxu0 0.0
        %5339 = vmatprep.subr.mxu0 0.0
        %5340 = vmatpush1.msra.mxu0 0.0
        %5341 = vmatprep.subr.mxu0 0.0
        %5342 = vmatpush1.msra.mxu0 0.0
        %5343 = vmatprep.subr.mxu0 0.0
        %5344 = vmatpush1.msra.mxu0 0.0
        %5345 = vmatprep.subr.mxu0 0.0
        %5346 = vmatpush1.msra.mxu0 0.0
        %5347 = vmatprep.subr.mxu0 0.0
        %5348 = vmatpush1.msra.mxu0 0.0
        %5349 = vmatprep.subr.mxu0 0.0
        %5350 = vmatpush1.msra.mxu0 0.0
        %5351 = vmatprep.subr.mxu0 0.0
        %5352 = vmatpush1.msra.mxu0 0.0
        %5353 = vmatprep.subr.mxu0 0.0
        %5354 = vmatpush1.msra.mxu0 0.0
        %5355 = vmatprep.subr.mxu0 0.0
        %5356 = vmatpush1.msra.mxu0 0.0
        %5357 = vmatprep.subr.mxu0 0.0
        %5358 = vmatpush1.msra.mxu0 0.0
        %5359 = vmatprep.subr.mxu0 0.0
        %5360 = vmatpush1.msra.mxu0 0.0
        %5361 = vmatprep.subr.mxu0 0.0
        %5362 = vmatpush1.msra.mxu0 0.0
        %5363 = vmatprep.subr.mxu0 0.0
        %5364 = vmatpush1.msra.mxu0 0.0
        %5365 = vmatprep.subr.mxu0 0.0
        %5366 = vmatpush1.msra.mxu0 0.0
        %5367 = vmatprep.subr.mxu0 0.0
        %5368 = vmatpush1.msra.mxu0 0.0
        %5369 = vmatprep.subr.mxu0 0.0
        %5370 = vmatpush1.msra.mxu0 0.0
        %5371 = vmatprep.subr.mxu0 0.0
        %5372 = vmatpush1.msra.mxu0 0.0
        %5373 = vmatprep.subr.mxu0 0.0
        %5374 = vmatpush1.msra.mxu0 0.0
        %5375 = vmatprep.subr.mxu0 0.0
        %5376 = vmatpush1.msra.mxu0 0.0
        %5377 = vmatprep.subr.mxu0 0.0
        %5378 = vmatpush1.msra.mxu0 0.0
        %5379 = vmatprep.subr.mxu0 0.0
        %5380 = vmatpush1.msra.mxu0 0.0
        %5381 = vmatprep.mubr.f32.mxu0 0.0
        %5382 = vmatmul.mubr.f32.gmra.mrb[0].mxu0 %v4202
        %v5383 = vpop.f32.mrb[0].mxu0
        %v5384 = vadd.f32 0.0, %v5383
        %v5385 = vpop.f32.mrb[0].mxu0
        %5386 = vdwg.mxu0
        %5387 = vmatprep.subr.mxu0 0.0
        %5388 = vmatpush1.msra.mxu0 %v5239
        %5389 = vmatprep.subr.mxu0 0.0
        %5390 = vmatpush1.msra.mxu0 %v5240
        %5391 = vmatprep.subr.mxu0 0.0
        %5392 = vmatpush1.msra.mxu0 0.0
        %5393 = vmatprep.subr.mxu0 0.0
        %5394 = vmatpush1.msra.mxu0 0.0
        %5395 = vmatprep.subr.mxu0 0.0
        %5396 = vmatpush1.msra.mxu0 0.0
        %5397 = vmatprep.subr.mxu0 0.0
        %5398 = vmatpush1.msra.mxu0 0.0
        %5399 = vmatprep.subr.mxu0 0.0
        %5400 = vmatpush1.msra.mxu0 0.0
        %5401 = vmatprep.subr.mxu0 0.0
        %5402 = vmatpush1.msra.mxu0 0.0
        %5403 = vmatprep.subr.mxu0 0.0
        %5404 = vmatpush1.msra.mxu0 0.0
        %5405 = vmatprep.subr.mxu0 0.0
        %5406 = vmatpush1.msra.mxu0 0.0
        %5407 = vmatprep.subr.mxu0 0.0
        %5408 = vmatpush1.msra.mxu0 0.0
        %5409 = vmatprep.subr.mxu0 0.0
        %5410 = vmatpush1.msra.mxu0 0.0
        %5411 = vmatprep.subr.mxu0 0.0
        %5412 = vmatpush1.msra.mxu0 0.0
        %5413 = vmatprep.subr.mxu0 0.0
        %5414 = vmatpush1.msra.mxu0 0.0
        %5415 = vmatprep.subr.mxu0 0.0
        %5416 = vmatpush1.msra.mxu0 0.0
        %5417 = vmatprep.subr.mxu0 0.0
        %5418 = vmatpush1.msra.mxu0 0.0
        %5419 = vmatprep.subr.mxu0 0.0
        %5420 = vmatpush1.msra.mxu0 0.0
        %5421 = vmatprep.subr.mxu0 0.0
        %5422 = vmatpush1.msra.mxu0 0.0
        %5423 = vmatprep.subr.mxu0 0.0
        %5424 = vmatpush1.msra.mxu0 0.0
        %5425 = vmatprep.subr.mxu0 0.0
        %5426 = vmatpush1.msra.mxu0 0.0
        %5427 = vmatprep.subr.mxu0 0.0
        %5428 = vmatpush1.msra.mxu0 0.0
        %5429 = vmatprep.subr.mxu0 0.0
        %5430 = vmatpush1.msra.mxu0 0.0
        %5431 = vmatprep.subr.mxu0 0.0
        %5432 = vmatpush1.msra.mxu0 0.0
        %5433 = vmatprep.subr.mxu0 0.0
        %5434 = vmatpush1.msra.mxu0 0.0
        %5435 = vmatprep.subr.mxu0 0.0
        %5436 = vmatpush1.msra.mxu0 0.0
        %5437 = vmatprep.subr.mxu0 0.0
        %5438 = vmatpush1.msra.mxu0 0.0
        %5439 = vmatprep.subr.mxu0 0.0
        %5440 = vmatpush1.msra.mxu0 0.0
        %5441 = vmatprep.subr.mxu0 0.0
        %5442 = vmatpush1.msra.mxu0 0.0
        %5443 = vmatprep.subr.mxu0 0.0
        %5444 = vmatpush1.msra.mxu0 0.0
        %5445 = vmatprep.subr.mxu0 0.0
        %5446 = vmatpush1.msra.mxu0 0.0
        %5447 = vmatprep.subr.mxu0 0.0
        %5448 = vmatpush1.msra.mxu0 0.0
        %5449 = vmatprep.subr.mxu0 0.0
        %5450 = vmatpush1.msra.mxu0 0.0
        %5451 = vmatprep.mubr.f32.mxu0 0.0
        %5452 = vmatmul.mubr.f32.gmra.mrb[0].mxu0 %v5166
        %v5453 = vpop.f32.mrb[0].mxu0
        %v5454 = vadd.f32 %v5384, %v5453
        %v5455 = vpop.f32.mrb[0].mxu0
        %5456 = vdwg.mxu0
        %v5458 = vsel %vm4204, %v5311, 0
        %5460 = vmatprep.subr.mxu0 0.0
        %5461 = vmatpush1.msra.mxu0 %v5458
        %5462 = vmatprep.subr.mxu0 0.0
        %5463 = vmatpush1.msra.mxu0 0.0
        %5464 = vmatprep.subr.mxu0 0.0
        %5465 = vmatpush1.msra.mxu0 0.0
        %5466 = vmatprep.subr.mxu0 0.0
        %5467 = vmatpush1.msra.mxu0 0.0
        %5468 = vmatprep.subr.mxu0 0.0
        %5469 = vmatpush1.msra.mxu0 0.0
        %5470 = vmatprep.subr.mxu0 0.0
        %5471 = vmatpush1.msra.mxu0 0.0
        %5472 = vmatprep.subr.mxu0 0.0
        %5473 = vmatpush1.msra.mxu0 0.0
        %5474 = vmatprep.subr.mxu0 0.0
        %5475 = vmatpush1.msra.mxu0 0.0
        %5476 = vmatprep.subr.mxu0 0.0
        %5477 = vmatpush1.msra.mxu0 0.0
        %5478 = vmatprep.subr.mxu0 0.0
        %5479 = vmatpush1.msra.mxu0 0.0
        %5480 = vmatprep.subr.mxu0 0.0
        %5481 = vmatpush1.msra.mxu0 0.0
        %5482 = vmatprep.subr.mxu0 0.0
        %5483 = vmatpush1.msra.mxu0 0.0
        %5484 = vmatprep.subr.mxu0 0.0
        %5485 = vmatpush1.msra.mxu0 0.0
        %5486 = vmatprep.subr.mxu0 0.0
        %5487 = vmatpush1.msra.mxu0 0.0
        %5488 = vmatprep.subr.mxu0 0.0
        %5489 = vmatpush1.msra.mxu0 0.0
        %5490 = vmatprep.subr.mxu0 0.0
        %5491 = vmatpush1.msra.mxu0 0.0
        %5492 = vmatprep.subr.mxu0 0.0
        %5493 = vmatpush1.msra.mxu0 0.0
        %5494 = vmatprep.subr.mxu0 0.0
        %5495 = vmatpush1.msra.mxu0 0.0
        %5496 = vmatprep.subr.mxu0 0.0
        %5497 = vmatpush1.msra.mxu0 0.0
        %5498 = vmatprep.subr.mxu0 0.0
        %5499 = vmatpush1.msra.mxu0 0.0
        %5500 = vmatprep.subr.mxu0 0.0
        %5501 = vmatpush1.msra.mxu0 0.0
        %5502 = vmatprep.subr.mxu0 0.0
        %5503 = vmatpush1.msra.mxu0 0.0
        %5504 = vmatprep.subr.mxu0 0.0
        %5505 = vmatpush1.msra.mxu0 0.0
        %5506 = vmatprep.subr.mxu0 0.0
        %5507 = vmatpush1.msra.mxu0 0.0
        %5508 = vmatprep.subr.mxu0 0.0
        %5509 = vmatpush1.msra.mxu0 0.0
        %5510 = vmatprep.subr.mxu0 0.0
        %5511 = vmatpush1.msra.mxu0 0.0
        %5512 = vmatprep.subr.mxu0 0.0
        %5513 = vmatpush1.msra.mxu0 0.0
        %5514 = vmatprep.subr.mxu0 0.0
        %5515 = vmatpush1.msra.mxu0 0.0
        %5516 = vmatprep.subr.mxu0 0.0
        %5517 = vmatpush1.msra.mxu0 0.0
        %5518 = vmatprep.subr.mxu0 0.0
        %5519 = vmatpush1.msra.mxu0 0.0
        %5520 = vmatprep.subr.mxu0 0.0
        %5521 = vmatpush1.msra.mxu0 0.0
        %5522 = vmatprep.subr.mxu0 0.0
        %5523 = vmatpush1.msra.mxu0 0.0
        %5524 = vmatprep.mubr.f32.mxu0 0.0
        %5525 = vmatmul.mubr.f32.gmra.mrb[0].mxu0 %v4351
        %v5526 = vpop.f32.mrb[0].mxu0
        %v5527 = vadd.f32 0.0, %v5526
        %v5528 = vpop.f32.mrb[0].mxu0
        %5529 = vdwg.mxu0
        %v5530 = vadd.f32 %v5454, %v5527
        %v5531 = vld [vmem:[#allocation26 + $0x3] sm:$0x1]
        %v5532 = vlaneseq
        %v5533 = vshrl.u32 %v5532, 7
        %v5534 = vsub.s32 0, %v5533
        %v5535 = vrot.slane %v5531, %v5534
        %v5536 = vadd.f32 %v5530, %v5535
        %v5537 = vmax.f32 %v5536, 0.0
        %v5538 = vld [vmem:[#allocation28] sm:$0xff]
        %v5539 = vld [vmem:[#allocation28 + $0x8] sm:$0xff]
        %v5540 = vld [vmem:[#allocation26 + $0x4] sm:$0x1]
        %v5541 = vlaneseq
        %v5542 = vshrl.u32 %v5541, 7
        %v5543 = vsub.s32 0, %v5542
        %v5544 = vrot.slane %v5540, %v5543
        %v5546 = vsel %vm1831, %v5537, 0
        %5548 = vmatprep.subr.mxu0 0.0
        %5549 = vmatpush1.msra.mxu0 %v5538
        %5550 = vmatprep.subr.mxu0 0.0
        %5551 = vmatpush1.msra.mxu0 %v5539
        %5552 = vmatprep.subr.mxu0 0.0
        %5553 = vmatpush1.msra.mxu0 0.0
        %5554 = vmatprep.subr.mxu0 0.0
        %5555 = vmatpush1.msra.mxu0 0.0
        %5556 = vmatprep.subr.mxu0 0.0
        %5557 = vmatpush1.msra.mxu0 0.0
        %5558 = vmatprep.subr.mxu0 0.0
        %5559 = vmatpush1.msra.mxu0 0.0
        %5560 = vmatprep.subr.mxu0 0.0
        %5561 = vmatpush1.msra.mxu0 0.0
        %5562 = vmatprep.subr.mxu0 0.0
        %5563 = vmatpush1.msra.mxu0 0.0
        %5564 = vmatprep.subr.mxu0 0.0
        %5565 = vmatpush1.msra.mxu0 0.0
        %5566 = vmatprep.subr.mxu0 0.0
        %5567 = vmatpush1.msra.mxu0 0.0
        %5568 = vmatprep.subr.mxu0 0.0
        %5569 = vmatpush1.msra.mxu0 0.0
        %5570 = vmatprep.subr.mxu0 0.0
        %5571 = vmatpush1.msra.mxu0 0.0
        %5572 = vmatprep.subr.mxu0 0.0
        %5573 = vmatpush1.msra.mxu0 0.0
        %5574 = vmatprep.subr.mxu0 0.0
        %5575 = vmatpush1.msra.mxu0 0.0
        %5576 = vmatprep.subr.mxu0 0.0
        %5577 = vmatpush1.msra.mxu0 0.0
        %5578 = vmatprep.subr.mxu0 0.0
        %5579 = vmatpush1.msra.mxu0 0.0
        %5580 = vmatprep.subr.mxu0 0.0
        %5581 = vmatpush1.msra.mxu0 0.0
        %5582 = vmatprep.subr.mxu0 0.0
        %5583 = vmatpush1.msra.mxu0 0.0
        %5584 = vmatprep.subr.mxu0 0.0
        %5585 = vmatpush1.msra.mxu0 0.0
        %5586 = vmatprep.subr.mxu0 0.0
        %5587 = vmatpush1.msra.mxu0 0.0
        %5588 = vmatprep.subr.mxu0 0.0
        %5589 = vmatpush1.msra.mxu0 0.0
        %5590 = vmatprep.subr.mxu0 0.0
        %5591 = vmatpush1.msra.mxu0 0.0
        %5592 = vmatprep.subr.mxu0 0.0
        %5593 = vmatpush1.msra.mxu0 0.0
        %5594 = vmatprep.subr.mxu0 0.0
        %5595 = vmatpush1.msra.mxu0 0.0
        %5596 = vmatprep.subr.mxu0 0.0
        %5597 = vmatpush1.msra.mxu0 0.0
        %5598 = vmatprep.subr.mxu0 0.0
        %5599 = vmatpush1.msra.mxu0 0.0
        %5600 = vmatprep.subr.mxu0 0.0
        %5601 = vmatpush1.msra.mxu0 0.0
        %5602 = vmatprep.subr.mxu0 0.0
        %5603 = vmatpush1.msra.mxu0 0.0
        %5604 = vmatprep.subr.mxu0 0.0
        %5605 = vmatpush1.msra.mxu0 0.0
        %5606 = vmatprep.subr.mxu0 0.0
        %5607 = vmatpush1.msra.mxu0 0.0
        %5608 = vmatprep.subr.mxu0 0.0
        %5609 = vmatpush1.msra.mxu0 0.0
        %5610 = vmatprep.subr.mxu0 0.0
        %5611 = vmatpush1.msra.mxu0 0.0
        %5612 = vmatprep.mubr.f32.mxu0 0.0
        %5613 = vmatmul.mubr.f32.gmra.mrb[0].mxu0 %v5546
        %v5614 = vpop.f32.mrb[0].mxu0
        %v5615 = vadd.f32 %v5544, %v5614
        %v5616 = vpop.f32.mrb[0].mxu0
        %5617 = vdwg.mxu0
        %v5618 = vadd.f32 %v5615, %v5066
        %v5619 = vld [vmem:[#allocation29] sm:$0x1]
        %v5620 = vld [vmem:[%s65] sm:$0xff]
        %v5621 = vld [vmem:[%s65 + $0x8] sm:$0xff]
        %v5622 = vld [vmem:[%s65 + $0x10] sm:$0xff]
        %v5623 = vld [vmem:[%s65 + $0x18] sm:$0xff]
        %v5625 = vsel %vm2618, %v5618, 0
        %5627 = vmatprep.subr.mxu0 0.0
        %5628 = vmatpush1.msra.mxu0 %v5620
        %5629 = vmatprep.subr.mxu0 0.0
        %5630 = vmatpush1.msra.mxu0 %v5621
        %5631 = vmatprep.subr.mxu0 0.0
        %5632 = vmatpush1.msra.mxu0 %v5622
        %5633 = vmatprep.subr.mxu0 0.0
        %5634 = vmatpush1.msra.mxu0 %v5623
        %5635 = vmatprep.subr.mxu0 0.0
        %5636 = vmatpush1.msra.mxu0 0.0
        %5637 = vmatprep.subr.mxu0 0.0
        %5638 = vmatpush1.msra.mxu0 0.0
        %5639 = vmatprep.subr.mxu0 0.0
        %5640 = vmatpush1.msra.mxu0 0.0
        %5641 = vmatprep.subr.mxu0 0.0
        %5642 = vmatpush1.msra.mxu0 0.0
        %5643 = vmatprep.subr.mxu0 0.0
        %5644 = vmatpush1.msra.mxu0 0.0
        %5645 = vmatprep.subr.mxu0 0.0
        %5646 = vmatpush1.msra.mxu0 0.0
        %5647 = vmatprep.subr.mxu0 0.0
        %5648 = vmatpush1.msra.mxu0 0.0
        %5649 = vmatprep.subr.mxu0 0.0
        %5650 = vmatpush1.msra.mxu0 0.0
        %5651 = vmatprep.subr.mxu0 0.0
        %5652 = vmatpush1.msra.mxu0 0.0
        %5653 = vmatprep.subr.mxu0 0.0
        %5654 = vmatpush1.msra.mxu0 0.0
        %5655 = vmatprep.subr.mxu0 0.0
        %5656 = vmatpush1.msra.mxu0 0.0
        %5657 = vmatprep.subr.mxu0 0.0
        %5658 = vmatpush1.msra.mxu0 0.0
        %5659 = vmatprep.subr.mxu0 0.0
        %5660 = vmatpush1.msra.mxu0 0.0
        %5661 = vmatprep.subr.mxu0 0.0
        %5662 = vmatpush1.msra.mxu0 0.0
        %5663 = vmatprep.subr.mxu0 0.0
        %5664 = vmatpush1.msra.mxu0 0.0
        %5665 = vmatprep.subr.mxu0 0.0
        %5666 = vmatpush1.msra.mxu0 0.0
        %5667 = vmatprep.subr.mxu0 0.0
        %5668 = vmatpush1.msra.mxu0 0.0
        %5669 = vmatprep.subr.mxu0 0.0
        %5670 = vmatpush1.msra.mxu0 0.0
        %5671 = vmatprep.subr.mxu0 0.0
        %5672 = vmatpush1.msra.mxu0 0.0
        %5673 = vmatprep.subr.mxu0 0.0
        %5674 = vmatpush1.msra.mxu0 0.0
        %5675 = vmatprep.subr.mxu0 0.0
        %5676 = vmatpush1.msra.mxu0 0.0
        %5677 = vmatprep.subr.mxu0 0.0
        %5678 = vmatpush1.msra.mxu0 0.0
        %5679 = vmatprep.subr.mxu0 0.0
        %5680 = vmatpush1.msra.mxu0 0.0
        %5681 = vmatprep.subr.mxu0 0.0
        %5682 = vmatpush1.msra.mxu0 0.0
        %5683 = vmatprep.subr.mxu0 0.0
        %5684 = vmatpush1.msra.mxu0 0.0
        %5685 = vmatprep.subr.mxu0 0.0
        %5686 = vmatpush1.msra.mxu0 0.0
        %5687 = vmatprep.subr.mxu0 0.0
        %5688 = vmatpush1.msra.mxu0 0.0
        %5689 = vmatprep.subr.mxu0 0.0
        %5690 = vmatpush1.msra.mxu0 0.0
        %5691 = vmatprep.mubr.f32.mxu0 0.0
        %5692 = vmatmul.mubr.f32.gmra.mrb[0].mxu0 %v5625
        %v5693 = vpop.f32.mrb[0].mxu0
        %v5694 = vadd.f32 0.0, %v5693
        %v5695 = vpop.f32.mrb[0].mxu0
        %5696 = vdwg.mxu0
        %s5697 = scalar_lea.vmem %s65, 32
        %v5698 = vld [vmem:[%s5697] sm:$0xff]
        %v5699 = vld [vmem:[%s5697 + $0x8] sm:$0xff]
        %v5700 = vld [vmem:[%s5697 + $0x10] sm:$0xff]
        %v5701 = vld [vmem:[%s5697 + $0x18] sm:$0xff]
        %s5702 = scalar_lea.vmem %s65, 64
        %v5703 = vld [vmem:[%s5702] sm:$0xff]
        %v5704 = vld [vmem:[%s5702 + $0x8] sm:$0xff]
        %v5705 = vld [vmem:[%s5702 + $0x10] sm:$0xff]
        %v5706 = vld [vmem:[%s5702 + $0x18] sm:$0xff]
        %s5707 = scalar_lea.vmem %s65, 96
        %v5708 = vld [vmem:[%s5707] sm:$0xff]
        %v5709 = vld [vmem:[%s5707 + $0x8] sm:$0xff]
        %v5710 = vld [vmem:[%s5707 + $0x10] sm:$0xff]
        %v5711 = vld [vmem:[%s5707 + $0x18] sm:$0xff]
        %5712 = vmatprep.subr.mxu0 0.0
        %5713 = vmatpush1.msra.mxu0 %v5708
        %5714 = vmatprep.subr.mxu0 0.0
        %5715 = vmatpush1.msra.mxu0 %v5709
        %5716 = vmatprep.subr.mxu0 0.0
        %5717 = vmatpush1.msra.mxu0 %v5710
        %5718 = vmatprep.subr.mxu0 0.0
        %5719 = vmatpush1.msra.mxu0 %v5711
        %5720 = vmatprep.subr.mxu0 0.0
        %5721 = vmatpush1.msra.mxu0 0.0
        %5722 = vmatprep.subr.mxu0 0.0
        %5723 = vmatpush1.msra.mxu0 0.0
        %5724 = vmatprep.subr.mxu0 0.0
        %5725 = vmatpush1.msra.mxu0 0.0
        %5726 = vmatprep.subr.mxu0 0.0
        %5727 = vmatpush1.msra.mxu0 0.0
        %5728 = vmatprep.subr.mxu0 0.0
        %5729 = vmatpush1.msra.mxu0 0.0
        %5730 = vmatprep.subr.mxu0 0.0
        %5731 = vmatpush1.msra.mxu0 0.0
        %5732 = vmatprep.subr.mxu0 0.0
        %5733 = vmatpush1.msra.mxu0 0.0
        %5734 = vmatprep.subr.mxu0 0.0
        %5735 = vmatpush1.msra.mxu0 0.0
        %5736 = vmatprep.subr.mxu0 0.0
        %5737 = vmatpush1.msra.mxu0 0.0
        %5738 = vmatprep.subr.mxu0 0.0
        %5739 = vmatpush1.msra.mxu0 0.0
        %5740 = vmatprep.subr.mxu0 0.0
        %5741 = vmatpush1.msra.mxu0 0.0
        %5742 = vmatprep.subr.mxu0 0.0
        %5743 = vmatpush1.msra.mxu0 0.0
        %5744 = vmatprep.subr.mxu0 0.0
        %5745 = vmatpush1.msra.mxu0 0.0
        %5746 = vmatprep.subr.mxu0 0.0
        %5747 = vmatpush1.msra.mxu0 0.0
        %5748 = vmatprep.subr.mxu0 0.0
        %5749 = vmatpush1.msra.mxu0 0.0
        %5750 = vmatprep.subr.mxu0 0.0
        %5751 = vmatpush1.msra.mxu0 0.0
        %5752 = vmatprep.subr.mxu0 0.0
        %5753 = vmatpush1.msra.mxu0 0.0
        %5754 = vmatprep.subr.mxu0 0.0
        %5755 = vmatpush1.msra.mxu0 0.0
        %5756 = vmatprep.subr.mxu0 0.0
        %5757 = vmatpush1.msra.mxu0 0.0
        %5758 = vmatprep.subr.mxu0 0.0
        %5759 = vmatpush1.msra.mxu0 0.0
        %5760 = vmatprep.subr.mxu0 0.0
        %5761 = vmatpush1.msra.mxu0 0.0
        %5762 = vmatprep.subr.mxu0 0.0
        %5763 = vmatpush1.msra.mxu0 0.0
        %5764 = vmatprep.subr.mxu0 0.0
        %5765 = vmatpush1.msra.mxu0 0.0
        %5766 = vmatprep.subr.mxu0 0.0
        %5767 = vmatpush1.msra.mxu0 0.0
        %5768 = vmatprep.subr.mxu0 0.0
        %5769 = vmatpush1.msra.mxu0 0.0
        %5770 = vmatprep.subr.mxu0 0.0
        %5771 = vmatpush1.msra.mxu0 0.0
        %5772 = vmatprep.subr.mxu0 0.0
        %5773 = vmatpush1.msra.mxu0 0.0
        %5774 = vmatprep.subr.mxu0 0.0
        %5775 = vmatpush1.msra.mxu0 0.0
        %5776 = vmatprep.mubr.f32.mxu0 0.0
        %5777 = vmatmul.mubr.f32.gmra.mrb[0].mxu0 %v5625
        %v5778 = vpop.f32.mrb[0].mxu0
        %v5779 = vadd.f32 0.0, %v5778
        %v5780 = vpop.f32.mrb[0].mxu0
        %5781 = vdwg.mxu0
        %v5783 = vsel %vm4204, %v5779, 0
        %5785 = vmatprep.subr.mxu0 0.0
        %5786 = vmatpush1.msra.mxu0 %v5783
        %5787 = vmatprep.subr.mxu0 0.0
        %5788 = vmatpush1.msra.mxu0 0.0
        %5789 = vmatprep.subr.mxu0 0.0
        %5790 = vmatpush1.msra.mxu0 0.0
        %5791 = vmatprep.subr.mxu0 0.0
        %5792 = vmatpush1.msra.mxu0 0.0
        %5793 = vmatprep.subr.mxu0 0.0
        %5794 = vmatpush1.msra.mxu0 0.0
        %5795 = vmatprep.subr.mxu0 0.0
        %5796 = vmatpush1.msra.mxu0 0.0
        %5797 = vmatprep.subr.mxu0 0.0
        %5798 = vmatpush1.msra.mxu0 0.0
        %5799 = vmatprep.subr.mxu0 0.0
        %5800 = vmatpush1.msra.mxu0 0.0
        %5801 = vmatprep.subr.mxu0 0.0
        %5802 = vmatpush1.msra.mxu0 0.0
        %5803 = vmatprep.subr.mxu0 0.0
        %5804 = vmatpush1.msra.mxu0 0.0
        %5805 = vmatprep.subr.mxu0 0.0
        %5806 = vmatpush1.msra.mxu0 0.0
        %5807 = vmatprep.subr.mxu0 0.0
        %5808 = vmatpush1.msra.mxu0 0.0
        %5809 = vmatprep.subr.mxu0 0.0
        %5810 = vmatpush1.msra.mxu0 0.0
        %5811 = vmatprep.subr.mxu0 0.0
        %5812 = vmatpush1.msra.mxu0 0.0
        %5813 = vmatprep.subr.mxu0 0.0
        %5814 = vmatpush1.msra.mxu0 0.0
        %5815 = vmatprep.subr.mxu0 0.0
        %5816 = vmatpush1.msra.mxu0 0.0
        %5817 = vmatprep.subr.mxu0 0.0
        %5818 = vmatpush1.msra.mxu0 0.0
        %5819 = vmatprep.subr.mxu0 0.0
        %5820 = vmatpush1.msra.mxu0 0.0
        %5821 = vmatprep.subr.mxu0 0.0
        %5822 = vmatpush1.msra.mxu0 0.0
        %5823 = vmatprep.subr.mxu0 0.0
        %5824 = vmatpush1.msra.mxu0 0.0
        %5825 = vmatprep.subr.mxu0 0.0
        %5826 = vmatpush1.msra.mxu0 0.0
        %5827 = vmatprep.subr.mxu0 0.0
        %5828 = vmatpush1.msra.mxu0 0.0
        %5829 = vmatprep.subr.mxu0 0.0
        %5830 = vmatpush1.msra.mxu0 0.0
        %5831 = vmatprep.subr.mxu0 0.0
        %5832 = vmatpush1.msra.mxu0 0.0
        %5833 = vmatprep.subr.mxu0 0.0
        %5834 = vmatpush1.msra.mxu0 0.0
        %5835 = vmatprep.subr.mxu0 0.0
        %5836 = vmatpush1.msra.mxu0 0.0
        %5837 = vmatprep.subr.mxu0 0.0
        %5838 = vmatpush1.msra.mxu0 0.0
        %5839 = vmatprep.subr.mxu0 0.0
        %5840 = vmatpush1.msra.mxu0 0.0
        %5841 = vmatprep.subr.mxu0 0.0
        %5842 = vmatpush1.msra.mxu0 0.0
        %5843 = vmatprep.subr.mxu0 0.0
        %5844 = vmatpush1.msra.mxu0 0.0
        %5845 = vmatprep.subr.mxu0 0.0
        %5846 = vmatpush1.msra.mxu0 0.0
        %5847 = vmatprep.subr.mxu0 0.0
        %5848 = vmatpush1.msra.mxu0 0.0
        %5849 = vmatprep.mubr.f32.mxu0 0.0
        %5850 = vmatmul.mubr.f32.gmra.mrb[0].mxu0 %v4202
        %v5851 = vpop.f32.mrb[0].mxu0
        %v5852 = vadd.f32 0.0, %v5851
        %v5853 = vpop.f32.mrb[0].mxu0
        %5854 = vdwg.mxu0
        %5855 = vmatprep.subr.mxu0 0.0
        %5856 = vmatpush1.msra.mxu0 %v5698
        %5857 = vmatprep.subr.mxu0 0.0
        %5858 = vmatpush1.msra.mxu0 %v5699
        %5859 = vmatprep.subr.mxu0 0.0
        %5860 = vmatpush1.msra.mxu0 %v5700
        %5861 = vmatprep.subr.mxu0 0.0
        %5862 = vmatpush1.msra.mxu0 %v5701
        %5863 = vmatprep.subr.mxu0 0.0
        %5864 = vmatpush1.msra.mxu0 0.0
        %5865 = vmatprep.subr.mxu0 0.0
        %5866 = vmatpush1.msra.mxu0 0.0
        %5867 = vmatprep.subr.mxu0 0.0
        %5868 = vmatpush1.msra.mxu0 0.0
        %5869 = vmatprep.subr.mxu0 0.0
        %5870 = vmatpush1.msra.mxu0 0.0
        %5871 = vmatprep.subr.mxu0 0.0
        %5872 = vmatpush1.msra.mxu0 0.0
        %5873 = vmatprep.subr.mxu0 0.0
        %5874 = vmatpush1.msra.mxu0 0.0
        %5875 = vmatprep.subr.mxu0 0.0
        %5876 = vmatpush1.msra.mxu0 0.0
        %5877 = vmatprep.subr.mxu0 0.0
        %5878 = vmatpush1.msra.mxu0 0.0
        %5879 = vmatprep.subr.mxu0 0.0
        %5880 = vmatpush1.msra.mxu0 0.0
        %5881 = vmatprep.subr.mxu0 0.0
        %5882 = vmatpush1.msra.mxu0 0.0
        %5883 = vmatprep.subr.mxu0 0.0
        %5884 = vmatpush1.msra.mxu0 0.0
        %5885 = vmatprep.subr.mxu0 0.0
        %5886 = vmatpush1.msra.mxu0 0.0
        %5887 = vmatprep.subr.mxu0 0.0
        %5888 = vmatpush1.msra.mxu0 0.0
        %5889 = vmatprep.subr.mxu0 0.0
        %5890 = vmatpush1.msra.mxu0 0.0
        %5891 = vmatprep.subr.mxu0 0.0
        %5892 = vmatpush1.msra.mxu0 0.0
        %5893 = vmatprep.subr.mxu0 0.0
        %5894 = vmatpush1.msra.mxu0 0.0
        %5895 = vmatprep.subr.mxu0 0.0
        %5896 = vmatpush1.msra.mxu0 0.0
        %5897 = vmatprep.subr.mxu0 0.0
        %5898 = vmatpush1.msra.mxu0 0.0
        %5899 = vmatprep.subr.mxu0 0.0
        %5900 = vmatpush1.msra.mxu0 0.0
        %5901 = vmatprep.subr.mxu0 0.0
        %5902 = vmatpush1.msra.mxu0 0.0
        %5903 = vmatprep.subr.mxu0 0.0
        %5904 = vmatpush1.msra.mxu0 0.0
        %5905 = vmatprep.subr.mxu0 0.0
        %5906 = vmatpush1.msra.mxu0 0.0
        %5907 = vmatprep.subr.mxu0 0.0
        %5908 = vmatpush1.msra.mxu0 0.0
        %5909 = vmatprep.subr.mxu0 0.0
        %5910 = vmatpush1.msra.mxu0 0.0
        %5911 = vmatprep.subr.mxu0 0.0
        %5912 = vmatpush1.msra.mxu0 0.0
        %5913 = vmatprep.subr.mxu0 0.0
        %5914 = vmatpush1.msra.mxu0 0.0
        %5915 = vmatprep.subr.mxu0 0.0
        %5916 = vmatpush1.msra.mxu0 0.0
        %5917 = vmatprep.subr.mxu0 0.0
        %5918 = vmatpush1.msra.mxu0 0.0
        %5919 = vmatprep.mubr.f32.mxu0 0.0
        %5920 = vmatmul.mubr.f32.gmra.mrb[0].mxu0 %v5625
        %v5921 = vpop.f32.mrb[0].mxu0
        %v5922 = vadd.f32 %v5852, %v5921
        %v5923 = vpop.f32.mrb[0].mxu0
        %5924 = vdwg.mxu0
        %v5926 = vlaneseq
        %v5927 = vshrl.u32 %v5926, 7
        %v5928 = vsub.s32 0, %v5927
        %v5929 = vrot.slane %v5619, %v5928
        %v5931 = vadd.f32 %v5922, %v5929
        %v5932 = vmax.f32 %v5931, 0.0
        %v5934 = vsel %vm4204, %v5694, 0
        %5936 = vmatprep.subr.mxu0 0.0
        %5937 = vmatpush1.msra.mxu0 %v5934
        %5938 = vmatprep.subr.mxu0 0.0
        %5939 = vmatpush1.msra.mxu0 0.0
        %5940 = vmatprep.subr.mxu0 0.0
        %5941 = vmatpush1.msra.mxu0 0.0
        %5942 = vmatprep.subr.mxu0 0.0
        %5943 = vmatpush1.msra.mxu0 0.0
        %5944 = vmatprep.subr.mxu0 0.0
        %5945 = vmatpush1.msra.mxu0 0.0
        %5946 = vmatprep.subr.mxu0 0.0
        %5947 = vmatpush1.msra.mxu0 0.0
        %5948 = vmatprep.subr.mxu0 0.0
        %5949 = vmatpush1.msra.mxu0 0.0
        %5950 = vmatprep.subr.mxu0 0.0
        %5951 = vmatpush1.msra.mxu0 0.0
        %5952 = vmatprep.subr.mxu0 0.0
        %5953 = vmatpush1.msra.mxu0 0.0
        %5954 = vmatprep.subr.mxu0 0.0
        %5955 = vmatpush1.msra.mxu0 0.0
        %5956 = vmatprep.subr.mxu0 0.0
        %5957 = vmatpush1.msra.mxu0 0.0
        %5958 = vmatprep.subr.mxu0 0.0
        %5959 = vmatpush1.msra.mxu0 0.0
        %5960 = vmatprep.subr.mxu0 0.0
        %5961 = vmatpush1.msra.mxu0 0.0
        %5962 = vmatprep.subr.mxu0 0.0
        %5963 = vmatpush1.msra.mxu0 0.0
        %5964 = vmatprep.subr.mxu0 0.0
        %5965 = vmatpush1.msra.mxu0 0.0
        %5966 = vmatprep.subr.mxu0 0.0
        %5967 = vmatpush1.msra.mxu0 0.0
        %5968 = vmatprep.subr.mxu0 0.0
        %5969 = vmatpush1.msra.mxu0 0.0
        %5970 = vmatprep.subr.mxu0 0.0
        %5971 = vmatpush1.msra.mxu0 0.0
        %5972 = vmatprep.subr.mxu0 0.0
        %5973 = vmatpush1.msra.mxu0 0.0
        %5974 = vmatprep.subr.mxu0 0.0
        %5975 = vmatpush1.msra.mxu0 0.0
        %5976 = vmatprep.subr.mxu0 0.0
        %5977 = vmatpush1.msra.mxu0 0.0
        %5978 = vmatprep.subr.mxu0 0.0
        %5979 = vmatpush1.msra.mxu0 0.0
        %5980 = vmatprep.subr.mxu0 0.0
        %5981 = vmatpush1.msra.mxu0 0.0
        %5982 = vmatprep.subr.mxu0 0.0
        %5983 = vmatpush1.msra.mxu0 0.0
        %5984 = vmatprep.subr.mxu0 0.0
        %5985 = vmatpush1.msra.mxu0 0.0
        %5986 = vmatprep.subr.mxu0 0.0
        %5987 = vmatpush1.msra.mxu0 0.0
        %5988 = vmatprep.subr.mxu0 0.0
        %5989 = vmatpush1.msra.mxu0 0.0
        %5990 = vmatprep.subr.mxu0 0.0
        %5991 = vmatpush1.msra.mxu0 0.0
        %5992 = vmatprep.subr.mxu0 0.0
        %5993 = vmatpush1.msra.mxu0 0.0
        %5994 = vmatprep.subr.mxu0 0.0
        %5995 = vmatpush1.msra.mxu0 0.0
        %5996 = vmatprep.subr.mxu0 0.0
        %5997 = vmatpush1.msra.mxu0 0.0
        %5998 = vmatprep.subr.mxu0 0.0
        %5999 = vmatpush1.msra.mxu0 0.0
        %6000 = vmatprep.mubr.f32.mxu0 0.0
        %6001 = vmatmul.mubr.f32.gmra.mrb[0].mxu0 %v4351
        %v6002 = vpop.f32.mrb[0].mxu0
        %v6003 = vadd.f32 0.0, %v6002
        %v6004 = vpop.f32.mrb[0].mxu0
        %6005 = vdwg.mxu0
        %6006 = vmatprep.subr.mxu0 0.0
        %6007 = vmatpush1.msra.mxu0 %v5703
        %6008 = vmatprep.subr.mxu0 0.0
        %6009 = vmatpush1.msra.mxu0 %v5704
        %6010 = vmatprep.subr.mxu0 0.0
        %6011 = vmatpush1.msra.mxu0 %v5705
        %6012 = vmatprep.subr.mxu0 0.0
        %6013 = vmatpush1.msra.mxu0 %v5706
        %6014 = vmatprep.subr.mxu0 0.0
        %6015 = vmatpush1.msra.mxu0 0.0
        %6016 = vmatprep.subr.mxu0 0.0
        %6017 = vmatpush1.msra.mxu0 0.0
        %6018 = vmatprep.subr.mxu0 0.0
        %6019 = vmatpush1.msra.mxu0 0.0
        %6020 = vmatprep.subr.mxu0 0.0
        %6021 = vmatpush1.msra.mxu0 0.0
        %6022 = vmatprep.subr.mxu0 0.0
        %6023 = vmatpush1.msra.mxu0 0.0
        %6024 = vmatprep.subr.mxu0 0.0
        %6025 = vmatpush1.msra.mxu0 0.0
        %6026 = vmatprep.subr.mxu0 0.0
        %6027 = vmatpush1.msra.mxu0 0.0
        %6028 = vmatprep.subr.mxu0 0.0
        %6029 = vmatpush1.msra.mxu0 0.0
        %6030 = vmatprep.subr.mxu0 0.0
        %6031 = vmatpush1.msra.mxu0 0.0
        %6032 = vmatprep.subr.mxu0 0.0
        %6033 = vmatpush1.msra.mxu0 0.0
        %6034 = vmatprep.subr.mxu0 0.0
        %6035 = vmatpush1.msra.mxu0 0.0
        %6036 = vmatprep.subr.mxu0 0.0
        %6037 = vmatpush1.msra.mxu0 0.0
        %6038 = vmatprep.subr.mxu0 0.0
        %6039 = vmatpush1.msra.mxu0 0.0
        %6040 = vmatprep.subr.mxu0 0.0
        %6041 = vmatpush1.msra.mxu0 0.0
        %6042 = vmatprep.subr.mxu0 0.0
        %6043 = vmatpush1.msra.mxu0 0.0
        %6044 = vmatprep.subr.mxu0 0.0
        %6045 = vmatpush1.msra.mxu0 0.0
        %6046 = vmatprep.subr.mxu0 0.0
        %6047 = vmatpush1.msra.mxu0 0.0
        %6048 = vmatprep.subr.mxu0 0.0
        %6049 = vmatpush1.msra.mxu0 0.0
        %6050 = vmatprep.subr.mxu0 0.0
        %6051 = vmatpush1.msra.mxu0 0.0
        %6052 = vmatprep.subr.mxu0 0.0
        %6053 = vmatpush1.msra.mxu0 0.0
        %6054 = vmatprep.subr.mxu0 0.0
        %6055 = vmatpush1.msra.mxu0 0.0
        %6056 = vmatprep.subr.mxu0 0.0
        %6057 = vmatpush1.msra.mxu0 0.0
        %6058 = vmatprep.subr.mxu0 0.0
        %6059 = vmatpush1.msra.mxu0 0.0
        %6060 = vmatprep.subr.mxu0 0.0
        %6061 = vmatpush1.msra.mxu0 0.0
        %6062 = vmatprep.subr.mxu0 0.0
        %6063 = vmatpush1.msra.mxu0 0.0
        %6064 = vmatprep.subr.mxu0 0.0
        %6065 = vmatpush1.msra.mxu0 0.0
        %6066 = vmatprep.subr.mxu0 0.0
        %6067 = vmatpush1.msra.mxu0 0.0
        %6068 = vmatprep.subr.mxu0 0.0
        %6069 = vmatpush1.msra.mxu0 0.0
        %6070 = vmatprep.mubr.f32.mxu0 0.0
        %6071 = vmatmul.mubr.f32.gmra.mrb[0].mxu0 %v5625
        %v6072 = vpop.f32.mrb[0].mxu0
        %v6073 = vadd.f32 %v6003, %v6072
        %v6074 = vpop.f32.mrb[0].mxu0
        %6075 = vdwg.mxu0
        %v6076 = vadd.f32 %v6073, %v5929
        %v6077 = vmax.f32 %v6076, 0.0
        %v6078 = vld [vmem:[%s69] sm:$0xff]
        %s6079 = scalar_lea.vmem %s69, 8
        %v6080 = vld [vmem:[%s6079] sm:$0xff]
        %v6082 = vsel %vm4200, %v6080, 0
        %v6085 = vsel %vm4204, %v6077, 0
        %6087 = vmatprep.subr.mxu0 0.0
        %6088 = vmatpush1.msra.mxu0 %v6085
        %6089 = vmatprep.subr.mxu0 0.0
        %6090 = vmatpush1.msra.mxu0 0.0
        %6091 = vmatprep.subr.mxu0 0.0
        %6092 = vmatpush1.msra.mxu0 0.0
        %6093 = vmatprep.subr.mxu0 0.0
        %6094 = vmatpush1.msra.mxu0 0.0
        %6095 = vmatprep.subr.mxu0 0.0
        %6096 = vmatpush1.msra.mxu0 0.0
        %6097 = vmatprep.subr.mxu0 0.0
        %6098 = vmatpush1.msra.mxu0 0.0
        %6099 = vmatprep.subr.mxu0 0.0
        %6100 = vmatpush1.msra.mxu0 0.0
        %6101 = vmatprep.subr.mxu0 0.0
        %6102 = vmatpush1.msra.mxu0 0.0
        %6103 = vmatprep.subr.mxu0 0.0
        %6104 = vmatpush1.msra.mxu0 0.0
        %6105 = vmatprep.subr.mxu0 0.0
        %6106 = vmatpush1.msra.mxu0 0.0
        %6107 = vmatprep.subr.mxu0 0.0
        %6108 = vmatpush1.msra.mxu0 0.0
        %6109 = vmatprep.subr.mxu0 0.0
        %6110 = vmatpush1.msra.mxu0 0.0
        %6111 = vmatprep.subr.mxu0 0.0
        %6112 = vmatpush1.msra.mxu0 0.0
        %6113 = vmatprep.subr.mxu0 0.0
        %6114 = vmatpush1.msra.mxu0 0.0
        %6115 = vmatprep.subr.mxu0 0.0
        %6116 = vmatpush1.msra.mxu0 0.0
        %6117 = vmatprep.subr.mxu0 0.0
        %6118 = vmatpush1.msra.mxu0 0.0
        %6119 = vmatprep.subr.mxu0 0.0
        %6120 = vmatpush1.msra.mxu0 0.0
        %6121 = vmatprep.subr.mxu0 0.0
        %6122 = vmatpush1.msra.mxu0 0.0
        %6123 = vmatprep.subr.mxu0 0.0
        %6124 = vmatpush1.msra.mxu0 0.0
        %6125 = vmatprep.subr.mxu0 0.0
        %6126 = vmatpush1.msra.mxu0 0.0
        %6127 = vmatprep.subr.mxu0 0.0
        %6128 = vmatpush1.msra.mxu0 0.0
        %6129 = vmatprep.subr.mxu0 0.0
        %6130 = vmatpush1.msra.mxu0 0.0
        %6131 = vmatprep.subr.mxu0 0.0
        %6132 = vmatpush1.msra.mxu0 0.0
        %6133 = vmatprep.subr.mxu0 0.0
        %6134 = vmatpush1.msra.mxu0 0.0
        %6135 = vmatprep.subr.mxu0 0.0
        %6136 = vmatpush1.msra.mxu0 0.0
        %6137 = vmatprep.subr.mxu0 0.0
        %6138 = vmatpush1.msra.mxu0 0.0
        %6139 = vmatprep.subr.mxu0 0.0
        %6140 = vmatpush1.msra.mxu0 0.0
        %6141 = vmatprep.subr.mxu0 0.0
        %6142 = vmatpush1.msra.mxu0 0.0
        %6143 = vmatprep.subr.mxu0 0.0
        %6144 = vmatpush1.msra.mxu0 0.0
        %6145 = vmatprep.subr.mxu0 0.0
        %6146 = vmatpush1.msra.mxu0 0.0
        %6147 = vmatprep.subr.mxu0 0.0
        %6148 = vmatpush1.msra.mxu0 0.0
        %6149 = vmatprep.subr.mxu0 0.0
        %6150 = vmatpush1.msra.mxu0 0.0
        %6151 = vmatprep.mubr.f32.mxu0 0.0
        %6152 = vmatmul.mubr.f32.gmra.mrb[0].mxu0 %v6082
        %v6153 = vpop.f32.mrb[0].mxu0
        %v6154 = vadd.f32 0.0, %v6153
        %v6155 = vpop.f32.mrb[0].mxu0
        %6156 = vdwg.mxu0
        %v6158 = vsel %vm4200, %v6078, 0
        %v6161 = vsel %vm4204, %v5932, 0
        %6163 = vmatprep.subr.mxu0 0.0
        %6164 = vmatpush1.msra.mxu0 %v6161
        %6165 = vmatprep.subr.mxu0 0.0
        %6166 = vmatpush1.msra.mxu0 0.0
        %6167 = vmatprep.subr.mxu0 0.0
        %6168 = vmatpush1.msra.mxu0 0.0
        %6169 = vmatprep.subr.mxu0 0.0
        %6170 = vmatpush1.msra.mxu0 0.0
        %6171 = vmatprep.subr.mxu0 0.0
        %6172 = vmatpush1.msra.mxu0 0.0
        %6173 = vmatprep.subr.mxu0 0.0
        %6174 = vmatpush1.msra.mxu0 0.0
        %6175 = vmatprep.subr.mxu0 0.0
        %6176 = vmatpush1.msra.mxu0 0.0
        %6177 = vmatprep.subr.mxu0 0.0
        %6178 = vmatpush1.msra.mxu0 0.0
        %6179 = vmatprep.subr.mxu0 0.0
        %6180 = vmatpush1.msra.mxu0 0.0
        %6181 = vmatprep.subr.mxu0 0.0
        %6182 = vmatpush1.msra.mxu0 0.0
        %6183 = vmatprep.subr.mxu0 0.0
        %6184 = vmatpush1.msra.mxu0 0.0
        %6185 = vmatprep.subr.mxu0 0.0
        %6186 = vmatpush1.msra.mxu0 0.0
        %6187 = vmatprep.subr.mxu0 0.0
        %6188 = vmatpush1.msra.mxu0 0.0
        %6189 = vmatprep.subr.mxu0 0.0
        %6190 = vmatpush1.msra.mxu0 0.0
        %6191 = vmatprep.subr.mxu0 0.0
        %6192 = vmatpush1.msra.mxu0 0.0
        %6193 = vmatprep.subr.mxu0 0.0
        %6194 = vmatpush1.msra.mxu0 0.0
        %6195 = vmatprep.subr.mxu0 0.0
        %6196 = vmatpush1.msra.mxu0 0.0
        %6197 = vmatprep.subr.mxu0 0.0
        %6198 = vmatpush1.msra.mxu0 0.0
        %6199 = vmatprep.subr.mxu0 0.0
        %6200 = vmatpush1.msra.mxu0 0.0
        %6201 = vmatprep.subr.mxu0 0.0
        %6202 = vmatpush1.msra.mxu0 0.0
        %6203 = vmatprep.subr.mxu0 0.0
        %6204 = vmatpush1.msra.mxu0 0.0
        %6205 = vmatprep.subr.mxu0 0.0
        %6206 = vmatpush1.msra.mxu0 0.0
        %6207 = vmatprep.subr.mxu0 0.0
        %6208 = vmatpush1.msra.mxu0 0.0
        %6209 = vmatprep.subr.mxu0 0.0
        %6210 = vmatpush1.msra.mxu0 0.0
        %6211 = vmatprep.subr.mxu0 0.0
        %6212 = vmatpush1.msra.mxu0 0.0
        %6213 = vmatprep.subr.mxu0 0.0
        %6214 = vmatpush1.msra.mxu0 0.0
        %6215 = vmatprep.subr.mxu0 0.0
        %6216 = vmatpush1.msra.mxu0 0.0
        %6217 = vmatprep.subr.mxu0 0.0
        %6218 = vmatpush1.msra.mxu0 0.0
        %6219 = vmatprep.subr.mxu0 0.0
        %6220 = vmatpush1.msra.mxu0 0.0
        %6221 = vmatprep.subr.mxu0 0.0
        %6222 = vmatpush1.msra.mxu0 0.0
        %6223 = vmatprep.subr.mxu0 0.0
        %6224 = vmatpush1.msra.mxu0 0.0
        %6225 = vmatprep.subr.mxu0 0.0
        %6226 = vmatpush1.msra.mxu0 0.0
        %6227 = vmatprep.mubr.f32.mxu0 0.0
        %6228 = vmatmul.mubr.f32.gmra.mrb[0].mxu0 %v6158
        %v6229 = vpop.f32.mrb[0].mxu0
        %v6230 = vadd.f32 %v6154, %v6229
        %v6231 = vpop.f32.mrb[0].mxu0
        %6232 = vdwg.mxu0
        %v6233 = vadd.f32 %v6230, %v3640
        %v6234 = vld [vmem:[#allocation31] sm:$0x1]
        %v6235 = vlaneseq
        %v6236 = vshrl.u32 %v6235, 7
        %v6237 = vsub.s32 0, %v6236
        %v6238 = vrot.slane %v6234, %v6237
        %v6239 = vmul.f32 %v6233, %v6238
        %v6240 = vld [vmem:[#allocation31 + $0x1] sm:$0x1]
        %v6241 = vlaneseq
        %v6242 = vshrl.u32 %v6241, 7
        %v6243 = vsub.s32 0, %v6242
        %v6244 = vrot.slane %v6240, %v6243
        %v6245 = vadd.f32 %v6239, %v6244
        %v6246 = vmax.f32 %v6245, 0.0
        %v6247 = vld [vmem:[%s73] sm:$0xff]
        %v6248 = vld [vmem:[%s73 + $0x8] sm:$0xff]
        %v6249 = vld [vmem:[%s73 + $0x10] sm:$0xff]
        %v6250 = vld [vmem:[%s73 + $0x18] sm:$0xff]
        %v6251 = vld [vmem:[%s73 + $0x20] sm:$0xff]
        %v6252 = vld [vmem:[%s73 + $0x28] sm:$0xff]
        %v6253 = vld [vmem:[%s73 + $0x30] sm:$0xff]
        %v6254 = vld [vmem:[%s73 + $0x38] sm:$0xff]
        %v6255 = vld [vmem:[#allocation31 + $0x2] sm:$0x1]
        %v6256 = vlaneseq
        %v6257 = vshrl.u32 %v6256, 7
        %v6258 = vsub.s32 0, %v6257
        %v6259 = vrot.slane %v6255, %v6258
        %v6261 = vsel %vm1654, %v6246, 0
        %6263 = vmatprep.subr.mxu0 0.0
        %6264 = vmatpush1.msra.mxu0 %v6247
        %6265 = vmatprep.subr.mxu0 0.0
        %6266 = vmatpush1.msra.mxu0 %v6248
        %6267 = vmatprep.subr.mxu0 0.0
        %6268 = vmatpush1.msra.mxu0 %v6249
        %6269 = vmatprep.subr.mxu0 0.0
        %6270 = vmatpush1.msra.mxu0 %v6250
        %6271 = vmatprep.subr.mxu0 0.0
        %6272 = vmatpush1.msra.mxu0 %v6251
        %6273 = vmatprep.subr.mxu0 0.0
        %6274 = vmatpush1.msra.mxu0 %v6252
        %6275 = vmatprep.subr.mxu0 0.0
        %6276 = vmatpush1.msra.mxu0 %v6253
        %6277 = vmatprep.subr.mxu0 0.0
        %6278 = vmatpush1.msra.mxu0 %v6254
        %6279 = vmatprep.subr.mxu0 0.0
        %6280 = vmatpush1.msra.mxu0 0.0
        %6281 = vmatprep.subr.mxu0 0.0
        %6282 = vmatpush1.msra.mxu0 0.0
        %6283 = vmatprep.subr.mxu0 0.0
        %6284 = vmatpush1.msra.mxu0 0.0
        %6285 = vmatprep.subr.mxu0 0.0
        %6286 = vmatpush1.msra.mxu0 0.0
        %6287 = vmatprep.subr.mxu0 0.0
        %6288 = vmatpush1.msra.mxu0 0.0
        %6289 = vmatprep.subr.mxu0 0.0
        %6290 = vmatpush1.msra.mxu0 0.0
        %6291 = vmatprep.subr.mxu0 0.0
        %6292 = vmatpush1.msra.mxu0 0.0
        %6293 = vmatprep.subr.mxu0 0.0
        %6294 = vmatpush1.msra.mxu0 0.0
        %6295 = vmatprep.subr.mxu0 0.0
        %6296 = vmatpush1.msra.mxu0 0.0
        %6297 = vmatprep.subr.mxu0 0.0
        %6298 = vmatpush1.msra.mxu0 0.0
        %6299 = vmatprep.subr.mxu0 0.0
        %6300 = vmatpush1.msra.mxu0 0.0
        %6301 = vmatprep.subr.mxu0 0.0
        %6302 = vmatpush1.msra.mxu0 0.0
        %6303 = vmatprep.subr.mxu0 0.0
        %6304 = vmatpush1.msra.mxu0 0.0
        %6305 = vmatprep.subr.mxu0 0.0
        %6306 = vmatpush1.msra.mxu0 0.0
        %6307 = vmatprep.subr.mxu0 0.0
        %6308 = vmatpush1.msra.mxu0 0.0
        %6309 = vmatprep.subr.mxu0 0.0
        %6310 = vmatpush1.msra.mxu0 0.0
        %6311 = vmatprep.subr.mxu0 0.0
        %6312 = vmatpush1.msra.mxu0 0.0
        %6313 = vmatprep.subr.mxu0 0.0
        %6314 = vmatpush1.msra.mxu0 0.0
        %6315 = vmatprep.subr.mxu0 0.0
        %6316 = vmatpush1.msra.mxu0 0.0
        %6317 = vmatprep.subr.mxu0 0.0
        %6318 = vmatpush1.msra.mxu0 0.0
        %6319 = vmatprep.subr.mxu0 0.0
        %6320 = vmatpush1.msra.mxu0 0.0
        %6321 = vmatprep.subr.mxu0 0.0
        %6322 = vmatpush1.msra.mxu0 0.0
        %6323 = vmatprep.subr.mxu0 0.0
        %6324 = vmatpush1.msra.mxu0 0.0
        %6325 = vmatprep.subr.mxu0 0.0
        %6326 = vmatpush1.msra.mxu0 0.0
        %6327 = vmatprep.mubr.f32.mxu0 0.0
        %6328 = vmatmul.mubr.f32.gmra.mrb[0].mxu0 %v6261
        %v6329 = vpop.f32.mrb[0].mxu0
        %v6330 = vadd.f32 %v6259, %v6329
        %v6331 = vpop.f32.mrb[0].mxu0
        %6332 = vdwg.mxu0
        %v6333 = vmax.f32 %v6330, 0.0
        %v6334 = vld [vmem:[%s75] sm:$0xff]
        %v6335 = vld [vmem:[%s75 + $0x8] sm:$0xff]
        %v6336 = vld [vmem:[%s75 + $0x10] sm:$0xff]
        %v6337 = vld [vmem:[%s75 + $0x18] sm:$0xff]
        %v6339 = vsel %vm2618, %v6333, 0
        %6341 = vmatprep.subr.mxu0 0.0
        %6342 = vmatpush1.msra.mxu0 %v6334
        %6343 = vmatprep.subr.mxu0 0.0
        %6344 = vmatpush1.msra.mxu0 %v6335
        %6345 = vmatprep.subr.mxu0 0.0
        %6346 = vmatpush1.msra.mxu0 %v6336
        %6347 = vmatprep.subr.mxu0 0.0
        %6348 = vmatpush1.msra.mxu0 %v6337
        %6349 = vmatprep.subr.mxu0 0.0
        %6350 = vmatpush1.msra.mxu0 0.0
        %6351 = vmatprep.subr.mxu0 0.0
        %6352 = vmatpush1.msra.mxu0 0.0
        %6353 = vmatprep.subr.mxu0 0.0
        %6354 = vmatpush1.msra.mxu0 0.0
        %6355 = vmatprep.subr.mxu0 0.0
        %6356 = vmatpush1.msra.mxu0 0.0
        %6357 = vmatprep.subr.mxu0 0.0
        %6358 = vmatpush1.msra.mxu0 0.0
        %6359 = vmatprep.subr.mxu0 0.0
        %6360 = vmatpush1.msra.mxu0 0.0
        %6361 = vmatprep.subr.mxu0 0.0
        %6362 = vmatpush1.msra.mxu0 0.0
        %6363 = vmatprep.subr.mxu0 0.0
        %6364 = vmatpush1.msra.mxu0 0.0
        %6365 = vmatprep.subr.mxu0 0.0
        %6366 = vmatpush1.msra.mxu0 0.0
        %6367 = vmatprep.subr.mxu0 0.0
        %6368 = vmatpush1.msra.mxu0 0.0
        %6369 = vmatprep.subr.mxu0 0.0
        %6370 = vmatpush1.msra.mxu0 0.0
        %6371 = vmatprep.subr.mxu0 0.0
        %6372 = vmatpush1.msra.mxu0 0.0
        %6373 = vmatprep.subr.mxu0 0.0
        %6374 = vmatpush1.msra.mxu0 0.0
        %6375 = vmatprep.subr.mxu0 0.0
        %6376 = vmatpush1.msra.mxu0 0.0
        %6377 = vmatprep.subr.mxu0 0.0
        %6378 = vmatpush1.msra.mxu0 0.0
        %6379 = vmatprep.subr.mxu0 0.0
        %6380 = vmatpush1.msra.mxu0 0.0
        %6381 = vmatprep.subr.mxu0 0.0
        %6382 = vmatpush1.msra.mxu0 0.0
        %6383 = vmatprep.subr.mxu0 0.0
        %6384 = vmatpush1.msra.mxu0 0.0
        %6385 = vmatprep.subr.mxu0 0.0
        %6386 = vmatpush1.msra.mxu0 0.0
        %6387 = vmatprep.subr.mxu0 0.0
        %6388 = vmatpush1.msra.mxu0 0.0
        %6389 = vmatprep.subr.mxu0 0.0
        %6390 = vmatpush1.msra.mxu0 0.0
        %6391 = vmatprep.subr.mxu0 0.0
        %6392 = vmatpush1.msra.mxu0 0.0
        %6393 = vmatprep.subr.mxu0 0.0
        %6394 = vmatpush1.msra.mxu0 0.0
        %6395 = vmatprep.subr.mxu0 0.0
        %6396 = vmatpush1.msra.mxu0 0.0
        %6397 = vmatprep.subr.mxu0 0.0
        %6398 = vmatpush1.msra.mxu0 0.0
        %6399 = vmatprep.subr.mxu0 0.0
        %6400 = vmatpush1.msra.mxu0 0.0
        %6401 = vmatprep.subr.mxu0 0.0
        %6402 = vmatpush1.msra.mxu0 0.0
        %6403 = vmatprep.subr.mxu0 0.0
        %6404 = vmatpush1.msra.mxu0 0.0
        %6405 = vmatprep.mubr.f32.mxu0 0.0
        %6406 = vmatmul.mubr.f32.gmra.mrb[0].mxu0 %v6339
        %v6407 = vpop.f32.mrb[0].mxu0
        %v6408 = vadd.f32 0.0, %v6407
        %v6409 = vpop.f32.mrb[0].mxu0
        %6410 = vdwg.mxu0
        %s6411 = scalar_lea.vmem %s75, 32
        %v6412 = vld [vmem:[%s6411] sm:$0xff]
        %v6413 = vld [vmem:[%s6411 + $0x8] sm:$0xff]
        %v6414 = vld [vmem:[%s6411 + $0x10] sm:$0xff]
        %v6415 = vld [vmem:[%s6411 + $0x18] sm:$0xff]
        %s6416 = scalar_lea.vmem %s75, 64
        %v6417 = vld [vmem:[%s6416] sm:$0xff]
        %v6418 = vld [vmem:[%s6416 + $0x8] sm:$0xff]
        %v6419 = vld [vmem:[%s6416 + $0x10] sm:$0xff]
        %v6420 = vld [vmem:[%s6416 + $0x18] sm:$0xff]
        %6421 = vmatprep.subr.mxu0 0.0
        %6422 = vmatpush1.msra.mxu0 %v6417
        %6423 = vmatprep.subr.mxu0 0.0
        %6424 = vmatpush1.msra.mxu0 %v6418
        %6425 = vmatprep.subr.mxu0 0.0
        %6426 = vmatpush1.msra.mxu0 %v6419
        %6427 = vmatprep.subr.mxu0 0.0
        %6428 = vmatpush1.msra.mxu0 %v6420
        %6429 = vmatprep.subr.mxu0 0.0
        %6430 = vmatpush1.msra.mxu0 0.0
        %6431 = vmatprep.subr.mxu0 0.0
        %6432 = vmatpush1.msra.mxu0 0.0
        %6433 = vmatprep.subr.mxu0 0.0
        %6434 = vmatpush1.msra.mxu0 0.0
        %6435 = vmatprep.subr.mxu0 0.0
        %6436 = vmatpush1.msra.mxu0 0.0
        %6437 = vmatprep.subr.mxu0 0.0
        %6438 = vmatpush1.msra.mxu0 0.0
        %6439 = vmatprep.subr.mxu0 0.0
        %6440 = vmatpush1.msra.mxu0 0.0
        %6441 = vmatprep.subr.mxu0 0.0
        %6442 = vmatpush1.msra.mxu0 0.0
        %6443 = vmatprep.subr.mxu0 0.0
        %6444 = vmatpush1.msra.mxu0 0.0
        %6445 = vmatprep.subr.mxu0 0.0
        %6446 = vmatpush1.msra.mxu0 0.0
        %6447 = vmatprep.subr.mxu0 0.0
        %6448 = vmatpush1.msra.mxu0 0.0
        %6449 = vmatprep.subr.mxu0 0.0
        %6450 = vmatpush1.msra.mxu0 0.0
        %6451 = vmatprep.subr.mxu0 0.0
        %6452 = vmatpush1.msra.mxu0 0.0
        %6453 = vmatprep.subr.mxu0 0.0
        %6454 = vmatpush1.msra.mxu0 0.0
        %6455 = vmatprep.subr.mxu0 0.0
        %6456 = vmatpush1.msra.mxu0 0.0
        %6457 = vmatprep.subr.mxu0 0.0
        %6458 = vmatpush1.msra.mxu0 0.0
        %6459 = vmatprep.subr.mxu0 0.0
        %6460 = vmatpush1.msra.mxu0 0.0
        %6461 = vmatprep.subr.mxu0 0.0
        %6462 = vmatpush1.msra.mxu0 0.0
        %6463 = vmatprep.subr.mxu0 0.0
        %6464 = vmatpush1.msra.mxu0 0.0
        %6465 = vmatprep.subr.mxu0 0.0
        %6466 = vmatpush1.msra.mxu0 0.0
        %6467 = vmatprep.subr.mxu0 0.0
        %6468 = vmatpush1.msra.mxu0 0.0
        %6469 = vmatprep.subr.mxu0 0.0
        %6470 = vmatpush1.msra.mxu0 0.0
        %6471 = vmatprep.subr.mxu0 0.0
        %6472 = vmatpush1.msra.mxu0 0.0
        %6473 = vmatprep.subr.mxu0 0.0
        %6474 = vmatpush1.msra.mxu0 0.0
        %6475 = vmatprep.subr.mxu0 0.0
        %6476 = vmatpush1.msra.mxu0 0.0
        %6477 = vmatprep.subr.mxu0 0.0
        %6478 = vmatpush1.msra.mxu0 0.0
        %6479 = vmatprep.subr.mxu0 0.0
        %6480 = vmatpush1.msra.mxu0 0.0
        %6481 = vmatprep.subr.mxu0 0.0
        %6482 = vmatpush1.msra.mxu0 0.0
        %6483 = vmatprep.subr.mxu0 0.0
        %6484 = vmatpush1.msra.mxu0 0.0
        %6485 = vmatprep.mubr.f32.mxu0 0.0
        %6486 = vmatmul.mubr.f32.gmra.mrb[0].mxu0 %v6339
        %v6487 = vpop.f32.mrb[0].mxu0
        %v6488 = vadd.f32 0.0, %v6487
        %v6489 = vpop.f32.mrb[0].mxu0
        %6490 = vdwg.mxu0
        %6491 = vmatprep.subr.mxu0 0.0
        %6492 = vmatpush1.msra.mxu0 %v6408
        %6493 = vmatprep.subr.mxu0 0.0
        %6494 = vmatpush1.msra.mxu0 0.0
        %6495 = vmatprep.subr.mxu0 0.0
        %6496 = vmatpush1.msra.mxu0 0.0
        %6497 = vmatprep.subr.mxu0 0.0
        %6498 = vmatpush1.msra.mxu0 0.0
        %6499 = vmatprep.subr.mxu0 0.0
        %6500 = vmatpush1.msra.mxu0 0.0
        %6501 = vmatprep.subr.mxu0 0.0
        %6502 = vmatpush1.msra.mxu0 0.0
        %6503 = vmatprep.subr.mxu0 0.0
        %6504 = vmatpush1.msra.mxu0 0.0
        %6505 = vmatprep.subr.mxu0 0.0
        %6506 = vmatpush1.msra.mxu0 0.0
        %6507 = vmatprep.subr.mxu0 0.0
        %6508 = vmatpush1.msra.mxu0 0.0
        %6509 = vmatprep.subr.mxu0 0.0
        %6510 = vmatpush1.msra.mxu0 0.0
        %6511 = vmatprep.subr.mxu0 0.0
        %6512 = vmatpush1.msra.mxu0 0.0
        %6513 = vmatprep.subr.mxu0 0.0
        %6514 = vmatpush1.msra.mxu0 0.0
        %6515 = vmatprep.subr.mxu0 0.0
        %6516 = vmatpush1.msra.mxu0 0.0
        %6517 = vmatprep.subr.mxu0 0.0
        %6518 = vmatpush1.msra.mxu0 0.0
        %6519 = vmatprep.subr.mxu0 0.0
        %6520 = vmatpush1.msra.mxu0 0.0
        %6521 = vmatprep.subr.mxu0 0.0
        %6522 = vmatpush1.msra.mxu0 0.0
        %6523 = vmatprep.subr.mxu0 0.0
        %6524 = vmatpush1.msra.mxu0 0.0
        %6525 = vmatprep.subr.mxu0 0.0
        %6526 = vmatpush1.msra.mxu0 0.0
        %6527 = vmatprep.subr.mxu0 0.0
        %6528 = vmatpush1.msra.mxu0 0.0
        %6529 = vmatprep.subr.mxu0 0.0
        %6530 = vmatpush1.msra.mxu0 0.0
        %6531 = vmatprep.subr.mxu0 0.0
        %6532 = vmatpush1.msra.mxu0 0.0
        %6533 = vmatprep.subr.mxu0 0.0
        %6534 = vmatpush1.msra.mxu0 0.0
        %6535 = vmatprep.subr.mxu0 0.0
        %6536 = vmatpush1.msra.mxu0 0.0
        %6537 = vmatprep.subr.mxu0 0.0
        %6538 = vmatpush1.msra.mxu0 0.0
        %6539 = vmatprep.subr.mxu0 0.0
        %6540 = vmatpush1.msra.mxu0 0.0
        %6541 = vmatprep.subr.mxu0 0.0
        %6542 = vmatpush1.msra.mxu0 0.0
        %6543 = vmatprep.subr.mxu0 0.0
        %6544 = vmatpush1.msra.mxu0 0.0
        %6545 = vmatprep.subr.mxu0 0.0
        %6546 = vmatpush1.msra.mxu0 0.0
        %6547 = vmatprep.subr.mxu0 0.0
        %6548 = vmatpush1.msra.mxu0 0.0
        %6549 = vmatprep.subr.mxu0 0.0
        %6550 = vmatpush1.msra.mxu0 0.0
        %6551 = vmatprep.subr.mxu0 0.0
        %6552 = vmatpush1.msra.mxu0 0.0
        %6553 = vmatprep.subr.mxu0 0.0
        %6554 = vmatpush1.msra.mxu0 0.0
        %6555 = vmatprep.mubr.f32.mxu0 0.0
        %6556 = vmatmul.mubr.f32.gmra.mrb[0].mxu0 %v2775
        %v6557 = vpop.f32.mrb[0].mxu0
        %v6558 = vadd.f32 0.0, %v6557
        %v6559 = vpop.f32.mrb[0].mxu0
        %6560 = vdwg.mxu0
        %6561 = vmatprep.subr.mxu0 0.0
        %6562 = vmatpush1.msra.mxu0 %v6412
        %6563 = vmatprep.subr.mxu0 0.0
        %6564 = vmatpush1.msra.mxu0 %v6413
        %6565 = vmatprep.subr.mxu0 0.0
        %6566 = vmatpush1.msra.mxu0 %v6414
        %6567 = vmatprep.subr.mxu0 0.0
        %6568 = vmatpush1.msra.mxu0 %v6415
        %6569 = vmatprep.subr.mxu0 0.0
        %6570 = vmatpush1.msra.mxu0 0.0
        %6571 = vmatprep.subr.mxu0 0.0
        %6572 = vmatpush1.msra.mxu0 0.0
        %6573 = vmatprep.subr.mxu0 0.0
        %6574 = vmatpush1.msra.mxu0 0.0
        %6575 = vmatprep.subr.mxu0 0.0
        %6576 = vmatpush1.msra.mxu0 0.0
        %6577 = vmatprep.subr.mxu0 0.0
        %6578 = vmatpush1.msra.mxu0 0.0
        %6579 = vmatprep.subr.mxu0 0.0
        %6580 = vmatpush1.msra.mxu0 0.0
        %6581 = vmatprep.subr.mxu0 0.0
        %6582 = vmatpush1.msra.mxu0 0.0
        %6583 = vmatprep.subr.mxu0 0.0
        %6584 = vmatpush1.msra.mxu0 0.0
        %6585 = vmatprep.subr.mxu0 0.0
        %6586 = vmatpush1.msra.mxu0 0.0
        %6587 = vmatprep.subr.mxu0 0.0
        %6588 = vmatpush1.msra.mxu0 0.0
        %6589 = vmatprep.subr.mxu0 0.0
        %6590 = vmatpush1.msra.mxu0 0.0
        %6591 = vmatprep.subr.mxu0 0.0
        %6592 = vmatpush1.msra.mxu0 0.0
        %6593 = vmatprep.subr.mxu0 0.0
        %6594 = vmatpush1.msra.mxu0 0.0
        %6595 = vmatprep.subr.mxu0 0.0
        %6596 = vmatpush1.msra.mxu0 0.0
        %6597 = vmatprep.subr.mxu0 0.0
        %6598 = vmatpush1.msra.mxu0 0.0
        %6599 = vmatprep.subr.mxu0 0.0
        %6600 = vmatpush1.msra.mxu0 0.0
        %6601 = vmatprep.subr.mxu0 0.0
        %6602 = vmatpush1.msra.mxu0 0.0
        %6603 = vmatprep.subr.mxu0 0.0
        %6604 = vmatpush1.msra.mxu0 0.0
        %6605 = vmatprep.subr.mxu0 0.0
        %6606 = vmatpush1.msra.mxu0 0.0
        %6607 = vmatprep.subr.mxu0 0.0
        %6608 = vmatpush1.msra.mxu0 0.0
        %6609 = vmatprep.subr.mxu0 0.0
        %6610 = vmatpush1.msra.mxu0 0.0
        %6611 = vmatprep.subr.mxu0 0.0
        %6612 = vmatpush1.msra.mxu0 0.0
        %6613 = vmatprep.subr.mxu0 0.0
        %6614 = vmatpush1.msra.mxu0 0.0
        %6615 = vmatprep.subr.mxu0 0.0
        %6616 = vmatpush1.msra.mxu0 0.0
        %6617 = vmatprep.subr.mxu0 0.0
        %6618 = vmatpush1.msra.mxu0 0.0
        %6619 = vmatprep.subr.mxu0 0.0
        %6620 = vmatpush1.msra.mxu0 0.0
        %6621 = vmatprep.subr.mxu0 0.0
        %6622 = vmatpush1.msra.mxu0 0.0
        %6623 = vmatprep.subr.mxu0 0.0
        %6624 = vmatpush1.msra.mxu0 0.0
        %6625 = vmatprep.mubr.f32.mxu0 0.0
        %6626 = vmatmul.mubr.f32.gmra.mrb[0].mxu0 %v6339
        %v6627 = vpop.f32.mrb[0].mxu0
        %v6628 = vadd.f32 %v6558, %v6627
        %v6629 = vpop.f32.mrb[0].mxu0
        %6630 = vdwg.mxu0
        %6631 = vmatprep.subr.mxu0 0.0
        %6632 = vmatpush1.msra.mxu0 %v6488
        %6633 = vmatprep.subr.mxu0 0.0
        %6634 = vmatpush1.msra.mxu0 0.0
        %6635 = vmatprep.subr.mxu0 0.0
        %6636 = vmatpush1.msra.mxu0 0.0
        %6637 = vmatprep.subr.mxu0 0.0
        %6638 = vmatpush1.msra.mxu0 0.0
        %6639 = vmatprep.subr.mxu0 0.0
        %6640 = vmatpush1.msra.mxu0 0.0
        %6641 = vmatprep.subr.mxu0 0.0
        %6642 = vmatpush1.msra.mxu0 0.0
        %6643 = vmatprep.subr.mxu0 0.0
        %6644 = vmatpush1.msra.mxu0 0.0
        %6645 = vmatprep.subr.mxu0 0.0
        %6646 = vmatpush1.msra.mxu0 0.0
        %6647 = vmatprep.subr.mxu0 0.0
        %6648 = vmatpush1.msra.mxu0 0.0
        %6649 = vmatprep.subr.mxu0 0.0
        %6650 = vmatpush1.msra.mxu0 0.0
        %6651 = vmatprep.subr.mxu0 0.0
        %6652 = vmatpush1.msra.mxu0 0.0
        %6653 = vmatprep.subr.mxu0 0.0
        %6654 = vmatpush1.msra.mxu0 0.0
        %6655 = vmatprep.subr.mxu0 0.0
        %6656 = vmatpush1.msra.mxu0 0.0
        %6657 = vmatprep.subr.mxu0 0.0
        %6658 = vmatpush1.msra.mxu0 0.0
        %6659 = vmatprep.subr.mxu0 0.0
        %6660 = vmatpush1.msra.mxu0 0.0
        %6661 = vmatprep.subr.mxu0 0.0
        %6662 = vmatpush1.msra.mxu0 0.0
        %6663 = vmatprep.subr.mxu0 0.0
        %6664 = vmatpush1.msra.mxu0 0.0
        %6665 = vmatprep.subr.mxu0 0.0
        %6666 = vmatpush1.msra.mxu0 0.0
        %6667 = vmatprep.subr.mxu0 0.0
        %6668 = vmatpush1.msra.mxu0 0.0
        %6669 = vmatprep.subr.mxu0 0.0
        %6670 = vmatpush1.msra.mxu0 0.0
        %6671 = vmatprep.subr.mxu0 0.0
        %6672 = vmatpush1.msra.mxu0 0.0
        %6673 = vmatprep.subr.mxu0 0.0
        %6674 = vmatpush1.msra.mxu0 0.0
        %6675 = vmatprep.subr.mxu0 0.0
        %6676 = vmatpush1.msra.mxu0 0.0
        %6677 = vmatprep.subr.mxu0 0.0
        %6678 = vmatpush1.msra.mxu0 0.0
        %6679 = vmatprep.subr.mxu0 0.0
        %6680 = vmatpush1.msra.mxu0 0.0
        %6681 = vmatprep.subr.mxu0 0.0
        %6682 = vmatpush1.msra.mxu0 0.0
        %6683 = vmatprep.subr.mxu0 0.0
        %6684 = vmatpush1.msra.mxu0 0.0
        %6685 = vmatprep.subr.mxu0 0.0
        %6686 = vmatpush1.msra.mxu0 0.0
        %6687 = vmatprep.subr.mxu0 0.0
        %6688 = vmatpush1.msra.mxu0 0.0
        %6689 = vmatprep.subr.mxu0 0.0
        %6690 = vmatpush1.msra.mxu0 0.0
        %6691 = vmatprep.subr.mxu0 0.0
        %6692 = vmatpush1.msra.mxu0 0.0
        %6693 = vmatprep.subr.mxu0 0.0
        %6694 = vmatpush1.msra.mxu0 0.0
        %6695 = vmatprep.mubr.f32.mxu0 0.0
        %6696 = vmatmul.mubr.f32.gmra.mrb[0].mxu0 %v2920
        %v6697 = vpop.f32.mrb[0].mxu0
        %v6698 = vadd.f32 0.0, %v6697
        %v6699 = vpop.f32.mrb[0].mxu0
        %6700 = vdwg.mxu0
        %v6701 = vadd.f32 %v6628, %v6698
        %v6702 = vld [vmem:[#allocation31 + $0x3] sm:$0x1]
        %v6703 = vlaneseq
        %v6704 = vshrl.u32 %v6703, 7
        %v6705 = vsub.s32 0, %v6704
        %v6706 = vrot.slane %v6702, %v6705
        %v6707 = vadd.f32 %v6701, %v6706
        %v6708 = vmax.f32 %v6707, 0.0
        %v6709 = vld [vmem:[%s77] sm:$0xff]
        %v6710 = vld [vmem:[%s77 + $0x8] sm:$0xff]
        %v6711 = vld [vmem:[%s77 + $0x10] sm:$0xff]
        %v6712 = vld [vmem:[%s77 + $0x18] sm:$0xff]
        %v6713 = vld [vmem:[#allocation31 + $0x4] sm:$0x1]
        %v6714 = vlaneseq
        %v6715 = vshrl.u32 %v6714, 7
        %v6716 = vsub.s32 0, %v6715
        %v6717 = vrot.slane %v6713, %v6716
        %v6719 = vsel %vm2618, %v6708, 0
        %6721 = vmatprep.subr.mxu0 0.0
        %6722 = vmatpush1.msra.mxu0 %v6709
        %6723 = vmatprep.subr.mxu0 0.0
        %6724 = vmatpush1.msra.mxu0 %v6710
        %6725 = vmatprep.subr.mxu0 0.0
        %6726 = vmatpush1.msra.mxu0 %v6711
        %6727 = vmatprep.subr.mxu0 0.0
        %6728 = vmatpush1.msra.mxu0 %v6712
        %6729 = vmatprep.subr.mxu0 0.0
        %6730 = vmatpush1.msra.mxu0 0.0
        %6731 = vmatprep.subr.mxu0 0.0
        %6732 = vmatpush1.msra.mxu0 0.0
        %6733 = vmatprep.subr.mxu0 0.0
        %6734 = vmatpush1.msra.mxu0 0.0
        %6735 = vmatprep.subr.mxu0 0.0
        %6736 = vmatpush1.msra.mxu0 0.0
        %6737 = vmatprep.subr.mxu0 0.0
        %6738 = vmatpush1.msra.mxu0 0.0
        %6739 = vmatprep.subr.mxu0 0.0
        %6740 = vmatpush1.msra.mxu0 0.0
        %6741 = vmatprep.subr.mxu0 0.0
        %6742 = vmatpush1.msra.mxu0 0.0
        %6743 = vmatprep.subr.mxu0 0.0
        %6744 = vmatpush1.msra.mxu0 0.0
        %6745 = vmatprep.subr.mxu0 0.0
        %6746 = vmatpush1.msra.mxu0 0.0
        %6747 = vmatprep.subr.mxu0 0.0
        %6748 = vmatpush1.msra.mxu0 0.0
        %6749 = vmatprep.subr.mxu0 0.0
        %6750 = vmatpush1.msra.mxu0 0.0
        %6751 = vmatprep.subr.mxu0 0.0
        %6752 = vmatpush1.msra.mxu0 0.0
        %6753 = vmatprep.subr.mxu0 0.0
        %6754 = vmatpush1.msra.mxu0 0.0
        %6755 = vmatprep.subr.mxu0 0.0
        %6756 = vmatpush1.msra.mxu0 0.0
        %6757 = vmatprep.subr.mxu0 0.0
        %6758 = vmatpush1.msra.mxu0 0.0
        %6759 = vmatprep.subr.mxu0 0.0
        %6760 = vmatpush1.msra.mxu0 0.0
        %6761 = vmatprep.subr.mxu0 0.0
        %6762 = vmatpush1.msra.mxu0 0.0
        %6763 = vmatprep.subr.mxu0 0.0
        %6764 = vmatpush1.msra.mxu0 0.0
        %6765 = vmatprep.subr.mxu0 0.0
        %6766 = vmatpush1.msra.mxu0 0.0
        %6767 = vmatprep.subr.mxu0 0.0
        %6768 = vmatpush1.msra.mxu0 0.0
        %6769 = vmatprep.subr.mxu0 0.0
        %6770 = vmatpush1.msra.mxu0 0.0
        %6771 = vmatprep.subr.mxu0 0.0
        %6772 = vmatpush1.msra.mxu0 0.0
        %6773 = vmatprep.subr.mxu0 0.0
        %6774 = vmatpush1.msra.mxu0 0.0
        %6775 = vmatprep.subr.mxu0 0.0
        %6776 = vmatpush1.msra.mxu0 0.0
        %6777 = vmatprep.subr.mxu0 0.0
        %6778 = vmatpush1.msra.mxu0 0.0
        %6779 = vmatprep.subr.mxu0 0.0
        %6780 = vmatpush1.msra.mxu0 0.0
        %6781 = vmatprep.subr.mxu0 0.0
        %6782 = vmatpush1.msra.mxu0 0.0
        %6783 = vmatprep.subr.mxu0 0.0
        %6784 = vmatpush1.msra.mxu0 0.0
        %6785 = vmatprep.mubr.f32.mxu0 0.0
        %6786 = vmatmul.mubr.f32.gmra.mrb[0].mxu0 %v6719
        %v6787 = vpop.f32.mrb[0].mxu0
        %v6788 = vadd.f32 %v6717, %v6787
        %v6789 = vpop.f32.mrb[0].mxu0
        %6790 = vdwg.mxu0
        %v6791 = vadd.f32 %v6788, %v6233
        %v6792 = vld [vmem:[%s81] sm:$0x1]
        %v6793 = vld [vmem:[%s79] sm:$0xff]
        %v6794 = vld [vmem:[%s79 + $0x8] sm:$0xff]
        %v6795 = vld [vmem:[%s79 + $0x10] sm:$0xff]
        %v6796 = vld [vmem:[%s79 + $0x18] sm:$0xff]
        %v6797 = vld [vmem:[%s79 + $0x20] sm:$0xff]
        %v6798 = vld [vmem:[%s79 + $0x28] sm:$0xff]
        %v6799 = vld [vmem:[%s79 + $0x30] sm:$0xff]
        %v6800 = vld [vmem:[%s79 + $0x38] sm:$0xff]
        %v6801 = vld [vmem:[%s79 + $0x40] sm:$0xff]
        %v6802 = vld [vmem:[%s79 + $0x48] sm:$0xff]
        %v6803 = vld [vmem:[%s79 + $0x50] sm:$0xff]
        %v6804 = vld [vmem:[%s79 + $0x58] sm:$0xff]
        %v6805 = vld [vmem:[%s79 + $0x60] sm:$0xff]
        %v6806 = vld [vmem:[%s79 + $0x68] sm:$0xff]
        %v6807 = vld [vmem:[%s79 + $0x70] sm:$0xff]
        %v6808 = vld [vmem:[%s79 + $0x78] sm:$0xff]
        %v6809 = vld [vmem:[%s79 + $0x80] sm:$0xff]
        %v6810 = vld [vmem:[%s79 + $0x88] sm:$0xff]
        %v6811 = vld [vmem:[%s79 + $0x90] sm:$0xff]
        %v6812 = vld [vmem:[%s79 + $0x98] sm:$0xff]
        %v6813 = vld [vmem:[%s79 + $0xa0] sm:$0xff]
        %v6814 = vld [vmem:[%s79 + $0xa8] sm:$0xff]
        %v6815 = vld [vmem:[%s79 + $0xb0] sm:$0xff]
        %v6816 = vld [vmem:[%s79 + $0xb8] sm:$0xff]
        %v6817 = vld [vmem:[%s79 + $0xc0] sm:$0xff]
        %v6818 = vld [vmem:[%s79 + $0xc8] sm:$0xff]
        %v6819 = vld [vmem:[%s79 + $0xd0] sm:$0xff]
        %v6820 = vld [vmem:[%s79 + $0xd8] sm:$0xff]
        %v6821 = vld [vmem:[%s79 + $0xe0] sm:$0xff]
        %v6822 = vld [vmem:[%s79 + $0xe8] sm:$0xff]
        %v6823 = vld [vmem:[%s79 + $0xf0] sm:$0xff]
        %v6824 = vld [vmem:[%s79 + $0xf8] sm:$0xff]
        %v6826 = vsel %vm1654, %v6791, 0
        %6828 = vmatprep.subr.mxu0 %v6794
        %6829 = vmatpush1.msra.mxu0 %v6793
        %6830 = vmatprep.subr.mxu0 %v6798
        %6831 = vmatpush1.msra.mxu0 %v6797
        %6832 = vmatprep.subr.mxu0 %v6802
        %6833 = vmatpush1.msra.mxu0 %v6801
        %6834 = vmatprep.subr.mxu0 %v6806
        %6835 = vmatpush1.msra.mxu0 %v6805
        %6836 = vmatprep.subr.mxu0 %v6810
        %6837 = vmatpush1.msra.mxu0 %v6809
        %6838 = vmatprep.subr.mxu0 %v6814
        %6839 = vmatpush1.msra.mxu0 %v6813
        %6840 = vmatprep.subr.mxu0 %v6818
        %6841 = vmatpush1.msra.mxu0 %v6817
        %6842 = vmatprep.subr.mxu0 %v6822
        %6843 = vmatpush1.msra.mxu0 %v6821
        %6844 = vmatprep.subr.mxu0 0.0
        %6845 = vmatpush1.msra.mxu0 0.0
        %6846 = vmatprep.subr.mxu0 0.0
        %6847 = vmatpush1.msra.mxu0 0.0
        %6848 = vmatprep.subr.mxu0 0.0
        %6849 = vmatpush1.msra.mxu0 0.0
        %6850 = vmatprep.subr.mxu0 0.0
        %6851 = vmatpush1.msra.mxu0 0.0
        %6852 = vmatprep.subr.mxu0 0.0
        %6853 = vmatpush1.msra.mxu0 0.0
        %6854 = vmatprep.subr.mxu0 0.0
        %6855 = vmatpush1.msra.mxu0 0.0
        %6856 = vmatprep.subr.mxu0 0.0
        %6857 = vmatpush1.msra.mxu0 0.0
        %6858 = vmatprep.subr.mxu0 0.0
        %6859 = vmatpush1.msra.mxu0 0.0
        %6860 = vmatprep.subr.mxu0 0.0
        %6861 = vmatpush1.msra.mxu0 0.0
        %6862 = vmatprep.subr.mxu0 0.0
        %6863 = vmatpush1.msra.mxu0 0.0
        %6864 = vmatprep.subr.mxu0 0.0
        %6865 = vmatpush1.msra.mxu0 0.0
        %6866 = vmatprep.subr.mxu0 0.0
        %6867 = vmatpush1.msra.mxu0 0.0
        %6868 = vmatprep.subr.mxu0 0.0
        %6869 = vmatpush1.msra.mxu0 0.0
        %6870 = vmatprep.subr.mxu0 0.0
        %6871 = vmatpush1.msra.mxu0 0.0
        %6872 = vmatprep.subr.mxu0 0.0
        %6873 = vmatpush1.msra.mxu0 0.0
        %6874 = vmatprep.subr.mxu0 0.0
        %6875 = vmatpush1.msra.mxu0 0.0
        %6876 = vmatprep.subr.mxu0 0.0
        %6877 = vmatpush1.msra.mxu0 0.0
        %6878 = vmatprep.subr.mxu0 0.0
        %6879 = vmatpush1.msra.mxu0 0.0
        %6880 = vmatprep.subr.mxu0 0.0
        %6881 = vmatpush1.msra.mxu0 0.0
        %6882 = vmatprep.subr.mxu0 0.0
        %6883 = vmatpush1.msra.mxu0 0.0
        %6884 = vmatprep.subr.mxu0 0.0
        %6885 = vmatpush1.msra.mxu0 0.0
        %6886 = vmatprep.subr.mxu0 0.0
        %6887 = vmatpush1.msra.mxu0 0.0
        %6888 = vmatprep.subr.mxu0 0.0
        %6889 = vmatpush1.msra.mxu0 0.0
        %6890 = vmatprep.subr.mxu0 0.0
        %6891 = vmatpush1.msra.mxu0 0.0
        %6892 = vmatprep.mubr.f32.mxu0 0.0
        %6893 = vmatmul.mubr.f32.gmra.mrb[0].mxu0 %v6826
        %v6894 = vpop.f32.mrb[0].mxu0
        %v6895 = vadd.f32 0.0, %v6894
        %v6896 = vpop.f32.mrb[0].mxu0
        %v6897 = vadd.f32 0.0, %v6896
        %6898 = vdwg.mxu0
        %6899 = vmatprep.subr.mxu0 %v6796
        %6900 = vmatpush1.msra.mxu0 %v6795
        %6901 = vmatprep.subr.mxu0 %v6800
        %6902 = vmatpush1.msra.mxu0 %v6799
        %6903 = vmatprep.subr.mxu0 %v6804
        %6904 = vmatpush1.msra.mxu0 %v6803
        %6905 = vmatprep.subr.mxu0 %v6808
        %6906 = vmatpush1.msra.mxu0 %v6807
        %6907 = vmatprep.subr.mxu0 %v6812
        %6908 = vmatpush1.msra.mxu0 %v6811
        %6909 = vmatprep.subr.mxu0 %v6816
        %6910 = vmatpush1.msra.mxu0 %v6815
        %6911 = vmatprep.subr.mxu0 %v6820
        %6912 = vmatpush1.msra.mxu0 %v6819
        %6913 = vmatprep.subr.mxu0 %v6824
        %6914 = vmatpush1.msra.mxu0 %v6823
        %6915 = vmatprep.subr.mxu0 0.0
        %6916 = vmatpush1.msra.mxu0 0.0
        %6917 = vmatprep.subr.mxu0 0.0
        %6918 = vmatpush1.msra.mxu0 0.0
        %6919 = vmatprep.subr.mxu0 0.0
        %6920 = vmatpush1.msra.mxu0 0.0
        %6921 = vmatprep.subr.mxu0 0.0
        %6922 = vmatpush1.msra.mxu0 0.0
        %6923 = vmatprep.subr.mxu0 0.0
        %6924 = vmatpush1.msra.mxu0 0.0
        %6925 = vmatprep.subr.mxu0 0.0
        %6926 = vmatpush1.msra.mxu0 0.0
        %6927 = vmatprep.subr.mxu0 0.0
        %6928 = vmatpush1.msra.mxu0 0.0
        %6929 = vmatprep.subr.mxu0 0.0
        %6930 = vmatpush1.msra.mxu0 0.0
        %6931 = vmatprep.subr.mxu0 0.0
        %6932 = vmatpush1.msra.mxu0 0.0
        %6933 = vmatprep.subr.mxu0 0.0
        %6934 = vmatpush1.msra.mxu0 0.0
        %6935 = vmatprep.subr.mxu0 0.0
        %6936 = vmatpush1.msra.mxu0 0.0
        %6937 = vmatprep.subr.mxu0 0.0
        %6938 = vmatpush1.msra.mxu0 0.0
        %6939 = vmatprep.subr.mxu0 0.0
        %6940 = vmatpush1.msra.mxu0 0.0
        %6941 = vmatprep.subr.mxu0 0.0
        %6942 = vmatpush1.msra.mxu0 0.0
        %6943 = vmatprep.subr.mxu0 0.0
        %6944 = vmatpush1.msra.mxu0 0.0
        %6945 = vmatprep.subr.mxu0 0.0
        %6946 = vmatpush1.msra.mxu0 0.0
        %6947 = vmatprep.subr.mxu0 0.0
        %6948 = vmatpush1.msra.mxu0 0.0
        %6949 = vmatprep.subr.mxu0 0.0
        %6950 = vmatpush1.msra.mxu0 0.0
        %6951 = vmatprep.subr.mxu0 0.0
        %6952 = vmatpush1.msra.mxu0 0.0
        %6953 = vmatprep.subr.mxu0 0.0
        %6954 = vmatpush1.msra.mxu0 0.0
        %6955 = vmatprep.subr.mxu0 0.0
        %6956 = vmatpush1.msra.mxu0 0.0
        %6957 = vmatprep.subr.mxu0 0.0
        %6958 = vmatpush1.msra.mxu0 0.0
        %6959 = vmatprep.subr.mxu0 0.0
        %6960 = vmatpush1.msra.mxu0 0.0
        %6961 = vmatprep.subr.mxu0 0.0
        %6962 = vmatpush1.msra.mxu0 0.0
        %6963 = vmatprep.mubr.f32.mxu0 0.0
        %6964 = vmatmul.mubr.f32.gmra.mrb[0].mxu0 %v6826
        %v6965 = vpop.f32.mrb[0].mxu0
        %v6966 = vadd.f32 0.0, %v6965
        %v6967 = vpop.f32.mrb[0].mxu0
        %v6968 = vadd.f32 0.0, %v6967
        %6969 = vdwg.mxu0
        %6970 = vmatprep.subr.mxu0 0.0
        %6971 = vmatpush1.msra.mxu0 %v6966
        %6972 = vmatprep.subr.mxu0 0.0
        %6973 = vmatpush1.msra.mxu0 0.0
        %6974 = vmatprep.subr.mxu0 0.0
        %6975 = vmatpush1.msra.mxu0 0.0
        %6976 = vmatprep.subr.mxu0 0.0
        %6977 = vmatpush1.msra.mxu0 0.0
        %6978 = vmatprep.subr.mxu0 0.0
        %6979 = vmatpush1.msra.mxu0 0.0
        %6980 = vmatprep.subr.mxu0 0.0
        %6981 = vmatpush1.msra.mxu0 0.0
        %6982 = vmatprep.subr.mxu0 0.0
        %6983 = vmatpush1.msra.mxu0 0.0
        %6984 = vmatprep.subr.mxu0 0.0
        %6985 = vmatpush1.msra.mxu0 0.0
        %6986 = vmatprep.subr.mxu0 0.0
        %6987 = vmatpush1.msra.mxu0 0.0
        %6988 = vmatprep.subr.mxu0 0.0
        %6989 = vmatpush1.msra.mxu0 0.0
        %6990 = vmatprep.subr.mxu0 0.0
        %6991 = vmatpush1.msra.mxu0 0.0
        %6992 = vmatprep.subr.mxu0 0.0
        %6993 = vmatpush1.msra.mxu0 0.0
        %6994 = vmatprep.subr.mxu0 0.0
        %6995 = vmatpush1.msra.mxu0 0.0
        %6996 = vmatprep.subr.mxu0 0.0
        %6997 = vmatpush1.msra.mxu0 0.0
        %6998 = vmatprep.subr.mxu0 0.0
        %6999 = vmatpush1.msra.mxu0 0.0
        %7000 = vmatprep.subr.mxu0 0.0
        %7001 = vmatpush1.msra.mxu0 0.0
        %7002 = vmatprep.subr.mxu0 0.0
        %7003 = vmatpush1.msra.mxu0 0.0
        %7004 = vmatprep.subr.mxu0 0.0
        %7005 = vmatpush1.msra.mxu0 0.0
        %7006 = vmatprep.subr.mxu0 0.0
        %7007 = vmatpush1.msra.mxu0 0.0
        %7008 = vmatprep.subr.mxu0 0.0
        %7009 = vmatpush1.msra.mxu0 0.0
        %7010 = vmatprep.subr.mxu0 0.0
        %7011 = vmatpush1.msra.mxu0 0.0
        %7012 = vmatprep.subr.mxu0 0.0
        %7013 = vmatpush1.msra.mxu0 0.0
        %7014 = vmatprep.subr.mxu0 0.0
        %7015 = vmatpush1.msra.mxu0 0.0
        %7016 = vmatprep.subr.mxu0 0.0
        %7017 = vmatpush1.msra.mxu0 0.0
        %7018 = vmatprep.subr.mxu0 0.0
        %7019 = vmatpush1.msra.mxu0 0.0
        %7020 = vmatprep.subr.mxu0 0.0
        %7021 = vmatpush1.msra.mxu0 0.0
        %7022 = vmatprep.subr.mxu0 0.0
        %7023 = vmatpush1.msra.mxu0 0.0
        %7024 = vmatprep.subr.mxu0 0.0
        %7025 = vmatpush1.msra.mxu0 0.0
        %7026 = vmatprep.subr.mxu0 0.0
        %7027 = vmatpush1.msra.mxu0 0.0
        %7028 = vmatprep.subr.mxu0 0.0
        %7029 = vmatpush1.msra.mxu0 0.0
        %7030 = vmatprep.subr.mxu0 0.0
        %7031 = vmatpush1.msra.mxu0 0.0
        %7032 = vmatprep.subr.mxu0 0.0
        %7033 = vmatpush1.msra.mxu0 0.0
        %7034 = vmatprep.mubr.f32.mxu0 0.0
        %7035 = vmatmul.mubr.f32.gmra.mrb[0].mxu0 %v2775
        %v7036 = vpop.f32.mrb[0].mxu0
        %v7037 = vadd.f32 0.0, %v7036
        %v7038 = vpop.f32.mrb[0].mxu0
        %7039 = vdwg.mxu0
        %v7040 = vadd.f32 %v6895, %v7037
        %v7042 = vlaneseq
        %v7043 = vshrl.u32 %v7042, 7
        %v7044 = vsub.s32 0, %v7043
        %v7045 = vrot.slane %v6792, %v7044
        %v7047 = vadd.f32 %v7040, %v7045
        %v7048 = vmax.f32 %v7047, 0.0
        %7049 = vmatprep.subr.mxu0 0.0
        %7050 = vmatpush1.msra.mxu0 %v6968
        %7051 = vmatprep.subr.mxu0 0.0
        %7052 = vmatpush1.msra.mxu0 0.0
        %7053 = vmatprep.subr.mxu0 0.0
        %7054 = vmatpush1.msra.mxu0 0.0
        %7055 = vmatprep.subr.mxu0 0.0
        %7056 = vmatpush1.msra.mxu0 0.0
        %7057 = vmatprep.subr.mxu0 0.0
        %7058 = vmatpush1.msra.mxu0 0.0
        %7059 = vmatprep.subr.mxu0 0.0
        %7060 = vmatpush1.msra.mxu0 0.0
        %7061 = vmatprep.subr.mxu0 0.0
        %7062 = vmatpush1.msra.mxu0 0.0
        %7063 = vmatprep.subr.mxu0 0.0
        %7064 = vmatpush1.msra.mxu0 0.0
        %7065 = vmatprep.subr.mxu0 0.0
        %7066 = vmatpush1.msra.mxu0 0.0
        %7067 = vmatprep.subr.mxu0 0.0
        %7068 = vmatpush1.msra.mxu0 0.0
        %7069 = vmatprep.subr.mxu0 0.0
        %7070 = vmatpush1.msra.mxu0 0.0
        %7071 = vmatprep.subr.mxu0 0.0
        %7072 = vmatpush1.msra.mxu0 0.0
        %7073 = vmatprep.subr.mxu0 0.0
        %7074 = vmatpush1.msra.mxu0 0.0
        %7075 = vmatprep.subr.mxu0 0.0
        %7076 = vmatpush1.msra.mxu0 0.0
        %7077 = vmatprep.subr.mxu0 0.0
        %7078 = vmatpush1.msra.mxu0 0.0
        %7079 = vmatprep.subr.mxu0 0.0
        %7080 = vmatpush1.msra.mxu0 0.0
        %7081 = vmatprep.subr.mxu0 0.0
        %7082 = vmatpush1.msra.mxu0 0.0
        %7083 = vmatprep.subr.mxu0 0.0
        %7084 = vmatpush1.msra.mxu0 0.0
        %7085 = vmatprep.subr.mxu0 0.0
        %7086 = vmatpush1.msra.mxu0 0.0
        %7087 = vmatprep.subr.mxu0 0.0
        %7088 = vmatpush1.msra.mxu0 0.0
        %7089 = vmatprep.subr.mxu0 0.0
        %7090 = vmatpush1.msra.mxu0 0.0
        %7091 = vmatprep.subr.mxu0 0.0
        %7092 = vmatpush1.msra.mxu0 0.0
        %7093 = vmatprep.subr.mxu0 0.0
        %7094 = vmatpush1.msra.mxu0 0.0
        %7095 = vmatprep.subr.mxu0 0.0
        %7096 = vmatpush1.msra.mxu0 0.0
        %7097 = vmatprep.subr.mxu0 0.0
        %7098 = vmatpush1.msra.mxu0 0.0
        %7099 = vmatprep.subr.mxu0 0.0
        %7100 = vmatpush1.msra.mxu0 0.0
        %7101 = vmatprep.subr.mxu0 0.0
        %7102 = vmatpush1.msra.mxu0 0.0
        %7103 = vmatprep.subr.mxu0 0.0
        %7104 = vmatpush1.msra.mxu0 0.0
        %7105 = vmatprep.subr.mxu0 0.0
        %7106 = vmatpush1.msra.mxu0 0.0
        %7107 = vmatprep.subr.mxu0 0.0
        %7108 = vmatpush1.msra.mxu0 0.0
        %7109 = vmatprep.subr.mxu0 0.0
        %7110 = vmatpush1.msra.mxu0 0.0
        %7111 = vmatprep.subr.mxu0 0.0
        %7112 = vmatpush1.msra.mxu0 0.0
        %7113 = vmatprep.mubr.f32.mxu0 0.0
        %7114 = vmatmul.mubr.f32.gmra.mrb[0].mxu0 %v2920
        %v7115 = vpop.f32.mrb[0].mxu0
        %v7116 = vadd.f32 0.0, %v7115
        %v7117 = vpop.f32.mrb[0].mxu0
        %7118 = vdwg.mxu0
        %v7119 = vadd.f32 %v6897, %v7116
        %v7120 = vadd.f32 %v7119, %v7045
        %v7121 = vmax.f32 %v7120, 0.0
        %v7122 = vld [vmem:[%s83] sm:$0xff]
        %v7123 = vld [vmem:[%s83 + $0x8] sm:$0xff]
        %s7124 = scalar_lea.vmem %s83, 16
        %v7125 = vld [vmem:[%s7124] sm:$0xff]
        %v7126 = vld [vmem:[%s7124 + $0x8] sm:$0xff]
        %v7128 = vsel %vm2773, %v7125, 0
        %v7131 = vsel %vm2773, %v7126, 0
        %7133 = vmatprep.subr.mxu0 0.0
        %7134 = vmatpush1.msra.mxu0 %v7121
        %7135 = vmatprep.subr.mxu0 0.0
        %7136 = vmatpush1.msra.mxu0 0.0
        %7137 = vmatprep.subr.mxu0 0.0
        %7138 = vmatpush1.msra.mxu0 0.0
        %7139 = vmatprep.subr.mxu0 0.0
        %7140 = vmatpush1.msra.mxu0 0.0
        %7141 = vmatprep.subr.mxu0 0.0
        %7142 = vmatpush1.msra.mxu0 0.0
        %7143 = vmatprep.subr.mxu0 0.0
        %7144 = vmatpush1.msra.mxu0 0.0
        %7145 = vmatprep.subr.mxu0 0.0
        %7146 = vmatpush1.msra.mxu0 0.0
        %7147 = vmatprep.subr.mxu0 0.0
        %7148 = vmatpush1.msra.mxu0 0.0
        %7149 = vmatprep.subr.mxu0 0.0
        %7150 = vmatpush1.msra.mxu0 0.0
        %7151 = vmatprep.subr.mxu0 0.0
        %7152 = vmatpush1.msra.mxu0 0.0
        %7153 = vmatprep.subr.mxu0 0.0
        %7154 = vmatpush1.msra.mxu0 0.0
        %7155 = vmatprep.subr.mxu0 0.0
        %7156 = vmatpush1.msra.mxu0 0.0
        %7157 = vmatprep.subr.mxu0 0.0
        %7158 = vmatpush1.msra.mxu0 0.0
        %7159 = vmatprep.subr.mxu0 0.0
        %7160 = vmatpush1.msra.mxu0 0.0
        %7161 = vmatprep.subr.mxu0 0.0
        %7162 = vmatpush1.msra.mxu0 0.0
        %7163 = vmatprep.subr.mxu0 0.0
        %7164 = vmatpush1.msra.mxu0 0.0
        %7165 = vmatprep.subr.mxu0 0.0
        %7166 = vmatpush1.msra.mxu0 0.0
        %7167 = vmatprep.subr.mxu0 0.0
        %7168 = vmatpush1.msra.mxu0 0.0
        %7169 = vmatprep.subr.mxu0 0.0
        %7170 = vmatpush1.msra.mxu0 0.0
        %7171 = vmatprep.subr.mxu0 0.0
        %7172 = vmatpush1.msra.mxu0 0.0
        %7173 = vmatprep.subr.mxu0 0.0
        %7174 = vmatpush1.msra.mxu0 0.0
        %7175 = vmatprep.subr.mxu0 0.0
        %7176 = vmatpush1.msra.mxu0 0.0
        %7177 = vmatprep.subr.mxu0 0.0
        %7178 = vmatpush1.msra.mxu0 0.0
        %7179 = vmatprep.subr.mxu0 0.0
        %7180 = vmatpush1.msra.mxu0 0.0
        %7181 = vmatprep.subr.mxu0 0.0
        %7182 = vmatpush1.msra.mxu0 0.0
        %7183 = vmatprep.subr.mxu0 0.0
        %7184 = vmatpush1.msra.mxu0 0.0
        %7185 = vmatprep.subr.mxu0 0.0
        %7186 = vmatpush1.msra.mxu0 0.0
        %7187 = vmatprep.subr.mxu0 0.0
        %7188 = vmatpush1.msra.mxu0 0.0
        %7189 = vmatprep.subr.mxu0 0.0
        %7190 = vmatpush1.msra.mxu0 0.0
        %7191 = vmatprep.subr.mxu0 0.0
        %7192 = vmatpush1.msra.mxu0 0.0
        %7193 = vmatprep.subr.mxu0 0.0
        %7194 = vmatpush1.msra.mxu0 0.0
        %7195 = vmatprep.subr.mxu0 0.0
        %7196 = vmatpush1.msra.mxu0 0.0
        %7197 = vmatprep.mubr.f32.mxu0 0.0
        %7198 = vmatmul.mubr.f32.gmra.mrb[0].mxu0 %v7128
        %v7199 = vpop.f32.mrb[0].mxu0
        %v7200 = vadd.f32 0.0, %v7199
        %v7201 = vpop.f32.mrb[0].mxu0
        %7202 = vmatprep.mubr.f32.mxu0 0.0
        %7203 = vmatmul.mubr.f32.gmra.mrb[0].mxu0 %v7131
        %v7204 = vpop.f32.mrb[0].mxu0
        %v7205 = vadd.f32 0.0, %v7204
        %v7206 = vpop.f32.mrb[0].mxu0
        %7207 = vdwg.mxu0
        %v7209 = vsel %vm2773, %v7122, 0
        %v7212 = vsel %vm2773, %v7123, 0
        %7214 = vmatprep.subr.mxu0 0.0
        %7215 = vmatpush1.msra.mxu0 %v7048
        %7216 = vmatprep.subr.mxu0 0.0
        %7217 = vmatpush1.msra.mxu0 0.0
        %7218 = vmatprep.subr.mxu0 0.0
        %7219 = vmatpush1.msra.mxu0 0.0
        %7220 = vmatprep.subr.mxu0 0.0
        %7221 = vmatpush1.msra.mxu0 0.0
        %7222 = vmatprep.subr.mxu0 0.0
        %7223 = vmatpush1.msra.mxu0 0.0
        %7224 = vmatprep.subr.mxu0 0.0
        %7225 = vmatpush1.msra.mxu0 0.0
        %7226 = vmatprep.subr.mxu0 0.0
        %7227 = vmatpush1.msra.mxu0 0.0
        %7228 = vmatprep.subr.mxu0 0.0
        %7229 = vmatpush1.msra.mxu0 0.0
        %7230 = vmatprep.subr.mxu0 0.0
        %7231 = vmatpush1.msra.mxu0 0.0
        %7232 = vmatprep.subr.mxu0 0.0
        %7233 = vmatpush1.msra.mxu0 0.0
        %7234 = vmatprep.subr.mxu0 0.0
        %7235 = vmatpush1.msra.mxu0 0.0
        %7236 = vmatprep.subr.mxu0 0.0
        %7237 = vmatpush1.msra.mxu0 0.0
        %7238 = vmatprep.subr.mxu0 0.0
        %7239 = vmatpush1.msra.mxu0 0.0
        %7240 = vmatprep.subr.mxu0 0.0
        %7241 = vmatpush1.msra.mxu0 0.0
        %7242 = vmatprep.subr.mxu0 0.0
        %7243 = vmatpush1.msra.mxu0 0.0
        %7244 = vmatprep.subr.mxu0 0.0
        %7245 = vmatpush1.msra.mxu0 0.0
        %7246 = vmatprep.subr.mxu0 0.0
        %7247 = vmatpush1.msra.mxu0 0.0
        %7248 = vmatprep.subr.mxu0 0.0
        %7249 = vmatpush1.msra.mxu0 0.0
        %7250 = vmatprep.subr.mxu0 0.0
        %7251 = vmatpush1.msra.mxu0 0.0
        %7252 = vmatprep.subr.mxu0 0.0
        %7253 = vmatpush1.msra.mxu0 0.0
        %7254 = vmatprep.subr.mxu0 0.0
        %7255 = vmatpush1.msra.mxu0 0.0
        %7256 = vmatprep.subr.mxu0 0.0
        %7257 = vmatpush1.msra.mxu0 0.0
        %7258 = vmatprep.subr.mxu0 0.0
        %7259 = vmatpush1.msra.mxu0 0.0
        %7260 = vmatprep.subr.mxu0 0.0
        %7261 = vmatpush1.msra.mxu0 0.0
        %7262 = vmatprep.subr.mxu0 0.0
        %7263 = vmatpush1.msra.mxu0 0.0
        %7264 = vmatprep.subr.mxu0 0.0
        %7265 = vmatpush1.msra.mxu0 0.0
        %7266 = vmatprep.subr.mxu0 0.0
        %7267 = vmatpush1.msra.mxu0 0.0
        %7268 = vmatprep.subr.mxu0 0.0
        %7269 = vmatpush1.msra.mxu0 0.0
        %7270 = vmatprep.subr.mxu0 0.0
        %7271 = vmatpush1.msra.mxu0 0.0
        %7272 = vmatprep.subr.mxu0 0.0
        %7273 = vmatpush1.msra.mxu0 0.0
        %7274 = vmatprep.subr.mxu0 0.0
        %7275 = vmatpush1.msra.mxu0 0.0
        %7276 = vmatprep.subr.mxu0 0.0
        %7277 = vmatpush1.msra.mxu0 0.0
        %7278 = vmatprep.mubr.f32.mxu0 0.0
        %7279 = vmatmul.mubr.f32.gmra.mrb[0].mxu0 %v7209
        %v7280 = vpop.f32.mrb[0].mxu0
        %v7281 = vadd.f32 %v7200, %v7280
        %v7282 = vpop.f32.mrb[0].mxu0
        %7283 = vmatprep.mubr.f32.mxu0 0.0
        %7284 = vmatmul.mubr.f32.gmra.mrb[0].mxu0 %v7212
        %v7285 = vpop.f32.mrb[0].mxu0
        %v7286 = vadd.f32 %v7205, %v7285
        %v7287 = vpop.f32.mrb[0].mxu0
        %7288 = vdwg.mxu0
        %v7289 = vadd.f32 %v7281, %v2177
        %v7290 = vadd.f32 %v7286, %v2178
        %7291 = vst [vmem:[%s1529] sm:$0xff] %v7289
        %7292 = vst [vmem:[%s1529 + $0x8] sm:$0xff] %v7290
        %s7293 = sand.u32 %s1006, 1
        %s7294 = scalar_lea.sflag [#allocation4], %s7293
        %s7295 = sand.u32 %s1006, 1
        %s7296 = smul.addr %s7295, 16
        %s7297 = scalar_lea.vmem [#allocation32], %s7296
        // Predicated region
        $region265: #{tpu_custom_call.1} parent=187 // pred_check
          %p7298 = pneg %p1016
        $region266: #{tpu_custom_call.1} parent=187 // pred_check_branch
          %7300 = sbr.rel (%p7298) target = $region268
        $region267: #{tpu_custom_call.1} parent=187 // pred_region
          %s7302 = ssub.s32 256, 256
          %7303 = vsyncadd %s7294, %s7302
          %s7304 = smul.addr %s111, 2
          %s7305 = smul.addr %s7304, 128
          %s7306 = scalar_lea.hbm %s85, %s7305
          %s7307 = sshll.u32 %s7297, 4
          %s7308 = int_to_ptr.vmem [resolvable:$true] %s7307
          %7313 = dma.vmem_to_hbm [thread:$0]  %s7308, 256, %s7306, %s7294, 128, 128, 8
        $region268: #{tpu_custom_call.1} parent=187 // pred_fallthru
          _
      $region188: #{tpu_custom_call.1} parent=5 // pred_fallthru
        _
      %p7314 = scmp.le.s32.totalorder 2, %s106
      // Predicated region
      $region269: #{tpu_custom_call.1} parent=5 // pred_check
        %p7315 = pneg %p7314
      $region270: #{tpu_custom_call.1} parent=5 // pred_check_branch
        %7317 = sbr.rel (%p7315) target = $region272
      $region271: #{tpu_custom_call.1} parent=5 // pred_region
        %s7318 = ssub.s32 %s106, 2
        // Predicated region
        $region273: #{tpu_custom_call.1} parent=271 // pred_check
          %p7319 = pneg %p1022
        $region274: #{tpu_custom_call.1} parent=271 // pred_check_branch
          %7321 = sbr.rel (%p7319) target = $region276
        $region275: #{tpu_custom_call.1} parent=271 // pred_region
          %s7322 = sand.u32 %s1007, 1
          %s7323 = scalar_lea.sflag [#allocation4], %s7322
          %s7324 = sand.u32 %s1007, 1
          %s7325 = smul.addr %s7324, 16
          %s7326 = scalar_lea.vmem [#allocation32], %s7325
          %7327 = dma.done %s7323, 256
        $region276: #{tpu_custom_call.1} parent=271 // pred_fallthru
          _
      $region272: #{tpu_custom_call.1} parent=5 // pred_fallthru
        _
    $region6: #{tpu_custom_call.1} parent=1 // loop_footer
      %s110 = sadd.s32 1, %s106
    $region7: #{tpu_custom_call.1} parent=1 // loop_footer_branch
      %105 = sbr.rel target = $region3
    $region8: #{tpu_custom_call.1} parent=1 // loop_exit
      _
    %7328 = vsyncpa [#allocation3], 1
    %s7329 = scalar_lea.sflag [#allocation3], 1
    %7330 = vsyncpa %s7329, 1
    %7331 = vsyncpa [#allocation6], 1
    %7332 = vsyncpa [#allocation9], 1
    %7333 = vsyncpa [#allocation12], 1
    %7334 = vsyncpa [#allocation15], 1
    %7335 = vsyncpa [#allocation18], 1
    %7336 = vsyncpa [#allocation21], 1
    %7337 = vsyncpa [#allocation24], 1
    %7338 = vsyncpa [#allocation27], 1
    %7339 = vsyncpa [#allocation30], 1
    %7340 = vsyncpa [#allocation4], 1
    %s7341 = scalar_lea.sflag [#allocation4], 1
    %7342 = vsyncpa %s7341, 1

</llo_original>
